<compile_context>
chip_gen: v7x
topology: tpu7x:2x2x1
jax: 0.10.0
libtpu: 0.0.40
codegen_flags: <defaults>
</compile_context>

<pallas_src>
import numpy as np
import jax
import jax.numpy as jnp
from jax.experimental import pallas as pl
from jax.experimental.pallas import tpu as pltpu

EPS = 1e-5
C = 32          # channels of both convs
POOL = 32       # adaptive pool output size (32, 32)


def adaptive_matrix(out_size, in_size):
    """Exact AdaptiveAvgPool1d bin matrix: row i averages in[start:end)."""
    m = np.zeros((out_size, in_size), dtype=np.float32)
    for i in range(out_size):
        s = (i * in_size) // out_size
        e = -((-(i + 1) * in_size) // out_size)  # ceil
        m[i, s:e] = 1.0 / (e - s)
    return m


def model_forward(x_nchw, params):
    w1, b1, g1, be1, w2, b2, g2, be2 = params
    N, Cin, H, W = x_nchw.shape
    H1, W1 = H - 2, W - 2        # after conv1 (VALID 3x3)
    H2, W2 = H1 - 2, W1 - 2      # after conv2
    HW = H * W
    R = N * HW                               # rows of the flattened grid
    max_off = 2 * W + 2
    Rpad = ((R + max_off + 7) // 8) * 8      # shift head-room, sublane aligned
    M1 = N * H1 * W1                         # valid conv1 outputs (BN1 count)
    M2 = N * H2 * W2                         # valid conv2 outputs (BN2 count)
    CIN_PAD = 8

    # --- trace-time constants: validity masks + Kronecker pooling operator ---
    hh = np.arange(HW) // W
    ww = np.arange(HW) % W
    m1_np = np.tile(((hh < H1) & (ww < W1)).astype(np.float32), N).reshape(R, 1)
    m2_np = np.tile(((hh < H2) & (ww < W2)).astype(np.float32), N).reshape(1, R)
    ph = adaptive_matrix(POOL, H2)           # (32, H2)
    pw = adaptive_matrix(POOL, W2)           # (32, W2)
    ktb_np = np.zeros((HW, POOL * POOL), np.float32)
    for h in range(H2):
        for w in range(W2):
            ktb_np[h * W + w] = np.outer(ph[:, h], pw[:, w]).reshape(-1)

    # --- input / parameter plumbing (tiny, only touches raw inputs/params) ---
    xr = jnp.transpose(x_nchw, (0, 2, 3, 1)).reshape(R, Cin)        # rows, cin
    xp = jnp.pad(xr, ((0, Rpad - R), (0, CIN_PAD - Cin)))           # (Rpad, 8)
    w1k = jnp.pad(w1.reshape(9, Cin, C),
                  ((0, 0), (0, CIN_PAD - Cin), (0, 0)))             # (9, 8, 32)
    w2k = jnp.transpose(w2.reshape(9, C, C), (0, 2, 1))             # (9,cout,cin)
    b1r = b1.reshape(1, C)
    g1r = g1.reshape(1, C)
    be1r = be1.reshape(1, C)
    b2c = b2.reshape(C, 1)
    g2c = g2.reshape(C, 1)
    be2c = be2.reshape(C, 1)
    m1a = jnp.asarray(m1_np)
    m2a = jnp.asarray(m2_np)
    ktb = jnp.asarray(ktb_np)

    def kernel(xp_ref, w1_ref, b1_ref, g1_ref, be1_ref,
               w2_ref, b2_ref, g2_ref, be2_ref,
               m1_ref, m2_ref, ktb_ref, o_ref, y1s_ref):
        # -------- conv1: 9 shifted-tap matmuls on the flattened grid --------
        y1 = None
        for t in range(9):
            off = (t // 3) * W + (t % 3)
            part = jnp.dot(xp_ref[off:off + R, :], w1_ref[t],
                           preferred_element_type=jnp.float32)
            y1 = part if y1 is None else y1 + part
        y1 = y1 + b1_ref[...]                                 # (R, C)

        # -------- bn1: one-pass masked batch statistics ----------------------
        mk1 = m1_ref[...]                                     # (R, 1)
        y1m = y1 * mk1
        s1 = jnp.sum(y1m, axis=0, keepdims=True)              # (1, C)
        ss1 = jnp.sum(y1m * y1, axis=0, keepdims=True)        # sum(mask*y^2)
        mu1 = s1 * (1.0 / M1)
        var1 = ss1 * (1.0 / M1) - mu1 * mu1
        y1n = (y1 - mu1) * jax.lax.rsqrt(var1 + EPS) * g1_ref[...] + be1_ref[...]

        # stash for conv2's shifted reads; zero the shift head-room
        y1s_ref[0:R, :] = y1n
        y1s_ref[R:Rpad, :] = jnp.zeros((Rpad - R, C), jnp.float32)

        # -------- conv2: 'nt' tap matmuls -> channels-major (C, R) ----------
        y2 = None
        for t in range(9):
            off = (t // 3) * W + (t % 3)
            part = jax.lax.dot_general(
                w2_ref[t], y1s_ref[off:off + R, :],
                (((1,), (1,)), ((), ())),
                preferred_element_type=jnp.float32)
            y2 = part if y2 is None else y2 + part
        y2 = y2 + b2_ref[...]                                 # (C, R)

        # -------- bn2: one-pass masked batch statistics ----------------------
        mk2 = m2_ref[...]                                     # (1, R)
        y2m = y2 * mk2
        s2 = jnp.sum(y2m, axis=1, keepdims=True)              # (C, 1)
        ss2 = jnp.sum(y2m * y2, axis=1, keepdims=True)
        mu2 = s2 * (1.0 / M2)
        var2 = ss2 * (1.0 / M2) - mu2 * mu2
        y2n = (y2 - mu2) * jax.lax.rsqrt(var2 + EPS) * g2_ref[...] + be2_ref[...]

        # -------- adaptive avg pool: one (C,HW)@(HW,1024) matmul per image ---
        kop = ktb_ref[...]                                    # (HW, 1024)
        for n in range(N):
            o_ref[n] = jnp.dot(y2n[:, n * HW:(n + 1) * HW], kop,
                               preferred_element_type=jnp.float32)

    vmem = pl.BlockSpec(memory_space=pltpu.MemorySpace.VMEM)
    out = pl.pallas_call(
        kernel,
        out_shape=jax.ShapeDtypeStruct((N, C, POOL * POOL), jnp.float32),
        in_specs=[vmem] * 12,
        out_specs=vmem,
        scratch_shapes=[pltpu.VMEM((Rpad, C), jnp.float32)],
    )(xp, w1k, b1r, g1r, be1r, w2k, b2c, g2c, be2c, m1a, m2a, ktb)
    return out.reshape(N, C, POOL, POOL)                      # NCHW


# ------------------------------ Reference ------------------------------------

def ref_forward(x_nchw, params):
    w1, b1, g1, be1, w2, b2, g2, be2 = params
    x = jnp.transpose(x_nchw, (0, 2, 3, 1))

    def conv(x, w, b):
        y = jax.lax.conv_general_dilated(
            x, w, (1, 1), "VALID",
            dimension_numbers=("NHWC", "HWIO", "NHWC"),
            precision=jax.lax.Precision.HIGHEST)
        return y + b.reshape(1, 1, 1, -1)

    def bn(y, g, be):
        mu = jnp.mean(y, axis=(0, 1, 2), keepdims=True)
        var = jnp.mean((y - mu) ** 2, axis=(0, 1, 2), keepdims=True)
        return (y - mu) * jax.lax.rsqrt(var + EPS) * g.reshape(1, 1, 1, -1) \
            + be.reshape(1, 1, 1, -1)

    y1 = bn(conv(x, w1, b1), g1, be1)
    y2 = bn(conv(y1, w2, b2), g2, be2)
    H2, W2 = y2.shape[1], y2.shape[2]
    ph = jnp.asarray(adaptive_matrix(POOL, H2))
    pw = jnp.asarray(adaptive_matrix(POOL, W2))
    return jnp.einsum("ih,nhwc,jw->ncij", ph, y2, pw,
                      precision=jax.lax.Precision.HIGHEST)


# --------------------------------- main ---------------------------------------

if __name__ == "__main__":
    key = jax.random.PRNGKey(0)
    ks = jax.random.split(key, 9)

    # conv weights in HWIO (kh, kw, in, out) tap layout.
    w1 = 0.10 * jax.random.normal(ks[0], (3, 3, 3, 32), jnp.float32)
    b1 = 0.10 * jax.random.normal(ks[1], (32,), jnp.float32)
    g1 = 1.0 + 0.10 * jax.random.normal(ks[2], (32,), jnp.float32)
    be1 = 0.10 * jax.random.normal(ks[3], (32,), jnp.float32)
    w2 = 0.05 * jax.random.normal(ks[4], (3, 3, 32, 32), jnp.float32)
    b2 = 0.10 * jax.random.normal(ks[5], (32,), jnp.float32)
    g2 = 1.0 + 0.10 * jax.random.normal(ks[6], (32,), jnp.float32)
    be2 = 0.10 * jax.random.normal(ks[7], (32,), jnp.float32)
    params = (w1, b1, g1, be1, w2, b2, g2, be2)

    # Input in PyTorch NCHW; 16x16 so both VALID 3x3 convs are legal.
    x = jax.random.normal(ks[8], (2, 3, 16, 16), jnp.float32)

    out = jax.block_until_ready(jax.jit(model_forward)(x, params))
    assert out.shape == (2, 32, 32, 32)

    ref = jax.block_until_ready(ref_forward(x, params))
    np.testing.assert_allclose(np.asarray(out), np.asarray(ref),
                               atol=2e-3, rtol=2e-3)
    print("KERNEL_OK")
</pallas_src>

<mosaic_0001>
module attributes {stable_mosaic.version = 11 : i64} {
  func.func @kernel(%arg0: memref<552x8xf32, #tpu.memory_space<vmem>>, %arg1: memref<9x8x32xf32, #tpu.memory_space<vmem>>, %arg2: memref<1x32xf32, #tpu.memory_space<vmem>>, %arg3: memref<1x32xf32, #tpu.memory_space<vmem>>, %arg4: memref<1x32xf32, #tpu.memory_space<vmem>>, %arg5: memref<9x32x32xf32, #tpu.memory_space<vmem>>, %arg6: memref<32x1xf32, #tpu.memory_space<vmem>>, %arg7: memref<32x1xf32, #tpu.memory_space<vmem>>, %arg8: memref<32x1xf32, #tpu.memory_space<vmem>>, %arg9: memref<512x1xf32, #tpu.memory_space<vmem>>, %arg10: memref<1x512xf32, #tpu.memory_space<vmem>>, %arg11: memref<256x1024xf32, #tpu.memory_space<vmem>>, %arg12: memref<2x32x1024xf32, #tpu.memory_space<vmem>>, %arg13: memref<552x32xf32, #tpu.memory_space<vmem>>) attributes {dimension_semantics = [], scalar_prefetch = 0 : i64, scratch_operands = 1 : i64, tpu.core_type = #tpu.core_type<tc>} {
    %c0 = arith.constant 0 : index
    %c0_0 = arith.constant 0 : index
    %0 = vector.load %arg0[%c0, %c0_0] : memref<552x8xf32, #tpu.memory_space<vmem>>, vector<512x8xf32>
    %c0_1 = arith.constant 0 : index
    %c0_2 = arith.constant 0 : index
    %c0_3 = arith.constant 0 : index
    %1 = vector.load %arg1[%c0_1, %c0_2, %c0_3] : memref<9x8x32xf32, #tpu.memory_space<vmem>>, vector<1x8x32xf32>
    %2 = vector.shape_cast %1 : vector<1x8x32xf32> to vector<8x32xf32>
    %cst = arith.constant dense<0.000000e+00> : vector<512x32xf32>
    %3 = tpu.matmul %0, %2, %cst {dimension_numbers = #tpu.dot_dimension_numbers<[1], [0], [0], [1], [0, 0, 1, 1], [], []>} : vector<512x8xf32>, vector<8x32xf32>, vector<512x32xf32> -> vector<512x32xf32>
    %c1 = arith.constant 1 : index
    %c0_4 = arith.constant 0 : index
    %4 = vector.load %arg0[%c1, %c0_4] : memref<552x8xf32, #tpu.memory_space<vmem>>, vector<512x8xf32>
    %c1_5 = arith.constant 1 : index
    %c0_6 = arith.constant 0 : index
    %c0_7 = arith.constant 0 : index
    %5 = vector.load %arg1[%c1_5, %c0_6, %c0_7] : memref<9x8x32xf32, #tpu.memory_space<vmem>>, vector<1x8x32xf32>
    %6 = vector.shape_cast %5 : vector<1x8x32xf32> to vector<8x32xf32>
    %cst_8 = arith.constant dense<0.000000e+00> : vector<512x32xf32>
    %7 = tpu.matmul %4, %6, %cst_8 {dimension_numbers = #tpu.dot_dimension_numbers<[1], [0], [0], [1], [0, 0, 1, 1], [], []>} : vector<512x8xf32>, vector<8x32xf32>, vector<512x32xf32> -> vector<512x32xf32>
    %8 = arith.addf %3, %7 : vector<512x32xf32>
    %c2 = arith.constant 2 : index
    %c0_9 = arith.constant 0 : index
    %9 = vector.load %arg0[%c2, %c0_9] : memref<552x8xf32, #tpu.memory_space<vmem>>, vector<512x8xf32>
    %c2_10 = arith.constant 2 : index
    %c0_11 = arith.constant 0 : index
    %c0_12 = arith.constant 0 : index
    %10 = vector.load %arg1[%c2_10, %c0_11, %c0_12] : memref<9x8x32xf32, #tpu.memory_space<vmem>>, vector<1x8x32xf32>
    %11 = vector.shape_cast %10 : vector<1x8x32xf32> to vector<8x32xf32>
    %cst_13 = arith.constant dense<0.000000e+00> : vector<512x32xf32>
    %12 = tpu.matmul %9, %11, %cst_13 {dimension_numbers = #tpu.dot_dimension_numbers<[1], [0], [0], [1], [0, 0, 1, 1], [], []>} : vector<512x8xf32>, vector<8x32xf32>, vector<512x32xf32> -> vector<512x32xf32>
    %13 = arith.addf %8, %12 : vector<512x32xf32>
    %c16 = arith.constant 16 : index
    %c0_14 = arith.constant 0 : index
    %14 = vector.load %arg0[%c16, %c0_14] : memref<552x8xf32, #tpu.memory_space<vmem>>, vector<512x8xf32>
    %c3 = arith.constant 3 : index
    %c0_15 = arith.constant 0 : index
    %c0_16 = arith.constant 0 : index
    %15 = vector.load %arg1[%c3, %c0_15, %c0_16] : memref<9x8x32xf32, #tpu.memory_space<vmem>>, vector<1x8x32xf32>
    %16 = vector.shape_cast %15 : vector<1x8x32xf32> to vector<8x32xf32>
    %cst_17 = arith.constant dense<0.000000e+00> : vector<512x32xf32>
    %17 = tpu.matmul %14, %16, %cst_17 {dimension_numbers = #tpu.dot_dimension_numbers<[1], [0], [0], [1], [0, 0, 1, 1], [], []>} : vector<512x8xf32>, vector<8x32xf32>, vector<512x32xf32> -> vector<512x32xf32>
    %18 = arith.addf %13, %17 : vector<512x32xf32>
    %c17 = arith.constant 17 : index
    %c0_18 = arith.constant 0 : index
    %19 = vector.load %arg0[%c17, %c0_18] : memref<552x8xf32, #tpu.memory_space<vmem>>, vector<512x8xf32>
    %c4 = arith.constant 4 : index
    %c0_19 = arith.constant 0 : index
    %c0_20 = arith.constant 0 : index
    %20 = vector.load %arg1[%c4, %c0_19, %c0_20] : memref<9x8x32xf32, #tpu.memory_space<vmem>>, vector<1x8x32xf32>
    %21 = vector.shape_cast %20 : vector<1x8x32xf32> to vector<8x32xf32>
    %cst_21 = arith.constant dense<0.000000e+00> : vector<512x32xf32>
    %22 = tpu.matmul %19, %21, %cst_21 {dimension_numbers = #tpu.dot_dimension_numbers<[1], [0], [0], [1], [0, 0, 1, 1], [], []>} : vector<512x8xf32>, vector<8x32xf32>, vector<512x32xf32> -> vector<512x32xf32>
    %23 = arith.addf %18, %22 : vector<512x32xf32>
    %c18 = arith.constant 18 : index
    %c0_22 = arith.constant 0 : index
    %24 = vector.load %arg0[%c18, %c0_22] : memref<552x8xf32, #tpu.memory_space<vmem>>, vector<512x8xf32>
    %c5 = arith.constant 5 : index
    %c0_23 = arith.constant 0 : index
    %c0_24 = arith.constant 0 : index
    %25 = vector.load %arg1[%c5, %c0_23, %c0_24] : memref<9x8x32xf32, #tpu.memory_space<vmem>>, vector<1x8x32xf32>
    %26 = vector.shape_cast %25 : vector<1x8x32xf32> to vector<8x32xf32>
    %cst_25 = arith.constant dense<0.000000e+00> : vector<512x32xf32>
    %27 = tpu.matmul %24, %26, %cst_25 {dimension_numbers = #tpu.dot_dimension_numbers<[1], [0], [0], [1], [0, 0, 1, 1], [], []>} : vector<512x8xf32>, vector<8x32xf32>, vector<512x32xf32> -> vector<512x32xf32>
    %28 = arith.addf %23, %27 : vector<512x32xf32>
    %c32 = arith.constant 32 : index
    %c0_26 = arith.constant 0 : index
    %29 = vector.load %arg0[%c32, %c0_26] : memref<552x8xf32, #tpu.memory_space<vmem>>, vector<512x8xf32>
    %c6 = arith.constant 6 : index
    %c0_27 = arith.constant 0 : index
    %c0_28 = arith.constant 0 : index
    %30 = vector.load %arg1[%c6, %c0_27, %c0_28] : memref<9x8x32xf32, #tpu.memory_space<vmem>>, vector<1x8x32xf32>
    %31 = vector.shape_cast %30 : vector<1x8x32xf32> to vector<8x32xf32>
    %cst_29 = arith.constant dense<0.000000e+00> : vector<512x32xf32>
    %32 = tpu.matmul %29, %31, %cst_29 {dimension_numbers = #tpu.dot_dimension_numbers<[1], [0], [0], [1], [0, 0, 1, 1], [], []>} : vector<512x8xf32>, vector<8x32xf32>, vector<512x32xf32> -> vector<512x32xf32>
    %33 = arith.addf %28, %32 : vector<512x32xf32>
    %c33 = arith.constant 33 : index
    %c0_30 = arith.constant 0 : index
    %34 = vector.load %arg0[%c33, %c0_30] : memref<552x8xf32, #tpu.memory_space<vmem>>, vector<512x8xf32>
    %c7 = arith.constant 7 : index
    %c0_31 = arith.constant 0 : index
    %c0_32 = arith.constant 0 : index
    %35 = vector.load %arg1[%c7, %c0_31, %c0_32] : memref<9x8x32xf32, #tpu.memory_space<vmem>>, vector<1x8x32xf32>
    %36 = vector.shape_cast %35 : vector<1x8x32xf32> to vector<8x32xf32>
    %cst_33 = arith.constant dense<0.000000e+00> : vector<512x32xf32>
    %37 = tpu.matmul %34, %36, %cst_33 {dimension_numbers = #tpu.dot_dimension_numbers<[1], [0], [0], [1], [0, 0, 1, 1], [], []>} : vector<512x8xf32>, vector<8x32xf32>, vector<512x32xf32> -> vector<512x32xf32>
    %38 = arith.addf %33, %37 : vector<512x32xf32>
    %c34 = arith.constant 34 : index
    %c0_34 = arith.constant 0 : index
    %39 = vector.load %arg0[%c34, %c0_34] : memref<552x8xf32, #tpu.memory_space<vmem>>, vector<512x8xf32>
    %c8 = arith.constant 8 : index
    %c0_35 = arith.constant 0 : index
    %c0_36 = arith.constant 0 : index
    %40 = vector.load %arg1[%c8, %c0_35, %c0_36] : memref<9x8x32xf32, #tpu.memory_space<vmem>>, vector<1x8x32xf32>
    %41 = vector.shape_cast %40 : vector<1x8x32xf32> to vector<8x32xf32>
    %cst_37 = arith.constant dense<0.000000e+00> : vector<512x32xf32>
    %42 = tpu.matmul %39, %41, %cst_37 {dimension_numbers = #tpu.dot_dimension_numbers<[1], [0], [0], [1], [0, 0, 1, 1], [], []>} : vector<512x8xf32>, vector<8x32xf32>, vector<512x32xf32> -> vector<512x32xf32>
    %43 = arith.addf %38, %42 : vector<512x32xf32>
    %c0_38 = arith.constant 0 : index
    %c0_39 = arith.constant 0 : index
    %44 = vector.load %arg2[%c0_38, %c0_39] : memref<1x32xf32, #tpu.memory_space<vmem>>, vector<1x32xf32>
    %45 = vector.broadcast %44 : vector<1x32xf32> to vector<512x32xf32>
    %46 = arith.addf %43, %45 : vector<512x32xf32>
    %c0_40 = arith.constant 0 : index
    %c0_41 = arith.constant 0 : index
    %47 = vector.load %arg9[%c0_40, %c0_41] : memref<512x1xf32, #tpu.memory_space<vmem>>, vector<512x1xf32>
    %48 = vector.broadcast %47 : vector<512x1xf32> to vector<512x32xf32>
    %49 = arith.mulf %46, %48 : vector<512x32xf32>
    %cst_42 = arith.constant dense<0.000000e+00> : vector<32xf32>
    %50 = vector.multi_reduction <add>, %49, %cst_42 [0] : vector<512x32xf32> to vector<32xf32>
    %51 = vector.shape_cast %50 : vector<32xf32> to vector<1x32xf32>
    %52 = arith.mulf %49, %46 : vector<512x32xf32>
    %cst_43 = arith.constant dense<0.000000e+00> : vector<32xf32>
    %53 = vector.multi_reduction <add>, %52, %cst_43 [0] : vector<512x32xf32> to vector<32xf32>
    %54 = vector.shape_cast %53 : vector<32xf32> to vector<1x32xf32>
    %cst_44 = arith.constant 0.00255102036 : f32
    %55 = vector.broadcast %cst_44 : f32 to vector<1x32xf32>
    %56 = arith.mulf %51, %55 : vector<1x32xf32>
    %cst_45 = arith.constant 0.00255102036 : f32
    %57 = vector.broadcast %cst_45 : f32 to vector<1x32xf32>
    %58 = arith.mulf %54, %57 : vector<1x32xf32>
    %59 = arith.mulf %56, %56 : vector<1x32xf32>
    %60 = arith.subf %58, %59 : vector<1x32xf32>
    %61 = vector.broadcast %56 : vector<1x32xf32> to vector<512x32xf32>
    %62 = arith.subf %46, %61 : vector<512x32xf32>
    %cst_46 = arith.constant 9.99999974E-6 : f32
    %63 = vector.broadcast %cst_46 : f32 to vector<1x32xf32>
    %64 = arith.addf %60, %63 : vector<1x32xf32>
    %65 = math.rsqrt %64 : vector<1x32xf32>
    %66 = vector.broadcast %65 : vector<1x32xf32> to vector<512x32xf32>
    %67 = arith.mulf %62, %66 : vector<512x32xf32>
    %c0_47 = arith.constant 0 : index
    %c0_48 = arith.constant 0 : index
    %68 = vector.load %arg3[%c0_47, %c0_48] : memref<1x32xf32, #tpu.memory_space<vmem>>, vector<1x32xf32>
    %69 = vector.broadcast %68 : vector<1x32xf32> to vector<512x32xf32>
    %70 = arith.mulf %67, %69 : vector<512x32xf32>
    %c0_49 = arith.constant 0 : index
    %c0_50 = arith.constant 0 : index
    %71 = vector.load %arg4[%c0_49, %c0_50] : memref<1x32xf32, #tpu.memory_space<vmem>>, vector<1x32xf32>
    %72 = vector.broadcast %71 : vector<1x32xf32> to vector<512x32xf32>
    %73 = arith.addf %70, %72 : vector<512x32xf32>
    %c0_51 = arith.constant 0 : index
    %c0_52 = arith.constant 0 : index
    %74 = vector.load %arg13[%c0_51, %c0_52] : memref<552x32xf32, #tpu.memory_space<vmem>>, vector<512x32xf32>
    tpu.vector_store %arg13[%c0_51, %c0_52], %73 {strides = array<i32>} : memref<552x32xf32, #tpu.memory_space<vmem>>, vector<512x32xf32>,
    %cst_53 = arith.constant 0.000000e+00 : f32
    %75 = vector.broadcast %cst_53 : f32 to vector<40x32xf32>
    %c512 = arith.constant 512 : index
    %c0_54 = arith.constant 0 : index
    %76 = vector.load %arg13[%c512, %c0_54] : memref<552x32xf32, #tpu.memory_space<vmem>>, vector<40x32xf32>
    tpu.vector_store %arg13[%c512, %c0_54], %75 {strides = array<i32>} : memref<552x32xf32, #tpu.memory_space<vmem>>, vector<40x32xf32>,
    %c0_55 = arith.constant 0 : index
    %c0_56 = arith.constant 0 : index
    %c0_57 = arith.constant 0 : index
    %77 = vector.load %arg5[%c0_55, %c0_56, %c0_57] : memref<9x32x32xf32, #tpu.memory_space<vmem>>, vector<1x32x32xf32>
    %78 = vector.shape_cast %77 : vector<1x32x32xf32> to vector<32x32xf32>
    %c0_58 = arith.constant 0 : index
    %c0_59 = arith.constant 0 : index
    %79 = vector.load %arg13[%c0_58, %c0_59] : memref<552x32xf32, #tpu.memory_space<vmem>>, vector<512x32xf32>
    %cst_60 = arith.constant dense<0.000000e+00> : vector<32x512xf32>
    %80 = tpu.matmul %78, %79, %cst_60 {dimension_numbers = #tpu.dot_dimension_numbers<[1], [1], [0], [0], [0, 0, 1, 0], [], []>} : vector<32x32xf32>, vector<512x32xf32>, vector<32x512xf32> -> vector<32x512xf32>
    %c1_61 = arith.constant 1 : index
    %c0_62 = arith.constant 0 : index
    %c0_63 = arith.constant 0 : index
    %81 = vector.load %arg5[%c1_61, %c0_62, %c0_63] : memref<9x32x32xf32, #tpu.memory_space<vmem>>, vector<1x32x32xf32>
    %82 = vector.shape_cast %81 : vector<1x32x32xf32> to vector<32x32xf32>
    %c1_64 = arith.constant 1 : index
    %c0_65 = arith.constant 0 : index
    %83 = vector.load %arg13[%c1_64, %c0_65] : memref<552x32xf32, #tpu.memory_space<vmem>>, vector<512x32xf32>
    %cst_66 = arith.constant dense<0.000000e+00> : vector<32x512xf32>
    %84 = tpu.matmul %82, %83, %cst_66 {dimension_numbers = #tpu.dot_dimension_numbers<[1], [1], [0], [0], [0, 0, 1, 0], [], []>} : vector<32x32xf32>, vector<512x32xf32>, vector<32x512xf32> -> vector<32x512xf32>
    %85 = arith.addf %80, %84 : vector<32x512xf32>
    %c2_67 = arith.constant 2 : index
    %c0_68 = arith.constant 0 : index
    %c0_69 = arith.constant 0 : index
    %86 = vector.load %arg5[%c2_67, %c0_68, %c0_69] : memref<9x32x32xf32, #tpu.memory_space<vmem>>, vector<1x32x32xf32>
    %87 = vector.shape_cast %86 : vector<1x32x32xf32> to vector<32x32xf32>
    %c2_70 = arith.constant 2 : index
    %c0_71 = arith.constant 0 : index
    %88 = vector.load %arg13[%c2_70, %c0_71] : memref<552x32xf32, #tpu.memory_space<vmem>>, vector<512x32xf32>
    %cst_72 = arith.constant dense<0.000000e+00> : vector<32x512xf32>
    %89 = tpu.matmul %87, %88, %cst_72 {dimension_numbers = #tpu.dot_dimension_numbers<[1], [1], [0], [0], [0, 0, 1, 0], [], []>} : vector<32x32xf32>, vector<512x32xf32>, vector<32x512xf32> -> vector<32x512xf32>
    %90 = arith.addf %85, %89 : vector<32x512xf32>
    %c3_73 = arith.constant 3 : index
    %c0_74 = arith.constant 0 : index
    %c0_75 = arith.constant 0 : index
    %91 = vector.load %arg5[%c3_73, %c0_74, %c0_75] : memref<9x32x32xf32, #tpu.memory_space<vmem>>, vector<1x32x32xf32>
    %92 = vector.shape_cast %91 : vector<1x32x32xf32> to vector<32x32xf32>
    %c16_76 = arith.constant 16 : index
    %c0_77 = arith.constant 0 : index
    %93 = vector.load %arg13[%c16_76, %c0_77] : memref<552x32xf32, #tpu.memory_space<vmem>>, vector<512x32xf32>
    %cst_78 = arith.constant dense<0.000000e+00> : vector<32x512xf32>
    %94 = tpu.matmul %92, %93, %cst_78 {dimension_numbers = #tpu.dot_dimension_numbers<[1], [1], [0], [0], [0, 0, 1, 0], [], []>} : vector<32x32xf32>, vector<512x32xf32>, vector<32x512xf32> -> vector<32x512xf32>
    %95 = arith.addf %90, %94 : vector<32x512xf32>
    %c4_79 = arith.constant 4 : index
    %c0_80 = arith.constant 0 : index
    %c0_81 = arith.constant 0 : index
    %96 = vector.load %arg5[%c4_79, %c0_80, %c0_81] : memref<9x32x32xf32, #tpu.memory_space<vmem>>, vector<1x32x32xf32>
    %97 = vector.shape_cast %96 : vector<1x32x32xf32> to vector<32x32xf32>
    %c17_82 = arith.constant 17 : index
    %c0_83 = arith.constant 0 : index
    %98 = vector.load %arg13[%c17_82, %c0_83] : memref<552x32xf32, #tpu.memory_space<vmem>>, vector<512x32xf32>
    %cst_84 = arith.constant dense<0.000000e+00> : vector<32x512xf32>
    %99 = tpu.matmul %97, %98, %cst_84 {dimension_numbers = #tpu.dot_dimension_numbers<[1], [1], [0], [0], [0, 0, 1, 0], [], []>} : vector<32x32xf32>, vector<512x32xf32>, vector<32x512xf32> -> vector<32x512xf32>
    %100 = arith.addf %95, %99 : vector<32x512xf32>
    %c5_85 = arith.constant 5 : index
    %c0_86 = arith.constant 0 : index
    %c0_87 = arith.constant 0 : index
    %101 = vector.load %arg5[%c5_85, %c0_86, %c0_87] : memref<9x32x32xf32, #tpu.memory_space<vmem>>, vector<1x32x32xf32>
    %102 = vector.shape_cast %101 : vector<1x32x32xf32> to vector<32x32xf32>
    %c18_88 = arith.constant 18 : index
    %c0_89 = arith.constant 0 : index
    %103 = vector.load %arg13[%c18_88, %c0_89] : memref<552x32xf32, #tpu.memory_space<vmem>>, vector<512x32xf32>
    %cst_90 = arith.constant dense<0.000000e+00> : vector<32x512xf32>
    %104 = tpu.matmul %102, %103, %cst_90 {dimension_numbers = #tpu.dot_dimension_numbers<[1], [1], [0], [0], [0, 0, 1, 0], [], []>} : vector<32x32xf32>, vector<512x32xf32>, vector<32x512xf32> -> vector<32x512xf32>
    %105 = arith.addf %100, %104 : vector<32x512xf32>
    %c6_91 = arith.constant 6 : index
    %c0_92 = arith.constant 0 : index
    %c0_93 = arith.constant 0 : index
    %106 = vector.load %arg5[%c6_91, %c0_92, %c0_93] : memref<9x32x32xf32, #tpu.memory_space<vmem>>, vector<1x32x32xf32>
    %107 = vector.shape_cast %106 : vector<1x32x32xf32> to vector<32x32xf32>
    %c32_94 = arith.constant 32 : index
    %c0_95 = arith.constant 0 : index
    %108 = vector.load %arg13[%c32_94, %c0_95] : memref<552x32xf32, #tpu.memory_space<vmem>>, vector<512x32xf32>
    %cst_96 = arith.constant dense<0.000000e+00> : vector<32x512xf32>
    %109 = tpu.matmul %107, %108, %cst_96 {dimension_numbers = #tpu.dot_dimension_numbers<[1], [1], [0], [0], [0, 0, 1, 0], [], []>} : vector<32x32xf32>, vector<512x32xf32>, vector<32x512xf32> -> vector<32x512xf32>
    %110 = arith.addf %105, %109 : vector<32x512xf32>
    %c7_97 = arith.constant 7 : index
    %c0_98 = arith.constant 0 : index
    %c0_99 = arith.constant 0 : index
    %111 = vector.load %arg5[%c7_97, %c0_98, %c0_99] : memref<9x32x32xf32, #tpu.memory_space<vmem>>, vector<1x32x32xf32>
    %112 = vector.shape_cast %111 : vector<1x32x32xf32> to vector<32x32xf32>
    %c33_100 = arith.constant 33 : index
    %c0_101 = arith.constant 0 : index
    %113 = vector.load %arg13[%c33_100, %c0_101] : memref<552x32xf32, #tpu.memory_space<vmem>>, vector<512x32xf32>
    %cst_102 = arith.constant dense<0.000000e+00> : vector<32x512xf32>
    %114 = tpu.matmul %112, %113, %cst_102 {dimension_numbers = #tpu.dot_dimension_numbers<[1], [1], [0], [0], [0, 0, 1, 0], [], []>} : vector<32x32xf32>, vector<512x32xf32>, vector<32x512xf32> -> vector<32x512xf32>
    %115 = arith.addf %110, %114 : vector<32x512xf32>
    %c8_103 = arith.constant 8 : index
    %c0_104 = arith.constant 0 : index
    %c0_105 = arith.constant 0 : index
    %116 = vector.load %arg5[%c8_103, %c0_104, %c0_105] : memref<9x32x32xf32, #tpu.memory_space<vmem>>, vector<1x32x32xf32>
    %117 = vector.shape_cast %116 : vector<1x32x32xf32> to vector<32x32xf32>
    %c34_106 = arith.constant 34 : index
    %c0_107 = arith.constant 0 : index
    %118 = vector.load %arg13[%c34_106, %c0_107] : memref<552x32xf32, #tpu.memory_space<vmem>>, vector<512x32xf32>
    %cst_108 = arith.constant dense<0.000000e+00> : vector<32x512xf32>
    %119 = tpu.matmul %117, %118, %cst_108 {dimension_numbers = #tpu.dot_dimension_numbers<[1], [1], [0], [0], [0, 0, 1, 0], [], []>} : vector<32x32xf32>, vector<512x32xf32>, vector<32x512xf32> -> vector<32x512xf32>
    %120 = arith.addf %115, %119 : vector<32x512xf32>
    %c0_109 = arith.constant 0 : index
    %c0_110 = arith.constant 0 : index
    %121 = vector.load %arg6[%c0_109, %c0_110] : memref<32x1xf32, #tpu.memory_space<vmem>>, vector<32x1xf32>
    %122 = vector.broadcast %121 : vector<32x1xf32> to vector<32x512xf32>
    %123 = arith.addf %120, %122 : vector<32x512xf32>
    %c0_111 = arith.constant 0 : index
    %c0_112 = arith.constant 0 : index
    %124 = vector.load %arg10[%c0_111, %c0_112] : memref<1x512xf32, #tpu.memory_space<vmem>>, vector<1x512xf32>
    %125 = vector.broadcast %124 : vector<1x512xf32> to vector<32x512xf32>
    %126 = arith.mulf %123, %125 : vector<32x512xf32>
    %cst_113 = arith.constant dense<0.000000e+00> : vector<32xf32>
    %127 = vector.multi_reduction <add>, %126, %cst_113 [1] : vector<32x512xf32> to vector<32xf32>
    %128 = vector.shape_cast %127 : vector<32xf32> to vector<32x1xf32>
    %129 = arith.mulf %126, %123 : vector<32x512xf32>
    %cst_114 = arith.constant dense<0.000000e+00> : vector<32xf32>
    %130 = vector.multi_reduction <add>, %129, %cst_114 [1] : vector<32x512xf32> to vector<32xf32>
    %131 = vector.shape_cast %130 : vector<32xf32> to vector<32x1xf32>
    %cst_115 = arith.constant 0.00347222225 : f32
    %132 = vector.broadcast %cst_115 : f32 to vector<32x1xf32>
    %133 = arith.mulf %128, %132 : vector<32x1xf32>
    %cst_116 = arith.constant 0.00347222225 : f32
    %134 = vector.broadcast %cst_116 : f32 to vector<32x1xf32>
    %135 = arith.mulf %131, %134 : vector<32x1xf32>
    %136 = arith.mulf %133, %133 : vector<32x1xf32>
    %137 = arith.subf %135, %136 : vector<32x1xf32>
    %138 = vector.broadcast %133 : vector<32x1xf32> to vector<32x512xf32>
    %139 = arith.subf %123, %138 : vector<32x512xf32>
    %cst_117 = arith.constant 9.99999974E-6 : f32
    %140 = vector.broadcast %cst_117 : f32 to vector<32x1xf32>
    %141 = arith.addf %137, %140 : vector<32x1xf32>
    %142 = math.rsqrt %141 : vector<32x1xf32>
    %143 = vector.broadcast %142 : vector<32x1xf32> to vector<32x512xf32>
    %144 = arith.mulf %139, %143 : vector<32x512xf32>
    %c0_118 = arith.constant 0 : index
    %c0_119 = arith.constant 0 : index
    %145 = vector.load %arg7[%c0_118, %c0_119] : memref<32x1xf32, #tpu.memory_space<vmem>>, vector<32x1xf32>
    %146 = vector.broadcast %145 : vector<32x1xf32> to vector<32x512xf32>
    %147 = arith.mulf %144, %146 : vector<32x512xf32>
    %c0_120 = arith.constant 0 : index
    %c0_121 = arith.constant 0 : index
    %148 = vector.load %arg8[%c0_120, %c0_121] : memref<32x1xf32, #tpu.memory_space<vmem>>, vector<32x1xf32>
    %149 = vector.broadcast %148 : vector<32x1xf32> to vector<32x512xf32>
    %150 = arith.addf %147, %149 : vector<32x512xf32>
    %c0_122 = arith.constant 0 : index
    %c0_123 = arith.constant 0 : index
    %151 = vector.load %arg11[%c0_122, %c0_123] : memref<256x1024xf32, #tpu.memory_space<vmem>>, vector<256x1024xf32>
    %152 = vector.extract_strided_slice %150 {offsets = [0, 0], sizes = [32, 256], strides = [1, 1]} : vector<32x512xf32> to vector<32x256xf32>
    %cst_124 = arith.constant dense<0.000000e+00> : vector<32x1024xf32>
    %153 = tpu.matmul %152, %151, %cst_124 {dimension_numbers = #tpu.dot_dimension_numbers<[1], [0], [0], [1], [0, 0, 1, 1], [], []>} : vector<32x256xf32>, vector<256x1024xf32>, vector<32x1024xf32> -> vector<32x1024xf32>
    %c0_125 = arith.constant 0 : index
    %c0_126 = arith.constant 0 : index
    %c0_127 = arith.constant 0 : index
    %154 = vector.load %arg12[%c0_125, %c0_126, %c0_127] : memref<2x32x1024xf32, #tpu.memory_space<vmem>>, vector<1x32x1024xf32>
    %155 = vector.shape_cast %154 : vector<1x32x1024xf32> to vector<32x1024xf32>
    %156 = vector.shape_cast %153 : vector<32x1024xf32> to vector<1x32x1024xf32>
    tpu.vector_store %arg12[%c0_125, %c0_126, %c0_127], %156 {strides = array<i32>} : memref<2x32x1024xf32, #tpu.memory_space<vmem>>, vector<1x32x1024xf32>,
    %157 = vector.extract_strided_slice %150 {offsets = [0, 256], sizes = [32, 256], strides = [1, 1]} : vector<32x512xf32> to vector<32x256xf32>
    %cst_128 = arith.constant dense<0.000000e+00> : vector<32x1024xf32>
    %158 = tpu.matmul %157, %151, %cst_128 {dimension_numbers = #tpu.dot_dimension_numbers<[1], [0], [0], [1], [0, 0, 1, 1], [], []>} : vector<32x256xf32>, vector<256x1024xf32>, vector<32x1024xf32> -> vector<32x1024xf32>
    %c1_129 = arith.constant 1 : index
    %c0_130 = arith.constant 0 : index
    %c0_131 = arith.constant 0 : index
    %159 = vector.load %arg12[%c1_129, %c0_130, %c0_131] : memref<2x32x1024xf32, #tpu.memory_space<vmem>>, vector<1x32x1024xf32>
    %160 = vector.shape_cast %159 : vector<1x32x1024xf32> to vector<32x1024xf32>
    %161 = vector.shape_cast %158 : vector<32x1024xf32> to vector<1x32x1024xf32>
    tpu.vector_store %arg12[%c1_129, %c0_130, %c0_131], %161 {strides = array<i32>} : memref<2x32x1024xf32, #tpu.memory_space<vmem>>, vector<1x32x1024xf32>,
    return
  }
}

</mosaic_0001>

<llo_original>
// kernel: model_forward.1
$region0: #{model_forward.1}
  #allocation0 [shape = 'u32[]', space=smem, size = 0x4, offset = 0x4, fixed_abs, tag = 'smem constant byte address 0x4 - core index']
  #allocation1 [shape = 'u32[144,128]{1,0:T(1,128)}', space=vmem, size = 0x12000, scoped, tag = 'internal scratch']
  #allocation2 [shape = 'f32[552,32]{1,0:T(8,128)}', space=vmem, size = 0x45000, scoped, tag = 'scratch operand']
  %s0 = inlined_call_operand.vmem [shape: f32[552,8], index: 0, kind: input, shape index: {}]
  %s1 = inlined_call_operand.vmem [shape: f32[9,8,32], index: 1, kind: input, shape index: {}]
  %s2 = inlined_call_operand.vmem [shape: f32[1,32], index: 2, kind: input, shape index: {}]
  %s3 = inlined_call_operand.vmem [shape: f32[1,32], index: 3, kind: input, shape index: {}]
  %s4 = inlined_call_operand.vmem [shape: f32[1,32], index: 4, kind: input, shape index: {}]
  %s5 = inlined_call_operand.vmem [shape: f32[9,32,32], index: 5, kind: input, shape index: {}]
  %s6 = inlined_call_operand.vmem [shape: f32[32,1], index: 6, kind: input, shape index: {}]
  %s7 = inlined_call_operand.vmem [shape: f32[32,1], index: 7, kind: input, shape index: {}]
  %s8 = inlined_call_operand.vmem [shape: f32[32,1], index: 8, kind: input, shape index: {}]
  %s9 = inlined_call_operand.hbm [shape: f32[512,1], index: 9, kind: input, shape index: {}]
  %s10 = inlined_call_operand.vmem [shape: f32[1,512], index: 10, kind: input, shape index: {}]
  %s11 = inlined_call_operand.vmem [shape: f32[256,1024], index: 11, kind: input, shape index: {}]
  %s12 = inlined_call_operand.vmem [shape: f32[2,32,1024], index: 12, kind: output, shape index: {}]
  %s13 = sld [smem:[#allocation0]]
  $region62: #{model_forward.1} parent=0
    _
  %s15 = ssub.s32 1, %s13
  %s16 = scalar_select 0, %s15, %s13
  $region1: #{model_forward.1} parent=0
    #allocation3 [shape = 'u8[262144]{0}', space=vmem, size = 0x40000, scoped, tag = 'input window, operand 9, single buffered']
    #allocation4 [shape = 's32[1]{0}', space=sflag, size = 0x4, scoped, tag = 'scoped memory for model_forward.1']
    %17 = vsyncpa [#allocation4], 0
    // Predicated region
    $region2: #{model_forward.1} parent=1 // pred_check
      _
    $region3: #{model_forward.1} parent=1 // pred_check_branch
      %19 = sbr.rel (0) target = $region5
    $region4: #{model_forward.1} parent=1 // pred_region
      _
    $region5: #{model_forward.1} parent=1 // pred_fallthru
      _
    // Predicated region
    $region6: #{model_forward.1} parent=1 // pred_check
      _
    $region7: #{model_forward.1} parent=1 // pred_check_branch
      %21 = sbr.rel (0) target = $region9
    $region8: #{model_forward.1} parent=1 // pred_region
      _
    $region9: #{model_forward.1} parent=1 // pred_fallthru
      _
    // Predicated region
    $region10: #{model_forward.1} parent=1 // pred_check
      _
    $region11: #{model_forward.1} parent=1 // pred_check_branch
      %23 = sbr.rel (0) target = $region13
    $region12: #{model_forward.1} parent=1 // pred_region
      _
    $region13: #{model_forward.1} parent=1 // pred_fallthru
      _
    // Predicated region
    $region14: #{model_forward.1} parent=1 // pred_check
      _
    $region15: #{model_forward.1} parent=1 // pred_check_branch
      %25 = sbr.rel (0) target = $region17
    $region16: #{model_forward.1} parent=1 // pred_region
      _
    $region17: #{model_forward.1} parent=1 // pred_fallthru
      _
    // Predicated region
    $region18: #{model_forward.1} parent=1 // pred_check
      _
    $region19: #{model_forward.1} parent=1 // pred_check_branch
      %27 = sbr.rel (0) target = $region21
    $region20: #{model_forward.1} parent=1 // pred_region
      _
    $region21: #{model_forward.1} parent=1 // pred_fallthru
      _
    // Predicated region
    $region22: #{model_forward.1} parent=1 // pred_check
      _
    $region23: #{model_forward.1} parent=1 // pred_check_branch
      %29 = sbr.rel (0) target = $region25
    $region24: #{model_forward.1} parent=1 // pred_region
      _
    $region25: #{model_forward.1} parent=1 // pred_fallthru
      _
    // Predicated region
    $region26: #{model_forward.1} parent=1 // pred_check
      _
    $region27: #{model_forward.1} parent=1 // pred_check_branch
      %31 = sbr.rel (0) target = $region29
    $region28: #{model_forward.1} parent=1 // pred_region
      _
    $region29: #{model_forward.1} parent=1 // pred_fallthru
      _
    // Predicated region
    $region30: #{model_forward.1} parent=1 // pred_check
      _
    $region31: #{model_forward.1} parent=1 // pred_check_branch
      %33 = sbr.rel (0) target = $region33
    $region32: #{model_forward.1} parent=1 // pred_region
      _
    $region33: #{model_forward.1} parent=1 // pred_fallthru
      _
    // Predicated region
    $region34: #{model_forward.1} parent=1 // pred_check
      _
    $region35: #{model_forward.1} parent=1 // pred_check_branch
      %35 = sbr.rel (0) target = $region37
    $region36: #{model_forward.1} parent=1 // pred_region
      _
    $region37: #{model_forward.1} parent=1 // pred_fallthru
      _
    // Predicated region
    $region38: #{model_forward.1} parent=1 // pred_check
      _
    $region39: #{model_forward.1} parent=1 // pred_check_branch
      %37 = sbr.rel (0) target = $region41
    $region40: #{model_forward.1} parent=1 // pred_region
      %s39 = ssub.s32 8192, 8192
      %40 = vsyncadd [#allocation4], %s39
      %s41 = sshll.u32 [#allocation3], 4
      %s42 = int_to_ptr.vmem [resolvable:$true] %s41
      %47 = dma.hbm_to_vmem [thread:$0]  %s9, 8192, %s42, [#allocation4], 128, 128, 8
    $region41: #{model_forward.1} parent=1 // pred_fallthru
      _
    // Predicated region
    $region42: #{model_forward.1} parent=1 // pred_check
      _
    $region43: #{model_forward.1} parent=1 // pred_check_branch
      %49 = sbr.rel (0) target = $region45
    $region44: #{model_forward.1} parent=1 // pred_region
      _
    $region45: #{model_forward.1} parent=1 // pred_fallthru
      _
    // Predicated region
    $region46: #{model_forward.1} parent=1 // pred_check
      _
    $region47: #{model_forward.1} parent=1 // pred_check_branch
      %51 = sbr.rel (0) target = $region49
    $region48: #{model_forward.1} parent=1 // pred_region
      _
    $region49: #{model_forward.1} parent=1 // pred_fallthru
      _
    // Predicated region
    $region50: #{model_forward.1} parent=1 // pred_check
      _
    $region51: #{model_forward.1} parent=1 // pred_check_branch
      %53 = sbr.rel (0) target = $region53
    $region52: #{model_forward.1} parent=1 // pred_region
      %54 = dma.done [#allocation4], 8192
    $region53: #{model_forward.1} parent=1 // pred_fallthru
      _
    %v55 = vld [vmem:[%s0] sm:$0xff]
    %v56 = vld [vmem:[%s0 + $0x8] sm:$0xff]
    %v57 = vld [vmem:[%s0 + $0x10] sm:$0xff]
    %v58 = vld [vmem:[%s0 + $0x18] sm:$0xff]
    %v59 = vld [vmem:[%s0 + $0x20] sm:$0xff]
    %v60 = vld [vmem:[%s0 + $0x28] sm:$0xff]
    %v61 = vld [vmem:[%s0 + $0x30] sm:$0xff]
    %v62 = vld [vmem:[%s0 + $0x38] sm:$0xff]
    %v63 = vld [vmem:[%s0 + $0x40] sm:$0xff]
    %v64 = vld [vmem:[%s0 + $0x48] sm:$0xff]
    %v65 = vld [vmem:[%s0 + $0x50] sm:$0xff]
    %v66 = vld [vmem:[%s0 + $0x58] sm:$0xff]
    %v67 = vld [vmem:[%s0 + $0x60] sm:$0xff]
    %v68 = vld [vmem:[%s0 + $0x68] sm:$0xff]
    %v69 = vld [vmem:[%s0 + $0x70] sm:$0xff]
    %v70 = vld [vmem:[%s0 + $0x78] sm:$0xff]
    %v71 = vld [vmem:[%s0 + $0x80] sm:$0xff]
    %v72 = vld [vmem:[%s0 + $0x88] sm:$0xff]
    %v73 = vld [vmem:[%s0 + $0x90] sm:$0xff]
    %v74 = vld [vmem:[%s0 + $0x98] sm:$0xff]
    %v75 = vld [vmem:[%s0 + $0xa0] sm:$0xff]
    %v76 = vld [vmem:[%s0 + $0xa8] sm:$0xff]
    %v77 = vld [vmem:[%s0 + $0xb0] sm:$0xff]
    %v78 = vld [vmem:[%s0 + $0xb8] sm:$0xff]
    %v79 = vld [vmem:[%s0 + $0xc0] sm:$0xff]
    %v80 = vld [vmem:[%s0 + $0xc8] sm:$0xff]
    %v81 = vld [vmem:[%s0 + $0xd0] sm:$0xff]
    %v82 = vld [vmem:[%s0 + $0xd8] sm:$0xff]
    %v83 = vld [vmem:[%s0 + $0xe0] sm:$0xff]
    %v84 = vld [vmem:[%s0 + $0xe8] sm:$0xff]
    %v85 = vld [vmem:[%s0 + $0xf0] sm:$0xff]
    %v86 = vld [vmem:[%s0 + $0xf8] sm:$0xff]
    %v87 = vld [vmem:[%s0 + $0x100] sm:$0xff]
    %v88 = vld [vmem:[%s0 + $0x108] sm:$0xff]
    %v89 = vld [vmem:[%s0 + $0x110] sm:$0xff]
    %v90 = vld [vmem:[%s0 + $0x118] sm:$0xff]
    %v91 = vld [vmem:[%s0 + $0x120] sm:$0xff]
    %v92 = vld [vmem:[%s0 + $0x128] sm:$0xff]
    %v93 = vld [vmem:[%s0 + $0x130] sm:$0xff]
    %v94 = vld [vmem:[%s0 + $0x138] sm:$0xff]
    %v95 = vld [vmem:[%s0 + $0x140] sm:$0xff]
    %v96 = vld [vmem:[%s0 + $0x148] sm:$0xff]
    %v97 = vld [vmem:[%s0 + $0x150] sm:$0xff]
    %v98 = vld [vmem:[%s0 + $0x158] sm:$0xff]
    %v99 = vld [vmem:[%s0 + $0x160] sm:$0xff]
    %v100 = vld [vmem:[%s0 + $0x168] sm:$0xff]
    %v101 = vld [vmem:[%s0 + $0x170] sm:$0xff]
    %v102 = vld [vmem:[%s0 + $0x178] sm:$0xff]
    %v103 = vld [vmem:[%s0 + $0x180] sm:$0xff]
    %v104 = vld [vmem:[%s0 + $0x188] sm:$0xff]
    %v105 = vld [vmem:[%s0 + $0x190] sm:$0xff]
    %v106 = vld [vmem:[%s0 + $0x198] sm:$0xff]
    %v107 = vld [vmem:[%s0 + $0x1a0] sm:$0xff]
    %v108 = vld [vmem:[%s0 + $0x1a8] sm:$0xff]
    %v109 = vld [vmem:[%s0 + $0x1b0] sm:$0xff]
    %v110 = vld [vmem:[%s0 + $0x1b8] sm:$0xff]
    %v111 = vld [vmem:[%s0 + $0x1c0] sm:$0xff]
    %v112 = vld [vmem:[%s0 + $0x1c8] sm:$0xff]
    %v113 = vld [vmem:[%s0 + $0x1d0] sm:$0xff]
    %v114 = vld [vmem:[%s0 + $0x1d8] sm:$0xff]
    %v115 = vld [vmem:[%s0 + $0x1e0] sm:$0xff]
    %v116 = vld [vmem:[%s0 + $0x1e8] sm:$0xff]
    %v117 = vld [vmem:[%s0 + $0x1f0] sm:$0xff]
    %v118 = vld [vmem:[%s0 + $0x1f8] sm:$0xff]
    %v119 = vld [vmem:[%s1] sm:$0xff]
    %v120 = vld [vmem:[%s0 + $0x1] sm:$0xff]
    %v121 = vld [vmem:[%s0 + $0x9] sm:$0xff]
    %v122 = vld [vmem:[%s0 + $0x11] sm:$0xff]
    %v123 = vld [vmem:[%s0 + $0x19] sm:$0xff]
    %v124 = vld [vmem:[%s0 + $0x21] sm:$0xff]
    %v125 = vld [vmem:[%s0 + $0x29] sm:$0xff]
    %v126 = vld [vmem:[%s0 + $0x31] sm:$0xff]
    %v127 = vld [vmem:[%s0 + $0x39] sm:$0xff]
    %v128 = vld [vmem:[%s0 + $0x41] sm:$0xff]
    %v129 = vld [vmem:[%s0 + $0x49] sm:$0xff]
    %v130 = vld [vmem:[%s0 + $0x51] sm:$0xff]
    %v131 = vld [vmem:[%s0 + $0x59] sm:$0xff]
    %v132 = vld [vmem:[%s0 + $0x61] sm:$0xff]
    %v133 = vld [vmem:[%s0 + $0x69] sm:$0xff]
    %v134 = vld [vmem:[%s0 + $0x71] sm:$0xff]
    %v135 = vld [vmem:[%s0 + $0x79] sm:$0xff]
    %v136 = vld [vmem:[%s0 + $0x81] sm:$0xff]
    %v137 = vld [vmem:[%s0 + $0x89] sm:$0xff]
    %v138 = vld [vmem:[%s0 + $0x91] sm:$0xff]
    %v139 = vld [vmem:[%s0 + $0x99] sm:$0xff]
    %v140 = vld [vmem:[%s0 + $0xa1] sm:$0xff]
    %v141 = vld [vmem:[%s0 + $0xa9] sm:$0xff]
    %v142 = vld [vmem:[%s0 + $0xb1] sm:$0xff]
    %v143 = vld [vmem:[%s0 + $0xb9] sm:$0xff]
    %v144 = vld [vmem:[%s0 + $0xc1] sm:$0xff]
    %v145 = vld [vmem:[%s0 + $0xc9] sm:$0xff]
    %v146 = vld [vmem:[%s0 + $0xd1] sm:$0xff]
    %v147 = vld [vmem:[%s0 + $0xd9] sm:$0xff]
    %v148 = vld [vmem:[%s0 + $0xe1] sm:$0xff]
    %v149 = vld [vmem:[%s0 + $0xe9] sm:$0xff]
    %v150 = vld [vmem:[%s0 + $0xf1] sm:$0xff]
    %v151 = vld [vmem:[%s0 + $0xf9] sm:$0xff]
    %v152 = vld [vmem:[%s0 + $0x101] sm:$0xff]
    %v153 = vld [vmem:[%s0 + $0x109] sm:$0xff]
    %v154 = vld [vmem:[%s0 + $0x111] sm:$0xff]
    %v155 = vld [vmem:[%s0 + $0x119] sm:$0xff]
    %v156 = vld [vmem:[%s0 + $0x121] sm:$0xff]
    %v157 = vld [vmem:[%s0 + $0x129] sm:$0xff]
    %v158 = vld [vmem:[%s0 + $0x131] sm:$0xff]
    %v159 = vld [vmem:[%s0 + $0x139] sm:$0xff]
    %v160 = vld [vmem:[%s0 + $0x141] sm:$0xff]
    %v161 = vld [vmem:[%s0 + $0x149] sm:$0xff]
    %v162 = vld [vmem:[%s0 + $0x151] sm:$0xff]
    %v163 = vld [vmem:[%s0 + $0x159] sm:$0xff]
    %v164 = vld [vmem:[%s0 + $0x161] sm:$0xff]
    %v165 = vld [vmem:[%s0 + $0x169] sm:$0xff]
    %v166 = vld [vmem:[%s0 + $0x171] sm:$0xff]
    %v167 = vld [vmem:[%s0 + $0x179] sm:$0xff]
    %v168 = vld [vmem:[%s0 + $0x181] sm:$0xff]
    %v169 = vld [vmem:[%s0 + $0x189] sm:$0xff]
    %v170 = vld [vmem:[%s0 + $0x191] sm:$0xff]
    %v171 = vld [vmem:[%s0 + $0x199] sm:$0xff]
    %v172 = vld [vmem:[%s0 + $0x1a1] sm:$0xff]
    %v173 = vld [vmem:[%s0 + $0x1a9] sm:$0xff]
    %v174 = vld [vmem:[%s0 + $0x1b1] sm:$0xff]
    %v175 = vld [vmem:[%s0 + $0x1b9] sm:$0xff]
    %v176 = vld [vmem:[%s0 + $0x1c1] sm:$0xff]
    %v177 = vld [vmem:[%s0 + $0x1c9] sm:$0xff]
    %v178 = vld [vmem:[%s0 + $0x1d1] sm:$0xff]
    %v179 = vld [vmem:[%s0 + $0x1d9] sm:$0xff]
    %v180 = vld [vmem:[%s0 + $0x1e1] sm:$0xff]
    %v181 = vld [vmem:[%s0 + $0x1e9] sm:$0xff]
    %v182 = vld [vmem:[%s0 + $0x1f1] sm:$0xff]
    %v183 = vld [vmem:[%s0 + $0x1f9] sm:$0xff]
    %s184 = scalar_lea.vmem %s1, 8
    %v185 = vld [vmem:[%s184] sm:$0xff]
    %vm186 = vcmask 64512
    %v188 = vsel %vm186, %v120, 0
    %v191 = vsel %vm186, %v121, 0
    %v194 = vsel %vm186, %v122, 0
    %v197 = vsel %vm186, %v123, 0
    %v200 = vsel %vm186, %v124, 0
    %v203 = vsel %vm186, %v125, 0
    %v206 = vsel %vm186, %v126, 0
    %v209 = vsel %vm186, %v127, 0
    %v212 = vsel %vm186, %v128, 0
    %v215 = vsel %vm186, %v129, 0
    %v218 = vsel %vm186, %v130, 0
    %v221 = vsel %vm186, %v131, 0
    %v224 = vsel %vm186, %v132, 0
    %v227 = vsel %vm186, %v133, 0
    %v230 = vsel %vm186, %v134, 0
    %v233 = vsel %vm186, %v135, 0
    %v236 = vsel %vm186, %v136, 0
    %v239 = vsel %vm186, %v137, 0
    %v242 = vsel %vm186, %v138, 0
    %v245 = vsel %vm186, %v139, 0
    %v248 = vsel %vm186, %v140, 0
    %v251 = vsel %vm186, %v141, 0
    %v254 = vsel %vm186, %v142, 0
    %v257 = vsel %vm186, %v143, 0
    %v260 = vsel %vm186, %v144, 0
    %v263 = vsel %vm186, %v145, 0
    %v266 = vsel %vm186, %v146, 0
    %v269 = vsel %vm186, %v147, 0
    %v272 = vsel %vm186, %v148, 0
    %v275 = vsel %vm186, %v149, 0
    %v278 = vsel %vm186, %v150, 0
    %v281 = vsel %vm186, %v151, 0
    %v284 = vsel %vm186, %v152, 0
    %v287 = vsel %vm186, %v153, 0
    %v290 = vsel %vm186, %v154, 0
    %v293 = vsel %vm186, %v155, 0
    %v296 = vsel %vm186, %v156, 0
    %v299 = vsel %vm186, %v157, 0
    %v302 = vsel %vm186, %v158, 0
    %v305 = vsel %vm186, %v159, 0
    %v308 = vsel %vm186, %v160, 0
    %v311 = vsel %vm186, %v161, 0
    %v314 = vsel %vm186, %v162, 0
    %v317 = vsel %vm186, %v163, 0
    %v320 = vsel %vm186, %v164, 0
    %v323 = vsel %vm186, %v165, 0
    %v326 = vsel %vm186, %v166, 0
    %v329 = vsel %vm186, %v167, 0
    %v332 = vsel %vm186, %v168, 0
    %v335 = vsel %vm186, %v169, 0
    %v338 = vsel %vm186, %v170, 0
    %v341 = vsel %vm186, %v171, 0
    %v344 = vsel %vm186, %v172, 0
    %v347 = vsel %vm186, %v173, 0
    %v350 = vsel %vm186, %v174, 0
    %v353 = vsel %vm186, %v175, 0
    %v356 = vsel %vm186, %v176, 0
    %v359 = vsel %vm186, %v177, 0
    %v362 = vsel %vm186, %v178, 0
    %v365 = vsel %vm186, %v179, 0
    %v368 = vsel %vm186, %v180, 0
    %v371 = vsel %vm186, %v181, 0
    %v374 = vsel %vm186, %v182, 0
    %v377 = vsel %vm186, %v183, 0
    %379 = vmatprep.subr.mxu0 0.0
    %380 = vmatpush1.msra.mxu0 %v185
    %381 = vmatprep.subr.mxu0 0.0
    %382 = vmatpush1.msra.mxu0 0.0
    %383 = vmatprep.subr.mxu0 0.0
    %384 = vmatpush1.msra.mxu0 0.0
    %385 = vmatprep.subr.mxu0 0.0
    %386 = vmatpush1.msra.mxu0 0.0
    %387 = vmatprep.subr.mxu0 0.0
    %388 = vmatpush1.msra.mxu0 0.0
    %389 = vmatprep.subr.mxu0 0.0
    %390 = vmatpush1.msra.mxu0 0.0
    %391 = vmatprep.subr.mxu0 0.0
    %392 = vmatpush1.msra.mxu0 0.0
    %393 = vmatprep.subr.mxu0 0.0
    %394 = vmatpush1.msra.mxu0 0.0
    %395 = vmatprep.subr.mxu0 0.0
    %396 = vmatpush1.msra.mxu0 0.0
    %397 = vmatprep.subr.mxu0 0.0
    %398 = vmatpush1.msra.mxu0 0.0
    %399 = vmatprep.subr.mxu0 0.0
    %400 = vmatpush1.msra.mxu0 0.0
    %401 = vmatprep.subr.mxu0 0.0
    %402 = vmatpush1.msra.mxu0 0.0
    %403 = vmatprep.subr.mxu0 0.0
    %404 = vmatpush1.msra.mxu0 0.0
    %405 = vmatprep.subr.mxu0 0.0
    %406 = vmatpush1.msra.mxu0 0.0
    %407 = vmatprep.subr.mxu0 0.0
    %408 = vmatpush1.msra.mxu0 0.0
    %409 = vmatprep.subr.mxu0 0.0
    %410 = vmatpush1.msra.mxu0 0.0
    %411 = vmatprep.subr.mxu0 0.0
    %412 = vmatpush1.msra.mxu0 0.0
    %413 = vmatprep.subr.mxu0 0.0
    %414 = vmatpush1.msra.mxu0 0.0
    %415 = vmatprep.subr.mxu0 0.0
    %416 = vmatpush1.msra.mxu0 0.0
    %417 = vmatprep.subr.mxu0 0.0
    %418 = vmatpush1.msra.mxu0 0.0
    %419 = vmatprep.subr.mxu0 0.0
    %420 = vmatpush1.msra.mxu0 0.0
    %421 = vmatprep.subr.mxu0 0.0
    %422 = vmatpush1.msra.mxu0 0.0
    %423 = vmatprep.subr.mxu0 0.0
    %424 = vmatpush1.msra.mxu0 0.0
    %425 = vmatprep.subr.mxu0 0.0
    %426 = vmatpush1.msra.mxu0 0.0
    %427 = vmatprep.subr.mxu0 0.0
    %428 = vmatpush1.msra.mxu0 0.0
    %429 = vmatprep.subr.mxu0 0.0
    %430 = vmatpush1.msra.mxu0 0.0
    %431 = vmatprep.subr.mxu0 0.0
    %432 = vmatpush1.msra.mxu0 0.0
    %433 = vmatprep.subr.mxu0 0.0
    %434 = vmatpush1.msra.mxu0 0.0
    %435 = vmatprep.subr.mxu0 0.0
    %436 = vmatpush1.msra.mxu0 0.0
    %437 = vmatprep.subr.mxu0 0.0
    %438 = vmatpush1.msra.mxu0 0.0
    %439 = vmatprep.subr.mxu0 0.0
    %440 = vmatpush1.msra.mxu0 0.0
    %441 = vmatprep.subr.mxu0 0.0
    %442 = vmatpush1.msra.mxu0 0.0
    %443 = vmatprep.mubr.f32.mxu0 0.0
    %444 = vmatmul.mubr.f32.gmra.mrb[0].mxu0 %v188
    %v445 = vpop.f32.mrb[0].mxu0
    %v446 = vadd.f32 0.0, %v445
    %v447 = vpop.f32.mrb[0].mxu0
    %448 = vmatprep.mubr.f32.mxu0 0.0
    %449 = vmatmul.mubr.f32.gmra.mrb[0].mxu0 %v191
    %v450 = vpop.f32.mrb[0].mxu0
    %v451 = vadd.f32 0.0, %v450
    %v452 = vpop.f32.mrb[0].mxu0
    %453 = vmatprep.mubr.f32.mxu0 0.0
    %454 = vmatmul.mubr.f32.gmra.mrb[0].mxu0 %v194
    %v455 = vpop.f32.mrb[0].mxu0
    %v456 = vadd.f32 0.0, %v455
    %v457 = vpop.f32.mrb[0].mxu0
    %458 = vmatprep.mubr.f32.mxu0 0.0
    %459 = vmatmul.mubr.f32.gmra.mrb[0].mxu0 %v197
    %v460 = vpop.f32.mrb[0].mxu0
    %v461 = vadd.f32 0.0, %v460
    %v462 = vpop.f32.mrb[0].mxu0
    %463 = vmatprep.mubr.f32.mxu0 0.0
    %464 = vmatmul.mubr.f32.gmra.mrb[0].mxu0 %v200
    %v465 = vpop.f32.mrb[0].mxu0
    %v466 = vadd.f32 0.0, %v465
    %v467 = vpop.f32.mrb[0].mxu0
    %468 = vmatprep.mubr.f32.mxu0 0.0
    %469 = vmatmul.mubr.f32.gmra.mrb[0].mxu0 %v203
    %v470 = vpop.f32.mrb[0].mxu0
    %v471 = vadd.f32 0.0, %v470
    %v472 = vpop.f32.mrb[0].mxu0
    %473 = vmatprep.mubr.f32.mxu0 0.0
    %474 = vmatmul.mubr.f32.gmra.mrb[0].mxu0 %v206
    %v475 = vpop.f32.mrb[0].mxu0
    %v476 = vadd.f32 0.0, %v475
    %v477 = vpop.f32.mrb[0].mxu0
    %478 = vmatprep.mubr.f32.mxu0 0.0
    %479 = vmatmul.mubr.f32.gmra.mrb[0].mxu0 %v209
    %v480 = vpop.f32.mrb[0].mxu0
    %v481 = vadd.f32 0.0, %v480
    %v482 = vpop.f32.mrb[0].mxu0
    %483 = vmatprep.mubr.f32.mxu0 0.0
    %484 = vmatmul.mubr.f32.gmra.mrb[0].mxu0 %v212
    %v485 = vpop.f32.mrb[0].mxu0
    %v486 = vadd.f32 0.0, %v485
    %v487 = vpop.f32.mrb[0].mxu0
    %488 = vmatprep.mubr.f32.mxu0 0.0
    %489 = vmatmul.mubr.f32.gmra.mrb[0].mxu0 %v215
    %v490 = vpop.f32.mrb[0].mxu0
    %v491 = vadd.f32 0.0, %v490
    %v492 = vpop.f32.mrb[0].mxu0
    %493 = vmatprep.mubr.f32.mxu0 0.0
    %494 = vmatmul.mubr.f32.gmra.mrb[0].mxu0 %v218
    %v495 = vpop.f32.mrb[0].mxu0
    %v496 = vadd.f32 0.0, %v495
    %v497 = vpop.f32.mrb[0].mxu0
    %498 = vmatprep.mubr.f32.mxu0 0.0
    %499 = vmatmul.mubr.f32.gmra.mrb[0].mxu0 %v221
    %v500 = vpop.f32.mrb[0].mxu0
    %v501 = vadd.f32 0.0, %v500
    %v502 = vpop.f32.mrb[0].mxu0
    %503 = vmatprep.mubr.f32.mxu0 0.0
    %504 = vmatmul.mubr.f32.gmra.mrb[0].mxu0 %v224
    %v505 = vpop.f32.mrb[0].mxu0
    %v506 = vadd.f32 0.0, %v505
    %v507 = vpop.f32.mrb[0].mxu0
    %508 = vmatprep.mubr.f32.mxu0 0.0
    %509 = vmatmul.mubr.f32.gmra.mrb[0].mxu0 %v227
    %v510 = vpop.f32.mrb[0].mxu0
    %v511 = vadd.f32 0.0, %v510
    %v512 = vpop.f32.mrb[0].mxu0
    %513 = vmatprep.mubr.f32.mxu0 0.0
    %514 = vmatmul.mubr.f32.gmra.mrb[0].mxu0 %v230
    %v515 = vpop.f32.mrb[0].mxu0
    %v516 = vadd.f32 0.0, %v515
    %v517 = vpop.f32.mrb[0].mxu0
    %518 = vmatprep.mubr.f32.mxu0 0.0
    %519 = vmatmul.mubr.f32.gmra.mrb[0].mxu0 %v233
    %v520 = vpop.f32.mrb[0].mxu0
    %v521 = vadd.f32 0.0, %v520
    %v522 = vpop.f32.mrb[0].mxu0
    %523 = vmatprep.mubr.f32.mxu0 0.0
    %524 = vmatmul.mubr.f32.gmra.mrb[0].mxu0 %v236
    %v525 = vpop.f32.mrb[0].mxu0
    %v526 = vadd.f32 0.0, %v525
    %v527 = vpop.f32.mrb[0].mxu0
    %528 = vmatprep.mubr.f32.mxu0 0.0
    %529 = vmatmul.mubr.f32.gmra.mrb[0].mxu0 %v239
    %v530 = vpop.f32.mrb[0].mxu0
    %v531 = vadd.f32 0.0, %v530
    %v532 = vpop.f32.mrb[0].mxu0
    %533 = vmatprep.mubr.f32.mxu0 0.0
    %534 = vmatmul.mubr.f32.gmra.mrb[0].mxu0 %v242
    %v535 = vpop.f32.mrb[0].mxu0
    %v536 = vadd.f32 0.0, %v535
    %v537 = vpop.f32.mrb[0].mxu0
    %538 = vmatprep.mubr.f32.mxu0 0.0
    %539 = vmatmul.mubr.f32.gmra.mrb[0].mxu0 %v245
    %v540 = vpop.f32.mrb[0].mxu0
    %v541 = vadd.f32 0.0, %v540
    %v542 = vpop.f32.mrb[0].mxu0
    %543 = vmatprep.mubr.f32.mxu0 0.0
    %544 = vmatmul.mubr.f32.gmra.mrb[0].mxu0 %v248
    %v545 = vpop.f32.mrb[0].mxu0
    %v546 = vadd.f32 0.0, %v545
    %v547 = vpop.f32.mrb[0].mxu0
    %548 = vmatprep.mubr.f32.mxu0 0.0
    %549 = vmatmul.mubr.f32.gmra.mrb[0].mxu0 %v251
    %v550 = vpop.f32.mrb[0].mxu0
    %v551 = vadd.f32 0.0, %v550
    %v552 = vpop.f32.mrb[0].mxu0
    %553 = vmatprep.mubr.f32.mxu0 0.0
    %554 = vmatmul.mubr.f32.gmra.mrb[0].mxu0 %v254
    %v555 = vpop.f32.mrb[0].mxu0
    %v556 = vadd.f32 0.0, %v555
    %v557 = vpop.f32.mrb[0].mxu0
    %558 = vmatprep.mubr.f32.mxu0 0.0
    %559 = vmatmul.mubr.f32.gmra.mrb[0].mxu0 %v257
    %v560 = vpop.f32.mrb[0].mxu0
    %v561 = vadd.f32 0.0, %v560
    %v562 = vpop.f32.mrb[0].mxu0
    %563 = vmatprep.mubr.f32.mxu0 0.0
    %564 = vmatmul.mubr.f32.gmra.mrb[0].mxu0 %v260
    %v565 = vpop.f32.mrb[0].mxu0
    %v566 = vadd.f32 0.0, %v565
    %v567 = vpop.f32.mrb[0].mxu0
    %568 = vmatprep.mubr.f32.mxu0 0.0
    %569 = vmatmul.mubr.f32.gmra.mrb[0].mxu0 %v263
    %v570 = vpop.f32.mrb[0].mxu0
    %v571 = vadd.f32 0.0, %v570
    %v572 = vpop.f32.mrb[0].mxu0
    %573 = vmatprep.mubr.f32.mxu0 0.0
    %574 = vmatmul.mubr.f32.gmra.mrb[0].mxu0 %v266
    %v575 = vpop.f32.mrb[0].mxu0
    %v576 = vadd.f32 0.0, %v575
    %v577 = vpop.f32.mrb[0].mxu0
    %578 = vmatprep.mubr.f32.mxu0 0.0
    %579 = vmatmul.mubr.f32.gmra.mrb[0].mxu0 %v269
    %v580 = vpop.f32.mrb[0].mxu0
    %v581 = vadd.f32 0.0, %v580
    %v582 = vpop.f32.mrb[0].mxu0
    %583 = vmatprep.mubr.f32.mxu0 0.0
    %584 = vmatmul.mubr.f32.gmra.mrb[0].mxu0 %v272
    %v585 = vpop.f32.mrb[0].mxu0
    %v586 = vadd.f32 0.0, %v585
    %v587 = vpop.f32.mrb[0].mxu0
    %588 = vmatprep.mubr.f32.mxu0 0.0
    %589 = vmatmul.mubr.f32.gmra.mrb[0].mxu0 %v275
    %v590 = vpop.f32.mrb[0].mxu0
    %v591 = vadd.f32 0.0, %v590
    %v592 = vpop.f32.mrb[0].mxu0
    %593 = vmatprep.mubr.f32.mxu0 0.0
    %594 = vmatmul.mubr.f32.gmra.mrb[0].mxu0 %v278
    %v595 = vpop.f32.mrb[0].mxu0
    %v596 = vadd.f32 0.0, %v595
    %v597 = vpop.f32.mrb[0].mxu0
    %598 = vmatprep.mubr.f32.mxu0 0.0
    %599 = vmatmul.mubr.f32.gmra.mrb[0].mxu0 %v281
    %v600 = vpop.f32.mrb[0].mxu0
    %v601 = vadd.f32 0.0, %v600
    %v602 = vpop.f32.mrb[0].mxu0
    %603 = vmatprep.mubr.f32.mxu0 0.0
    %604 = vmatmul.mubr.f32.gmra.mrb[0].mxu0 %v284
    %v605 = vpop.f32.mrb[0].mxu0
    %v606 = vadd.f32 0.0, %v605
    %v607 = vpop.f32.mrb[0].mxu0
    %608 = vmatprep.mubr.f32.mxu0 0.0
    %609 = vmatmul.mubr.f32.gmra.mrb[0].mxu0 %v287
    %v610 = vpop.f32.mrb[0].mxu0
    %v611 = vadd.f32 0.0, %v610
    %v612 = vpop.f32.mrb[0].mxu0
    %613 = vmatprep.mubr.f32.mxu0 0.0
    %614 = vmatmul.mubr.f32.gmra.mrb[0].mxu0 %v290
    %v615 = vpop.f32.mrb[0].mxu0
    %v616 = vadd.f32 0.0, %v615
    %v617 = vpop.f32.mrb[0].mxu0
    %618 = vmatprep.mubr.f32.mxu0 0.0
    %619 = vmatmul.mubr.f32.gmra.mrb[0].mxu0 %v293
    %v620 = vpop.f32.mrb[0].mxu0
    %v621 = vadd.f32 0.0, %v620
    %v622 = vpop.f32.mrb[0].mxu0
    %623 = vmatprep.mubr.f32.mxu0 0.0
    %624 = vmatmul.mubr.f32.gmra.mrb[0].mxu0 %v296
    %v625 = vpop.f32.mrb[0].mxu0
    %v626 = vadd.f32 0.0, %v625
    %v627 = vpop.f32.mrb[0].mxu0
    %628 = vmatprep.mubr.f32.mxu0 0.0
    %629 = vmatmul.mubr.f32.gmra.mrb[0].mxu0 %v299
    %v630 = vpop.f32.mrb[0].mxu0
    %v631 = vadd.f32 0.0, %v630
    %v632 = vpop.f32.mrb[0].mxu0
    %633 = vmatprep.mubr.f32.mxu0 0.0
    %634 = vmatmul.mubr.f32.gmra.mrb[0].mxu0 %v302
    %v635 = vpop.f32.mrb[0].mxu0
    %v636 = vadd.f32 0.0, %v635
    %v637 = vpop.f32.mrb[0].mxu0
    %638 = vmatprep.mubr.f32.mxu0 0.0
    %639 = vmatmul.mubr.f32.gmra.mrb[0].mxu0 %v305
    %v640 = vpop.f32.mrb[0].mxu0
    %v641 = vadd.f32 0.0, %v640
    %v642 = vpop.f32.mrb[0].mxu0
    %643 = vmatprep.mubr.f32.mxu0 0.0
    %644 = vmatmul.mubr.f32.gmra.mrb[0].mxu0 %v308
    %v645 = vpop.f32.mrb[0].mxu0
    %v646 = vadd.f32 0.0, %v645
    %v647 = vpop.f32.mrb[0].mxu0
    %648 = vmatprep.mubr.f32.mxu0 0.0
    %649 = vmatmul.mubr.f32.gmra.mrb[0].mxu0 %v311
    %v650 = vpop.f32.mrb[0].mxu0
    %v651 = vadd.f32 0.0, %v650
    %v652 = vpop.f32.mrb[0].mxu0
    %653 = vmatprep.mubr.f32.mxu0 0.0
    %654 = vmatmul.mubr.f32.gmra.mrb[0].mxu0 %v314
    %v655 = vpop.f32.mrb[0].mxu0
    %v656 = vadd.f32 0.0, %v655
    %v657 = vpop.f32.mrb[0].mxu0
    %658 = vmatprep.mubr.f32.mxu0 0.0
    %659 = vmatmul.mubr.f32.gmra.mrb[0].mxu0 %v317
    %v660 = vpop.f32.mrb[0].mxu0
    %v661 = vadd.f32 0.0, %v660
    %v662 = vpop.f32.mrb[0].mxu0
    %663 = vmatprep.mubr.f32.mxu0 0.0
    %664 = vmatmul.mubr.f32.gmra.mrb[0].mxu0 %v320
    %v665 = vpop.f32.mrb[0].mxu0
    %v666 = vadd.f32 0.0, %v665
    %v667 = vpop.f32.mrb[0].mxu0
    %668 = vmatprep.mubr.f32.mxu0 0.0
    %669 = vmatmul.mubr.f32.gmra.mrb[0].mxu0 %v323
    %v670 = vpop.f32.mrb[0].mxu0
    %v671 = vadd.f32 0.0, %v670
    %v672 = vpop.f32.mrb[0].mxu0
    %673 = vmatprep.mubr.f32.mxu0 0.0
    %674 = vmatmul.mubr.f32.gmra.mrb[0].mxu0 %v326
    %v675 = vpop.f32.mrb[0].mxu0
    %v676 = vadd.f32 0.0, %v675
    %v677 = vpop.f32.mrb[0].mxu0
    %678 = vmatprep.mubr.f32.mxu0 0.0
    %679 = vmatmul.mubr.f32.gmra.mrb[0].mxu0 %v329
    %v680 = vpop.f32.mrb[0].mxu0
    %v681 = vadd.f32 0.0, %v680
    %v682 = vpop.f32.mrb[0].mxu0
    %683 = vmatprep.mubr.f32.mxu0 0.0
    %684 = vmatmul.mubr.f32.gmra.mrb[0].mxu0 %v332
    %v685 = vpop.f32.mrb[0].mxu0
    %v686 = vadd.f32 0.0, %v685
    %v687 = vpop.f32.mrb[0].mxu0
    %688 = vmatprep.mubr.f32.mxu0 0.0
    %689 = vmatmul.mubr.f32.gmra.mrb[0].mxu0 %v335
    %v690 = vpop.f32.mrb[0].mxu0
    %v691 = vadd.f32 0.0, %v690
    %v692 = vpop.f32.mrb[0].mxu0
    %693 = vmatprep.mubr.f32.mxu0 0.0
    %694 = vmatmul.mubr.f32.gmra.mrb[0].mxu0 %v338
    %v695 = vpop.f32.mrb[0].mxu0
    %v696 = vadd.f32 0.0, %v695
    %v697 = vpop.f32.mrb[0].mxu0
    %698 = vmatprep.mubr.f32.mxu0 0.0
    %699 = vmatmul.mubr.f32.gmra.mrb[0].mxu0 %v341
    %v700 = vpop.f32.mrb[0].mxu0
    %v701 = vadd.f32 0.0, %v700
    %v702 = vpop.f32.mrb[0].mxu0
    %703 = vmatprep.mubr.f32.mxu0 0.0
    %704 = vmatmul.mubr.f32.gmra.mrb[0].mxu0 %v344
    %v705 = vpop.f32.mrb[0].mxu0
    %v706 = vadd.f32 0.0, %v705
    %v707 = vpop.f32.mrb[0].mxu0
    %708 = vmatprep.mubr.f32.mxu0 0.0
    %709 = vmatmul.mubr.f32.gmra.mrb[0].mxu0 %v347
    %v710 = vpop.f32.mrb[0].mxu0
    %v711 = vadd.f32 0.0, %v710
    %v712 = vpop.f32.mrb[0].mxu0
    %713 = vmatprep.mubr.f32.mxu0 0.0
    %714 = vmatmul.mubr.f32.gmra.mrb[0].mxu0 %v350
    %v715 = vpop.f32.mrb[0].mxu0
    %v716 = vadd.f32 0.0, %v715
    %v717 = vpop.f32.mrb[0].mxu0
    %718 = vmatprep.mubr.f32.mxu0 0.0
    %719 = vmatmul.mubr.f32.gmra.mrb[0].mxu0 %v353
    %v720 = vpop.f32.mrb[0].mxu0
    %v721 = vadd.f32 0.0, %v720
    %v722 = vpop.f32.mrb[0].mxu0
    %723 = vmatprep.mubr.f32.mxu0 0.0
    %724 = vmatmul.mubr.f32.gmra.mrb[0].mxu0 %v356
    %v725 = vpop.f32.mrb[0].mxu0
    %v726 = vadd.f32 0.0, %v725
    %v727 = vpop.f32.mrb[0].mxu0
    %728 = vmatprep.mubr.f32.mxu0 0.0
    %729 = vmatmul.mubr.f32.gmra.mrb[0].mxu0 %v359
    %v730 = vpop.f32.mrb[0].mxu0
    %v731 = vadd.f32 0.0, %v730
    %v732 = vpop.f32.mrb[0].mxu0
    %733 = vmatprep.mubr.f32.mxu0 0.0
    %734 = vmatmul.mubr.f32.gmra.mrb[0].mxu0 %v362
    %v735 = vpop.f32.mrb[0].mxu0
    %v736 = vadd.f32 0.0, %v735
    %v737 = vpop.f32.mrb[0].mxu0
    %738 = vmatprep.mubr.f32.mxu0 0.0
    %739 = vmatmul.mubr.f32.gmra.mrb[0].mxu0 %v365
    %v740 = vpop.f32.mrb[0].mxu0
    %v741 = vadd.f32 0.0, %v740
    %v742 = vpop.f32.mrb[0].mxu0
    %743 = vmatprep.mubr.f32.mxu0 0.0
    %744 = vmatmul.mubr.f32.gmra.mrb[0].mxu0 %v368
    %v745 = vpop.f32.mrb[0].mxu0
    %v746 = vadd.f32 0.0, %v745
    %v747 = vpop.f32.mrb[0].mxu0
    %748 = vmatprep.mubr.f32.mxu0 0.0
    %749 = vmatmul.mubr.f32.gmra.mrb[0].mxu0 %v371
    %v750 = vpop.f32.mrb[0].mxu0
    %v751 = vadd.f32 0.0, %v750
    %v752 = vpop.f32.mrb[0].mxu0
    %753 = vmatprep.mubr.f32.mxu0 0.0
    %754 = vmatmul.mubr.f32.gmra.mrb[0].mxu0 %v374
    %v755 = vpop.f32.mrb[0].mxu0
    %v756 = vadd.f32 0.0, %v755
    %v757 = vpop.f32.mrb[0].mxu0
    %758 = vmatprep.mubr.f32.mxu0 0.0
    %759 = vmatmul.mubr.f32.gmra.mrb[0].mxu0 %v377
    %v760 = vpop.f32.mrb[0].mxu0
    %v761 = vadd.f32 0.0, %v760
    %v762 = vpop.f32.mrb[0].mxu0
    %763 = vdwg.mxu0
    %v765 = vsel %vm186, %v55, 0
    %v768 = vsel %vm186, %v56, 0
    %v771 = vsel %vm186, %v57, 0
    %v774 = vsel %vm186, %v58, 0
    %v777 = vsel %vm186, %v59, 0
    %v780 = vsel %vm186, %v60, 0
    %v783 = vsel %vm186, %v61, 0
    %v786 = vsel %vm186, %v62, 0
    %v789 = vsel %vm186, %v63, 0
    %v792 = vsel %vm186, %v64, 0
    %v795 = vsel %vm186, %v65, 0
    %v798 = vsel %vm186, %v66, 0
    %v801 = vsel %vm186, %v67, 0
    %v804 = vsel %vm186, %v68, 0
    %v807 = vsel %vm186, %v69, 0
    %v810 = vsel %vm186, %v70, 0
    %v813 = vsel %vm186, %v71, 0
    %v816 = vsel %vm186, %v72, 0
    %v819 = vsel %vm186, %v73, 0
    %v822 = vsel %vm186, %v74, 0
    %v825 = vsel %vm186, %v75, 0
    %v828 = vsel %vm186, %v76, 0
    %v831 = vsel %vm186, %v77, 0
    %v834 = vsel %vm186, %v78, 0
    %v837 = vsel %vm186, %v79, 0
    %v840 = vsel %vm186, %v80, 0
    %v843 = vsel %vm186, %v81, 0
    %v846 = vsel %vm186, %v82, 0
    %v849 = vsel %vm186, %v83, 0
    %v852 = vsel %vm186, %v84, 0
    %v855 = vsel %vm186, %v85, 0
    %v858 = vsel %vm186, %v86, 0
    %v861 = vsel %vm186, %v87, 0
    %v864 = vsel %vm186, %v88, 0
    %v867 = vsel %vm186, %v89, 0
    %v870 = vsel %vm186, %v90, 0
    %v873 = vsel %vm186, %v91, 0
    %v876 = vsel %vm186, %v92, 0
    %v879 = vsel %vm186, %v93, 0
    %v882 = vsel %vm186, %v94, 0
    %v885 = vsel %vm186, %v95, 0
    %v888 = vsel %vm186, %v96, 0
    %v891 = vsel %vm186, %v97, 0
    %v894 = vsel %vm186, %v98, 0
    %v897 = vsel %vm186, %v99, 0
    %v900 = vsel %vm186, %v100, 0
    %v903 = vsel %vm186, %v101, 0
    %v906 = vsel %vm186, %v102, 0
    %v909 = vsel %vm186, %v103, 0
    %v912 = vsel %vm186, %v104, 0
    %v915 = vsel %vm186, %v105, 0
    %v918 = vsel %vm186, %v106, 0
    %v921 = vsel %vm186, %v107, 0
    %v924 = vsel %vm186, %v108, 0
    %v927 = vsel %vm186, %v109, 0
    %v930 = vsel %vm186, %v110, 0
    %v933 = vsel %vm186, %v111, 0
    %v936 = vsel %vm186, %v112, 0
    %v939 = vsel %vm186, %v113, 0
    %v942 = vsel %vm186, %v114, 0
    %v945 = vsel %vm186, %v115, 0
    %v948 = vsel %vm186, %v116, 0
    %v951 = vsel %vm186, %v117, 0
    %v954 = vsel %vm186, %v118, 0
    %956 = vmatprep.subr.mxu0 0.0
    %957 = vmatpush1.msra.mxu0 %v119
    %958 = vmatprep.subr.mxu0 0.0
    %959 = vmatpush1.msra.mxu0 0.0
    %960 = vmatprep.subr.mxu0 0.0
    %961 = vmatpush1.msra.mxu0 0.0
    %962 = vmatprep.subr.mxu0 0.0
    %963 = vmatpush1.msra.mxu0 0.0
    %964 = vmatprep.subr.mxu0 0.0
    %965 = vmatpush1.msra.mxu0 0.0
    %966 = vmatprep.subr.mxu0 0.0
    %967 = vmatpush1.msra.mxu0 0.0
    %968 = vmatprep.subr.mxu0 0.0
    %969 = vmatpush1.msra.mxu0 0.0
    %970 = vmatprep.subr.mxu0 0.0
    %971 = vmatpush1.msra.mxu0 0.0
    %972 = vmatprep.subr.mxu0 0.0
    %973 = vmatpush1.msra.mxu0 0.0
    %974 = vmatprep.subr.mxu0 0.0
    %975 = vmatpush1.msra.mxu0 0.0
    %976 = vmatprep.subr.mxu0 0.0
    %977 = vmatpush1.msra.mxu0 0.0
    %978 = vmatprep.subr.mxu0 0.0
    %979 = vmatpush1.msra.mxu0 0.0
    %980 = vmatprep.subr.mxu0 0.0
    %981 = vmatpush1.msra.mxu0 0.0
    %982 = vmatprep.subr.mxu0 0.0
    %983 = vmatpush1.msra.mxu0 0.0
    %984 = vmatprep.subr.mxu0 0.0
    %985 = vmatpush1.msra.mxu0 0.0
    %986 = vmatprep.subr.mxu0 0.0
    %987 = vmatpush1.msra.mxu0 0.0
    %988 = vmatprep.subr.mxu0 0.0
    %989 = vmatpush1.msra.mxu0 0.0
    %990 = vmatprep.subr.mxu0 0.0
    %991 = vmatpush1.msra.mxu0 0.0
    %992 = vmatprep.subr.mxu0 0.0
    %993 = vmatpush1.msra.mxu0 0.0
    %994 = vmatprep.subr.mxu0 0.0
    %995 = vmatpush1.msra.mxu0 0.0
    %996 = vmatprep.subr.mxu0 0.0
    %997 = vmatpush1.msra.mxu0 0.0
    %998 = vmatprep.subr.mxu0 0.0
    %999 = vmatpush1.msra.mxu0 0.0
    %1000 = vmatprep.subr.mxu0 0.0
    %1001 = vmatpush1.msra.mxu0 0.0
    %1002 = vmatprep.subr.mxu0 0.0
    %1003 = vmatpush1.msra.mxu0 0.0
    %1004 = vmatprep.subr.mxu0 0.0
    %1005 = vmatpush1.msra.mxu0 0.0
    %1006 = vmatprep.subr.mxu0 0.0
    %1007 = vmatpush1.msra.mxu0 0.0
    %1008 = vmatprep.subr.mxu0 0.0
    %1009 = vmatpush1.msra.mxu0 0.0
    %1010 = vmatprep.subr.mxu0 0.0
    %1011 = vmatpush1.msra.mxu0 0.0
    %1012 = vmatprep.subr.mxu0 0.0
    %1013 = vmatpush1.msra.mxu0 0.0
    %1014 = vmatprep.subr.mxu0 0.0
    %1015 = vmatpush1.msra.mxu0 0.0
    %1016 = vmatprep.subr.mxu0 0.0
    %1017 = vmatpush1.msra.mxu0 0.0
    %1018 = vmatprep.subr.mxu0 0.0
    %1019 = vmatpush1.msra.mxu0 0.0
    %1020 = vmatprep.mubr.f32.mxu0 0.0
    %1021 = vmatmul.mubr.f32.gmra.mrb[0].mxu0 %v765
    %v1022 = vpop.f32.mrb[0].mxu0
    %v1023 = vadd.f32 %v446, %v1022
    %v1024 = vpop.f32.mrb[0].mxu0
    %1025 = vmatprep.mubr.f32.mxu0 0.0
    %1026 = vmatmul.mubr.f32.gmra.mrb[0].mxu0 %v768
    %v1027 = vpop.f32.mrb[0].mxu0
    %v1028 = vadd.f32 %v451, %v1027
    %v1029 = vpop.f32.mrb[0].mxu0
    %1030 = vmatprep.mubr.f32.mxu0 0.0
    %1031 = vmatmul.mubr.f32.gmra.mrb[0].mxu0 %v771
    %v1032 = vpop.f32.mrb[0].mxu0
    %v1033 = vadd.f32 %v456, %v1032
    %v1034 = vpop.f32.mrb[0].mxu0
    %1035 = vmatprep.mubr.f32.mxu0 0.0
    %1036 = vmatmul.mubr.f32.gmra.mrb[0].mxu0 %v774
    %v1037 = vpop.f32.mrb[0].mxu0
    %v1038 = vadd.f32 %v461, %v1037
    %v1039 = vpop.f32.mrb[0].mxu0
    %1040 = vmatprep.mubr.f32.mxu0 0.0
    %1041 = vmatmul.mubr.f32.gmra.mrb[0].mxu0 %v777
    %v1042 = vpop.f32.mrb[0].mxu0
    %v1043 = vadd.f32 %v466, %v1042
    %v1044 = vpop.f32.mrb[0].mxu0
    %1045 = vmatprep.mubr.f32.mxu0 0.0
    %1046 = vmatmul.mubr.f32.gmra.mrb[0].mxu0 %v780
    %v1047 = vpop.f32.mrb[0].mxu0
    %v1048 = vadd.f32 %v471, %v1047
    %v1049 = vpop.f32.mrb[0].mxu0
    %1050 = vmatprep.mubr.f32.mxu0 0.0
    %1051 = vmatmul.mubr.f32.gmra.mrb[0].mxu0 %v783
    %v1052 = vpop.f32.mrb[0].mxu0
    %v1053 = vadd.f32 %v476, %v1052
    %v1054 = vpop.f32.mrb[0].mxu0
    %1055 = vmatprep.mubr.f32.mxu0 0.0
    %1056 = vmatmul.mubr.f32.gmra.mrb[0].mxu0 %v786
    %v1057 = vpop.f32.mrb[0].mxu0
    %v1058 = vadd.f32 %v481, %v1057
    %v1059 = vpop.f32.mrb[0].mxu0
    %1060 = vmatprep.mubr.f32.mxu0 0.0
    %1061 = vmatmul.mubr.f32.gmra.mrb[0].mxu0 %v789
    %v1062 = vpop.f32.mrb[0].mxu0
    %v1063 = vadd.f32 %v486, %v1062
    %v1064 = vpop.f32.mrb[0].mxu0
    %1065 = vmatprep.mubr.f32.mxu0 0.0
    %1066 = vmatmul.mubr.f32.gmra.mrb[0].mxu0 %v792
    %v1067 = vpop.f32.mrb[0].mxu0
    %v1068 = vadd.f32 %v491, %v1067
    %v1069 = vpop.f32.mrb[0].mxu0
    %1070 = vmatprep.mubr.f32.mxu0 0.0
    %1071 = vmatmul.mubr.f32.gmra.mrb[0].mxu0 %v795
    %v1072 = vpop.f32.mrb[0].mxu0
    %v1073 = vadd.f32 %v496, %v1072
    %v1074 = vpop.f32.mrb[0].mxu0
    %1075 = vmatprep.mubr.f32.mxu0 0.0
    %1076 = vmatmul.mubr.f32.gmra.mrb[0].mxu0 %v798
    %v1077 = vpop.f32.mrb[0].mxu0
    %v1078 = vadd.f32 %v501, %v1077
    %v1079 = vpop.f32.mrb[0].mxu0
    %1080 = vmatprep.mubr.f32.mxu0 0.0
    %1081 = vmatmul.mubr.f32.gmra.mrb[0].mxu0 %v801
    %v1082 = vpop.f32.mrb[0].mxu0
    %v1083 = vadd.f32 %v506, %v1082
    %v1084 = vpop.f32.mrb[0].mxu0
    %1085 = vmatprep.mubr.f32.mxu0 0.0
    %1086 = vmatmul.mubr.f32.gmra.mrb[0].mxu0 %v804
    %v1087 = vpop.f32.mrb[0].mxu0
    %v1088 = vadd.f32 %v511, %v1087
    %v1089 = vpop.f32.mrb[0].mxu0
    %1090 = vmatprep.mubr.f32.mxu0 0.0
    %1091 = vmatmul.mubr.f32.gmra.mrb[0].mxu0 %v807
    %v1092 = vpop.f32.mrb[0].mxu0
    %v1093 = vadd.f32 %v516, %v1092
    %v1094 = vpop.f32.mrb[0].mxu0
    %1095 = vmatprep.mubr.f32.mxu0 0.0
    %1096 = vmatmul.mubr.f32.gmra.mrb[0].mxu0 %v810
    %v1097 = vpop.f32.mrb[0].mxu0
    %v1098 = vadd.f32 %v521, %v1097
    %v1099 = vpop.f32.mrb[0].mxu0
    %1100 = vmatprep.mubr.f32.mxu0 0.0
    %1101 = vmatmul.mubr.f32.gmra.mrb[0].mxu0 %v813
    %v1102 = vpop.f32.mrb[0].mxu0
    %v1103 = vadd.f32 %v526, %v1102
    %v1104 = vpop.f32.mrb[0].mxu0
    %1105 = vmatprep.mubr.f32.mxu0 0.0
    %1106 = vmatmul.mubr.f32.gmra.mrb[0].mxu0 %v816
    %v1107 = vpop.f32.mrb[0].mxu0
    %v1108 = vadd.f32 %v531, %v1107
    %v1109 = vpop.f32.mrb[0].mxu0
    %1110 = vmatprep.mubr.f32.mxu0 0.0
    %1111 = vmatmul.mubr.f32.gmra.mrb[0].mxu0 %v819
    %v1112 = vpop.f32.mrb[0].mxu0
    %v1113 = vadd.f32 %v536, %v1112
    %v1114 = vpop.f32.mrb[0].mxu0
    %1115 = vmatprep.mubr.f32.mxu0 0.0
    %1116 = vmatmul.mubr.f32.gmra.mrb[0].mxu0 %v822
    %v1117 = vpop.f32.mrb[0].mxu0
    %v1118 = vadd.f32 %v541, %v1117
    %v1119 = vpop.f32.mrb[0].mxu0
    %1120 = vmatprep.mubr.f32.mxu0 0.0
    %1121 = vmatmul.mubr.f32.gmra.mrb[0].mxu0 %v825
    %v1122 = vpop.f32.mrb[0].mxu0
    %v1123 = vadd.f32 %v546, %v1122
    %v1124 = vpop.f32.mrb[0].mxu0
    %1125 = vmatprep.mubr.f32.mxu0 0.0
    %1126 = vmatmul.mubr.f32.gmra.mrb[0].mxu0 %v828
    %v1127 = vpop.f32.mrb[0].mxu0
    %v1128 = vadd.f32 %v551, %v1127
    %v1129 = vpop.f32.mrb[0].mxu0
    %1130 = vmatprep.mubr.f32.mxu0 0.0
    %1131 = vmatmul.mubr.f32.gmra.mrb[0].mxu0 %v831
    %v1132 = vpop.f32.mrb[0].mxu0
    %v1133 = vadd.f32 %v556, %v1132
    %v1134 = vpop.f32.mrb[0].mxu0
    %1135 = vmatprep.mubr.f32.mxu0 0.0
    %1136 = vmatmul.mubr.f32.gmra.mrb[0].mxu0 %v834
    %v1137 = vpop.f32.mrb[0].mxu0
    %v1138 = vadd.f32 %v561, %v1137
    %v1139 = vpop.f32.mrb[0].mxu0
    %1140 = vmatprep.mubr.f32.mxu0 0.0
    %1141 = vmatmul.mubr.f32.gmra.mrb[0].mxu0 %v837
    %v1142 = vpop.f32.mrb[0].mxu0
    %v1143 = vadd.f32 %v566, %v1142
    %v1144 = vpop.f32.mrb[0].mxu0
    %1145 = vmatprep.mubr.f32.mxu0 0.0
    %1146 = vmatmul.mubr.f32.gmra.mrb[0].mxu0 %v840
    %v1147 = vpop.f32.mrb[0].mxu0
    %v1148 = vadd.f32 %v571, %v1147
    %v1149 = vpop.f32.mrb[0].mxu0
    %1150 = vmatprep.mubr.f32.mxu0 0.0
    %1151 = vmatmul.mubr.f32.gmra.mrb[0].mxu0 %v843
    %v1152 = vpop.f32.mrb[0].mxu0
    %v1153 = vadd.f32 %v576, %v1152
    %v1154 = vpop.f32.mrb[0].mxu0
    %1155 = vmatprep.mubr.f32.mxu0 0.0
    %1156 = vmatmul.mubr.f32.gmra.mrb[0].mxu0 %v846
    %v1157 = vpop.f32.mrb[0].mxu0
    %v1158 = vadd.f32 %v581, %v1157
    %v1159 = vpop.f32.mrb[0].mxu0
    %1160 = vmatprep.mubr.f32.mxu0 0.0
    %1161 = vmatmul.mubr.f32.gmra.mrb[0].mxu0 %v849
    %v1162 = vpop.f32.mrb[0].mxu0
    %v1163 = vadd.f32 %v586, %v1162
    %v1164 = vpop.f32.mrb[0].mxu0
    %1165 = vmatprep.mubr.f32.mxu0 0.0
    %1166 = vmatmul.mubr.f32.gmra.mrb[0].mxu0 %v852
    %v1167 = vpop.f32.mrb[0].mxu0
    %v1168 = vadd.f32 %v591, %v1167
    %v1169 = vpop.f32.mrb[0].mxu0
    %1170 = vmatprep.mubr.f32.mxu0 0.0
    %1171 = vmatmul.mubr.f32.gmra.mrb[0].mxu0 %v855
    %v1172 = vpop.f32.mrb[0].mxu0
    %v1173 = vadd.f32 %v596, %v1172
    %v1174 = vpop.f32.mrb[0].mxu0
    %1175 = vmatprep.mubr.f32.mxu0 0.0
    %1176 = vmatmul.mubr.f32.gmra.mrb[0].mxu0 %v858
    %v1177 = vpop.f32.mrb[0].mxu0
    %v1178 = vadd.f32 %v601, %v1177
    %v1179 = vpop.f32.mrb[0].mxu0
    %1180 = vmatprep.mubr.f32.mxu0 0.0
    %1181 = vmatmul.mubr.f32.gmra.mrb[0].mxu0 %v861
    %v1182 = vpop.f32.mrb[0].mxu0
    %v1183 = vadd.f32 %v606, %v1182
    %v1184 = vpop.f32.mrb[0].mxu0
    %1185 = vmatprep.mubr.f32.mxu0 0.0
    %1186 = vmatmul.mubr.f32.gmra.mrb[0].mxu0 %v864
    %v1187 = vpop.f32.mrb[0].mxu0
    %v1188 = vadd.f32 %v611, %v1187
    %v1189 = vpop.f32.mrb[0].mxu0
    %1190 = vmatprep.mubr.f32.mxu0 0.0
    %1191 = vmatmul.mubr.f32.gmra.mrb[0].mxu0 %v867
    %v1192 = vpop.f32.mrb[0].mxu0
    %v1193 = vadd.f32 %v616, %v1192
    %v1194 = vpop.f32.mrb[0].mxu0
    %1195 = vmatprep.mubr.f32.mxu0 0.0
    %1196 = vmatmul.mubr.f32.gmra.mrb[0].mxu0 %v870
    %v1197 = vpop.f32.mrb[0].mxu0
    %v1198 = vadd.f32 %v621, %v1197
    %v1199 = vpop.f32.mrb[0].mxu0
    %1200 = vmatprep.mubr.f32.mxu0 0.0
    %1201 = vmatmul.mubr.f32.gmra.mrb[0].mxu0 %v873
    %v1202 = vpop.f32.mrb[0].mxu0
    %v1203 = vadd.f32 %v626, %v1202
    %v1204 = vpop.f32.mrb[0].mxu0
    %1205 = vmatprep.mubr.f32.mxu0 0.0
    %1206 = vmatmul.mubr.f32.gmra.mrb[0].mxu0 %v876
    %v1207 = vpop.f32.mrb[0].mxu0
    %v1208 = vadd.f32 %v631, %v1207
    %v1209 = vpop.f32.mrb[0].mxu0
    %1210 = vmatprep.mubr.f32.mxu0 0.0
    %1211 = vmatmul.mubr.f32.gmra.mrb[0].mxu0 %v879
    %v1212 = vpop.f32.mrb[0].mxu0
    %v1213 = vadd.f32 %v636, %v1212
    %v1214 = vpop.f32.mrb[0].mxu0
    %1215 = vmatprep.mubr.f32.mxu0 0.0
    %1216 = vmatmul.mubr.f32.gmra.mrb[0].mxu0 %v882
    %v1217 = vpop.f32.mrb[0].mxu0
    %v1218 = vadd.f32 %v641, %v1217
    %v1219 = vpop.f32.mrb[0].mxu0
    %1220 = vmatprep.mubr.f32.mxu0 0.0
    %1221 = vmatmul.mubr.f32.gmra.mrb[0].mxu0 %v885
    %v1222 = vpop.f32.mrb[0].mxu0
    %v1223 = vadd.f32 %v646, %v1222
    %v1224 = vpop.f32.mrb[0].mxu0
    %1225 = vmatprep.mubr.f32.mxu0 0.0
    %1226 = vmatmul.mubr.f32.gmra.mrb[0].mxu0 %v888
    %v1227 = vpop.f32.mrb[0].mxu0
    %v1228 = vadd.f32 %v651, %v1227
    %v1229 = vpop.f32.mrb[0].mxu0
    %1230 = vmatprep.mubr.f32.mxu0 0.0
    %1231 = vmatmul.mubr.f32.gmra.mrb[0].mxu0 %v891
    %v1232 = vpop.f32.mrb[0].mxu0
    %v1233 = vadd.f32 %v656, %v1232
    %v1234 = vpop.f32.mrb[0].mxu0
    %1235 = vmatprep.mubr.f32.mxu0 0.0
    %1236 = vmatmul.mubr.f32.gmra.mrb[0].mxu0 %v894
    %v1237 = vpop.f32.mrb[0].mxu0
    %v1238 = vadd.f32 %v661, %v1237
    %v1239 = vpop.f32.mrb[0].mxu0
    %1240 = vmatprep.mubr.f32.mxu0 0.0
    %1241 = vmatmul.mubr.f32.gmra.mrb[0].mxu0 %v897
    %v1242 = vpop.f32.mrb[0].mxu0
    %v1243 = vadd.f32 %v666, %v1242
    %v1244 = vpop.f32.mrb[0].mxu0
    %1245 = vmatprep.mubr.f32.mxu0 0.0
    %1246 = vmatmul.mubr.f32.gmra.mrb[0].mxu0 %v900
    %v1247 = vpop.f32.mrb[0].mxu0
    %v1248 = vadd.f32 %v671, %v1247
    %v1249 = vpop.f32.mrb[0].mxu0
    %1250 = vmatprep.mubr.f32.mxu0 0.0
    %1251 = vmatmul.mubr.f32.gmra.mrb[0].mxu0 %v903
    %v1252 = vpop.f32.mrb[0].mxu0
    %v1253 = vadd.f32 %v676, %v1252
    %v1254 = vpop.f32.mrb[0].mxu0
    %1255 = vmatprep.mubr.f32.mxu0 0.0
    %1256 = vmatmul.mubr.f32.gmra.mrb[0].mxu0 %v906
    %v1257 = vpop.f32.mrb[0].mxu0
    %v1258 = vadd.f32 %v681, %v1257
    %v1259 = vpop.f32.mrb[0].mxu0
    %1260 = vmatprep.mubr.f32.mxu0 0.0
    %1261 = vmatmul.mubr.f32.gmra.mrb[0].mxu0 %v909
    %v1262 = vpop.f32.mrb[0].mxu0
    %v1263 = vadd.f32 %v686, %v1262
    %v1264 = vpop.f32.mrb[0].mxu0
    %1265 = vmatprep.mubr.f32.mxu0 0.0
    %1266 = vmatmul.mubr.f32.gmra.mrb[0].mxu0 %v912
    %v1267 = vpop.f32.mrb[0].mxu0
    %v1268 = vadd.f32 %v691, %v1267
    %v1269 = vpop.f32.mrb[0].mxu0
    %1270 = vmatprep.mubr.f32.mxu0 0.0
    %1271 = vmatmul.mubr.f32.gmra.mrb[0].mxu0 %v915
    %v1272 = vpop.f32.mrb[0].mxu0
    %v1273 = vadd.f32 %v696, %v1272
    %v1274 = vpop.f32.mrb[0].mxu0
    %1275 = vmatprep.mubr.f32.mxu0 0.0
    %1276 = vmatmul.mubr.f32.gmra.mrb[0].mxu0 %v918
    %v1277 = vpop.f32.mrb[0].mxu0
    %v1278 = vadd.f32 %v701, %v1277
    %v1279 = vpop.f32.mrb[0].mxu0
    %1280 = vmatprep.mubr.f32.mxu0 0.0
    %1281 = vmatmul.mubr.f32.gmra.mrb[0].mxu0 %v921
    %v1282 = vpop.f32.mrb[0].mxu0
    %v1283 = vadd.f32 %v706, %v1282
    %v1284 = vpop.f32.mrb[0].mxu0
    %1285 = vmatprep.mubr.f32.mxu0 0.0
    %1286 = vmatmul.mubr.f32.gmra.mrb[0].mxu0 %v924
    %v1287 = vpop.f32.mrb[0].mxu0
    %v1288 = vadd.f32 %v711, %v1287
    %v1289 = vpop.f32.mrb[0].mxu0
    %1290 = vmatprep.mubr.f32.mxu0 0.0
    %1291 = vmatmul.mubr.f32.gmra.mrb[0].mxu0 %v927
    %v1292 = vpop.f32.mrb[0].mxu0
    %v1293 = vadd.f32 %v716, %v1292
    %v1294 = vpop.f32.mrb[0].mxu0
    %1295 = vmatprep.mubr.f32.mxu0 0.0
    %1296 = vmatmul.mubr.f32.gmra.mrb[0].mxu0 %v930
    %v1297 = vpop.f32.mrb[0].mxu0
    %v1298 = vadd.f32 %v721, %v1297
    %v1299 = vpop.f32.mrb[0].mxu0
    %1300 = vmatprep.mubr.f32.mxu0 0.0
    %1301 = vmatmul.mubr.f32.gmra.mrb[0].mxu0 %v933
    %v1302 = vpop.f32.mrb[0].mxu0
    %v1303 = vadd.f32 %v726, %v1302
    %v1304 = vpop.f32.mrb[0].mxu0
    %1305 = vmatprep.mubr.f32.mxu0 0.0
    %1306 = vmatmul.mubr.f32.gmra.mrb[0].mxu0 %v936
    %v1307 = vpop.f32.mrb[0].mxu0
    %v1308 = vadd.f32 %v731, %v1307
    %v1309 = vpop.f32.mrb[0].mxu0
    %1310 = vmatprep.mubr.f32.mxu0 0.0
    %1311 = vmatmul.mubr.f32.gmra.mrb[0].mxu0 %v939
    %v1312 = vpop.f32.mrb[0].mxu0
    %v1313 = vadd.f32 %v736, %v1312
    %v1314 = vpop.f32.mrb[0].mxu0
    %1315 = vmatprep.mubr.f32.mxu0 0.0
    %1316 = vmatmul.mubr.f32.gmra.mrb[0].mxu0 %v942
    %v1317 = vpop.f32.mrb[0].mxu0
    %v1318 = vadd.f32 %v741, %v1317
    %v1319 = vpop.f32.mrb[0].mxu0
    %1320 = vmatprep.mubr.f32.mxu0 0.0
    %1321 = vmatmul.mubr.f32.gmra.mrb[0].mxu0 %v945
    %v1322 = vpop.f32.mrb[0].mxu0
    %v1323 = vadd.f32 %v746, %v1322
    %v1324 = vpop.f32.mrb[0].mxu0
    %1325 = vmatprep.mubr.f32.mxu0 0.0
    %1326 = vmatmul.mubr.f32.gmra.mrb[0].mxu0 %v948
    %v1327 = vpop.f32.mrb[0].mxu0
    %v1328 = vadd.f32 %v751, %v1327
    %v1329 = vpop.f32.mrb[0].mxu0
    %1330 = vmatprep.mubr.f32.mxu0 0.0
    %1331 = vmatmul.mubr.f32.gmra.mrb[0].mxu0 %v951
    %v1332 = vpop.f32.mrb[0].mxu0
    %v1333 = vadd.f32 %v756, %v1332
    %v1334 = vpop.f32.mrb[0].mxu0
    %1335 = vmatprep.mubr.f32.mxu0 0.0
    %1336 = vmatmul.mubr.f32.gmra.mrb[0].mxu0 %v954
    %v1337 = vpop.f32.mrb[0].mxu0
    %v1338 = vadd.f32 %v761, %v1337
    %v1339 = vpop.f32.mrb[0].mxu0
    %1340 = vdwg.mxu0
    %v1341 = vld [vmem:[%s0 + $0x2] sm:$0xff]
    %v1342 = vld [vmem:[%s0 + $0xa] sm:$0xff]
    %v1343 = vld [vmem:[%s0 + $0x12] sm:$0xff]
    %v1344 = vld [vmem:[%s0 + $0x1a] sm:$0xff]
    %v1345 = vld [vmem:[%s0 + $0x22] sm:$0xff]
    %v1346 = vld [vmem:[%s0 + $0x2a] sm:$0xff]
    %v1347 = vld [vmem:[%s0 + $0x32] sm:$0xff]
    %v1348 = vld [vmem:[%s0 + $0x3a] sm:$0xff]
    %v1349 = vld [vmem:[%s0 + $0x42] sm:$0xff]
    %v1350 = vld [vmem:[%s0 + $0x4a] sm:$0xff]
    %v1351 = vld [vmem:[%s0 + $0x52] sm:$0xff]
    %v1352 = vld [vmem:[%s0 + $0x5a] sm:$0xff]
    %v1353 = vld [vmem:[%s0 + $0x62] sm:$0xff]
    %v1354 = vld [vmem:[%s0 + $0x6a] sm:$0xff]
    %v1355 = vld [vmem:[%s0 + $0x72] sm:$0xff]
    %v1356 = vld [vmem:[%s0 + $0x7a] sm:$0xff]
    %v1357 = vld [vmem:[%s0 + $0x82] sm:$0xff]
    %v1358 = vld [vmem:[%s0 + $0x8a] sm:$0xff]
    %v1359 = vld [vmem:[%s0 + $0x92] sm:$0xff]
    %v1360 = vld [vmem:[%s0 + $0x9a] sm:$0xff]
    %v1361 = vld [vmem:[%s0 + $0xa2] sm:$0xff]
    %v1362 = vld [vmem:[%s0 + $0xaa] sm:$0xff]
    %v1363 = vld [vmem:[%s0 + $0xb2] sm:$0xff]
    %v1364 = vld [vmem:[%s0 + $0xba] sm:$0xff]
    %v1365 = vld [vmem:[%s0 + $0xc2] sm:$0xff]
    %v1366 = vld [vmem:[%s0 + $0xca] sm:$0xff]
    %v1367 = vld [vmem:[%s0 + $0xd2] sm:$0xff]
    %v1368 = vld [vmem:[%s0 + $0xda] sm:$0xff]
    %v1369 = vld [vmem:[%s0 + $0xe2] sm:$0xff]
    %v1370 = vld [vmem:[%s0 + $0xea] sm:$0xff]
    %v1371 = vld [vmem:[%s0 + $0xf2] sm:$0xff]
    %v1372 = vld [vmem:[%s0 + $0xfa] sm:$0xff]
    %v1373 = vld [vmem:[%s0 + $0x102] sm:$0xff]
    %v1374 = vld [vmem:[%s0 + $0x10a] sm:$0xff]
    %v1375 = vld [vmem:[%s0 + $0x112] sm:$0xff]
    %v1376 = vld [vmem:[%s0 + $0x11a] sm:$0xff]
    %v1377 = vld [vmem:[%s0 + $0x122] sm:$0xff]
    %v1378 = vld [vmem:[%s0 + $0x12a] sm:$0xff]
    %v1379 = vld [vmem:[%s0 + $0x132] sm:$0xff]
    %v1380 = vld [vmem:[%s0 + $0x13a] sm:$0xff]
    %v1381 = vld [vmem:[%s0 + $0x142] sm:$0xff]
    %v1382 = vld [vmem:[%s0 + $0x14a] sm:$0xff]
    %v1383 = vld [vmem:[%s0 + $0x152] sm:$0xff]
    %v1384 = vld [vmem:[%s0 + $0x15a] sm:$0xff]
    %v1385 = vld [vmem:[%s0 + $0x162] sm:$0xff]
    %v1386 = vld [vmem:[%s0 + $0x16a] sm:$0xff]
    %v1387 = vld [vmem:[%s0 + $0x172] sm:$0xff]
    %v1388 = vld [vmem:[%s0 + $0x17a] sm:$0xff]
    %v1389 = vld [vmem:[%s0 + $0x182] sm:$0xff]
    %v1390 = vld [vmem:[%s0 + $0x18a] sm:$0xff]
    %v1391 = vld [vmem:[%s0 + $0x192] sm:$0xff]
    %v1392 = vld [vmem:[%s0 + $0x19a] sm:$0xff]
    %v1393 = vld [vmem:[%s0 + $0x1a2] sm:$0xff]
    %v1394 = vld [vmem:[%s0 + $0x1aa] sm:$0xff]
    %v1395 = vld [vmem:[%s0 + $0x1b2] sm:$0xff]
    %v1396 = vld [vmem:[%s0 + $0x1ba] sm:$0xff]
    %v1397 = vld [vmem:[%s0 + $0x1c2] sm:$0xff]
    %v1398 = vld [vmem:[%s0 + $0x1ca] sm:$0xff]
    %v1399 = vld [vmem:[%s0 + $0x1d2] sm:$0xff]
    %v1400 = vld [vmem:[%s0 + $0x1da] sm:$0xff]
    %v1401 = vld [vmem:[%s0 + $0x1e2] sm:$0xff]
    %v1402 = vld [vmem:[%s0 + $0x1ea] sm:$0xff]
    %v1403 = vld [vmem:[%s0 + $0x1f2] sm:$0xff]
    %v1404 = vld [vmem:[%s0 + $0x1fa] sm:$0xff]
    %s1405 = scalar_lea.vmem %s1, 16
    %v1406 = vld [vmem:[%s1405] sm:$0xff]
    %v1408 = vsel %vm186, %v1341, 0
    %v1411 = vsel %vm186, %v1342, 0
    %v1414 = vsel %vm186, %v1343, 0
    %v1417 = vsel %vm186, %v1344, 0
    %v1420 = vsel %vm186, %v1345, 0
    %v1423 = vsel %vm186, %v1346, 0
    %v1426 = vsel %vm186, %v1347, 0
    %v1429 = vsel %vm186, %v1348, 0
    %v1432 = vsel %vm186, %v1349, 0
    %v1435 = vsel %vm186, %v1350, 0
    %v1438 = vsel %vm186, %v1351, 0
    %v1441 = vsel %vm186, %v1352, 0
    %v1444 = vsel %vm186, %v1353, 0
    %v1447 = vsel %vm186, %v1354, 0
    %v1450 = vsel %vm186, %v1355, 0
    %v1453 = vsel %vm186, %v1356, 0
    %v1456 = vsel %vm186, %v1357, 0
    %v1459 = vsel %vm186, %v1358, 0
    %v1462 = vsel %vm186, %v1359, 0
    %v1465 = vsel %vm186, %v1360, 0
    %v1468 = vsel %vm186, %v1361, 0
    %v1471 = vsel %vm186, %v1362, 0
    %v1474 = vsel %vm186, %v1363, 0
    %v1477 = vsel %vm186, %v1364, 0
    %v1480 = vsel %vm186, %v1365, 0
    %v1483 = vsel %vm186, %v1366, 0
    %v1486 = vsel %vm186, %v1367, 0
    %v1489 = vsel %vm186, %v1368, 0
    %v1492 = vsel %vm186, %v1369, 0
    %v1495 = vsel %vm186, %v1370, 0
    %v1498 = vsel %vm186, %v1371, 0
    %v1501 = vsel %vm186, %v1372, 0
    %v1504 = vsel %vm186, %v1373, 0
    %v1507 = vsel %vm186, %v1374, 0
    %v1510 = vsel %vm186, %v1375, 0
    %v1513 = vsel %vm186, %v1376, 0
    %v1516 = vsel %vm186, %v1377, 0
    %v1519 = vsel %vm186, %v1378, 0
    %v1522 = vsel %vm186, %v1379, 0
    %v1525 = vsel %vm186, %v1380, 0
    %v1528 = vsel %vm186, %v1381, 0
    %v1531 = vsel %vm186, %v1382, 0
    %v1534 = vsel %vm186, %v1383, 0
    %v1537 = vsel %vm186, %v1384, 0
    %v1540 = vsel %vm186, %v1385, 0
    %v1543 = vsel %vm186, %v1386, 0
    %v1546 = vsel %vm186, %v1387, 0
    %v1549 = vsel %vm186, %v1388, 0
    %v1552 = vsel %vm186, %v1389, 0
    %v1555 = vsel %vm186, %v1390, 0
    %v1558 = vsel %vm186, %v1391, 0
    %v1561 = vsel %vm186, %v1392, 0
    %v1564 = vsel %vm186, %v1393, 0
    %v1567 = vsel %vm186, %v1394, 0
    %v1570 = vsel %vm186, %v1395, 0
    %v1573 = vsel %vm186, %v1396, 0
    %v1576 = vsel %vm186, %v1397, 0
    %v1579 = vsel %vm186, %v1398, 0
    %v1582 = vsel %vm186, %v1399, 0
    %v1585 = vsel %vm186, %v1400, 0
    %v1588 = vsel %vm186, %v1401, 0
    %v1591 = vsel %vm186, %v1402, 0
    %v1594 = vsel %vm186, %v1403, 0
    %v1597 = vsel %vm186, %v1404, 0
    %1599 = vmatprep.subr.mxu0 0.0
    %1600 = vmatpush1.msra.mxu0 %v1406
    %1601 = vmatprep.subr.mxu0 0.0
    %1602 = vmatpush1.msra.mxu0 0.0
    %1603 = vmatprep.subr.mxu0 0.0
    %1604 = vmatpush1.msra.mxu0 0.0
    %1605 = vmatprep.subr.mxu0 0.0
    %1606 = vmatpush1.msra.mxu0 0.0
    %1607 = vmatprep.subr.mxu0 0.0
    %1608 = vmatpush1.msra.mxu0 0.0
    %1609 = vmatprep.subr.mxu0 0.0
    %1610 = vmatpush1.msra.mxu0 0.0
    %1611 = vmatprep.subr.mxu0 0.0
    %1612 = vmatpush1.msra.mxu0 0.0
    %1613 = vmatprep.subr.mxu0 0.0
    %1614 = vmatpush1.msra.mxu0 0.0
    %1615 = vmatprep.subr.mxu0 0.0
    %1616 = vmatpush1.msra.mxu0 0.0
    %1617 = vmatprep.subr.mxu0 0.0
    %1618 = vmatpush1.msra.mxu0 0.0
    %1619 = vmatprep.subr.mxu0 0.0
    %1620 = vmatpush1.msra.mxu0 0.0
    %1621 = vmatprep.subr.mxu0 0.0
    %1622 = vmatpush1.msra.mxu0 0.0
    %1623 = vmatprep.subr.mxu0 0.0
    %1624 = vmatpush1.msra.mxu0 0.0
    %1625 = vmatprep.subr.mxu0 0.0
    %1626 = vmatpush1.msra.mxu0 0.0
    %1627 = vmatprep.subr.mxu0 0.0
    %1628 = vmatpush1.msra.mxu0 0.0
    %1629 = vmatprep.subr.mxu0 0.0
    %1630 = vmatpush1.msra.mxu0 0.0
    %1631 = vmatprep.subr.mxu0 0.0
    %1632 = vmatpush1.msra.mxu0 0.0
    %1633 = vmatprep.subr.mxu0 0.0
    %1634 = vmatpush1.msra.mxu0 0.0
    %1635 = vmatprep.subr.mxu0 0.0
    %1636 = vmatpush1.msra.mxu0 0.0
    %1637 = vmatprep.subr.mxu0 0.0
    %1638 = vmatpush1.msra.mxu0 0.0
    %1639 = vmatprep.subr.mxu0 0.0
    %1640 = vmatpush1.msra.mxu0 0.0
    %1641 = vmatprep.subr.mxu0 0.0
    %1642 = vmatpush1.msra.mxu0 0.0
    %1643 = vmatprep.subr.mxu0 0.0
    %1644 = vmatpush1.msra.mxu0 0.0
    %1645 = vmatprep.subr.mxu0 0.0
    %1646 = vmatpush1.msra.mxu0 0.0
    %1647 = vmatprep.subr.mxu0 0.0
    %1648 = vmatpush1.msra.mxu0 0.0
    %1649 = vmatprep.subr.mxu0 0.0
    %1650 = vmatpush1.msra.mxu0 0.0
    %1651 = vmatprep.subr.mxu0 0.0
    %1652 = vmatpush1.msra.mxu0 0.0
    %1653 = vmatprep.subr.mxu0 0.0
    %1654 = vmatpush1.msra.mxu0 0.0
    %1655 = vmatprep.subr.mxu0 0.0
    %1656 = vmatpush1.msra.mxu0 0.0
    %1657 = vmatprep.subr.mxu0 0.0
    %1658 = vmatpush1.msra.mxu0 0.0
    %1659 = vmatprep.subr.mxu0 0.0
    %1660 = vmatpush1.msra.mxu0 0.0
    %1661 = vmatprep.subr.mxu0 0.0
    %1662 = vmatpush1.msra.mxu0 0.0
    %1663 = vmatprep.mubr.f32.mxu0 0.0
    %1664 = vmatmul.mubr.f32.gmra.mrb[0].mxu0 %v1408
    %v1665 = vpop.f32.mrb[0].mxu0
    %v1666 = vadd.f32 0.0, %v1665
    %v1667 = vpop.f32.mrb[0].mxu0
    %1668 = vmatprep.mubr.f32.mxu0 0.0
    %1669 = vmatmul.mubr.f32.gmra.mrb[0].mxu0 %v1411
    %v1670 = vpop.f32.mrb[0].mxu0
    %v1671 = vadd.f32 0.0, %v1670
    %v1672 = vpop.f32.mrb[0].mxu0
    %1673 = vmatprep.mubr.f32.mxu0 0.0
    %1674 = vmatmul.mubr.f32.gmra.mrb[0].mxu0 %v1414
    %v1675 = vpop.f32.mrb[0].mxu0
    %v1676 = vadd.f32 0.0, %v1675
    %v1677 = vpop.f32.mrb[0].mxu0
    %1678 = vmatprep.mubr.f32.mxu0 0.0
    %1679 = vmatmul.mubr.f32.gmra.mrb[0].mxu0 %v1417
    %v1680 = vpop.f32.mrb[0].mxu0
    %v1681 = vadd.f32 0.0, %v1680
    %v1682 = vpop.f32.mrb[0].mxu0
    %1683 = vmatprep.mubr.f32.mxu0 0.0
    %1684 = vmatmul.mubr.f32.gmra.mrb[0].mxu0 %v1420
    %v1685 = vpop.f32.mrb[0].mxu0
    %v1686 = vadd.f32 0.0, %v1685
    %v1687 = vpop.f32.mrb[0].mxu0
    %1688 = vmatprep.mubr.f32.mxu0 0.0
    %1689 = vmatmul.mubr.f32.gmra.mrb[0].mxu0 %v1423
    %v1690 = vpop.f32.mrb[0].mxu0
    %v1691 = vadd.f32 0.0, %v1690
    %v1692 = vpop.f32.mrb[0].mxu0
    %1693 = vmatprep.mubr.f32.mxu0 0.0
    %1694 = vmatmul.mubr.f32.gmra.mrb[0].mxu0 %v1426
    %v1695 = vpop.f32.mrb[0].mxu0
    %v1696 = vadd.f32 0.0, %v1695
    %v1697 = vpop.f32.mrb[0].mxu0
    %1698 = vmatprep.mubr.f32.mxu0 0.0
    %1699 = vmatmul.mubr.f32.gmra.mrb[0].mxu0 %v1429
    %v1700 = vpop.f32.mrb[0].mxu0
    %v1701 = vadd.f32 0.0, %v1700
    %v1702 = vpop.f32.mrb[0].mxu0
    %1703 = vmatprep.mubr.f32.mxu0 0.0
    %1704 = vmatmul.mubr.f32.gmra.mrb[0].mxu0 %v1432
    %v1705 = vpop.f32.mrb[0].mxu0
    %v1706 = vadd.f32 0.0, %v1705
    %v1707 = vpop.f32.mrb[0].mxu0
    %1708 = vmatprep.mubr.f32.mxu0 0.0
    %1709 = vmatmul.mubr.f32.gmra.mrb[0].mxu0 %v1435
    %v1710 = vpop.f32.mrb[0].mxu0
    %v1711 = vadd.f32 0.0, %v1710
    %v1712 = vpop.f32.mrb[0].mxu0
    %1713 = vmatprep.mubr.f32.mxu0 0.0
    %1714 = vmatmul.mubr.f32.gmra.mrb[0].mxu0 %v1438
    %v1715 = vpop.f32.mrb[0].mxu0
    %v1716 = vadd.f32 0.0, %v1715
    %v1717 = vpop.f32.mrb[0].mxu0
    %1718 = vmatprep.mubr.f32.mxu0 0.0
    %1719 = vmatmul.mubr.f32.gmra.mrb[0].mxu0 %v1441
    %v1720 = vpop.f32.mrb[0].mxu0
    %v1721 = vadd.f32 0.0, %v1720
    %v1722 = vpop.f32.mrb[0].mxu0
    %1723 = vmatprep.mubr.f32.mxu0 0.0
    %1724 = vmatmul.mubr.f32.gmra.mrb[0].mxu0 %v1444
    %v1725 = vpop.f32.mrb[0].mxu0
    %v1726 = vadd.f32 0.0, %v1725
    %v1727 = vpop.f32.mrb[0].mxu0
    %1728 = vmatprep.mubr.f32.mxu0 0.0
    %1729 = vmatmul.mubr.f32.gmra.mrb[0].mxu0 %v1447
    %v1730 = vpop.f32.mrb[0].mxu0
    %v1731 = vadd.f32 0.0, %v1730
    %v1732 = vpop.f32.mrb[0].mxu0
    %1733 = vmatprep.mubr.f32.mxu0 0.0
    %1734 = vmatmul.mubr.f32.gmra.mrb[0].mxu0 %v1450
    %v1735 = vpop.f32.mrb[0].mxu0
    %v1736 = vadd.f32 0.0, %v1735
    %v1737 = vpop.f32.mrb[0].mxu0
    %1738 = vmatprep.mubr.f32.mxu0 0.0
    %1739 = vmatmul.mubr.f32.gmra.mrb[0].mxu0 %v1453
    %v1740 = vpop.f32.mrb[0].mxu0
    %v1741 = vadd.f32 0.0, %v1740
    %v1742 = vpop.f32.mrb[0].mxu0
    %1743 = vmatprep.mubr.f32.mxu0 0.0
    %1744 = vmatmul.mubr.f32.gmra.mrb[0].mxu0 %v1456
    %v1745 = vpop.f32.mrb[0].mxu0
    %v1746 = vadd.f32 0.0, %v1745
    %v1747 = vpop.f32.mrb[0].mxu0
    %1748 = vmatprep.mubr.f32.mxu0 0.0
    %1749 = vmatmul.mubr.f32.gmra.mrb[0].mxu0 %v1459
    %v1750 = vpop.f32.mrb[0].mxu0
    %v1751 = vadd.f32 0.0, %v1750
    %v1752 = vpop.f32.mrb[0].mxu0
    %1753 = vmatprep.mubr.f32.mxu0 0.0
    %1754 = vmatmul.mubr.f32.gmra.mrb[0].mxu0 %v1462
    %v1755 = vpop.f32.mrb[0].mxu0
    %v1756 = vadd.f32 0.0, %v1755
    %v1757 = vpop.f32.mrb[0].mxu0
    %1758 = vmatprep.mubr.f32.mxu0 0.0
    %1759 = vmatmul.mubr.f32.gmra.mrb[0].mxu0 %v1465
    %v1760 = vpop.f32.mrb[0].mxu0
    %v1761 = vadd.f32 0.0, %v1760
    %v1762 = vpop.f32.mrb[0].mxu0
    %1763 = vmatprep.mubr.f32.mxu0 0.0
    %1764 = vmatmul.mubr.f32.gmra.mrb[0].mxu0 %v1468
    %v1765 = vpop.f32.mrb[0].mxu0
    %v1766 = vadd.f32 0.0, %v1765
    %v1767 = vpop.f32.mrb[0].mxu0
    %1768 = vmatprep.mubr.f32.mxu0 0.0
    %1769 = vmatmul.mubr.f32.gmra.mrb[0].mxu0 %v1471
    %v1770 = vpop.f32.mrb[0].mxu0
    %v1771 = vadd.f32 0.0, %v1770
    %v1772 = vpop.f32.mrb[0].mxu0
    %1773 = vmatprep.mubr.f32.mxu0 0.0
    %1774 = vmatmul.mubr.f32.gmra.mrb[0].mxu0 %v1474
    %v1775 = vpop.f32.mrb[0].mxu0
    %v1776 = vadd.f32 0.0, %v1775
    %v1777 = vpop.f32.mrb[0].mxu0
    %1778 = vmatprep.mubr.f32.mxu0 0.0
    %1779 = vmatmul.mubr.f32.gmra.mrb[0].mxu0 %v1477
    %v1780 = vpop.f32.mrb[0].mxu0
    %v1781 = vadd.f32 0.0, %v1780
    %v1782 = vpop.f32.mrb[0].mxu0
    %1783 = vmatprep.mubr.f32.mxu0 0.0
    %1784 = vmatmul.mubr.f32.gmra.mrb[0].mxu0 %v1480
    %v1785 = vpop.f32.mrb[0].mxu0
    %v1786 = vadd.f32 0.0, %v1785
    %v1787 = vpop.f32.mrb[0].mxu0
    %1788 = vmatprep.mubr.f32.mxu0 0.0
    %1789 = vmatmul.mubr.f32.gmra.mrb[0].mxu0 %v1483
    %v1790 = vpop.f32.mrb[0].mxu0
    %v1791 = vadd.f32 0.0, %v1790
    %v1792 = vpop.f32.mrb[0].mxu0
    %1793 = vmatprep.mubr.f32.mxu0 0.0
    %1794 = vmatmul.mubr.f32.gmra.mrb[0].mxu0 %v1486
    %v1795 = vpop.f32.mrb[0].mxu0
    %v1796 = vadd.f32 0.0, %v1795
    %v1797 = vpop.f32.mrb[0].mxu0
    %1798 = vmatprep.mubr.f32.mxu0 0.0
    %1799 = vmatmul.mubr.f32.gmra.mrb[0].mxu0 %v1489
    %v1800 = vpop.f32.mrb[0].mxu0
    %v1801 = vadd.f32 0.0, %v1800
    %v1802 = vpop.f32.mrb[0].mxu0
    %1803 = vmatprep.mubr.f32.mxu0 0.0
    %1804 = vmatmul.mubr.f32.gmra.mrb[0].mxu0 %v1492
    %v1805 = vpop.f32.mrb[0].mxu0
    %v1806 = vadd.f32 0.0, %v1805
    %v1807 = vpop.f32.mrb[0].mxu0
    %1808 = vmatprep.mubr.f32.mxu0 0.0
    %1809 = vmatmul.mubr.f32.gmra.mrb[0].mxu0 %v1495
    %v1810 = vpop.f32.mrb[0].mxu0
    %v1811 = vadd.f32 0.0, %v1810
    %v1812 = vpop.f32.mrb[0].mxu0
    %1813 = vmatprep.mubr.f32.mxu0 0.0
    %1814 = vmatmul.mubr.f32.gmra.mrb[0].mxu0 %v1498
    %v1815 = vpop.f32.mrb[0].mxu0
    %v1816 = vadd.f32 0.0, %v1815
    %v1817 = vpop.f32.mrb[0].mxu0
    %1818 = vmatprep.mubr.f32.mxu0 0.0
    %1819 = vmatmul.mubr.f32.gmra.mrb[0].mxu0 %v1501
    %v1820 = vpop.f32.mrb[0].mxu0
    %v1821 = vadd.f32 0.0, %v1820
    %v1822 = vpop.f32.mrb[0].mxu0
    %1823 = vmatprep.mubr.f32.mxu0 0.0
    %1824 = vmatmul.mubr.f32.gmra.mrb[0].mxu0 %v1504
    %v1825 = vpop.f32.mrb[0].mxu0
    %v1826 = vadd.f32 0.0, %v1825
    %v1827 = vpop.f32.mrb[0].mxu0
    %1828 = vmatprep.mubr.f32.mxu0 0.0
    %1829 = vmatmul.mubr.f32.gmra.mrb[0].mxu0 %v1507
    %v1830 = vpop.f32.mrb[0].mxu0
    %v1831 = vadd.f32 0.0, %v1830
    %v1832 = vpop.f32.mrb[0].mxu0
    %1833 = vmatprep.mubr.f32.mxu0 0.0
    %1834 = vmatmul.mubr.f32.gmra.mrb[0].mxu0 %v1510
    %v1835 = vpop.f32.mrb[0].mxu0
    %v1836 = vadd.f32 0.0, %v1835
    %v1837 = vpop.f32.mrb[0].mxu0
    %1838 = vmatprep.mubr.f32.mxu0 0.0
    %1839 = vmatmul.mubr.f32.gmra.mrb[0].mxu0 %v1513
    %v1840 = vpop.f32.mrb[0].mxu0
    %v1841 = vadd.f32 0.0, %v1840
    %v1842 = vpop.f32.mrb[0].mxu0
    %1843 = vmatprep.mubr.f32.mxu0 0.0
    %1844 = vmatmul.mubr.f32.gmra.mrb[0].mxu0 %v1516
    %v1845 = vpop.f32.mrb[0].mxu0
    %v1846 = vadd.f32 0.0, %v1845
    %v1847 = vpop.f32.mrb[0].mxu0
    %1848 = vmatprep.mubr.f32.mxu0 0.0
    %1849 = vmatmul.mubr.f32.gmra.mrb[0].mxu0 %v1519
    %v1850 = vpop.f32.mrb[0].mxu0
    %v1851 = vadd.f32 0.0, %v1850
    %v1852 = vpop.f32.mrb[0].mxu0
    %1853 = vmatprep.mubr.f32.mxu0 0.0
    %1854 = vmatmul.mubr.f32.gmra.mrb[0].mxu0 %v1522
    %v1855 = vpop.f32.mrb[0].mxu0
    %v1856 = vadd.f32 0.0, %v1855
    %v1857 = vpop.f32.mrb[0].mxu0
    %1858 = vmatprep.mubr.f32.mxu0 0.0
    %1859 = vmatmul.mubr.f32.gmra.mrb[0].mxu0 %v1525
    %v1860 = vpop.f32.mrb[0].mxu0
    %v1861 = vadd.f32 0.0, %v1860
    %v1862 = vpop.f32.mrb[0].mxu0
    %1863 = vmatprep.mubr.f32.mxu0 0.0
    %1864 = vmatmul.mubr.f32.gmra.mrb[0].mxu0 %v1528
    %v1865 = vpop.f32.mrb[0].mxu0
    %v1866 = vadd.f32 0.0, %v1865
    %v1867 = vpop.f32.mrb[0].mxu0
    %1868 = vmatprep.mubr.f32.mxu0 0.0
    %1869 = vmatmul.mubr.f32.gmra.mrb[0].mxu0 %v1531
    %v1870 = vpop.f32.mrb[0].mxu0
    %v1871 = vadd.f32 0.0, %v1870
    %v1872 = vpop.f32.mrb[0].mxu0
    %1873 = vmatprep.mubr.f32.mxu0 0.0
    %1874 = vmatmul.mubr.f32.gmra.mrb[0].mxu0 %v1534
    %v1875 = vpop.f32.mrb[0].mxu0
    %v1876 = vadd.f32 0.0, %v1875
    %v1877 = vpop.f32.mrb[0].mxu0
    %1878 = vmatprep.mubr.f32.mxu0 0.0
    %1879 = vmatmul.mubr.f32.gmra.mrb[0].mxu0 %v1537
    %v1880 = vpop.f32.mrb[0].mxu0
    %v1881 = vadd.f32 0.0, %v1880
    %v1882 = vpop.f32.mrb[0].mxu0
    %1883 = vmatprep.mubr.f32.mxu0 0.0
    %1884 = vmatmul.mubr.f32.gmra.mrb[0].mxu0 %v1540
    %v1885 = vpop.f32.mrb[0].mxu0
    %v1886 = vadd.f32 0.0, %v1885
    %v1887 = vpop.f32.mrb[0].mxu0
    %1888 = vmatprep.mubr.f32.mxu0 0.0
    %1889 = vmatmul.mubr.f32.gmra.mrb[0].mxu0 %v1543
    %v1890 = vpop.f32.mrb[0].mxu0
    %v1891 = vadd.f32 0.0, %v1890
    %v1892 = vpop.f32.mrb[0].mxu0
    %1893 = vmatprep.mubr.f32.mxu0 0.0
    %1894 = vmatmul.mubr.f32.gmra.mrb[0].mxu0 %v1546
    %v1895 = vpop.f32.mrb[0].mxu0
    %v1896 = vadd.f32 0.0, %v1895
    %v1897 = vpop.f32.mrb[0].mxu0
    %1898 = vmatprep.mubr.f32.mxu0 0.0
    %1899 = vmatmul.mubr.f32.gmra.mrb[0].mxu0 %v1549
    %v1900 = vpop.f32.mrb[0].mxu0
    %v1901 = vadd.f32 0.0, %v1900
    %v1902 = vpop.f32.mrb[0].mxu0
    %1903 = vmatprep.mubr.f32.mxu0 0.0
    %1904 = vmatmul.mubr.f32.gmra.mrb[0].mxu0 %v1552
    %v1905 = vpop.f32.mrb[0].mxu0
    %v1906 = vadd.f32 0.0, %v1905
    %v1907 = vpop.f32.mrb[0].mxu0
    %1908 = vmatprep.mubr.f32.mxu0 0.0
    %1909 = vmatmul.mubr.f32.gmra.mrb[0].mxu0 %v1555
    %v1910 = vpop.f32.mrb[0].mxu0
    %v1911 = vadd.f32 0.0, %v1910
    %v1912 = vpop.f32.mrb[0].mxu0
    %1913 = vmatprep.mubr.f32.mxu0 0.0
    %1914 = vmatmul.mubr.f32.gmra.mrb[0].mxu0 %v1558
    %v1915 = vpop.f32.mrb[0].mxu0
    %v1916 = vadd.f32 0.0, %v1915
    %v1917 = vpop.f32.mrb[0].mxu0
    %1918 = vmatprep.mubr.f32.mxu0 0.0
    %1919 = vmatmul.mubr.f32.gmra.mrb[0].mxu0 %v1561
    %v1920 = vpop.f32.mrb[0].mxu0
    %v1921 = vadd.f32 0.0, %v1920
    %v1922 = vpop.f32.mrb[0].mxu0
    %1923 = vmatprep.mubr.f32.mxu0 0.0
    %1924 = vmatmul.mubr.f32.gmra.mrb[0].mxu0 %v1564
    %v1925 = vpop.f32.mrb[0].mxu0
    %v1926 = vadd.f32 0.0, %v1925
    %v1927 = vpop.f32.mrb[0].mxu0
    %1928 = vmatprep.mubr.f32.mxu0 0.0
    %1929 = vmatmul.mubr.f32.gmra.mrb[0].mxu0 %v1567
    %v1930 = vpop.f32.mrb[0].mxu0
    %v1931 = vadd.f32 0.0, %v1930
    %v1932 = vpop.f32.mrb[0].mxu0
    %1933 = vmatprep.mubr.f32.mxu0 0.0
    %1934 = vmatmul.mubr.f32.gmra.mrb[0].mxu0 %v1570
    %v1935 = vpop.f32.mrb[0].mxu0
    %v1936 = vadd.f32 0.0, %v1935
    %v1937 = vpop.f32.mrb[0].mxu0
    %1938 = vmatprep.mubr.f32.mxu0 0.0
    %1939 = vmatmul.mubr.f32.gmra.mrb[0].mxu0 %v1573
    %v1940 = vpop.f32.mrb[0].mxu0
    %v1941 = vadd.f32 0.0, %v1940
    %v1942 = vpop.f32.mrb[0].mxu0
    %1943 = vmatprep.mubr.f32.mxu0 0.0
    %1944 = vmatmul.mubr.f32.gmra.mrb[0].mxu0 %v1576
    %v1945 = vpop.f32.mrb[0].mxu0
    %v1946 = vadd.f32 0.0, %v1945
    %v1947 = vpop.f32.mrb[0].mxu0
    %1948 = vmatprep.mubr.f32.mxu0 0.0
    %1949 = vmatmul.mubr.f32.gmra.mrb[0].mxu0 %v1579
    %v1950 = vpop.f32.mrb[0].mxu0
    %v1951 = vadd.f32 0.0, %v1950
    %v1952 = vpop.f32.mrb[0].mxu0
    %1953 = vmatprep.mubr.f32.mxu0 0.0
    %1954 = vmatmul.mubr.f32.gmra.mrb[0].mxu0 %v1582
    %v1955 = vpop.f32.mrb[0].mxu0
    %v1956 = vadd.f32 0.0, %v1955
    %v1957 = vpop.f32.mrb[0].mxu0
    %1958 = vmatprep.mubr.f32.mxu0 0.0
    %1959 = vmatmul.mubr.f32.gmra.mrb[0].mxu0 %v1585
    %v1960 = vpop.f32.mrb[0].mxu0
    %v1961 = vadd.f32 0.0, %v1960
    %v1962 = vpop.f32.mrb[0].mxu0
    %1963 = vmatprep.mubr.f32.mxu0 0.0
    %1964 = vmatmul.mubr.f32.gmra.mrb[0].mxu0 %v1588
    %v1965 = vpop.f32.mrb[0].mxu0
    %v1966 = vadd.f32 0.0, %v1965
    %v1967 = vpop.f32.mrb[0].mxu0
    %1968 = vmatprep.mubr.f32.mxu0 0.0
    %1969 = vmatmul.mubr.f32.gmra.mrb[0].mxu0 %v1591
    %v1970 = vpop.f32.mrb[0].mxu0
    %v1971 = vadd.f32 0.0, %v1970
    %v1972 = vpop.f32.mrb[0].mxu0
    %1973 = vmatprep.mubr.f32.mxu0 0.0
    %1974 = vmatmul.mubr.f32.gmra.mrb[0].mxu0 %v1594
    %v1975 = vpop.f32.mrb[0].mxu0
    %v1976 = vadd.f32 0.0, %v1975
    %v1977 = vpop.f32.mrb[0].mxu0
    %1978 = vmatprep.mubr.f32.mxu0 0.0
    %1979 = vmatmul.mubr.f32.gmra.mrb[0].mxu0 %v1597
    %v1980 = vpop.f32.mrb[0].mxu0
    %v1981 = vadd.f32 0.0, %v1980
    %v1982 = vpop.f32.mrb[0].mxu0
    %1983 = vdwg.mxu0
    %v1984 = vadd.f32 %v1023, %v1666
    %v1985 = vadd.f32 %v1028, %v1671
    %v1986 = vadd.f32 %v1033, %v1676
    %v1987 = vadd.f32 %v1038, %v1681
    %v1988 = vadd.f32 %v1043, %v1686
    %v1989 = vadd.f32 %v1048, %v1691
    %v1990 = vadd.f32 %v1053, %v1696
    %v1991 = vadd.f32 %v1058, %v1701
    %v1992 = vadd.f32 %v1063, %v1706
    %v1993 = vadd.f32 %v1068, %v1711
    %v1994 = vadd.f32 %v1073, %v1716
    %v1995 = vadd.f32 %v1078, %v1721
    %v1996 = vadd.f32 %v1083, %v1726
    %v1997 = vadd.f32 %v1088, %v1731
    %v1998 = vadd.f32 %v1093, %v1736
    %v1999 = vadd.f32 %v1098, %v1741
    %v2000 = vadd.f32 %v1103, %v1746
    %v2001 = vadd.f32 %v1108, %v1751
    %v2002 = vadd.f32 %v1113, %v1756
    %v2003 = vadd.f32 %v1118, %v1761
    %v2004 = vadd.f32 %v1123, %v1766
    %v2005 = vadd.f32 %v1128, %v1771
    %v2006 = vadd.f32 %v1133, %v1776
    %v2007 = vadd.f32 %v1138, %v1781
    %v2008 = vadd.f32 %v1143, %v1786
    %v2009 = vadd.f32 %v1148, %v1791
    %v2010 = vadd.f32 %v1153, %v1796
    %v2011 = vadd.f32 %v1158, %v1801
    %v2012 = vadd.f32 %v1163, %v1806
    %v2013 = vadd.f32 %v1168, %v1811
    %v2014 = vadd.f32 %v1173, %v1816
    %v2015 = vadd.f32 %v1178, %v1821
    %v2016 = vadd.f32 %v1183, %v1826
    %v2017 = vadd.f32 %v1188, %v1831
    %v2018 = vadd.f32 %v1193, %v1836
    %v2019 = vadd.f32 %v1198, %v1841
    %v2020 = vadd.f32 %v1203, %v1846
    %v2021 = vadd.f32 %v1208, %v1851
    %v2022 = vadd.f32 %v1213, %v1856
    %v2023 = vadd.f32 %v1218, %v1861
    %v2024 = vadd.f32 %v1223, %v1866
    %v2025 = vadd.f32 %v1228, %v1871
    %v2026 = vadd.f32 %v1233, %v1876
    %v2027 = vadd.f32 %v1238, %v1881
    %v2028 = vadd.f32 %v1243, %v1886
    %v2029 = vadd.f32 %v1248, %v1891
    %v2030 = vadd.f32 %v1253, %v1896
    %v2031 = vadd.f32 %v1258, %v1901
    %v2032 = vadd.f32 %v1263, %v1906
    %v2033 = vadd.f32 %v1268, %v1911
    %v2034 = vadd.f32 %v1273, %v1916
    %v2035 = vadd.f32 %v1278, %v1921
    %v2036 = vadd.f32 %v1283, %v1926
    %v2037 = vadd.f32 %v1288, %v1931
    %v2038 = vadd.f32 %v1293, %v1936
    %v2039 = vadd.f32 %v1298, %v1941
    %v2040 = vadd.f32 %v1303, %v1946
    %v2041 = vadd.f32 %v1308, %v1951
    %v2042 = vadd.f32 %v1313, %v1956
    %v2043 = vadd.f32 %v1318, %v1961
    %v2044 = vadd.f32 %v1323, %v1966
    %v2045 = vadd.f32 %v1328, %v1971
    %v2046 = vadd.f32 %v1333, %v1976
    %v2047 = vadd.f32 %v1338, %v1981
    %v2048 = vld [vmem:[%s0 + $0x10] sm:$0xff]
    %v2049 = vld [vmem:[%s0 + $0x18] sm:$0xff]
    %v2050 = vld [vmem:[%s0 + $0x20] sm:$0xff]
    %v2051 = vld [vmem:[%s0 + $0x28] sm:$0xff]
    %v2052 = vld [vmem:[%s0 + $0x30] sm:$0xff]
    %v2053 = vld [vmem:[%s0 + $0x38] sm:$0xff]
    %v2054 = vld [vmem:[%s0 + $0x40] sm:$0xff]
    %v2055 = vld [vmem:[%s0 + $0x48] sm:$0xff]
    %v2056 = vld [vmem:[%s0 + $0x50] sm:$0xff]
    %v2057 = vld [vmem:[%s0 + $0x58] sm:$0xff]
    %v2058 = vld [vmem:[%s0 + $0x60] sm:$0xff]
    %v2059 = vld [vmem:[%s0 + $0x68] sm:$0xff]
    %v2060 = vld [vmem:[%s0 + $0x70] sm:$0xff]
    %v2061 = vld [vmem:[%s0 + $0x78] sm:$0xff]
    %v2062 = vld [vmem:[%s0 + $0x80] sm:$0xff]
    %v2063 = vld [vmem:[%s0 + $0x88] sm:$0xff]
    %v2064 = vld [vmem:[%s0 + $0x90] sm:$0xff]
    %v2065 = vld [vmem:[%s0 + $0x98] sm:$0xff]
    %v2066 = vld [vmem:[%s0 + $0xa0] sm:$0xff]
    %v2067 = vld [vmem:[%s0 + $0xa8] sm:$0xff]
    %v2068 = vld [vmem:[%s0 + $0xb0] sm:$0xff]
    %v2069 = vld [vmem:[%s0 + $0xb8] sm:$0xff]
    %v2070 = vld [vmem:[%s0 + $0xc0] sm:$0xff]
    %v2071 = vld [vmem:[%s0 + $0xc8] sm:$0xff]
    %v2072 = vld [vmem:[%s0 + $0xd0] sm:$0xff]
    %v2073 = vld [vmem:[%s0 + $0xd8] sm:$0xff]
    %v2074 = vld [vmem:[%s0 + $0xe0] sm:$0xff]
    %v2075 = vld [vmem:[%s0 + $0xe8] sm:$0xff]
    %v2076 = vld [vmem:[%s0 + $0xf0] sm:$0xff]
    %v2077 = vld [vmem:[%s0 + $0xf8] sm:$0xff]
    %v2078 = vld [vmem:[%s0 + $0x100] sm:$0xff]
    %v2079 = vld [vmem:[%s0 + $0x108] sm:$0xff]
    %v2080 = vld [vmem:[%s0 + $0x110] sm:$0xff]
    %v2081 = vld [vmem:[%s0 + $0x118] sm:$0xff]
    %v2082 = vld [vmem:[%s0 + $0x120] sm:$0xff]
    %v2083 = vld [vmem:[%s0 + $0x128] sm:$0xff]
    %v2084 = vld [vmem:[%s0 + $0x130] sm:$0xff]
    %v2085 = vld [vmem:[%s0 + $0x138] sm:$0xff]
    %v2086 = vld [vmem:[%s0 + $0x140] sm:$0xff]
    %v2087 = vld [vmem:[%s0 + $0x148] sm:$0xff]
    %v2088 = vld [vmem:[%s0 + $0x150] sm:$0xff]
    %v2089 = vld [vmem:[%s0 + $0x158] sm:$0xff]
    %v2090 = vld [vmem:[%s0 + $0x160] sm:$0xff]
    %v2091 = vld [vmem:[%s0 + $0x168] sm:$0xff]
    %v2092 = vld [vmem:[%s0 + $0x170] sm:$0xff]
    %v2093 = vld [vmem:[%s0 + $0x178] sm:$0xff]
    %v2094 = vld [vmem:[%s0 + $0x180] sm:$0xff]
    %v2095 = vld [vmem:[%s0 + $0x188] sm:$0xff]
    %v2096 = vld [vmem:[%s0 + $0x190] sm:$0xff]
    %v2097 = vld [vmem:[%s0 + $0x198] sm:$0xff]
    %v2098 = vld [vmem:[%s0 + $0x1a0] sm:$0xff]
    %v2099 = vld [vmem:[%s0 + $0x1a8] sm:$0xff]
    %v2100 = vld [vmem:[%s0 + $0x1b0] sm:$0xff]
    %v2101 = vld [vmem:[%s0 + $0x1b8] sm:$0xff]
    %v2102 = vld [vmem:[%s0 + $0x1c0] sm:$0xff]
    %v2103 = vld [vmem:[%s0 + $0x1c8] sm:$0xff]
    %v2104 = vld [vmem:[%s0 + $0x1d0] sm:$0xff]
    %v2105 = vld [vmem:[%s0 + $0x1d8] sm:$0xff]
    %v2106 = vld [vmem:[%s0 + $0x1e0] sm:$0xff]
    %v2107 = vld [vmem:[%s0 + $0x1e8] sm:$0xff]
    %v2108 = vld [vmem:[%s0 + $0x1f0] sm:$0xff]
    %v2109 = vld [vmem:[%s0 + $0x1f8] sm:$0xff]
    %v2110 = vld [vmem:[%s0 + $0x200] sm:$0xff]
    %v2111 = vld [vmem:[%s0 + $0x208] sm:$0xff]
    %s2112 = scalar_lea.vmem %s1, 24
    %v2113 = vld [vmem:[%s2112] sm:$0xff]
    %v2115 = vsel %vm186, %v2048, 0
    %v2118 = vsel %vm186, %v2049, 0
    %v2121 = vsel %vm186, %v2050, 0
    %v2124 = vsel %vm186, %v2051, 0
    %v2127 = vsel %vm186, %v2052, 0
    %v2130 = vsel %vm186, %v2053, 0
    %v2133 = vsel %vm186, %v2054, 0
    %v2136 = vsel %vm186, %v2055, 0
    %v2139 = vsel %vm186, %v2056, 0
    %v2142 = vsel %vm186, %v2057, 0
    %v2145 = vsel %vm186, %v2058, 0
    %v2148 = vsel %vm186, %v2059, 0
    %v2151 = vsel %vm186, %v2060, 0
    %v2154 = vsel %vm186, %v2061, 0
    %v2157 = vsel %vm186, %v2062, 0
    %v2160 = vsel %vm186, %v2063, 0
    %v2163 = vsel %vm186, %v2064, 0
    %v2166 = vsel %vm186, %v2065, 0
    %v2169 = vsel %vm186, %v2066, 0
    %v2172 = vsel %vm186, %v2067, 0
    %v2175 = vsel %vm186, %v2068, 0
    %v2178 = vsel %vm186, %v2069, 0
    %v2181 = vsel %vm186, %v2070, 0
    %v2184 = vsel %vm186, %v2071, 0
    %v2187 = vsel %vm186, %v2072, 0
    %v2190 = vsel %vm186, %v2073, 0
    %v2193 = vsel %vm186, %v2074, 0
    %v2196 = vsel %vm186, %v2075, 0
    %v2199 = vsel %vm186, %v2076, 0
    %v2202 = vsel %vm186, %v2077, 0
    %v2205 = vsel %vm186, %v2078, 0
    %v2208 = vsel %vm186, %v2079, 0
    %v2211 = vsel %vm186, %v2080, 0
    %v2214 = vsel %vm186, %v2081, 0
    %v2217 = vsel %vm186, %v2082, 0
    %v2220 = vsel %vm186, %v2083, 0
    %v2223 = vsel %vm186, %v2084, 0
    %v2226 = vsel %vm186, %v2085, 0
    %v2229 = vsel %vm186, %v2086, 0
    %v2232 = vsel %vm186, %v2087, 0
    %v2235 = vsel %vm186, %v2088, 0
    %v2238 = vsel %vm186, %v2089, 0
    %v2241 = vsel %vm186, %v2090, 0
    %v2244 = vsel %vm186, %v2091, 0
    %v2247 = vsel %vm186, %v2092, 0
    %v2250 = vsel %vm186, %v2093, 0
    %v2253 = vsel %vm186, %v2094, 0
    %v2256 = vsel %vm186, %v2095, 0
    %v2259 = vsel %vm186, %v2096, 0
    %v2262 = vsel %vm186, %v2097, 0
    %v2265 = vsel %vm186, %v2098, 0
    %v2268 = vsel %vm186, %v2099, 0
    %v2271 = vsel %vm186, %v2100, 0
    %v2274 = vsel %vm186, %v2101, 0
    %v2277 = vsel %vm186, %v2102, 0
    %v2280 = vsel %vm186, %v2103, 0
    %v2283 = vsel %vm186, %v2104, 0
    %v2286 = vsel %vm186, %v2105, 0
    %v2289 = vsel %vm186, %v2106, 0
    %v2292 = vsel %vm186, %v2107, 0
    %v2295 = vsel %vm186, %v2108, 0
    %v2298 = vsel %vm186, %v2109, 0
    %v2301 = vsel %vm186, %v2110, 0
    %v2304 = vsel %vm186, %v2111, 0
    %2306 = vmatprep.subr.mxu0 0.0
    %2307 = vmatpush1.msra.mxu0 %v2113
    %2308 = vmatprep.subr.mxu0 0.0
    %2309 = vmatpush1.msra.mxu0 0.0
    %2310 = vmatprep.subr.mxu0 0.0
    %2311 = vmatpush1.msra.mxu0 0.0
    %2312 = vmatprep.subr.mxu0 0.0
    %2313 = vmatpush1.msra.mxu0 0.0
    %2314 = vmatprep.subr.mxu0 0.0
    %2315 = vmatpush1.msra.mxu0 0.0
    %2316 = vmatprep.subr.mxu0 0.0
    %2317 = vmatpush1.msra.mxu0 0.0
    %2318 = vmatprep.subr.mxu0 0.0
    %2319 = vmatpush1.msra.mxu0 0.0
    %2320 = vmatprep.subr.mxu0 0.0
    %2321 = vmatpush1.msra.mxu0 0.0
    %2322 = vmatprep.subr.mxu0 0.0
    %2323 = vmatpush1.msra.mxu0 0.0
    %2324 = vmatprep.subr.mxu0 0.0
    %2325 = vmatpush1.msra.mxu0 0.0
    %2326 = vmatprep.subr.mxu0 0.0
    %2327 = vmatpush1.msra.mxu0 0.0
    %2328 = vmatprep.subr.mxu0 0.0
    %2329 = vmatpush1.msra.mxu0 0.0
    %2330 = vmatprep.subr.mxu0 0.0
    %2331 = vmatpush1.msra.mxu0 0.0
    %2332 = vmatprep.subr.mxu0 0.0
    %2333 = vmatpush1.msra.mxu0 0.0
    %2334 = vmatprep.subr.mxu0 0.0
    %2335 = vmatpush1.msra.mxu0 0.0
    %2336 = vmatprep.subr.mxu0 0.0
    %2337 = vmatpush1.msra.mxu0 0.0
    %2338 = vmatprep.subr.mxu0 0.0
    %2339 = vmatpush1.msra.mxu0 0.0
    %2340 = vmatprep.subr.mxu0 0.0
    %2341 = vmatpush1.msra.mxu0 0.0
    %2342 = vmatprep.subr.mxu0 0.0
    %2343 = vmatpush1.msra.mxu0 0.0
    %2344 = vmatprep.subr.mxu0 0.0
    %2345 = vmatpush1.msra.mxu0 0.0
    %2346 = vmatprep.subr.mxu0 0.0
    %2347 = vmatpush1.msra.mxu0 0.0
    %2348 = vmatprep.subr.mxu0 0.0
    %2349 = vmatpush1.msra.mxu0 0.0
    %2350 = vmatprep.subr.mxu0 0.0
    %2351 = vmatpush1.msra.mxu0 0.0
    %2352 = vmatprep.subr.mxu0 0.0
    %2353 = vmatpush1.msra.mxu0 0.0
    %2354 = vmatprep.subr.mxu0 0.0
    %2355 = vmatpush1.msra.mxu0 0.0
    %2356 = vmatprep.subr.mxu0 0.0
    %2357 = vmatpush1.msra.mxu0 0.0
    %2358 = vmatprep.subr.mxu0 0.0
    %2359 = vmatpush1.msra.mxu0 0.0
    %2360 = vmatprep.subr.mxu0 0.0
    %2361 = vmatpush1.msra.mxu0 0.0
    %2362 = vmatprep.subr.mxu0 0.0
    %2363 = vmatpush1.msra.mxu0 0.0
    %2364 = vmatprep.subr.mxu0 0.0
    %2365 = vmatpush1.msra.mxu0 0.0
    %2366 = vmatprep.subr.mxu0 0.0
    %2367 = vmatpush1.msra.mxu0 0.0
    %2368 = vmatprep.subr.mxu0 0.0
    %2369 = vmatpush1.msra.mxu0 0.0
    %2370 = vmatprep.mubr.f32.mxu0 0.0
    %2371 = vmatmul.mubr.f32.gmra.mrb[0].mxu0 %v2115
    %v2372 = vpop.f32.mrb[0].mxu0
    %v2373 = vadd.f32 0.0, %v2372
    %v2374 = vpop.f32.mrb[0].mxu0
    %2375 = vmatprep.mubr.f32.mxu0 0.0
    %2376 = vmatmul.mubr.f32.gmra.mrb[0].mxu0 %v2118
    %v2377 = vpop.f32.mrb[0].mxu0
    %v2378 = vadd.f32 0.0, %v2377
    %v2379 = vpop.f32.mrb[0].mxu0
    %2380 = vmatprep.mubr.f32.mxu0 0.0
    %2381 = vmatmul.mubr.f32.gmra.mrb[0].mxu0 %v2121
    %v2382 = vpop.f32.mrb[0].mxu0
    %v2383 = vadd.f32 0.0, %v2382
    %v2384 = vpop.f32.mrb[0].mxu0
    %2385 = vmatprep.mubr.f32.mxu0 0.0
    %2386 = vmatmul.mubr.f32.gmra.mrb[0].mxu0 %v2124
    %v2387 = vpop.f32.mrb[0].mxu0
    %v2388 = vadd.f32 0.0, %v2387
    %v2389 = vpop.f32.mrb[0].mxu0
    %2390 = vmatprep.mubr.f32.mxu0 0.0
    %2391 = vmatmul.mubr.f32.gmra.mrb[0].mxu0 %v2127
    %v2392 = vpop.f32.mrb[0].mxu0
    %v2393 = vadd.f32 0.0, %v2392
    %v2394 = vpop.f32.mrb[0].mxu0
    %2395 = vmatprep.mubr.f32.mxu0 0.0
    %2396 = vmatmul.mubr.f32.gmra.mrb[0].mxu0 %v2130
    %v2397 = vpop.f32.mrb[0].mxu0
    %v2398 = vadd.f32 0.0, %v2397
    %v2399 = vpop.f32.mrb[0].mxu0
    %2400 = vmatprep.mubr.f32.mxu0 0.0
    %2401 = vmatmul.mubr.f32.gmra.mrb[0].mxu0 %v2133
    %v2402 = vpop.f32.mrb[0].mxu0
    %v2403 = vadd.f32 0.0, %v2402
    %v2404 = vpop.f32.mrb[0].mxu0
    %2405 = vmatprep.mubr.f32.mxu0 0.0
    %2406 = vmatmul.mubr.f32.gmra.mrb[0].mxu0 %v2136
    %v2407 = vpop.f32.mrb[0].mxu0
    %v2408 = vadd.f32 0.0, %v2407
    %v2409 = vpop.f32.mrb[0].mxu0
    %2410 = vmatprep.mubr.f32.mxu0 0.0
    %2411 = vmatmul.mubr.f32.gmra.mrb[0].mxu0 %v2139
    %v2412 = vpop.f32.mrb[0].mxu0
    %v2413 = vadd.f32 0.0, %v2412
    %v2414 = vpop.f32.mrb[0].mxu0
    %2415 = vmatprep.mubr.f32.mxu0 0.0
    %2416 = vmatmul.mubr.f32.gmra.mrb[0].mxu0 %v2142
    %v2417 = vpop.f32.mrb[0].mxu0
    %v2418 = vadd.f32 0.0, %v2417
    %v2419 = vpop.f32.mrb[0].mxu0
    %2420 = vmatprep.mubr.f32.mxu0 0.0
    %2421 = vmatmul.mubr.f32.gmra.mrb[0].mxu0 %v2145
    %v2422 = vpop.f32.mrb[0].mxu0
    %v2423 = vadd.f32 0.0, %v2422
    %v2424 = vpop.f32.mrb[0].mxu0
    %2425 = vmatprep.mubr.f32.mxu0 0.0
    %2426 = vmatmul.mubr.f32.gmra.mrb[0].mxu0 %v2148
    %v2427 = vpop.f32.mrb[0].mxu0
    %v2428 = vadd.f32 0.0, %v2427
    %v2429 = vpop.f32.mrb[0].mxu0
    %2430 = vmatprep.mubr.f32.mxu0 0.0
    %2431 = vmatmul.mubr.f32.gmra.mrb[0].mxu0 %v2151
    %v2432 = vpop.f32.mrb[0].mxu0
    %v2433 = vadd.f32 0.0, %v2432
    %v2434 = vpop.f32.mrb[0].mxu0
    %2435 = vmatprep.mubr.f32.mxu0 0.0
    %2436 = vmatmul.mubr.f32.gmra.mrb[0].mxu0 %v2154
    %v2437 = vpop.f32.mrb[0].mxu0
    %v2438 = vadd.f32 0.0, %v2437
    %v2439 = vpop.f32.mrb[0].mxu0
    %2440 = vmatprep.mubr.f32.mxu0 0.0
    %2441 = vmatmul.mubr.f32.gmra.mrb[0].mxu0 %v2157
    %v2442 = vpop.f32.mrb[0].mxu0
    %v2443 = vadd.f32 0.0, %v2442
    %v2444 = vpop.f32.mrb[0].mxu0
    %2445 = vmatprep.mubr.f32.mxu0 0.0
    %2446 = vmatmul.mubr.f32.gmra.mrb[0].mxu0 %v2160
    %v2447 = vpop.f32.mrb[0].mxu0
    %v2448 = vadd.f32 0.0, %v2447
    %v2449 = vpop.f32.mrb[0].mxu0
    %2450 = vmatprep.mubr.f32.mxu0 0.0
    %2451 = vmatmul.mubr.f32.gmra.mrb[0].mxu0 %v2163
    %v2452 = vpop.f32.mrb[0].mxu0
    %v2453 = vadd.f32 0.0, %v2452
    %v2454 = vpop.f32.mrb[0].mxu0
    %2455 = vmatprep.mubr.f32.mxu0 0.0
    %2456 = vmatmul.mubr.f32.gmra.mrb[0].mxu0 %v2166
    %v2457 = vpop.f32.mrb[0].mxu0
    %v2458 = vadd.f32 0.0, %v2457
    %v2459 = vpop.f32.mrb[0].mxu0
    %2460 = vmatprep.mubr.f32.mxu0 0.0
    %2461 = vmatmul.mubr.f32.gmra.mrb[0].mxu0 %v2169
    %v2462 = vpop.f32.mrb[0].mxu0
    %v2463 = vadd.f32 0.0, %v2462
    %v2464 = vpop.f32.mrb[0].mxu0
    %2465 = vmatprep.mubr.f32.mxu0 0.0
    %2466 = vmatmul.mubr.f32.gmra.mrb[0].mxu0 %v2172
    %v2467 = vpop.f32.mrb[0].mxu0
    %v2468 = vadd.f32 0.0, %v2467
    %v2469 = vpop.f32.mrb[0].mxu0
    %2470 = vmatprep.mubr.f32.mxu0 0.0
    %2471 = vmatmul.mubr.f32.gmra.mrb[0].mxu0 %v2175
    %v2472 = vpop.f32.mrb[0].mxu0
    %v2473 = vadd.f32 0.0, %v2472
    %v2474 = vpop.f32.mrb[0].mxu0
    %2475 = vmatprep.mubr.f32.mxu0 0.0
    %2476 = vmatmul.mubr.f32.gmra.mrb[0].mxu0 %v2178
    %v2477 = vpop.f32.mrb[0].mxu0
    %v2478 = vadd.f32 0.0, %v2477
    %v2479 = vpop.f32.mrb[0].mxu0
    %2480 = vmatprep.mubr.f32.mxu0 0.0
    %2481 = vmatmul.mubr.f32.gmra.mrb[0].mxu0 %v2181
    %v2482 = vpop.f32.mrb[0].mxu0
    %v2483 = vadd.f32 0.0, %v2482
    %v2484 = vpop.f32.mrb[0].mxu0
    %2485 = vmatprep.mubr.f32.mxu0 0.0
    %2486 = vmatmul.mubr.f32.gmra.mrb[0].mxu0 %v2184
    %v2487 = vpop.f32.mrb[0].mxu0
    %v2488 = vadd.f32 0.0, %v2487
    %v2489 = vpop.f32.mrb[0].mxu0
    %2490 = vmatprep.mubr.f32.mxu0 0.0
    %2491 = vmatmul.mubr.f32.gmra.mrb[0].mxu0 %v2187
    %v2492 = vpop.f32.mrb[0].mxu0
    %v2493 = vadd.f32 0.0, %v2492
    %v2494 = vpop.f32.mrb[0].mxu0
    %2495 = vmatprep.mubr.f32.mxu0 0.0
    %2496 = vmatmul.mubr.f32.gmra.mrb[0].mxu0 %v2190
    %v2497 = vpop.f32.mrb[0].mxu0
    %v2498 = vadd.f32 0.0, %v2497
    %v2499 = vpop.f32.mrb[0].mxu0
    %2500 = vmatprep.mubr.f32.mxu0 0.0
    %2501 = vmatmul.mubr.f32.gmra.mrb[0].mxu0 %v2193
    %v2502 = vpop.f32.mrb[0].mxu0
    %v2503 = vadd.f32 0.0, %v2502
    %v2504 = vpop.f32.mrb[0].mxu0
    %2505 = vmatprep.mubr.f32.mxu0 0.0
    %2506 = vmatmul.mubr.f32.gmra.mrb[0].mxu0 %v2196
    %v2507 = vpop.f32.mrb[0].mxu0
    %v2508 = vadd.f32 0.0, %v2507
    %v2509 = vpop.f32.mrb[0].mxu0
    %2510 = vmatprep.mubr.f32.mxu0 0.0
    %2511 = vmatmul.mubr.f32.gmra.mrb[0].mxu0 %v2199
    %v2512 = vpop.f32.mrb[0].mxu0
    %v2513 = vadd.f32 0.0, %v2512
    %v2514 = vpop.f32.mrb[0].mxu0
    %2515 = vmatprep.mubr.f32.mxu0 0.0
    %2516 = vmatmul.mubr.f32.gmra.mrb[0].mxu0 %v2202
    %v2517 = vpop.f32.mrb[0].mxu0
    %v2518 = vadd.f32 0.0, %v2517
    %v2519 = vpop.f32.mrb[0].mxu0
    %2520 = vmatprep.mubr.f32.mxu0 0.0
    %2521 = vmatmul.mubr.f32.gmra.mrb[0].mxu0 %v2205
    %v2522 = vpop.f32.mrb[0].mxu0
    %v2523 = vadd.f32 0.0, %v2522
    %v2524 = vpop.f32.mrb[0].mxu0
    %2525 = vmatprep.mubr.f32.mxu0 0.0
    %2526 = vmatmul.mubr.f32.gmra.mrb[0].mxu0 %v2208
    %v2527 = vpop.f32.mrb[0].mxu0
    %v2528 = vadd.f32 0.0, %v2527
    %v2529 = vpop.f32.mrb[0].mxu0
    %2530 = vmatprep.mubr.f32.mxu0 0.0
    %2531 = vmatmul.mubr.f32.gmra.mrb[0].mxu0 %v2211
    %v2532 = vpop.f32.mrb[0].mxu0
    %v2533 = vadd.f32 0.0, %v2532
    %v2534 = vpop.f32.mrb[0].mxu0
    %2535 = vmatprep.mubr.f32.mxu0 0.0
    %2536 = vmatmul.mubr.f32.gmra.mrb[0].mxu0 %v2214
    %v2537 = vpop.f32.mrb[0].mxu0
    %v2538 = vadd.f32 0.0, %v2537
    %v2539 = vpop.f32.mrb[0].mxu0
    %2540 = vmatprep.mubr.f32.mxu0 0.0
    %2541 = vmatmul.mubr.f32.gmra.mrb[0].mxu0 %v2217
    %v2542 = vpop.f32.mrb[0].mxu0
    %v2543 = vadd.f32 0.0, %v2542
    %v2544 = vpop.f32.mrb[0].mxu0
    %2545 = vmatprep.mubr.f32.mxu0 0.0
    %2546 = vmatmul.mubr.f32.gmra.mrb[0].mxu0 %v2220
    %v2547 = vpop.f32.mrb[0].mxu0
    %v2548 = vadd.f32 0.0, %v2547
    %v2549 = vpop.f32.mrb[0].mxu0
    %2550 = vmatprep.mubr.f32.mxu0 0.0
    %2551 = vmatmul.mubr.f32.gmra.mrb[0].mxu0 %v2223
    %v2552 = vpop.f32.mrb[0].mxu0
    %v2553 = vadd.f32 0.0, %v2552
    %v2554 = vpop.f32.mrb[0].mxu0
    %2555 = vmatprep.mubr.f32.mxu0 0.0
    %2556 = vmatmul.mubr.f32.gmra.mrb[0].mxu0 %v2226
    %v2557 = vpop.f32.mrb[0].mxu0
    %v2558 = vadd.f32 0.0, %v2557
    %v2559 = vpop.f32.mrb[0].mxu0
    %2560 = vmatprep.mubr.f32.mxu0 0.0
    %2561 = vmatmul.mubr.f32.gmra.mrb[0].mxu0 %v2229
    %v2562 = vpop.f32.mrb[0].mxu0
    %v2563 = vadd.f32 0.0, %v2562
    %v2564 = vpop.f32.mrb[0].mxu0
    %2565 = vmatprep.mubr.f32.mxu0 0.0
    %2566 = vmatmul.mubr.f32.gmra.mrb[0].mxu0 %v2232
    %v2567 = vpop.f32.mrb[0].mxu0
    %v2568 = vadd.f32 0.0, %v2567
    %v2569 = vpop.f32.mrb[0].mxu0
    %2570 = vmatprep.mubr.f32.mxu0 0.0
    %2571 = vmatmul.mubr.f32.gmra.mrb[0].mxu0 %v2235
    %v2572 = vpop.f32.mrb[0].mxu0
    %v2573 = vadd.f32 0.0, %v2572
    %v2574 = vpop.f32.mrb[0].mxu0
    %2575 = vmatprep.mubr.f32.mxu0 0.0
    %2576 = vmatmul.mubr.f32.gmra.mrb[0].mxu0 %v2238
    %v2577 = vpop.f32.mrb[0].mxu0
    %v2578 = vadd.f32 0.0, %v2577
    %v2579 = vpop.f32.mrb[0].mxu0
    %2580 = vmatprep.mubr.f32.mxu0 0.0
    %2581 = vmatmul.mubr.f32.gmra.mrb[0].mxu0 %v2241
    %v2582 = vpop.f32.mrb[0].mxu0
    %v2583 = vadd.f32 0.0, %v2582
    %v2584 = vpop.f32.mrb[0].mxu0
    %2585 = vmatprep.mubr.f32.mxu0 0.0
    %2586 = vmatmul.mubr.f32.gmra.mrb[0].mxu0 %v2244
    %v2587 = vpop.f32.mrb[0].mxu0
    %v2588 = vadd.f32 0.0, %v2587
    %v2589 = vpop.f32.mrb[0].mxu0
    %2590 = vmatprep.mubr.f32.mxu0 0.0
    %2591 = vmatmul.mubr.f32.gmra.mrb[0].mxu0 %v2247
    %v2592 = vpop.f32.mrb[0].mxu0
    %v2593 = vadd.f32 0.0, %v2592
    %v2594 = vpop.f32.mrb[0].mxu0
    %2595 = vmatprep.mubr.f32.mxu0 0.0
    %2596 = vmatmul.mubr.f32.gmra.mrb[0].mxu0 %v2250
    %v2597 = vpop.f32.mrb[0].mxu0
    %v2598 = vadd.f32 0.0, %v2597
    %v2599 = vpop.f32.mrb[0].mxu0
    %2600 = vmatprep.mubr.f32.mxu0 0.0
    %2601 = vmatmul.mubr.f32.gmra.mrb[0].mxu0 %v2253
    %v2602 = vpop.f32.mrb[0].mxu0
    %v2603 = vadd.f32 0.0, %v2602
    %v2604 = vpop.f32.mrb[0].mxu0
    %2605 = vmatprep.mubr.f32.mxu0 0.0
    %2606 = vmatmul.mubr.f32.gmra.mrb[0].mxu0 %v2256
    %v2607 = vpop.f32.mrb[0].mxu0
    %v2608 = vadd.f32 0.0, %v2607
    %v2609 = vpop.f32.mrb[0].mxu0
    %2610 = vmatprep.mubr.f32.mxu0 0.0
    %2611 = vmatmul.mubr.f32.gmra.mrb[0].mxu0 %v2259
    %v2612 = vpop.f32.mrb[0].mxu0
    %v2613 = vadd.f32 0.0, %v2612
    %v2614 = vpop.f32.mrb[0].mxu0
    %2615 = vmatprep.mubr.f32.mxu0 0.0
    %2616 = vmatmul.mubr.f32.gmra.mrb[0].mxu0 %v2262
    %v2617 = vpop.f32.mrb[0].mxu0
    %v2618 = vadd.f32 0.0, %v2617
    %v2619 = vpop.f32.mrb[0].mxu0
    %2620 = vmatprep.mubr.f32.mxu0 0.0
    %2621 = vmatmul.mubr.f32.gmra.mrb[0].mxu0 %v2265
    %v2622 = vpop.f32.mrb[0].mxu0
    %v2623 = vadd.f32 0.0, %v2622
    %v2624 = vpop.f32.mrb[0].mxu0
    %2625 = vmatprep.mubr.f32.mxu0 0.0
    %2626 = vmatmul.mubr.f32.gmra.mrb[0].mxu0 %v2268
    %v2627 = vpop.f32.mrb[0].mxu0
    %v2628 = vadd.f32 0.0, %v2627
    %v2629 = vpop.f32.mrb[0].mxu0
    %2630 = vmatprep.mubr.f32.mxu0 0.0
    %2631 = vmatmul.mubr.f32.gmra.mrb[0].mxu0 %v2271
    %v2632 = vpop.f32.mrb[0].mxu0
    %v2633 = vadd.f32 0.0, %v2632
    %v2634 = vpop.f32.mrb[0].mxu0
    %2635 = vmatprep.mubr.f32.mxu0 0.0
    %2636 = vmatmul.mubr.f32.gmra.mrb[0].mxu0 %v2274
    %v2637 = vpop.f32.mrb[0].mxu0
    %v2638 = vadd.f32 0.0, %v2637
    %v2639 = vpop.f32.mrb[0].mxu0
    %2640 = vmatprep.mubr.f32.mxu0 0.0
    %2641 = vmatmul.mubr.f32.gmra.mrb[0].mxu0 %v2277
    %v2642 = vpop.f32.mrb[0].mxu0
    %v2643 = vadd.f32 0.0, %v2642
    %v2644 = vpop.f32.mrb[0].mxu0
    %2645 = vmatprep.mubr.f32.mxu0 0.0
    %2646 = vmatmul.mubr.f32.gmra.mrb[0].mxu0 %v2280
    %v2647 = vpop.f32.mrb[0].mxu0
    %v2648 = vadd.f32 0.0, %v2647
    %v2649 = vpop.f32.mrb[0].mxu0
    %2650 = vmatprep.mubr.f32.mxu0 0.0
    %2651 = vmatmul.mubr.f32.gmra.mrb[0].mxu0 %v2283
    %v2652 = vpop.f32.mrb[0].mxu0
    %v2653 = vadd.f32 0.0, %v2652
    %v2654 = vpop.f32.mrb[0].mxu0
    %2655 = vmatprep.mubr.f32.mxu0 0.0
    %2656 = vmatmul.mubr.f32.gmra.mrb[0].mxu0 %v2286
    %v2657 = vpop.f32.mrb[0].mxu0
    %v2658 = vadd.f32 0.0, %v2657
    %v2659 = vpop.f32.mrb[0].mxu0
    %2660 = vmatprep.mubr.f32.mxu0 0.0
    %2661 = vmatmul.mubr.f32.gmra.mrb[0].mxu0 %v2289
    %v2662 = vpop.f32.mrb[0].mxu0
    %v2663 = vadd.f32 0.0, %v2662
    %v2664 = vpop.f32.mrb[0].mxu0
    %2665 = vmatprep.mubr.f32.mxu0 0.0
    %2666 = vmatmul.mubr.f32.gmra.mrb[0].mxu0 %v2292
    %v2667 = vpop.f32.mrb[0].mxu0
    %v2668 = vadd.f32 0.0, %v2667
    %v2669 = vpop.f32.mrb[0].mxu0
    %2670 = vmatprep.mubr.f32.mxu0 0.0
    %2671 = vmatmul.mubr.f32.gmra.mrb[0].mxu0 %v2295
    %v2672 = vpop.f32.mrb[0].mxu0
    %v2673 = vadd.f32 0.0, %v2672
    %v2674 = vpop.f32.mrb[0].mxu0
    %2675 = vmatprep.mubr.f32.mxu0 0.0
    %2676 = vmatmul.mubr.f32.gmra.mrb[0].mxu0 %v2298
    %v2677 = vpop.f32.mrb[0].mxu0
    %v2678 = vadd.f32 0.0, %v2677
    %v2679 = vpop.f32.mrb[0].mxu0
    %2680 = vmatprep.mubr.f32.mxu0 0.0
    %2681 = vmatmul.mubr.f32.gmra.mrb[0].mxu0 %v2301
    %v2682 = vpop.f32.mrb[0].mxu0
    %v2683 = vadd.f32 0.0, %v2682
    %v2684 = vpop.f32.mrb[0].mxu0
    %2685 = vmatprep.mubr.f32.mxu0 0.0
    %2686 = vmatmul.mubr.f32.gmra.mrb[0].mxu0 %v2304
    %v2687 = vpop.f32.mrb[0].mxu0
    %v2688 = vadd.f32 0.0, %v2687
    %v2689 = vpop.f32.mrb[0].mxu0
    %2690 = vdwg.mxu0
    %v2691 = vadd.f32 %v1984, %v2373
    %v2692 = vadd.f32 %v1985, %v2378
    %v2693 = vadd.f32 %v1986, %v2383
    %v2694 = vadd.f32 %v1987, %v2388
    %v2695 = vadd.f32 %v1988, %v2393
    %v2696 = vadd.f32 %v1989, %v2398
    %v2697 = vadd.f32 %v1990, %v2403
    %v2698 = vadd.f32 %v1991, %v2408
    %v2699 = vadd.f32 %v1992, %v2413
    %v2700 = vadd.f32 %v1993, %v2418
    %v2701 = vadd.f32 %v1994, %v2423
    %v2702 = vadd.f32 %v1995, %v2428
    %v2703 = vadd.f32 %v1996, %v2433
    %v2704 = vadd.f32 %v1997, %v2438
    %v2705 = vadd.f32 %v1998, %v2443
    %v2706 = vadd.f32 %v1999, %v2448
    %v2707 = vadd.f32 %v2000, %v2453
    %v2708 = vadd.f32 %v2001, %v2458
    %v2709 = vadd.f32 %v2002, %v2463
    %v2710 = vadd.f32 %v2003, %v2468
    %v2711 = vadd.f32 %v2004, %v2473
    %v2712 = vadd.f32 %v2005, %v2478
    %v2713 = vadd.f32 %v2006, %v2483
    %v2714 = vadd.f32 %v2007, %v2488
    %v2715 = vadd.f32 %v2008, %v2493
    %v2716 = vadd.f32 %v2009, %v2498
    %v2717 = vadd.f32 %v2010, %v2503
    %v2718 = vadd.f32 %v2011, %v2508
    %v2719 = vadd.f32 %v2012, %v2513
    %v2720 = vadd.f32 %v2013, %v2518
    %v2721 = vadd.f32 %v2014, %v2523
    %v2722 = vadd.f32 %v2015, %v2528
    %v2723 = vadd.f32 %v2016, %v2533
    %v2724 = vadd.f32 %v2017, %v2538
    %v2725 = vadd.f32 %v2018, %v2543
    %v2726 = vadd.f32 %v2019, %v2548
    %v2727 = vadd.f32 %v2020, %v2553
    %v2728 = vadd.f32 %v2021, %v2558
    %v2729 = vadd.f32 %v2022, %v2563
    %v2730 = vadd.f32 %v2023, %v2568
    %v2731 = vadd.f32 %v2024, %v2573
    %v2732 = vadd.f32 %v2025, %v2578
    %v2733 = vadd.f32 %v2026, %v2583
    %v2734 = vadd.f32 %v2027, %v2588
    %v2735 = vadd.f32 %v2028, %v2593
    %v2736 = vadd.f32 %v2029, %v2598
    %v2737 = vadd.f32 %v2030, %v2603
    %v2738 = vadd.f32 %v2031, %v2608
    %v2739 = vadd.f32 %v2032, %v2613
    %v2740 = vadd.f32 %v2033, %v2618
    %v2741 = vadd.f32 %v2034, %v2623
    %v2742 = vadd.f32 %v2035, %v2628
    %v2743 = vadd.f32 %v2036, %v2633
    %v2744 = vadd.f32 %v2037, %v2638
    %v2745 = vadd.f32 %v2038, %v2643
    %v2746 = vadd.f32 %v2039, %v2648
    %v2747 = vadd.f32 %v2040, %v2653
    %v2748 = vadd.f32 %v2041, %v2658
    %v2749 = vadd.f32 %v2042, %v2663
    %v2750 = vadd.f32 %v2043, %v2668
    %v2751 = vadd.f32 %v2044, %v2673
    %v2752 = vadd.f32 %v2045, %v2678
    %v2753 = vadd.f32 %v2046, %v2683
    %v2754 = vadd.f32 %v2047, %v2688
    %v2755 = vld [vmem:[%s0 + $0x11] sm:$0xff]
    %v2756 = vld [vmem:[%s0 + $0x19] sm:$0xff]
    %v2757 = vld [vmem:[%s0 + $0x21] sm:$0xff]
    %v2758 = vld [vmem:[%s0 + $0x29] sm:$0xff]
    %v2759 = vld [vmem:[%s0 + $0x31] sm:$0xff]
    %v2760 = vld [vmem:[%s0 + $0x39] sm:$0xff]
    %v2761 = vld [vmem:[%s0 + $0x41] sm:$0xff]
    %v2762 = vld [vmem:[%s0 + $0x49] sm:$0xff]
    %v2763 = vld [vmem:[%s0 + $0x51] sm:$0xff]
    %v2764 = vld [vmem:[%s0 + $0x59] sm:$0xff]
    %v2765 = vld [vmem:[%s0 + $0x61] sm:$0xff]
    %v2766 = vld [vmem:[%s0 + $0x69] sm:$0xff]
    %v2767 = vld [vmem:[%s0 + $0x71] sm:$0xff]
    %v2768 = vld [vmem:[%s0 + $0x79] sm:$0xff]
    %v2769 = vld [vmem:[%s0 + $0x81] sm:$0xff]
    %v2770 = vld [vmem:[%s0 + $0x89] sm:$0xff]
    %v2771 = vld [vmem:[%s0 + $0x91] sm:$0xff]
    %v2772 = vld [vmem:[%s0 + $0x99] sm:$0xff]
    %v2773 = vld [vmem:[%s0 + $0xa1] sm:$0xff]
    %v2774 = vld [vmem:[%s0 + $0xa9] sm:$0xff]
    %v2775 = vld [vmem:[%s0 + $0xb1] sm:$0xff]
    %v2776 = vld [vmem:[%s0 + $0xb9] sm:$0xff]
    %v2777 = vld [vmem:[%s0 + $0xc1] sm:$0xff]
    %v2778 = vld [vmem:[%s0 + $0xc9] sm:$0xff]
    %v2779 = vld [vmem:[%s0 + $0xd1] sm:$0xff]
    %v2780 = vld [vmem:[%s0 + $0xd9] sm:$0xff]
    %v2781 = vld [vmem:[%s0 + $0xe1] sm:$0xff]
    %v2782 = vld [vmem:[%s0 + $0xe9] sm:$0xff]
    %v2783 = vld [vmem:[%s0 + $0xf1] sm:$0xff]
    %v2784 = vld [vmem:[%s0 + $0xf9] sm:$0xff]
    %v2785 = vld [vmem:[%s0 + $0x101] sm:$0xff]
    %v2786 = vld [vmem:[%s0 + $0x109] sm:$0xff]
    %v2787 = vld [vmem:[%s0 + $0x111] sm:$0xff]
    %v2788 = vld [vmem:[%s0 + $0x119] sm:$0xff]
    %v2789 = vld [vmem:[%s0 + $0x121] sm:$0xff]
    %v2790 = vld [vmem:[%s0 + $0x129] sm:$0xff]
    %v2791 = vld [vmem:[%s0 + $0x131] sm:$0xff]
    %v2792 = vld [vmem:[%s0 + $0x139] sm:$0xff]
    %v2793 = vld [vmem:[%s0 + $0x141] sm:$0xff]
    %v2794 = vld [vmem:[%s0 + $0x149] sm:$0xff]
    %v2795 = vld [vmem:[%s0 + $0x151] sm:$0xff]
    %v2796 = vld [vmem:[%s0 + $0x159] sm:$0xff]
    %v2797 = vld [vmem:[%s0 + $0x161] sm:$0xff]
    %v2798 = vld [vmem:[%s0 + $0x169] sm:$0xff]
    %v2799 = vld [vmem:[%s0 + $0x171] sm:$0xff]
    %v2800 = vld [vmem:[%s0 + $0x179] sm:$0xff]
    %v2801 = vld [vmem:[%s0 + $0x181] sm:$0xff]
    %v2802 = vld [vmem:[%s0 + $0x189] sm:$0xff]
    %v2803 = vld [vmem:[%s0 + $0x191] sm:$0xff]
    %v2804 = vld [vmem:[%s0 + $0x199] sm:$0xff]
    %v2805 = vld [vmem:[%s0 + $0x1a1] sm:$0xff]
    %v2806 = vld [vmem:[%s0 + $0x1a9] sm:$0xff]
    %v2807 = vld [vmem:[%s0 + $0x1b1] sm:$0xff]
    %v2808 = vld [vmem:[%s0 + $0x1b9] sm:$0xff]
    %v2809 = vld [vmem:[%s0 + $0x1c1] sm:$0xff]
    %v2810 = vld [vmem:[%s0 + $0x1c9] sm:$0xff]
    %v2811 = vld [vmem:[%s0 + $0x1d1] sm:$0xff]
    %v2812 = vld [vmem:[%s0 + $0x1d9] sm:$0xff]
    %v2813 = vld [vmem:[%s0 + $0x1e1] sm:$0xff]
    %v2814 = vld [vmem:[%s0 + $0x1e9] sm:$0xff]
    %v2815 = vld [vmem:[%s0 + $0x1f1] sm:$0xff]
    %v2816 = vld [vmem:[%s0 + $0x1f9] sm:$0xff]
    %v2817 = vld [vmem:[%s0 + $0x201] sm:$0xff]
    %v2818 = vld [vmem:[%s0 + $0x209] sm:$0xff]
    %s2819 = scalar_lea.vmem %s1, 32
    %v2820 = vld [vmem:[%s2819] sm:$0xff]
    %v2822 = vsel %vm186, %v2755, 0
    %v2825 = vsel %vm186, %v2756, 0
    %v2828 = vsel %vm186, %v2757, 0
    %v2831 = vsel %vm186, %v2758, 0
    %v2834 = vsel %vm186, %v2759, 0
    %v2837 = vsel %vm186, %v2760, 0
    %v2840 = vsel %vm186, %v2761, 0
    %v2843 = vsel %vm186, %v2762, 0
    %v2846 = vsel %vm186, %v2763, 0
    %v2849 = vsel %vm186, %v2764, 0
    %v2852 = vsel %vm186, %v2765, 0
    %v2855 = vsel %vm186, %v2766, 0
    %v2858 = vsel %vm186, %v2767, 0
    %v2861 = vsel %vm186, %v2768, 0
    %v2864 = vsel %vm186, %v2769, 0
    %v2867 = vsel %vm186, %v2770, 0
    %v2870 = vsel %vm186, %v2771, 0
    %v2873 = vsel %vm186, %v2772, 0
    %v2876 = vsel %vm186, %v2773, 0
    %v2879 = vsel %vm186, %v2774, 0
    %v2882 = vsel %vm186, %v2775, 0
    %v2885 = vsel %vm186, %v2776, 0
    %v2888 = vsel %vm186, %v2777, 0
    %v2891 = vsel %vm186, %v2778, 0
    %v2894 = vsel %vm186, %v2779, 0
    %v2897 = vsel %vm186, %v2780, 0
    %v2900 = vsel %vm186, %v2781, 0
    %v2903 = vsel %vm186, %v2782, 0
    %v2906 = vsel %vm186, %v2783, 0
    %v2909 = vsel %vm186, %v2784, 0
    %v2912 = vsel %vm186, %v2785, 0
    %v2915 = vsel %vm186, %v2786, 0
    %v2918 = vsel %vm186, %v2787, 0
    %v2921 = vsel %vm186, %v2788, 0
    %v2924 = vsel %vm186, %v2789, 0
    %v2927 = vsel %vm186, %v2790, 0
    %v2930 = vsel %vm186, %v2791, 0
    %v2933 = vsel %vm186, %v2792, 0
    %v2936 = vsel %vm186, %v2793, 0
    %v2939 = vsel %vm186, %v2794, 0
    %v2942 = vsel %vm186, %v2795, 0
    %v2945 = vsel %vm186, %v2796, 0
    %v2948 = vsel %vm186, %v2797, 0
    %v2951 = vsel %vm186, %v2798, 0
    %v2954 = vsel %vm186, %v2799, 0
    %v2957 = vsel %vm186, %v2800, 0
    %v2960 = vsel %vm186, %v2801, 0
    %v2963 = vsel %vm186, %v2802, 0
    %v2966 = vsel %vm186, %v2803, 0
    %v2969 = vsel %vm186, %v2804, 0
    %v2972 = vsel %vm186, %v2805, 0
    %v2975 = vsel %vm186, %v2806, 0
    %v2978 = vsel %vm186, %v2807, 0
    %v2981 = vsel %vm186, %v2808, 0
    %v2984 = vsel %vm186, %v2809, 0
    %v2987 = vsel %vm186, %v2810, 0
    %v2990 = vsel %vm186, %v2811, 0
    %v2993 = vsel %vm186, %v2812, 0
    %v2996 = vsel %vm186, %v2813, 0
    %v2999 = vsel %vm186, %v2814, 0
    %v3002 = vsel %vm186, %v2815, 0
    %v3005 = vsel %vm186, %v2816, 0
    %v3008 = vsel %vm186, %v2817, 0
    %v3011 = vsel %vm186, %v2818, 0
    %3013 = vmatprep.subr.mxu0 0.0
    %3014 = vmatpush1.msra.mxu0 %v2820
    %3015 = vmatprep.subr.mxu0 0.0
    %3016 = vmatpush1.msra.mxu0 0.0
    %3017 = vmatprep.subr.mxu0 0.0
    %3018 = vmatpush1.msra.mxu0 0.0
    %3019 = vmatprep.subr.mxu0 0.0
    %3020 = vmatpush1.msra.mxu0 0.0
    %3021 = vmatprep.subr.mxu0 0.0
    %3022 = vmatpush1.msra.mxu0 0.0
    %3023 = vmatprep.subr.mxu0 0.0
    %3024 = vmatpush1.msra.mxu0 0.0
    %3025 = vmatprep.subr.mxu0 0.0
    %3026 = vmatpush1.msra.mxu0 0.0
    %3027 = vmatprep.subr.mxu0 0.0
    %3028 = vmatpush1.msra.mxu0 0.0
    %3029 = vmatprep.subr.mxu0 0.0
    %3030 = vmatpush1.msra.mxu0 0.0
    %3031 = vmatprep.subr.mxu0 0.0
    %3032 = vmatpush1.msra.mxu0 0.0
    %3033 = vmatprep.subr.mxu0 0.0
    %3034 = vmatpush1.msra.mxu0 0.0
    %3035 = vmatprep.subr.mxu0 0.0
    %3036 = vmatpush1.msra.mxu0 0.0
    %3037 = vmatprep.subr.mxu0 0.0
    %3038 = vmatpush1.msra.mxu0 0.0
    %3039 = vmatprep.subr.mxu0 0.0
    %3040 = vmatpush1.msra.mxu0 0.0
    %3041 = vmatprep.subr.mxu0 0.0
    %3042 = vmatpush1.msra.mxu0 0.0
    %3043 = vmatprep.subr.mxu0 0.0
    %3044 = vmatpush1.msra.mxu0 0.0
    %3045 = vmatprep.subr.mxu0 0.0
    %3046 = vmatpush1.msra.mxu0 0.0
    %3047 = vmatprep.subr.mxu0 0.0
    %3048 = vmatpush1.msra.mxu0 0.0
    %3049 = vmatprep.subr.mxu0 0.0
    %3050 = vmatpush1.msra.mxu0 0.0
    %3051 = vmatprep.subr.mxu0 0.0
    %3052 = vmatpush1.msra.mxu0 0.0
    %3053 = vmatprep.subr.mxu0 0.0
    %3054 = vmatpush1.msra.mxu0 0.0
    %3055 = vmatprep.subr.mxu0 0.0
    %3056 = vmatpush1.msra.mxu0 0.0
    %3057 = vmatprep.subr.mxu0 0.0
    %3058 = vmatpush1.msra.mxu0 0.0
    %3059 = vmatprep.subr.mxu0 0.0
    %3060 = vmatpush1.msra.mxu0 0.0
    %3061 = vmatprep.subr.mxu0 0.0
    %3062 = vmatpush1.msra.mxu0 0.0
    %3063 = vmatprep.subr.mxu0 0.0
    %3064 = vmatpush1.msra.mxu0 0.0
    %3065 = vmatprep.subr.mxu0 0.0
    %3066 = vmatpush1.msra.mxu0 0.0
    %3067 = vmatprep.subr.mxu0 0.0
    %3068 = vmatpush1.msra.mxu0 0.0
    %3069 = vmatprep.subr.mxu0 0.0
    %3070 = vmatpush1.msra.mxu0 0.0
    %3071 = vmatprep.subr.mxu0 0.0
    %3072 = vmatpush1.msra.mxu0 0.0
    %3073 = vmatprep.subr.mxu0 0.0
    %3074 = vmatpush1.msra.mxu0 0.0
    %3075 = vmatprep.subr.mxu0 0.0
    %3076 = vmatpush1.msra.mxu0 0.0
    %3077 = vmatprep.mubr.f32.mxu0 0.0
    %3078 = vmatmul.mubr.f32.gmra.mrb[0].mxu0 %v2822
    %v3079 = vpop.f32.mrb[0].mxu0
    %v3080 = vadd.f32 0.0, %v3079
    %v3081 = vpop.f32.mrb[0].mxu0
    %3082 = vmatprep.mubr.f32.mxu0 0.0
    %3083 = vmatmul.mubr.f32.gmra.mrb[0].mxu0 %v2825
    %v3084 = vpop.f32.mrb[0].mxu0
    %v3085 = vadd.f32 0.0, %v3084
    %v3086 = vpop.f32.mrb[0].mxu0
    %3087 = vmatprep.mubr.f32.mxu0 0.0
    %3088 = vmatmul.mubr.f32.gmra.mrb[0].mxu0 %v2828
    %v3089 = vpop.f32.mrb[0].mxu0
    %v3090 = vadd.f32 0.0, %v3089
    %v3091 = vpop.f32.mrb[0].mxu0
    %3092 = vmatprep.mubr.f32.mxu0 0.0
    %3093 = vmatmul.mubr.f32.gmra.mrb[0].mxu0 %v2831
    %v3094 = vpop.f32.mrb[0].mxu0
    %v3095 = vadd.f32 0.0, %v3094
    %v3096 = vpop.f32.mrb[0].mxu0
    %3097 = vmatprep.mubr.f32.mxu0 0.0
    %3098 = vmatmul.mubr.f32.gmra.mrb[0].mxu0 %v2834
    %v3099 = vpop.f32.mrb[0].mxu0
    %v3100 = vadd.f32 0.0, %v3099
    %v3101 = vpop.f32.mrb[0].mxu0
    %3102 = vmatprep.mubr.f32.mxu0 0.0
    %3103 = vmatmul.mubr.f32.gmra.mrb[0].mxu0 %v2837
    %v3104 = vpop.f32.mrb[0].mxu0
    %v3105 = vadd.f32 0.0, %v3104
    %v3106 = vpop.f32.mrb[0].mxu0
    %3107 = vmatprep.mubr.f32.mxu0 0.0
    %3108 = vmatmul.mubr.f32.gmra.mrb[0].mxu0 %v2840
    %v3109 = vpop.f32.mrb[0].mxu0
    %v3110 = vadd.f32 0.0, %v3109
    %v3111 = vpop.f32.mrb[0].mxu0
    %3112 = vmatprep.mubr.f32.mxu0 0.0
    %3113 = vmatmul.mubr.f32.gmra.mrb[0].mxu0 %v2843
    %v3114 = vpop.f32.mrb[0].mxu0
    %v3115 = vadd.f32 0.0, %v3114
    %v3116 = vpop.f32.mrb[0].mxu0
    %3117 = vmatprep.mubr.f32.mxu0 0.0
    %3118 = vmatmul.mubr.f32.gmra.mrb[0].mxu0 %v2846
    %v3119 = vpop.f32.mrb[0].mxu0
    %v3120 = vadd.f32 0.0, %v3119
    %v3121 = vpop.f32.mrb[0].mxu0
    %3122 = vmatprep.mubr.f32.mxu0 0.0
    %3123 = vmatmul.mubr.f32.gmra.mrb[0].mxu0 %v2849
    %v3124 = vpop.f32.mrb[0].mxu0
    %v3125 = vadd.f32 0.0, %v3124
    %v3126 = vpop.f32.mrb[0].mxu0
    %3127 = vmatprep.mubr.f32.mxu0 0.0
    %3128 = vmatmul.mubr.f32.gmra.mrb[0].mxu0 %v2852
    %v3129 = vpop.f32.mrb[0].mxu0
    %v3130 = vadd.f32 0.0, %v3129
    %v3131 = vpop.f32.mrb[0].mxu0
    %3132 = vmatprep.mubr.f32.mxu0 0.0
    %3133 = vmatmul.mubr.f32.gmra.mrb[0].mxu0 %v2855
    %v3134 = vpop.f32.mrb[0].mxu0
    %v3135 = vadd.f32 0.0, %v3134
    %v3136 = vpop.f32.mrb[0].mxu0
    %3137 = vmatprep.mubr.f32.mxu0 0.0
    %3138 = vmatmul.mubr.f32.gmra.mrb[0].mxu0 %v2858
    %v3139 = vpop.f32.mrb[0].mxu0
    %v3140 = vadd.f32 0.0, %v3139
    %v3141 = vpop.f32.mrb[0].mxu0
    %3142 = vmatprep.mubr.f32.mxu0 0.0
    %3143 = vmatmul.mubr.f32.gmra.mrb[0].mxu0 %v2861
    %v3144 = vpop.f32.mrb[0].mxu0
    %v3145 = vadd.f32 0.0, %v3144
    %v3146 = vpop.f32.mrb[0].mxu0
    %3147 = vmatprep.mubr.f32.mxu0 0.0
    %3148 = vmatmul.mubr.f32.gmra.mrb[0].mxu0 %v2864
    %v3149 = vpop.f32.mrb[0].mxu0
    %v3150 = vadd.f32 0.0, %v3149
    %v3151 = vpop.f32.mrb[0].mxu0
    %3152 = vmatprep.mubr.f32.mxu0 0.0
    %3153 = vmatmul.mubr.f32.gmra.mrb[0].mxu0 %v2867
    %v3154 = vpop.f32.mrb[0].mxu0
    %v3155 = vadd.f32 0.0, %v3154
    %v3156 = vpop.f32.mrb[0].mxu0
    %3157 = vmatprep.mubr.f32.mxu0 0.0
    %3158 = vmatmul.mubr.f32.gmra.mrb[0].mxu0 %v2870
    %v3159 = vpop.f32.mrb[0].mxu0
    %v3160 = vadd.f32 0.0, %v3159
    %v3161 = vpop.f32.mrb[0].mxu0
    %3162 = vmatprep.mubr.f32.mxu0 0.0
    %3163 = vmatmul.mubr.f32.gmra.mrb[0].mxu0 %v2873
    %v3164 = vpop.f32.mrb[0].mxu0
    %v3165 = vadd.f32 0.0, %v3164
    %v3166 = vpop.f32.mrb[0].mxu0
    %3167 = vmatprep.mubr.f32.mxu0 0.0
    %3168 = vmatmul.mubr.f32.gmra.mrb[0].mxu0 %v2876
    %v3169 = vpop.f32.mrb[0].mxu0
    %v3170 = vadd.f32 0.0, %v3169
    %v3171 = vpop.f32.mrb[0].mxu0
    %3172 = vmatprep.mubr.f32.mxu0 0.0
    %3173 = vmatmul.mubr.f32.gmra.mrb[0].mxu0 %v2879
    %v3174 = vpop.f32.mrb[0].mxu0
    %v3175 = vadd.f32 0.0, %v3174
    %v3176 = vpop.f32.mrb[0].mxu0
    %3177 = vmatprep.mubr.f32.mxu0 0.0
    %3178 = vmatmul.mubr.f32.gmra.mrb[0].mxu0 %v2882
    %v3179 = vpop.f32.mrb[0].mxu0
    %v3180 = vadd.f32 0.0, %v3179
    %v3181 = vpop.f32.mrb[0].mxu0
    %3182 = vmatprep.mubr.f32.mxu0 0.0
    %3183 = vmatmul.mubr.f32.gmra.mrb[0].mxu0 %v2885
    %v3184 = vpop.f32.mrb[0].mxu0
    %v3185 = vadd.f32 0.0, %v3184
    %v3186 = vpop.f32.mrb[0].mxu0
    %3187 = vmatprep.mubr.f32.mxu0 0.0
    %3188 = vmatmul.mubr.f32.gmra.mrb[0].mxu0 %v2888
    %v3189 = vpop.f32.mrb[0].mxu0
    %v3190 = vadd.f32 0.0, %v3189
    %v3191 = vpop.f32.mrb[0].mxu0
    %3192 = vmatprep.mubr.f32.mxu0 0.0
    %3193 = vmatmul.mubr.f32.gmra.mrb[0].mxu0 %v2891
    %v3194 = vpop.f32.mrb[0].mxu0
    %v3195 = vadd.f32 0.0, %v3194
    %v3196 = vpop.f32.mrb[0].mxu0
    %3197 = vmatprep.mubr.f32.mxu0 0.0
    %3198 = vmatmul.mubr.f32.gmra.mrb[0].mxu0 %v2894
    %v3199 = vpop.f32.mrb[0].mxu0
    %v3200 = vadd.f32 0.0, %v3199
    %v3201 = vpop.f32.mrb[0].mxu0
    %3202 = vmatprep.mubr.f32.mxu0 0.0
    %3203 = vmatmul.mubr.f32.gmra.mrb[0].mxu0 %v2897
    %v3204 = vpop.f32.mrb[0].mxu0
    %v3205 = vadd.f32 0.0, %v3204
    %v3206 = vpop.f32.mrb[0].mxu0
    %3207 = vmatprep.mubr.f32.mxu0 0.0
    %3208 = vmatmul.mubr.f32.gmra.mrb[0].mxu0 %v2900
    %v3209 = vpop.f32.mrb[0].mxu0
    %v3210 = vadd.f32 0.0, %v3209
    %v3211 = vpop.f32.mrb[0].mxu0
    %3212 = vmatprep.mubr.f32.mxu0 0.0
    %3213 = vmatmul.mubr.f32.gmra.mrb[0].mxu0 %v2903
    %v3214 = vpop.f32.mrb[0].mxu0
    %v3215 = vadd.f32 0.0, %v3214
    %v3216 = vpop.f32.mrb[0].mxu0
    %3217 = vmatprep.mubr.f32.mxu0 0.0
    %3218 = vmatmul.mubr.f32.gmra.mrb[0].mxu0 %v2906
    %v3219 = vpop.f32.mrb[0].mxu0
    %v3220 = vadd.f32 0.0, %v3219
    %v3221 = vpop.f32.mrb[0].mxu0
    %3222 = vmatprep.mubr.f32.mxu0 0.0
    %3223 = vmatmul.mubr.f32.gmra.mrb[0].mxu0 %v2909
    %v3224 = vpop.f32.mrb[0].mxu0
    %v3225 = vadd.f32 0.0, %v3224
    %v3226 = vpop.f32.mrb[0].mxu0
    %3227 = vmatprep.mubr.f32.mxu0 0.0
    %3228 = vmatmul.mubr.f32.gmra.mrb[0].mxu0 %v2912
    %v3229 = vpop.f32.mrb[0].mxu0
    %v3230 = vadd.f32 0.0, %v3229
    %v3231 = vpop.f32.mrb[0].mxu0
    %3232 = vmatprep.mubr.f32.mxu0 0.0
    %3233 = vmatmul.mubr.f32.gmra.mrb[0].mxu0 %v2915
    %v3234 = vpop.f32.mrb[0].mxu0
    %v3235 = vadd.f32 0.0, %v3234
    %v3236 = vpop.f32.mrb[0].mxu0
    %3237 = vmatprep.mubr.f32.mxu0 0.0
    %3238 = vmatmul.mubr.f32.gmra.mrb[0].mxu0 %v2918
    %v3239 = vpop.f32.mrb[0].mxu0
    %v3240 = vadd.f32 0.0, %v3239
    %v3241 = vpop.f32.mrb[0].mxu0
    %3242 = vmatprep.mubr.f32.mxu0 0.0
    %3243 = vmatmul.mubr.f32.gmra.mrb[0].mxu0 %v2921
    %v3244 = vpop.f32.mrb[0].mxu0
    %v3245 = vadd.f32 0.0, %v3244
    %v3246 = vpop.f32.mrb[0].mxu0
    %3247 = vmatprep.mubr.f32.mxu0 0.0
    %3248 = vmatmul.mubr.f32.gmra.mrb[0].mxu0 %v2924
    %v3249 = vpop.f32.mrb[0].mxu0
    %v3250 = vadd.f32 0.0, %v3249
    %v3251 = vpop.f32.mrb[0].mxu0
    %3252 = vmatprep.mubr.f32.mxu0 0.0
    %3253 = vmatmul.mubr.f32.gmra.mrb[0].mxu0 %v2927
    %v3254 = vpop.f32.mrb[0].mxu0
    %v3255 = vadd.f32 0.0, %v3254
    %v3256 = vpop.f32.mrb[0].mxu0
    %3257 = vmatprep.mubr.f32.mxu0 0.0
    %3258 = vmatmul.mubr.f32.gmra.mrb[0].mxu0 %v2930
    %v3259 = vpop.f32.mrb[0].mxu0
    %v3260 = vadd.f32 0.0, %v3259
    %v3261 = vpop.f32.mrb[0].mxu0
    %3262 = vmatprep.mubr.f32.mxu0 0.0
    %3263 = vmatmul.mubr.f32.gmra.mrb[0].mxu0 %v2933
    %v3264 = vpop.f32.mrb[0].mxu0
    %v3265 = vadd.f32 0.0, %v3264
    %v3266 = vpop.f32.mrb[0].mxu0
    %3267 = vmatprep.mubr.f32.mxu0 0.0
    %3268 = vmatmul.mubr.f32.gmra.mrb[0].mxu0 %v2936
    %v3269 = vpop.f32.mrb[0].mxu0
    %v3270 = vadd.f32 0.0, %v3269
    %v3271 = vpop.f32.mrb[0].mxu0
    %3272 = vmatprep.mubr.f32.mxu0 0.0
    %3273 = vmatmul.mubr.f32.gmra.mrb[0].mxu0 %v2939
    %v3274 = vpop.f32.mrb[0].mxu0
    %v3275 = vadd.f32 0.0, %v3274
    %v3276 = vpop.f32.mrb[0].mxu0
    %3277 = vmatprep.mubr.f32.mxu0 0.0
    %3278 = vmatmul.mubr.f32.gmra.mrb[0].mxu0 %v2942
    %v3279 = vpop.f32.mrb[0].mxu0
    %v3280 = vadd.f32 0.0, %v3279
    %v3281 = vpop.f32.mrb[0].mxu0
    %3282 = vmatprep.mubr.f32.mxu0 0.0
    %3283 = vmatmul.mubr.f32.gmra.mrb[0].mxu0 %v2945
    %v3284 = vpop.f32.mrb[0].mxu0
    %v3285 = vadd.f32 0.0, %v3284
    %v3286 = vpop.f32.mrb[0].mxu0
    %3287 = vmatprep.mubr.f32.mxu0 0.0
    %3288 = vmatmul.mubr.f32.gmra.mrb[0].mxu0 %v2948
    %v3289 = vpop.f32.mrb[0].mxu0
    %v3290 = vadd.f32 0.0, %v3289
    %v3291 = vpop.f32.mrb[0].mxu0
    %3292 = vmatprep.mubr.f32.mxu0 0.0
    %3293 = vmatmul.mubr.f32.gmra.mrb[0].mxu0 %v2951
    %v3294 = vpop.f32.mrb[0].mxu0
    %v3295 = vadd.f32 0.0, %v3294
    %v3296 = vpop.f32.mrb[0].mxu0
    %3297 = vmatprep.mubr.f32.mxu0 0.0
    %3298 = vmatmul.mubr.f32.gmra.mrb[0].mxu0 %v2954
    %v3299 = vpop.f32.mrb[0].mxu0
    %v3300 = vadd.f32 0.0, %v3299
    %v3301 = vpop.f32.mrb[0].mxu0
    %3302 = vmatprep.mubr.f32.mxu0 0.0
    %3303 = vmatmul.mubr.f32.gmra.mrb[0].mxu0 %v2957
    %v3304 = vpop.f32.mrb[0].mxu0
    %v3305 = vadd.f32 0.0, %v3304
    %v3306 = vpop.f32.mrb[0].mxu0
    %3307 = vmatprep.mubr.f32.mxu0 0.0
    %3308 = vmatmul.mubr.f32.gmra.mrb[0].mxu0 %v2960
    %v3309 = vpop.f32.mrb[0].mxu0
    %v3310 = vadd.f32 0.0, %v3309
    %v3311 = vpop.f32.mrb[0].mxu0
    %3312 = vmatprep.mubr.f32.mxu0 0.0
    %3313 = vmatmul.mubr.f32.gmra.mrb[0].mxu0 %v2963
    %v3314 = vpop.f32.mrb[0].mxu0
    %v3315 = vadd.f32 0.0, %v3314
    %v3316 = vpop.f32.mrb[0].mxu0
    %3317 = vmatprep.mubr.f32.mxu0 0.0
    %3318 = vmatmul.mubr.f32.gmra.mrb[0].mxu0 %v2966
    %v3319 = vpop.f32.mrb[0].mxu0
    %v3320 = vadd.f32 0.0, %v3319
    %v3321 = vpop.f32.mrb[0].mxu0
    %3322 = vmatprep.mubr.f32.mxu0 0.0
    %3323 = vmatmul.mubr.f32.gmra.mrb[0].mxu0 %v2969
    %v3324 = vpop.f32.mrb[0].mxu0
    %v3325 = vadd.f32 0.0, %v3324
    %v3326 = vpop.f32.mrb[0].mxu0
    %3327 = vmatprep.mubr.f32.mxu0 0.0
    %3328 = vmatmul.mubr.f32.gmra.mrb[0].mxu0 %v2972
    %v3329 = vpop.f32.mrb[0].mxu0
    %v3330 = vadd.f32 0.0, %v3329
    %v3331 = vpop.f32.mrb[0].mxu0
    %3332 = vmatprep.mubr.f32.mxu0 0.0
    %3333 = vmatmul.mubr.f32.gmra.mrb[0].mxu0 %v2975
    %v3334 = vpop.f32.mrb[0].mxu0
    %v3335 = vadd.f32 0.0, %v3334
    %v3336 = vpop.f32.mrb[0].mxu0
    %3337 = vmatprep.mubr.f32.mxu0 0.0
    %3338 = vmatmul.mubr.f32.gmra.mrb[0].mxu0 %v2978
    %v3339 = vpop.f32.mrb[0].mxu0
    %v3340 = vadd.f32 0.0, %v3339
    %v3341 = vpop.f32.mrb[0].mxu0
    %3342 = vmatprep.mubr.f32.mxu0 0.0
    %3343 = vmatmul.mubr.f32.gmra.mrb[0].mxu0 %v2981
    %v3344 = vpop.f32.mrb[0].mxu0
    %v3345 = vadd.f32 0.0, %v3344
    %v3346 = vpop.f32.mrb[0].mxu0
    %3347 = vmatprep.mubr.f32.mxu0 0.0
    %3348 = vmatmul.mubr.f32.gmra.mrb[0].mxu0 %v2984
    %v3349 = vpop.f32.mrb[0].mxu0
    %v3350 = vadd.f32 0.0, %v3349
    %v3351 = vpop.f32.mrb[0].mxu0
    %3352 = vmatprep.mubr.f32.mxu0 0.0
    %3353 = vmatmul.mubr.f32.gmra.mrb[0].mxu0 %v2987
    %v3354 = vpop.f32.mrb[0].mxu0
    %v3355 = vadd.f32 0.0, %v3354
    %v3356 = vpop.f32.mrb[0].mxu0
    %3357 = vmatprep.mubr.f32.mxu0 0.0
    %3358 = vmatmul.mubr.f32.gmra.mrb[0].mxu0 %v2990
    %v3359 = vpop.f32.mrb[0].mxu0
    %v3360 = vadd.f32 0.0, %v3359
    %v3361 = vpop.f32.mrb[0].mxu0
    %3362 = vmatprep.mubr.f32.mxu0 0.0
    %3363 = vmatmul.mubr.f32.gmra.mrb[0].mxu0 %v2993
    %v3364 = vpop.f32.mrb[0].mxu0
    %v3365 = vadd.f32 0.0, %v3364
    %v3366 = vpop.f32.mrb[0].mxu0
    %3367 = vmatprep.mubr.f32.mxu0 0.0
    %3368 = vmatmul.mubr.f32.gmra.mrb[0].mxu0 %v2996
    %v3369 = vpop.f32.mrb[0].mxu0
    %v3370 = vadd.f32 0.0, %v3369
    %v3371 = vpop.f32.mrb[0].mxu0
    %3372 = vmatprep.mubr.f32.mxu0 0.0
    %3373 = vmatmul.mubr.f32.gmra.mrb[0].mxu0 %v2999
    %v3374 = vpop.f32.mrb[0].mxu0
    %v3375 = vadd.f32 0.0, %v3374
    %v3376 = vpop.f32.mrb[0].mxu0
    %3377 = vmatprep.mubr.f32.mxu0 0.0
    %3378 = vmatmul.mubr.f32.gmra.mrb[0].mxu0 %v3002
    %v3379 = vpop.f32.mrb[0].mxu0
    %v3380 = vadd.f32 0.0, %v3379
    %v3381 = vpop.f32.mrb[0].mxu0
    %3382 = vmatprep.mubr.f32.mxu0 0.0
    %3383 = vmatmul.mubr.f32.gmra.mrb[0].mxu0 %v3005
    %v3384 = vpop.f32.mrb[0].mxu0
    %v3385 = vadd.f32 0.0, %v3384
    %v3386 = vpop.f32.mrb[0].mxu0
    %3387 = vmatprep.mubr.f32.mxu0 0.0
    %3388 = vmatmul.mubr.f32.gmra.mrb[0].mxu0 %v3008
    %v3389 = vpop.f32.mrb[0].mxu0
    %v3390 = vadd.f32 0.0, %v3389
    %v3391 = vpop.f32.mrb[0].mxu0
    %3392 = vmatprep.mubr.f32.mxu0 0.0
    %3393 = vmatmul.mubr.f32.gmra.mrb[0].mxu0 %v3011
    %v3394 = vpop.f32.mrb[0].mxu0
    %v3395 = vadd.f32 0.0, %v3394
    %v3396 = vpop.f32.mrb[0].mxu0
    %3397 = vdwg.mxu0
    %v3398 = vadd.f32 %v2691, %v3080
    %v3399 = vadd.f32 %v2692, %v3085
    %v3400 = vadd.f32 %v2693, %v3090
    %v3401 = vadd.f32 %v2694, %v3095
    %v3402 = vadd.f32 %v2695, %v3100
    %v3403 = vadd.f32 %v2696, %v3105
    %v3404 = vadd.f32 %v2697, %v3110
    %v3405 = vadd.f32 %v2698, %v3115
    %v3406 = vadd.f32 %v2699, %v3120
    %v3407 = vadd.f32 %v2700, %v3125
    %v3408 = vadd.f32 %v2701, %v3130
    %v3409 = vadd.f32 %v2702, %v3135
    %v3410 = vadd.f32 %v2703, %v3140
    %v3411 = vadd.f32 %v2704, %v3145
    %v3412 = vadd.f32 %v2705, %v3150
    %v3413 = vadd.f32 %v2706, %v3155
    %v3414 = vadd.f32 %v2707, %v3160
    %v3415 = vadd.f32 %v2708, %v3165
    %v3416 = vadd.f32 %v2709, %v3170
    %v3417 = vadd.f32 %v2710, %v3175
    %v3418 = vadd.f32 %v2711, %v3180
    %v3419 = vadd.f32 %v2712, %v3185
    %v3420 = vadd.f32 %v2713, %v3190
    %v3421 = vadd.f32 %v2714, %v3195
    %v3422 = vadd.f32 %v2715, %v3200
    %v3423 = vadd.f32 %v2716, %v3205
    %v3424 = vadd.f32 %v2717, %v3210
    %v3425 = vadd.f32 %v2718, %v3215
    %v3426 = vadd.f32 %v2719, %v3220
    %v3427 = vadd.f32 %v2720, %v3225
    %v3428 = vadd.f32 %v2721, %v3230
    %v3429 = vadd.f32 %v2722, %v3235
    %v3430 = vadd.f32 %v2723, %v3240
    %v3431 = vadd.f32 %v2724, %v3245
    %v3432 = vadd.f32 %v2725, %v3250
    %v3433 = vadd.f32 %v2726, %v3255
    %v3434 = vadd.f32 %v2727, %v3260
    %v3435 = vadd.f32 %v2728, %v3265
    %v3436 = vadd.f32 %v2729, %v3270
    %v3437 = vadd.f32 %v2730, %v3275
    %v3438 = vadd.f32 %v2731, %v3280
    %v3439 = vadd.f32 %v2732, %v3285
    %v3440 = vadd.f32 %v2733, %v3290
    %v3441 = vadd.f32 %v2734, %v3295
    %v3442 = vadd.f32 %v2735, %v3300
    %v3443 = vadd.f32 %v2736, %v3305
    %v3444 = vadd.f32 %v2737, %v3310
    %v3445 = vadd.f32 %v2738, %v3315
    %v3446 = vadd.f32 %v2739, %v3320
    %v3447 = vadd.f32 %v2740, %v3325
    %v3448 = vadd.f32 %v2741, %v3330
    %v3449 = vadd.f32 %v2742, %v3335
    %v3450 = vadd.f32 %v2743, %v3340
    %v3451 = vadd.f32 %v2744, %v3345
    %v3452 = vadd.f32 %v2745, %v3350
    %v3453 = vadd.f32 %v2746, %v3355
    %v3454 = vadd.f32 %v2747, %v3360
    %v3455 = vadd.f32 %v2748, %v3365
    %v3456 = vadd.f32 %v2749, %v3370
    %v3457 = vadd.f32 %v2750, %v3375
    %v3458 = vadd.f32 %v2751, %v3380
    %v3459 = vadd.f32 %v2752, %v3385
    %v3460 = vadd.f32 %v2753, %v3390
    %v3461 = vadd.f32 %v2754, %v3395
    %v3462 = vld [vmem:[%s0 + $0x12] sm:$0xff]
    %v3463 = vld [vmem:[%s0 + $0x1a] sm:$0xff]
    %v3464 = vld [vmem:[%s0 + $0x22] sm:$0xff]
    %v3465 = vld [vmem:[%s0 + $0x2a] sm:$0xff]
    %v3466 = vld [vmem:[%s0 + $0x32] sm:$0xff]
    %v3467 = vld [vmem:[%s0 + $0x3a] sm:$0xff]
    %v3468 = vld [vmem:[%s0 + $0x42] sm:$0xff]
    %v3469 = vld [vmem:[%s0 + $0x4a] sm:$0xff]
    %v3470 = vld [vmem:[%s0 + $0x52] sm:$0xff]
    %v3471 = vld [vmem:[%s0 + $0x5a] sm:$0xff]
    %v3472 = vld [vmem:[%s0 + $0x62] sm:$0xff]
    %v3473 = vld [vmem:[%s0 + $0x6a] sm:$0xff]
    %v3474 = vld [vmem:[%s0 + $0x72] sm:$0xff]
    %v3475 = vld [vmem:[%s0 + $0x7a] sm:$0xff]
    %v3476 = vld [vmem:[%s0 + $0x82] sm:$0xff]
    %v3477 = vld [vmem:[%s0 + $0x8a] sm:$0xff]
    %v3478 = vld [vmem:[%s0 + $0x92] sm:$0xff]
    %v3479 = vld [vmem:[%s0 + $0x9a] sm:$0xff]
    %v3480 = vld [vmem:[%s0 + $0xa2] sm:$0xff]
    %v3481 = vld [vmem:[%s0 + $0xaa] sm:$0xff]
    %v3482 = vld [vmem:[%s0 + $0xb2] sm:$0xff]
    %v3483 = vld [vmem:[%s0 + $0xba] sm:$0xff]
    %v3484 = vld [vmem:[%s0 + $0xc2] sm:$0xff]
    %v3485 = vld [vmem:[%s0 + $0xca] sm:$0xff]
    %v3486 = vld [vmem:[%s0 + $0xd2] sm:$0xff]
    %v3487 = vld [vmem:[%s0 + $0xda] sm:$0xff]
    %v3488 = vld [vmem:[%s0 + $0xe2] sm:$0xff]
    %v3489 = vld [vmem:[%s0 + $0xea] sm:$0xff]
    %v3490 = vld [vmem:[%s0 + $0xf2] sm:$0xff]
    %v3491 = vld [vmem:[%s0 + $0xfa] sm:$0xff]
    %v3492 = vld [vmem:[%s0 + $0x102] sm:$0xff]
    %v3493 = vld [vmem:[%s0 + $0x10a] sm:$0xff]
    %v3494 = vld [vmem:[%s0 + $0x112] sm:$0xff]
    %v3495 = vld [vmem:[%s0 + $0x11a] sm:$0xff]
    %v3496 = vld [vmem:[%s0 + $0x122] sm:$0xff]
    %v3497 = vld [vmem:[%s0 + $0x12a] sm:$0xff]
    %v3498 = vld [vmem:[%s0 + $0x132] sm:$0xff]
    %v3499 = vld [vmem:[%s0 + $0x13a] sm:$0xff]
    %v3500 = vld [vmem:[%s0 + $0x142] sm:$0xff]
    %v3501 = vld [vmem:[%s0 + $0x14a] sm:$0xff]
    %v3502 = vld [vmem:[%s0 + $0x152] sm:$0xff]
    %v3503 = vld [vmem:[%s0 + $0x15a] sm:$0xff]
    %v3504 = vld [vmem:[%s0 + $0x162] sm:$0xff]
    %v3505 = vld [vmem:[%s0 + $0x16a] sm:$0xff]
    %v3506 = vld [vmem:[%s0 + $0x172] sm:$0xff]
    %v3507 = vld [vmem:[%s0 + $0x17a] sm:$0xff]
    %v3508 = vld [vmem:[%s0 + $0x182] sm:$0xff]
    %v3509 = vld [vmem:[%s0 + $0x18a] sm:$0xff]
    %v3510 = vld [vmem:[%s0 + $0x192] sm:$0xff]
    %v3511 = vld [vmem:[%s0 + $0x19a] sm:$0xff]
    %v3512 = vld [vmem:[%s0 + $0x1a2] sm:$0xff]
    %v3513 = vld [vmem:[%s0 + $0x1aa] sm:$0xff]
    %v3514 = vld [vmem:[%s0 + $0x1b2] sm:$0xff]
    %v3515 = vld [vmem:[%s0 + $0x1ba] sm:$0xff]
    %v3516 = vld [vmem:[%s0 + $0x1c2] sm:$0xff]
    %v3517 = vld [vmem:[%s0 + $0x1ca] sm:$0xff]
    %v3518 = vld [vmem:[%s0 + $0x1d2] sm:$0xff]
    %v3519 = vld [vmem:[%s0 + $0x1da] sm:$0xff]
    %v3520 = vld [vmem:[%s0 + $0x1e2] sm:$0xff]
    %v3521 = vld [vmem:[%s0 + $0x1ea] sm:$0xff]
    %v3522 = vld [vmem:[%s0 + $0x1f2] sm:$0xff]
    %v3523 = vld [vmem:[%s0 + $0x1fa] sm:$0xff]
    %v3524 = vld [vmem:[%s0 + $0x202] sm:$0xff]
    %v3525 = vld [vmem:[%s0 + $0x20a] sm:$0xff]
    %s3526 = scalar_lea.vmem %s1, 40
    %v3527 = vld [vmem:[%s3526] sm:$0xff]
    %v3529 = vsel %vm186, %v3462, 0
    %v3532 = vsel %vm186, %v3463, 0
    %v3535 = vsel %vm186, %v3464, 0
    %v3538 = vsel %vm186, %v3465, 0
    %v3541 = vsel %vm186, %v3466, 0
    %v3544 = vsel %vm186, %v3467, 0
    %v3547 = vsel %vm186, %v3468, 0
    %v3550 = vsel %vm186, %v3469, 0
    %v3553 = vsel %vm186, %v3470, 0
    %v3556 = vsel %vm186, %v3471, 0
    %v3559 = vsel %vm186, %v3472, 0
    %v3562 = vsel %vm186, %v3473, 0
    %v3565 = vsel %vm186, %v3474, 0
    %v3568 = vsel %vm186, %v3475, 0
    %v3571 = vsel %vm186, %v3476, 0
    %v3574 = vsel %vm186, %v3477, 0
    %v3577 = vsel %vm186, %v3478, 0
    %v3580 = vsel %vm186, %v3479, 0
    %v3583 = vsel %vm186, %v3480, 0
    %v3586 = vsel %vm186, %v3481, 0
    %v3589 = vsel %vm186, %v3482, 0
    %v3592 = vsel %vm186, %v3483, 0
    %v3595 = vsel %vm186, %v3484, 0
    %v3598 = vsel %vm186, %v3485, 0
    %v3601 = vsel %vm186, %v3486, 0
    %v3604 = vsel %vm186, %v3487, 0
    %v3607 = vsel %vm186, %v3488, 0
    %v3610 = vsel %vm186, %v3489, 0
    %v3613 = vsel %vm186, %v3490, 0
    %v3616 = vsel %vm186, %v3491, 0
    %v3619 = vsel %vm186, %v3492, 0
    %v3622 = vsel %vm186, %v3493, 0
    %v3625 = vsel %vm186, %v3494, 0
    %v3628 = vsel %vm186, %v3495, 0
    %v3631 = vsel %vm186, %v3496, 0
    %v3634 = vsel %vm186, %v3497, 0
    %v3637 = vsel %vm186, %v3498, 0
    %v3640 = vsel %vm186, %v3499, 0
    %v3643 = vsel %vm186, %v3500, 0
    %v3646 = vsel %vm186, %v3501, 0
    %v3649 = vsel %vm186, %v3502, 0
    %v3652 = vsel %vm186, %v3503, 0
    %v3655 = vsel %vm186, %v3504, 0
    %v3658 = vsel %vm186, %v3505, 0
    %v3661 = vsel %vm186, %v3506, 0
    %v3664 = vsel %vm186, %v3507, 0
    %v3667 = vsel %vm186, %v3508, 0
    %v3670 = vsel %vm186, %v3509, 0
    %v3673 = vsel %vm186, %v3510, 0
    %v3676 = vsel %vm186, %v3511, 0
    %v3679 = vsel %vm186, %v3512, 0
    %v3682 = vsel %vm186, %v3513, 0
    %v3685 = vsel %vm186, %v3514, 0
    %v3688 = vsel %vm186, %v3515, 0
    %v3691 = vsel %vm186, %v3516, 0
    %v3694 = vsel %vm186, %v3517, 0
    %v3697 = vsel %vm186, %v3518, 0
    %v3700 = vsel %vm186, %v3519, 0
    %v3703 = vsel %vm186, %v3520, 0
    %v3706 = vsel %vm186, %v3521, 0
    %v3709 = vsel %vm186, %v3522, 0
    %v3712 = vsel %vm186, %v3523, 0
    %v3715 = vsel %vm186, %v3524, 0
    %v3718 = vsel %vm186, %v3525, 0
    %3720 = vmatprep.subr.mxu0 0.0
    %3721 = vmatpush1.msra.mxu0 %v3527
    %3722 = vmatprep.subr.mxu0 0.0
    %3723 = vmatpush1.msra.mxu0 0.0
    %3724 = vmatprep.subr.mxu0 0.0
    %3725 = vmatpush1.msra.mxu0 0.0
    %3726 = vmatprep.subr.mxu0 0.0
    %3727 = vmatpush1.msra.mxu0 0.0
    %3728 = vmatprep.subr.mxu0 0.0
    %3729 = vmatpush1.msra.mxu0 0.0
    %3730 = vmatprep.subr.mxu0 0.0
    %3731 = vmatpush1.msra.mxu0 0.0
    %3732 = vmatprep.subr.mxu0 0.0
    %3733 = vmatpush1.msra.mxu0 0.0
    %3734 = vmatprep.subr.mxu0 0.0
    %3735 = vmatpush1.msra.mxu0 0.0
    %3736 = vmatprep.subr.mxu0 0.0
    %3737 = vmatpush1.msra.mxu0 0.0
    %3738 = vmatprep.subr.mxu0 0.0
    %3739 = vmatpush1.msra.mxu0 0.0
    %3740 = vmatprep.subr.mxu0 0.0
    %3741 = vmatpush1.msra.mxu0 0.0
    %3742 = vmatprep.subr.mxu0 0.0
    %3743 = vmatpush1.msra.mxu0 0.0
    %3744 = vmatprep.subr.mxu0 0.0
    %3745 = vmatpush1.msra.mxu0 0.0
    %3746 = vmatprep.subr.mxu0 0.0
    %3747 = vmatpush1.msra.mxu0 0.0
    %3748 = vmatprep.subr.mxu0 0.0
    %3749 = vmatpush1.msra.mxu0 0.0
    %3750 = vmatprep.subr.mxu0 0.0
    %3751 = vmatpush1.msra.mxu0 0.0
    %3752 = vmatprep.subr.mxu0 0.0
    %3753 = vmatpush1.msra.mxu0 0.0
    %3754 = vmatprep.subr.mxu0 0.0
    %3755 = vmatpush1.msra.mxu0 0.0
    %3756 = vmatprep.subr.mxu0 0.0
    %3757 = vmatpush1.msra.mxu0 0.0
    %3758 = vmatprep.subr.mxu0 0.0
    %3759 = vmatpush1.msra.mxu0 0.0
    %3760 = vmatprep.subr.mxu0 0.0
    %3761 = vmatpush1.msra.mxu0 0.0
    %3762 = vmatprep.subr.mxu0 0.0
    %3763 = vmatpush1.msra.mxu0 0.0
    %3764 = vmatprep.subr.mxu0 0.0
    %3765 = vmatpush1.msra.mxu0 0.0
    %3766 = vmatprep.subr.mxu0 0.0
    %3767 = vmatpush1.msra.mxu0 0.0
    %3768 = vmatprep.subr.mxu0 0.0
    %3769 = vmatpush1.msra.mxu0 0.0
    %3770 = vmatprep.subr.mxu0 0.0
    %3771 = vmatpush1.msra.mxu0 0.0
    %3772 = vmatprep.subr.mxu0 0.0
    %3773 = vmatpush1.msra.mxu0 0.0
    %3774 = vmatprep.subr.mxu0 0.0
    %3775 = vmatpush1.msra.mxu0 0.0
    %3776 = vmatprep.subr.mxu0 0.0
    %3777 = vmatpush1.msra.mxu0 0.0
    %3778 = vmatprep.subr.mxu0 0.0
    %3779 = vmatpush1.msra.mxu0 0.0
    %3780 = vmatprep.subr.mxu0 0.0
    %3781 = vmatpush1.msra.mxu0 0.0
    %3782 = vmatprep.subr.mxu0 0.0
    %3783 = vmatpush1.msra.mxu0 0.0
    %3784 = vmatprep.mubr.f32.mxu0 0.0
    %3785 = vmatmul.mubr.f32.gmra.mrb[0].mxu0 %v3529
    %v3786 = vpop.f32.mrb[0].mxu0
    %v3787 = vadd.f32 0.0, %v3786
    %v3788 = vpop.f32.mrb[0].mxu0
    %3789 = vmatprep.mubr.f32.mxu0 0.0
    %3790 = vmatmul.mubr.f32.gmra.mrb[0].mxu0 %v3532
    %v3791 = vpop.f32.mrb[0].mxu0
    %v3792 = vadd.f32 0.0, %v3791
    %v3793 = vpop.f32.mrb[0].mxu0
    %3794 = vmatprep.mubr.f32.mxu0 0.0
    %3795 = vmatmul.mubr.f32.gmra.mrb[0].mxu0 %v3535
    %v3796 = vpop.f32.mrb[0].mxu0
    %v3797 = vadd.f32 0.0, %v3796
    %v3798 = vpop.f32.mrb[0].mxu0
    %3799 = vmatprep.mubr.f32.mxu0 0.0
    %3800 = vmatmul.mubr.f32.gmra.mrb[0].mxu0 %v3538
    %v3801 = vpop.f32.mrb[0].mxu0
    %v3802 = vadd.f32 0.0, %v3801
    %v3803 = vpop.f32.mrb[0].mxu0
    %3804 = vmatprep.mubr.f32.mxu0 0.0
    %3805 = vmatmul.mubr.f32.gmra.mrb[0].mxu0 %v3541
    %v3806 = vpop.f32.mrb[0].mxu0
    %v3807 = vadd.f32 0.0, %v3806
    %v3808 = vpop.f32.mrb[0].mxu0
    %3809 = vmatprep.mubr.f32.mxu0 0.0
    %3810 = vmatmul.mubr.f32.gmra.mrb[0].mxu0 %v3544
    %v3811 = vpop.f32.mrb[0].mxu0
    %v3812 = vadd.f32 0.0, %v3811
    %v3813 = vpop.f32.mrb[0].mxu0
    %3814 = vmatprep.mubr.f32.mxu0 0.0
    %3815 = vmatmul.mubr.f32.gmra.mrb[0].mxu0 %v3547
    %v3816 = vpop.f32.mrb[0].mxu0
    %v3817 = vadd.f32 0.0, %v3816
    %v3818 = vpop.f32.mrb[0].mxu0
    %3819 = vmatprep.mubr.f32.mxu0 0.0
    %3820 = vmatmul.mubr.f32.gmra.mrb[0].mxu0 %v3550
    %v3821 = vpop.f32.mrb[0].mxu0
    %v3822 = vadd.f32 0.0, %v3821
    %v3823 = vpop.f32.mrb[0].mxu0
    %3824 = vmatprep.mubr.f32.mxu0 0.0
    %3825 = vmatmul.mubr.f32.gmra.mrb[0].mxu0 %v3553
    %v3826 = vpop.f32.mrb[0].mxu0
    %v3827 = vadd.f32 0.0, %v3826
    %v3828 = vpop.f32.mrb[0].mxu0
    %3829 = vmatprep.mubr.f32.mxu0 0.0
    %3830 = vmatmul.mubr.f32.gmra.mrb[0].mxu0 %v3556
    %v3831 = vpop.f32.mrb[0].mxu0
    %v3832 = vadd.f32 0.0, %v3831
    %v3833 = vpop.f32.mrb[0].mxu0
    %3834 = vmatprep.mubr.f32.mxu0 0.0
    %3835 = vmatmul.mubr.f32.gmra.mrb[0].mxu0 %v3559
    %v3836 = vpop.f32.mrb[0].mxu0
    %v3837 = vadd.f32 0.0, %v3836
    %v3838 = vpop.f32.mrb[0].mxu0
    %3839 = vmatprep.mubr.f32.mxu0 0.0
    %3840 = vmatmul.mubr.f32.gmra.mrb[0].mxu0 %v3562
    %v3841 = vpop.f32.mrb[0].mxu0
    %v3842 = vadd.f32 0.0, %v3841
    %v3843 = vpop.f32.mrb[0].mxu0
    %3844 = vmatprep.mubr.f32.mxu0 0.0
    %3845 = vmatmul.mubr.f32.gmra.mrb[0].mxu0 %v3565
    %v3846 = vpop.f32.mrb[0].mxu0
    %v3847 = vadd.f32 0.0, %v3846
    %v3848 = vpop.f32.mrb[0].mxu0
    %3849 = vmatprep.mubr.f32.mxu0 0.0
    %3850 = vmatmul.mubr.f32.gmra.mrb[0].mxu0 %v3568
    %v3851 = vpop.f32.mrb[0].mxu0
    %v3852 = vadd.f32 0.0, %v3851
    %v3853 = vpop.f32.mrb[0].mxu0
    %3854 = vmatprep.mubr.f32.mxu0 0.0
    %3855 = vmatmul.mubr.f32.gmra.mrb[0].mxu0 %v3571
    %v3856 = vpop.f32.mrb[0].mxu0
    %v3857 = vadd.f32 0.0, %v3856
    %v3858 = vpop.f32.mrb[0].mxu0
    %3859 = vmatprep.mubr.f32.mxu0 0.0
    %3860 = vmatmul.mubr.f32.gmra.mrb[0].mxu0 %v3574
    %v3861 = vpop.f32.mrb[0].mxu0
    %v3862 = vadd.f32 0.0, %v3861
    %v3863 = vpop.f32.mrb[0].mxu0
    %3864 = vmatprep.mubr.f32.mxu0 0.0
    %3865 = vmatmul.mubr.f32.gmra.mrb[0].mxu0 %v3577
    %v3866 = vpop.f32.mrb[0].mxu0
    %v3867 = vadd.f32 0.0, %v3866
    %v3868 = vpop.f32.mrb[0].mxu0
    %3869 = vmatprep.mubr.f32.mxu0 0.0
    %3870 = vmatmul.mubr.f32.gmra.mrb[0].mxu0 %v3580
    %v3871 = vpop.f32.mrb[0].mxu0
    %v3872 = vadd.f32 0.0, %v3871
    %v3873 = vpop.f32.mrb[0].mxu0
    %3874 = vmatprep.mubr.f32.mxu0 0.0
    %3875 = vmatmul.mubr.f32.gmra.mrb[0].mxu0 %v3583
    %v3876 = vpop.f32.mrb[0].mxu0
    %v3877 = vadd.f32 0.0, %v3876
    %v3878 = vpop.f32.mrb[0].mxu0
    %3879 = vmatprep.mubr.f32.mxu0 0.0
    %3880 = vmatmul.mubr.f32.gmra.mrb[0].mxu0 %v3586
    %v3881 = vpop.f32.mrb[0].mxu0
    %v3882 = vadd.f32 0.0, %v3881
    %v3883 = vpop.f32.mrb[0].mxu0
    %3884 = vmatprep.mubr.f32.mxu0 0.0
    %3885 = vmatmul.mubr.f32.gmra.mrb[0].mxu0 %v3589
    %v3886 = vpop.f32.mrb[0].mxu0
    %v3887 = vadd.f32 0.0, %v3886
    %v3888 = vpop.f32.mrb[0].mxu0
    %3889 = vmatprep.mubr.f32.mxu0 0.0
    %3890 = vmatmul.mubr.f32.gmra.mrb[0].mxu0 %v3592
    %v3891 = vpop.f32.mrb[0].mxu0
    %v3892 = vadd.f32 0.0, %v3891
    %v3893 = vpop.f32.mrb[0].mxu0
    %3894 = vmatprep.mubr.f32.mxu0 0.0
    %3895 = vmatmul.mubr.f32.gmra.mrb[0].mxu0 %v3595
    %v3896 = vpop.f32.mrb[0].mxu0
    %v3897 = vadd.f32 0.0, %v3896
    %v3898 = vpop.f32.mrb[0].mxu0
    %3899 = vmatprep.mubr.f32.mxu0 0.0
    %3900 = vmatmul.mubr.f32.gmra.mrb[0].mxu0 %v3598
    %v3901 = vpop.f32.mrb[0].mxu0
    %v3902 = vadd.f32 0.0, %v3901
    %v3903 = vpop.f32.mrb[0].mxu0
    %3904 = vmatprep.mubr.f32.mxu0 0.0
    %3905 = vmatmul.mubr.f32.gmra.mrb[0].mxu0 %v3601
    %v3906 = vpop.f32.mrb[0].mxu0
    %v3907 = vadd.f32 0.0, %v3906
    %v3908 = vpop.f32.mrb[0].mxu0
    %3909 = vmatprep.mubr.f32.mxu0 0.0
    %3910 = vmatmul.mubr.f32.gmra.mrb[0].mxu0 %v3604
    %v3911 = vpop.f32.mrb[0].mxu0
    %v3912 = vadd.f32 0.0, %v3911
    %v3913 = vpop.f32.mrb[0].mxu0
    %3914 = vmatprep.mubr.f32.mxu0 0.0
    %3915 = vmatmul.mubr.f32.gmra.mrb[0].mxu0 %v3607
    %v3916 = vpop.f32.mrb[0].mxu0
    %v3917 = vadd.f32 0.0, %v3916
    %v3918 = vpop.f32.mrb[0].mxu0
    %3919 = vmatprep.mubr.f32.mxu0 0.0
    %3920 = vmatmul.mubr.f32.gmra.mrb[0].mxu0 %v3610
    %v3921 = vpop.f32.mrb[0].mxu0
    %v3922 = vadd.f32 0.0, %v3921
    %v3923 = vpop.f32.mrb[0].mxu0
    %3924 = vmatprep.mubr.f32.mxu0 0.0
    %3925 = vmatmul.mubr.f32.gmra.mrb[0].mxu0 %v3613
    %v3926 = vpop.f32.mrb[0].mxu0
    %v3927 = vadd.f32 0.0, %v3926
    %v3928 = vpop.f32.mrb[0].mxu0
    %3929 = vmatprep.mubr.f32.mxu0 0.0
    %3930 = vmatmul.mubr.f32.gmra.mrb[0].mxu0 %v3616
    %v3931 = vpop.f32.mrb[0].mxu0
    %v3932 = vadd.f32 0.0, %v3931
    %v3933 = vpop.f32.mrb[0].mxu0
    %3934 = vmatprep.mubr.f32.mxu0 0.0
    %3935 = vmatmul.mubr.f32.gmra.mrb[0].mxu0 %v3619
    %v3936 = vpop.f32.mrb[0].mxu0
    %v3937 = vadd.f32 0.0, %v3936
    %v3938 = vpop.f32.mrb[0].mxu0
    %3939 = vmatprep.mubr.f32.mxu0 0.0
    %3940 = vmatmul.mubr.f32.gmra.mrb[0].mxu0 %v3622
    %v3941 = vpop.f32.mrb[0].mxu0
    %v3942 = vadd.f32 0.0, %v3941
    %v3943 = vpop.f32.mrb[0].mxu0
    %3944 = vmatprep.mubr.f32.mxu0 0.0
    %3945 = vmatmul.mubr.f32.gmra.mrb[0].mxu0 %v3625
    %v3946 = vpop.f32.mrb[0].mxu0
    %v3947 = vadd.f32 0.0, %v3946
    %v3948 = vpop.f32.mrb[0].mxu0
    %3949 = vmatprep.mubr.f32.mxu0 0.0
    %3950 = vmatmul.mubr.f32.gmra.mrb[0].mxu0 %v3628
    %v3951 = vpop.f32.mrb[0].mxu0
    %v3952 = vadd.f32 0.0, %v3951
    %v3953 = vpop.f32.mrb[0].mxu0
    %3954 = vmatprep.mubr.f32.mxu0 0.0
    %3955 = vmatmul.mubr.f32.gmra.mrb[0].mxu0 %v3631
    %v3956 = vpop.f32.mrb[0].mxu0
    %v3957 = vadd.f32 0.0, %v3956
    %v3958 = vpop.f32.mrb[0].mxu0
    %3959 = vmatprep.mubr.f32.mxu0 0.0
    %3960 = vmatmul.mubr.f32.gmra.mrb[0].mxu0 %v3634
    %v3961 = vpop.f32.mrb[0].mxu0
    %v3962 = vadd.f32 0.0, %v3961
    %v3963 = vpop.f32.mrb[0].mxu0
    %3964 = vmatprep.mubr.f32.mxu0 0.0
    %3965 = vmatmul.mubr.f32.gmra.mrb[0].mxu0 %v3637
    %v3966 = vpop.f32.mrb[0].mxu0
    %v3967 = vadd.f32 0.0, %v3966
    %v3968 = vpop.f32.mrb[0].mxu0
    %3969 = vmatprep.mubr.f32.mxu0 0.0
    %3970 = vmatmul.mubr.f32.gmra.mrb[0].mxu0 %v3640
    %v3971 = vpop.f32.mrb[0].mxu0
    %v3972 = vadd.f32 0.0, %v3971
    %v3973 = vpop.f32.mrb[0].mxu0
    %3974 = vmatprep.mubr.f32.mxu0 0.0
    %3975 = vmatmul.mubr.f32.gmra.mrb[0].mxu0 %v3643
    %v3976 = vpop.f32.mrb[0].mxu0
    %v3977 = vadd.f32 0.0, %v3976
    %v3978 = vpop.f32.mrb[0].mxu0
    %3979 = vmatprep.mubr.f32.mxu0 0.0
    %3980 = vmatmul.mubr.f32.gmra.mrb[0].mxu0 %v3646
    %v3981 = vpop.f32.mrb[0].mxu0
    %v3982 = vadd.f32 0.0, %v3981
    %v3983 = vpop.f32.mrb[0].mxu0
    %3984 = vmatprep.mubr.f32.mxu0 0.0
    %3985 = vmatmul.mubr.f32.gmra.mrb[0].mxu0 %v3649
    %v3986 = vpop.f32.mrb[0].mxu0
    %v3987 = vadd.f32 0.0, %v3986
    %v3988 = vpop.f32.mrb[0].mxu0
    %3989 = vmatprep.mubr.f32.mxu0 0.0
    %3990 = vmatmul.mubr.f32.gmra.mrb[0].mxu0 %v3652
    %v3991 = vpop.f32.mrb[0].mxu0
    %v3992 = vadd.f32 0.0, %v3991
    %v3993 = vpop.f32.mrb[0].mxu0
    %3994 = vmatprep.mubr.f32.mxu0 0.0
    %3995 = vmatmul.mubr.f32.gmra.mrb[0].mxu0 %v3655
    %v3996 = vpop.f32.mrb[0].mxu0
    %v3997 = vadd.f32 0.0, %v3996
    %v3998 = vpop.f32.mrb[0].mxu0
    %3999 = vmatprep.mubr.f32.mxu0 0.0
    %4000 = vmatmul.mubr.f32.gmra.mrb[0].mxu0 %v3658
    %v4001 = vpop.f32.mrb[0].mxu0
    %v4002 = vadd.f32 0.0, %v4001
    %v4003 = vpop.f32.mrb[0].mxu0
    %4004 = vmatprep.mubr.f32.mxu0 0.0
    %4005 = vmatmul.mubr.f32.gmra.mrb[0].mxu0 %v3661
    %v4006 = vpop.f32.mrb[0].mxu0
    %v4007 = vadd.f32 0.0, %v4006
    %v4008 = vpop.f32.mrb[0].mxu0
    %4009 = vmatprep.mubr.f32.mxu0 0.0
    %4010 = vmatmul.mubr.f32.gmra.mrb[0].mxu0 %v3664
    %v4011 = vpop.f32.mrb[0].mxu0
    %v4012 = vadd.f32 0.0, %v4011
    %v4013 = vpop.f32.mrb[0].mxu0
    %4014 = vmatprep.mubr.f32.mxu0 0.0
    %4015 = vmatmul.mubr.f32.gmra.mrb[0].mxu0 %v3667
    %v4016 = vpop.f32.mrb[0].mxu0
    %v4017 = vadd.f32 0.0, %v4016
    %v4018 = vpop.f32.mrb[0].mxu0
    %4019 = vmatprep.mubr.f32.mxu0 0.0
    %4020 = vmatmul.mubr.f32.gmra.mrb[0].mxu0 %v3670
    %v4021 = vpop.f32.mrb[0].mxu0
    %v4022 = vadd.f32 0.0, %v4021
    %v4023 = vpop.f32.mrb[0].mxu0
    %4024 = vmatprep.mubr.f32.mxu0 0.0
    %4025 = vmatmul.mubr.f32.gmra.mrb[0].mxu0 %v3673
    %v4026 = vpop.f32.mrb[0].mxu0
    %v4027 = vadd.f32 0.0, %v4026
    %v4028 = vpop.f32.mrb[0].mxu0
    %4029 = vmatprep.mubr.f32.mxu0 0.0
    %4030 = vmatmul.mubr.f32.gmra.mrb[0].mxu0 %v3676
    %v4031 = vpop.f32.mrb[0].mxu0
    %v4032 = vadd.f32 0.0, %v4031
    %v4033 = vpop.f32.mrb[0].mxu0
    %4034 = vmatprep.mubr.f32.mxu0 0.0
    %4035 = vmatmul.mubr.f32.gmra.mrb[0].mxu0 %v3679
    %v4036 = vpop.f32.mrb[0].mxu0
    %v4037 = vadd.f32 0.0, %v4036
    %v4038 = vpop.f32.mrb[0].mxu0
    %4039 = vmatprep.mubr.f32.mxu0 0.0
    %4040 = vmatmul.mubr.f32.gmra.mrb[0].mxu0 %v3682
    %v4041 = vpop.f32.mrb[0].mxu0
    %v4042 = vadd.f32 0.0, %v4041
    %v4043 = vpop.f32.mrb[0].mxu0
    %4044 = vmatprep.mubr.f32.mxu0 0.0
    %4045 = vmatmul.mubr.f32.gmra.mrb[0].mxu0 %v3685
    %v4046 = vpop.f32.mrb[0].mxu0
    %v4047 = vadd.f32 0.0, %v4046
    %v4048 = vpop.f32.mrb[0].mxu0
    %4049 = vmatprep.mubr.f32.mxu0 0.0
    %4050 = vmatmul.mubr.f32.gmra.mrb[0].mxu0 %v3688
    %v4051 = vpop.f32.mrb[0].mxu0
    %v4052 = vadd.f32 0.0, %v4051
    %v4053 = vpop.f32.mrb[0].mxu0
    %4054 = vmatprep.mubr.f32.mxu0 0.0
    %4055 = vmatmul.mubr.f32.gmra.mrb[0].mxu0 %v3691
    %v4056 = vpop.f32.mrb[0].mxu0
    %v4057 = vadd.f32 0.0, %v4056
    %v4058 = vpop.f32.mrb[0].mxu0
    %4059 = vmatprep.mubr.f32.mxu0 0.0
    %4060 = vmatmul.mubr.f32.gmra.mrb[0].mxu0 %v3694
    %v4061 = vpop.f32.mrb[0].mxu0
    %v4062 = vadd.f32 0.0, %v4061
    %v4063 = vpop.f32.mrb[0].mxu0
    %4064 = vmatprep.mubr.f32.mxu0 0.0
    %4065 = vmatmul.mubr.f32.gmra.mrb[0].mxu0 %v3697
    %v4066 = vpop.f32.mrb[0].mxu0
    %v4067 = vadd.f32 0.0, %v4066
    %v4068 = vpop.f32.mrb[0].mxu0
    %4069 = vmatprep.mubr.f32.mxu0 0.0
    %4070 = vmatmul.mubr.f32.gmra.mrb[0].mxu0 %v3700
    %v4071 = vpop.f32.mrb[0].mxu0
    %v4072 = vadd.f32 0.0, %v4071
    %v4073 = vpop.f32.mrb[0].mxu0
    %4074 = vmatprep.mubr.f32.mxu0 0.0
    %4075 = vmatmul.mubr.f32.gmra.mrb[0].mxu0 %v3703
    %v4076 = vpop.f32.mrb[0].mxu0
    %v4077 = vadd.f32 0.0, %v4076
    %v4078 = vpop.f32.mrb[0].mxu0
    %4079 = vmatprep.mubr.f32.mxu0 0.0
    %4080 = vmatmul.mubr.f32.gmra.mrb[0].mxu0 %v3706
    %v4081 = vpop.f32.mrb[0].mxu0
    %v4082 = vadd.f32 0.0, %v4081
    %v4083 = vpop.f32.mrb[0].mxu0
    %4084 = vmatprep.mubr.f32.mxu0 0.0
    %4085 = vmatmul.mubr.f32.gmra.mrb[0].mxu0 %v3709
    %v4086 = vpop.f32.mrb[0].mxu0
    %v4087 = vadd.f32 0.0, %v4086
    %v4088 = vpop.f32.mrb[0].mxu0
    %4089 = vmatprep.mubr.f32.mxu0 0.0
    %4090 = vmatmul.mubr.f32.gmra.mrb[0].mxu0 %v3712
    %v4091 = vpop.f32.mrb[0].mxu0
    %v4092 = vadd.f32 0.0, %v4091
    %v4093 = vpop.f32.mrb[0].mxu0
    %4094 = vmatprep.mubr.f32.mxu0 0.0
    %4095 = vmatmul.mubr.f32.gmra.mrb[0].mxu0 %v3715
    %v4096 = vpop.f32.mrb[0].mxu0
    %v4097 = vadd.f32 0.0, %v4096
    %v4098 = vpop.f32.mrb[0].mxu0
    %4099 = vmatprep.mubr.f32.mxu0 0.0
    %4100 = vmatmul.mubr.f32.gmra.mrb[0].mxu0 %v3718
    %v4101 = vpop.f32.mrb[0].mxu0
    %v4102 = vadd.f32 0.0, %v4101
    %v4103 = vpop.f32.mrb[0].mxu0
    %4104 = vdwg.mxu0
    %v4105 = vadd.f32 %v3398, %v3787
    %v4106 = vadd.f32 %v3399, %v3792
    %v4107 = vadd.f32 %v3400, %v3797
    %v4108 = vadd.f32 %v3401, %v3802
    %v4109 = vadd.f32 %v3402, %v3807
    %v4110 = vadd.f32 %v3403, %v3812
    %v4111 = vadd.f32 %v3404, %v3817
    %v4112 = vadd.f32 %v3405, %v3822
    %v4113 = vadd.f32 %v3406, %v3827
    %v4114 = vadd.f32 %v3407, %v3832
    %v4115 = vadd.f32 %v3408, %v3837
    %v4116 = vadd.f32 %v3409, %v3842
    %v4117 = vadd.f32 %v3410, %v3847
    %v4118 = vadd.f32 %v3411, %v3852
    %v4119 = vadd.f32 %v3412, %v3857
    %v4120 = vadd.f32 %v3413, %v3862
    %v4121 = vadd.f32 %v3414, %v3867
    %v4122 = vadd.f32 %v3415, %v3872
    %v4123 = vadd.f32 %v3416, %v3877
    %v4124 = vadd.f32 %v3417, %v3882
    %v4125 = vadd.f32 %v3418, %v3887
    %v4126 = vadd.f32 %v3419, %v3892
    %v4127 = vadd.f32 %v3420, %v3897
    %v4128 = vadd.f32 %v3421, %v3902
    %v4129 = vadd.f32 %v3422, %v3907
    %v4130 = vadd.f32 %v3423, %v3912
    %v4131 = vadd.f32 %v3424, %v3917
    %v4132 = vadd.f32 %v3425, %v3922
    %v4133 = vadd.f32 %v3426, %v3927
    %v4134 = vadd.f32 %v3427, %v3932
    %v4135 = vadd.f32 %v3428, %v3937
    %v4136 = vadd.f32 %v3429, %v3942
    %v4137 = vadd.f32 %v3430, %v3947
    %v4138 = vadd.f32 %v3431, %v3952
    %v4139 = vadd.f32 %v3432, %v3957
    %v4140 = vadd.f32 %v3433, %v3962
    %v4141 = vadd.f32 %v3434, %v3967
    %v4142 = vadd.f32 %v3435, %v3972
    %v4143 = vadd.f32 %v3436, %v3977
    %v4144 = vadd.f32 %v3437, %v3982
    %v4145 = vadd.f32 %v3438, %v3987
    %v4146 = vadd.f32 %v3439, %v3992
    %v4147 = vadd.f32 %v3440, %v3997
    %v4148 = vadd.f32 %v3441, %v4002
    %v4149 = vadd.f32 %v3442, %v4007
    %v4150 = vadd.f32 %v3443, %v4012
    %v4151 = vadd.f32 %v3444, %v4017
    %v4152 = vadd.f32 %v3445, %v4022
    %v4153 = vadd.f32 %v3446, %v4027
    %v4154 = vadd.f32 %v3447, %v4032
    %v4155 = vadd.f32 %v3448, %v4037
    %v4156 = vadd.f32 %v3449, %v4042
    %v4157 = vadd.f32 %v3450, %v4047
    %v4158 = vadd.f32 %v3451, %v4052
    %v4159 = vadd.f32 %v3452, %v4057
    %v4160 = vadd.f32 %v3453, %v4062
    %v4161 = vadd.f32 %v3454, %v4067
    %v4162 = vadd.f32 %v3455, %v4072
    %v4163 = vadd.f32 %v3456, %v4077
    %v4164 = vadd.f32 %v3457, %v4082
    %v4165 = vadd.f32 %v3458, %v4087
    %v4166 = vadd.f32 %v3459, %v4092
    %v4167 = vadd.f32 %v3460, %v4097
    %v4168 = vadd.f32 %v3461, %v4102
    %v4169 = vld [vmem:[%s0 + $0x20] sm:$0xff]
    %v4170 = vld [vmem:[%s0 + $0x28] sm:$0xff]
    %v4171 = vld [vmem:[%s0 + $0x30] sm:$0xff]
    %v4172 = vld [vmem:[%s0 + $0x38] sm:$0xff]
    %v4173 = vld [vmem:[%s0 + $0x40] sm:$0xff]
    %v4174 = vld [vmem:[%s0 + $0x48] sm:$0xff]
    %v4175 = vld [vmem:[%s0 + $0x50] sm:$0xff]
    %v4176 = vld [vmem:[%s0 + $0x58] sm:$0xff]
    %v4177 = vld [vmem:[%s0 + $0x60] sm:$0xff]
    %v4178 = vld [vmem:[%s0 + $0x68] sm:$0xff]
    %v4179 = vld [vmem:[%s0 + $0x70] sm:$0xff]
    %v4180 = vld [vmem:[%s0 + $0x78] sm:$0xff]
    %v4181 = vld [vmem:[%s0 + $0x80] sm:$0xff]
    %v4182 = vld [vmem:[%s0 + $0x88] sm:$0xff]
    %v4183 = vld [vmem:[%s0 + $0x90] sm:$0xff]
    %v4184 = vld [vmem:[%s0 + $0x98] sm:$0xff]
    %v4185 = vld [vmem:[%s0 + $0xa0] sm:$0xff]
    %v4186 = vld [vmem:[%s0 + $0xa8] sm:$0xff]
    %v4187 = vld [vmem:[%s0 + $0xb0] sm:$0xff]
    %v4188 = vld [vmem:[%s0 + $0xb8] sm:$0xff]
    %v4189 = vld [vmem:[%s0 + $0xc0] sm:$0xff]
    %v4190 = vld [vmem:[%s0 + $0xc8] sm:$0xff]
    %v4191 = vld [vmem:[%s0 + $0xd0] sm:$0xff]
    %v4192 = vld [vmem:[%s0 + $0xd8] sm:$0xff]
    %v4193 = vld [vmem:[%s0 + $0xe0] sm:$0xff]
    %v4194 = vld [vmem:[%s0 + $0xe8] sm:$0xff]
    %v4195 = vld [vmem:[%s0 + $0xf0] sm:$0xff]
    %v4196 = vld [vmem:[%s0 + $0xf8] sm:$0xff]
    %v4197 = vld [vmem:[%s0 + $0x100] sm:$0xff]
    %v4198 = vld [vmem:[%s0 + $0x108] sm:$0xff]
    %v4199 = vld [vmem:[%s0 + $0x110] sm:$0xff]
    %v4200 = vld [vmem:[%s0 + $0x118] sm:$0xff]
    %v4201 = vld [vmem:[%s0 + $0x120] sm:$0xff]
    %v4202 = vld [vmem:[%s0 + $0x128] sm:$0xff]
    %v4203 = vld [vmem:[%s0 + $0x130] sm:$0xff]
    %v4204 = vld [vmem:[%s0 + $0x138] sm:$0xff]
    %v4205 = vld [vmem:[%s0 + $0x140] sm:$0xff]
    %v4206 = vld [vmem:[%s0 + $0x148] sm:$0xff]
    %v4207 = vld [vmem:[%s0 + $0x150] sm:$0xff]
    %v4208 = vld [vmem:[%s0 + $0x158] sm:$0xff]
    %v4209 = vld [vmem:[%s0 + $0x160] sm:$0xff]
    %v4210 = vld [vmem:[%s0 + $0x168] sm:$0xff]
    %v4211 = vld [vmem:[%s0 + $0x170] sm:$0xff]
    %v4212 = vld [vmem:[%s0 + $0x178] sm:$0xff]
    %v4213 = vld [vmem:[%s0 + $0x180] sm:$0xff]
    %v4214 = vld [vmem:[%s0 + $0x188] sm:$0xff]
    %v4215 = vld [vmem:[%s0 + $0x190] sm:$0xff]
    %v4216 = vld [vmem:[%s0 + $0x198] sm:$0xff]
    %v4217 = vld [vmem:[%s0 + $0x1a0] sm:$0xff]
    %v4218 = vld [vmem:[%s0 + $0x1a8] sm:$0xff]
    %v4219 = vld [vmem:[%s0 + $0x1b0] sm:$0xff]
    %v4220 = vld [vmem:[%s0 + $0x1b8] sm:$0xff]
    %v4221 = vld [vmem:[%s0 + $0x1c0] sm:$0xff]
    %v4222 = vld [vmem:[%s0 + $0x1c8] sm:$0xff]
    %v4223 = vld [vmem:[%s0 + $0x1d0] sm:$0xff]
    %v4224 = vld [vmem:[%s0 + $0x1d8] sm:$0xff]
    %v4225 = vld [vmem:[%s0 + $0x1e0] sm:$0xff]
    %v4226 = vld [vmem:[%s0 + $0x1e8] sm:$0xff]
    %v4227 = vld [vmem:[%s0 + $0x1f0] sm:$0xff]
    %v4228 = vld [vmem:[%s0 + $0x1f8] sm:$0xff]
    %v4229 = vld [vmem:[%s0 + $0x200] sm:$0xff]
    %v4230 = vld [vmem:[%s0 + $0x208] sm:$0xff]
    %v4231 = vld [vmem:[%s0 + $0x210] sm:$0xff]
    %v4232 = vld [vmem:[%s0 + $0x218] sm:$0xff]
    %s4233 = scalar_lea.vmem %s1, 48
    %v4234 = vld [vmem:[%s4233] sm:$0xff]
    %v4236 = vsel %vm186, %v4169, 0
    %v4239 = vsel %vm186, %v4170, 0
    %v4242 = vsel %vm186, %v4171, 0
    %v4245 = vsel %vm186, %v4172, 0
    %v4248 = vsel %vm186, %v4173, 0
    %v4251 = vsel %vm186, %v4174, 0
    %v4254 = vsel %vm186, %v4175, 0
    %v4257 = vsel %vm186, %v4176, 0
    %v4260 = vsel %vm186, %v4177, 0
    %v4263 = vsel %vm186, %v4178, 0
    %v4266 = vsel %vm186, %v4179, 0
    %v4269 = vsel %vm186, %v4180, 0
    %v4272 = vsel %vm186, %v4181, 0
    %v4275 = vsel %vm186, %v4182, 0
    %v4278 = vsel %vm186, %v4183, 0
    %v4281 = vsel %vm186, %v4184, 0
    %v4284 = vsel %vm186, %v4185, 0
    %v4287 = vsel %vm186, %v4186, 0
    %v4290 = vsel %vm186, %v4187, 0
    %v4293 = vsel %vm186, %v4188, 0
    %v4296 = vsel %vm186, %v4189, 0
    %v4299 = vsel %vm186, %v4190, 0
    %v4302 = vsel %vm186, %v4191, 0
    %v4305 = vsel %vm186, %v4192, 0
    %v4308 = vsel %vm186, %v4193, 0
    %v4311 = vsel %vm186, %v4194, 0
    %v4314 = vsel %vm186, %v4195, 0
    %v4317 = vsel %vm186, %v4196, 0
    %v4320 = vsel %vm186, %v4197, 0
    %v4323 = vsel %vm186, %v4198, 0
    %v4326 = vsel %vm186, %v4199, 0
    %v4329 = vsel %vm186, %v4200, 0
    %v4332 = vsel %vm186, %v4201, 0
    %v4335 = vsel %vm186, %v4202, 0
    %v4338 = vsel %vm186, %v4203, 0
    %v4341 = vsel %vm186, %v4204, 0
    %v4344 = vsel %vm186, %v4205, 0
    %v4347 = vsel %vm186, %v4206, 0
    %v4350 = vsel %vm186, %v4207, 0
    %v4353 = vsel %vm186, %v4208, 0
    %v4356 = vsel %vm186, %v4209, 0
    %v4359 = vsel %vm186, %v4210, 0
    %v4362 = vsel %vm186, %v4211, 0
    %v4365 = vsel %vm186, %v4212, 0
    %v4368 = vsel %vm186, %v4213, 0
    %v4371 = vsel %vm186, %v4214, 0
    %v4374 = vsel %vm186, %v4215, 0
    %v4377 = vsel %vm186, %v4216, 0
    %v4380 = vsel %vm186, %v4217, 0
    %v4383 = vsel %vm186, %v4218, 0
    %v4386 = vsel %vm186, %v4219, 0
    %v4389 = vsel %vm186, %v4220, 0
    %v4392 = vsel %vm186, %v4221, 0
    %v4395 = vsel %vm186, %v4222, 0
    %v4398 = vsel %vm186, %v4223, 0
    %v4401 = vsel %vm186, %v4224, 0
    %v4404 = vsel %vm186, %v4225, 0
    %v4407 = vsel %vm186, %v4226, 0
    %v4410 = vsel %vm186, %v4227, 0
    %v4413 = vsel %vm186, %v4228, 0
    %v4416 = vsel %vm186, %v4229, 0
    %v4419 = vsel %vm186, %v4230, 0
    %v4422 = vsel %vm186, %v4231, 0
    %v4425 = vsel %vm186, %v4232, 0
    %4427 = vmatprep.subr.mxu0 0.0
    %4428 = vmatpush1.msra.mxu0 %v4234
    %4429 = vmatprep.subr.mxu0 0.0
    %4430 = vmatpush1.msra.mxu0 0.0
    %4431 = vmatprep.subr.mxu0 0.0
    %4432 = vmatpush1.msra.mxu0 0.0
    %4433 = vmatprep.subr.mxu0 0.0
    %4434 = vmatpush1.msra.mxu0 0.0
    %4435 = vmatprep.subr.mxu0 0.0
    %4436 = vmatpush1.msra.mxu0 0.0
    %4437 = vmatprep.subr.mxu0 0.0
    %4438 = vmatpush1.msra.mxu0 0.0
    %4439 = vmatprep.subr.mxu0 0.0
    %4440 = vmatpush1.msra.mxu0 0.0
    %4441 = vmatprep.subr.mxu0 0.0
    %4442 = vmatpush1.msra.mxu0 0.0
    %4443 = vmatprep.subr.mxu0 0.0
    %4444 = vmatpush1.msra.mxu0 0.0
    %4445 = vmatprep.subr.mxu0 0.0
    %4446 = vmatpush1.msra.mxu0 0.0
    %4447 = vmatprep.subr.mxu0 0.0
    %4448 = vmatpush1.msra.mxu0 0.0
    %4449 = vmatprep.subr.mxu0 0.0
    %4450 = vmatpush1.msra.mxu0 0.0
    %4451 = vmatprep.subr.mxu0 0.0
    %4452 = vmatpush1.msra.mxu0 0.0
    %4453 = vmatprep.subr.mxu0 0.0
    %4454 = vmatpush1.msra.mxu0 0.0
    %4455 = vmatprep.subr.mxu0 0.0
    %4456 = vmatpush1.msra.mxu0 0.0
    %4457 = vmatprep.subr.mxu0 0.0
    %4458 = vmatpush1.msra.mxu0 0.0
    %4459 = vmatprep.subr.mxu0 0.0
    %4460 = vmatpush1.msra.mxu0 0.0
    %4461 = vmatprep.subr.mxu0 0.0
    %4462 = vmatpush1.msra.mxu0 0.0
    %4463 = vmatprep.subr.mxu0 0.0
    %4464 = vmatpush1.msra.mxu0 0.0
    %4465 = vmatprep.subr.mxu0 0.0
    %4466 = vmatpush1.msra.mxu0 0.0
    %4467 = vmatprep.subr.mxu0 0.0
    %4468 = vmatpush1.msra.mxu0 0.0
    %4469 = vmatprep.subr.mxu0 0.0
    %4470 = vmatpush1.msra.mxu0 0.0
    %4471 = vmatprep.subr.mxu0 0.0
    %4472 = vmatpush1.msra.mxu0 0.0
    %4473 = vmatprep.subr.mxu0 0.0
    %4474 = vmatpush1.msra.mxu0 0.0
    %4475 = vmatprep.subr.mxu0 0.0
    %4476 = vmatpush1.msra.mxu0 0.0
    %4477 = vmatprep.subr.mxu0 0.0
    %4478 = vmatpush1.msra.mxu0 0.0
    %4479 = vmatprep.subr.mxu0 0.0
    %4480 = vmatpush1.msra.mxu0 0.0
    %4481 = vmatprep.subr.mxu0 0.0
    %4482 = vmatpush1.msra.mxu0 0.0
    %4483 = vmatprep.subr.mxu0 0.0
    %4484 = vmatpush1.msra.mxu0 0.0
    %4485 = vmatprep.subr.mxu0 0.0
    %4486 = vmatpush1.msra.mxu0 0.0
    %4487 = vmatprep.subr.mxu0 0.0
    %4488 = vmatpush1.msra.mxu0 0.0
    %4489 = vmatprep.subr.mxu0 0.0
    %4490 = vmatpush1.msra.mxu0 0.0
    %4491 = vmatprep.mubr.f32.mxu0 0.0
    %4492 = vmatmul.mubr.f32.gmra.mrb[0].mxu0 %v4236
    %v4493 = vpop.f32.mrb[0].mxu0
    %v4494 = vadd.f32 0.0, %v4493
    %v4495 = vpop.f32.mrb[0].mxu0
    %4496 = vmatprep.mubr.f32.mxu0 0.0
    %4497 = vmatmul.mubr.f32.gmra.mrb[0].mxu0 %v4239
    %v4498 = vpop.f32.mrb[0].mxu0
    %v4499 = vadd.f32 0.0, %v4498
    %v4500 = vpop.f32.mrb[0].mxu0
    %4501 = vmatprep.mubr.f32.mxu0 0.0
    %4502 = vmatmul.mubr.f32.gmra.mrb[0].mxu0 %v4242
    %v4503 = vpop.f32.mrb[0].mxu0
    %v4504 = vadd.f32 0.0, %v4503
    %v4505 = vpop.f32.mrb[0].mxu0
    %4506 = vmatprep.mubr.f32.mxu0 0.0
    %4507 = vmatmul.mubr.f32.gmra.mrb[0].mxu0 %v4245
    %v4508 = vpop.f32.mrb[0].mxu0
    %v4509 = vadd.f32 0.0, %v4508
    %v4510 = vpop.f32.mrb[0].mxu0
    %4511 = vmatprep.mubr.f32.mxu0 0.0
    %4512 = vmatmul.mubr.f32.gmra.mrb[0].mxu0 %v4248
    %v4513 = vpop.f32.mrb[0].mxu0
    %v4514 = vadd.f32 0.0, %v4513
    %v4515 = vpop.f32.mrb[0].mxu0
    %4516 = vmatprep.mubr.f32.mxu0 0.0
    %4517 = vmatmul.mubr.f32.gmra.mrb[0].mxu0 %v4251
    %v4518 = vpop.f32.mrb[0].mxu0
    %v4519 = vadd.f32 0.0, %v4518
    %v4520 = vpop.f32.mrb[0].mxu0
    %4521 = vmatprep.mubr.f32.mxu0 0.0
    %4522 = vmatmul.mubr.f32.gmra.mrb[0].mxu0 %v4254
    %v4523 = vpop.f32.mrb[0].mxu0
    %v4524 = vadd.f32 0.0, %v4523
    %v4525 = vpop.f32.mrb[0].mxu0
    %4526 = vmatprep.mubr.f32.mxu0 0.0
    %4527 = vmatmul.mubr.f32.gmra.mrb[0].mxu0 %v4257
    %v4528 = vpop.f32.mrb[0].mxu0
    %v4529 = vadd.f32 0.0, %v4528
    %v4530 = vpop.f32.mrb[0].mxu0
    %4531 = vmatprep.mubr.f32.mxu0 0.0
    %4532 = vmatmul.mubr.f32.gmra.mrb[0].mxu0 %v4260
    %v4533 = vpop.f32.mrb[0].mxu0
    %v4534 = vadd.f32 0.0, %v4533
    %v4535 = vpop.f32.mrb[0].mxu0
    %4536 = vmatprep.mubr.f32.mxu0 0.0
    %4537 = vmatmul.mubr.f32.gmra.mrb[0].mxu0 %v4263
    %v4538 = vpop.f32.mrb[0].mxu0
    %v4539 = vadd.f32 0.0, %v4538
    %v4540 = vpop.f32.mrb[0].mxu0
    %4541 = vmatprep.mubr.f32.mxu0 0.0
    %4542 = vmatmul.mubr.f32.gmra.mrb[0].mxu0 %v4266
    %v4543 = vpop.f32.mrb[0].mxu0
    %v4544 = vadd.f32 0.0, %v4543
    %v4545 = vpop.f32.mrb[0].mxu0
    %4546 = vmatprep.mubr.f32.mxu0 0.0
    %4547 = vmatmul.mubr.f32.gmra.mrb[0].mxu0 %v4269
    %v4548 = vpop.f32.mrb[0].mxu0
    %v4549 = vadd.f32 0.0, %v4548
    %v4550 = vpop.f32.mrb[0].mxu0
    %4551 = vmatprep.mubr.f32.mxu0 0.0
    %4552 = vmatmul.mubr.f32.gmra.mrb[0].mxu0 %v4272
    %v4553 = vpop.f32.mrb[0].mxu0
    %v4554 = vadd.f32 0.0, %v4553
    %v4555 = vpop.f32.mrb[0].mxu0
    %4556 = vmatprep.mubr.f32.mxu0 0.0
    %4557 = vmatmul.mubr.f32.gmra.mrb[0].mxu0 %v4275
    %v4558 = vpop.f32.mrb[0].mxu0
    %v4559 = vadd.f32 0.0, %v4558
    %v4560 = vpop.f32.mrb[0].mxu0
    %4561 = vmatprep.mubr.f32.mxu0 0.0
    %4562 = vmatmul.mubr.f32.gmra.mrb[0].mxu0 %v4278
    %v4563 = vpop.f32.mrb[0].mxu0
    %v4564 = vadd.f32 0.0, %v4563
    %v4565 = vpop.f32.mrb[0].mxu0
    %4566 = vmatprep.mubr.f32.mxu0 0.0
    %4567 = vmatmul.mubr.f32.gmra.mrb[0].mxu0 %v4281
    %v4568 = vpop.f32.mrb[0].mxu0
    %v4569 = vadd.f32 0.0, %v4568
    %v4570 = vpop.f32.mrb[0].mxu0
    %4571 = vmatprep.mubr.f32.mxu0 0.0
    %4572 = vmatmul.mubr.f32.gmra.mrb[0].mxu0 %v4284
    %v4573 = vpop.f32.mrb[0].mxu0
    %v4574 = vadd.f32 0.0, %v4573
    %v4575 = vpop.f32.mrb[0].mxu0
    %4576 = vmatprep.mubr.f32.mxu0 0.0
    %4577 = vmatmul.mubr.f32.gmra.mrb[0].mxu0 %v4287
    %v4578 = vpop.f32.mrb[0].mxu0
    %v4579 = vadd.f32 0.0, %v4578
    %v4580 = vpop.f32.mrb[0].mxu0
    %4581 = vmatprep.mubr.f32.mxu0 0.0
    %4582 = vmatmul.mubr.f32.gmra.mrb[0].mxu0 %v4290
    %v4583 = vpop.f32.mrb[0].mxu0
    %v4584 = vadd.f32 0.0, %v4583
    %v4585 = vpop.f32.mrb[0].mxu0
    %4586 = vmatprep.mubr.f32.mxu0 0.0
    %4587 = vmatmul.mubr.f32.gmra.mrb[0].mxu0 %v4293
    %v4588 = vpop.f32.mrb[0].mxu0
    %v4589 = vadd.f32 0.0, %v4588
    %v4590 = vpop.f32.mrb[0].mxu0
    %4591 = vmatprep.mubr.f32.mxu0 0.0
    %4592 = vmatmul.mubr.f32.gmra.mrb[0].mxu0 %v4296
    %v4593 = vpop.f32.mrb[0].mxu0
    %v4594 = vadd.f32 0.0, %v4593
    %v4595 = vpop.f32.mrb[0].mxu0
    %4596 = vmatprep.mubr.f32.mxu0 0.0
    %4597 = vmatmul.mubr.f32.gmra.mrb[0].mxu0 %v4299
    %v4598 = vpop.f32.mrb[0].mxu0
    %v4599 = vadd.f32 0.0, %v4598
    %v4600 = vpop.f32.mrb[0].mxu0
    %4601 = vmatprep.mubr.f32.mxu0 0.0
    %4602 = vmatmul.mubr.f32.gmra.mrb[0].mxu0 %v4302
    %v4603 = vpop.f32.mrb[0].mxu0
    %v4604 = vadd.f32 0.0, %v4603
    %v4605 = vpop.f32.mrb[0].mxu0
    %4606 = vmatprep.mubr.f32.mxu0 0.0
    %4607 = vmatmul.mubr.f32.gmra.mrb[0].mxu0 %v4305
    %v4608 = vpop.f32.mrb[0].mxu0
    %v4609 = vadd.f32 0.0, %v4608
    %v4610 = vpop.f32.mrb[0].mxu0
    %4611 = vmatprep.mubr.f32.mxu0 0.0
    %4612 = vmatmul.mubr.f32.gmra.mrb[0].mxu0 %v4308
    %v4613 = vpop.f32.mrb[0].mxu0
    %v4614 = vadd.f32 0.0, %v4613
    %v4615 = vpop.f32.mrb[0].mxu0
    %4616 = vmatprep.mubr.f32.mxu0 0.0
    %4617 = vmatmul.mubr.f32.gmra.mrb[0].mxu0 %v4311
    %v4618 = vpop.f32.mrb[0].mxu0
    %v4619 = vadd.f32 0.0, %v4618
    %v4620 = vpop.f32.mrb[0].mxu0
    %4621 = vmatprep.mubr.f32.mxu0 0.0
    %4622 = vmatmul.mubr.f32.gmra.mrb[0].mxu0 %v4314
    %v4623 = vpop.f32.mrb[0].mxu0
    %v4624 = vadd.f32 0.0, %v4623
    %v4625 = vpop.f32.mrb[0].mxu0
    %4626 = vmatprep.mubr.f32.mxu0 0.0
    %4627 = vmatmul.mubr.f32.gmra.mrb[0].mxu0 %v4317
    %v4628 = vpop.f32.mrb[0].mxu0
    %v4629 = vadd.f32 0.0, %v4628
    %v4630 = vpop.f32.mrb[0].mxu0
    %4631 = vmatprep.mubr.f32.mxu0 0.0
    %4632 = vmatmul.mubr.f32.gmra.mrb[0].mxu0 %v4320
    %v4633 = vpop.f32.mrb[0].mxu0
    %v4634 = vadd.f32 0.0, %v4633
    %v4635 = vpop.f32.mrb[0].mxu0
    %4636 = vmatprep.mubr.f32.mxu0 0.0
    %4637 = vmatmul.mubr.f32.gmra.mrb[0].mxu0 %v4323
    %v4638 = vpop.f32.mrb[0].mxu0
    %v4639 = vadd.f32 0.0, %v4638
    %v4640 = vpop.f32.mrb[0].mxu0
    %4641 = vmatprep.mubr.f32.mxu0 0.0
    %4642 = vmatmul.mubr.f32.gmra.mrb[0].mxu0 %v4326
    %v4643 = vpop.f32.mrb[0].mxu0
    %v4644 = vadd.f32 0.0, %v4643
    %v4645 = vpop.f32.mrb[0].mxu0
    %4646 = vmatprep.mubr.f32.mxu0 0.0
    %4647 = vmatmul.mubr.f32.gmra.mrb[0].mxu0 %v4329
    %v4648 = vpop.f32.mrb[0].mxu0
    %v4649 = vadd.f32 0.0, %v4648
    %v4650 = vpop.f32.mrb[0].mxu0
    %4651 = vmatprep.mubr.f32.mxu0 0.0
    %4652 = vmatmul.mubr.f32.gmra.mrb[0].mxu0 %v4332
    %v4653 = vpop.f32.mrb[0].mxu0
    %v4654 = vadd.f32 0.0, %v4653
    %v4655 = vpop.f32.mrb[0].mxu0
    %4656 = vmatprep.mubr.f32.mxu0 0.0
    %4657 = vmatmul.mubr.f32.gmra.mrb[0].mxu0 %v4335
    %v4658 = vpop.f32.mrb[0].mxu0
    %v4659 = vadd.f32 0.0, %v4658
    %v4660 = vpop.f32.mrb[0].mxu0
    %4661 = vmatprep.mubr.f32.mxu0 0.0
    %4662 = vmatmul.mubr.f32.gmra.mrb[0].mxu0 %v4338
    %v4663 = vpop.f32.mrb[0].mxu0
    %v4664 = vadd.f32 0.0, %v4663
    %v4665 = vpop.f32.mrb[0].mxu0
    %4666 = vmatprep.mubr.f32.mxu0 0.0
    %4667 = vmatmul.mubr.f32.gmra.mrb[0].mxu0 %v4341
    %v4668 = vpop.f32.mrb[0].mxu0
    %v4669 = vadd.f32 0.0, %v4668
    %v4670 = vpop.f32.mrb[0].mxu0
    %4671 = vmatprep.mubr.f32.mxu0 0.0
    %4672 = vmatmul.mubr.f32.gmra.mrb[0].mxu0 %v4344
    %v4673 = vpop.f32.mrb[0].mxu0
    %v4674 = vadd.f32 0.0, %v4673
    %v4675 = vpop.f32.mrb[0].mxu0
    %4676 = vmatprep.mubr.f32.mxu0 0.0
    %4677 = vmatmul.mubr.f32.gmra.mrb[0].mxu0 %v4347
    %v4678 = vpop.f32.mrb[0].mxu0
    %v4679 = vadd.f32 0.0, %v4678
    %v4680 = vpop.f32.mrb[0].mxu0
    %4681 = vmatprep.mubr.f32.mxu0 0.0
    %4682 = vmatmul.mubr.f32.gmra.mrb[0].mxu0 %v4350
    %v4683 = vpop.f32.mrb[0].mxu0
    %v4684 = vadd.f32 0.0, %v4683
    %v4685 = vpop.f32.mrb[0].mxu0
    %4686 = vmatprep.mubr.f32.mxu0 0.0
    %4687 = vmatmul.mubr.f32.gmra.mrb[0].mxu0 %v4353
    %v4688 = vpop.f32.mrb[0].mxu0
    %v4689 = vadd.f32 0.0, %v4688
    %v4690 = vpop.f32.mrb[0].mxu0
    %4691 = vmatprep.mubr.f32.mxu0 0.0
    %4692 = vmatmul.mubr.f32.gmra.mrb[0].mxu0 %v4356
    %v4693 = vpop.f32.mrb[0].mxu0
    %v4694 = vadd.f32 0.0, %v4693
    %v4695 = vpop.f32.mrb[0].mxu0
    %4696 = vmatprep.mubr.f32.mxu0 0.0
    %4697 = vmatmul.mubr.f32.gmra.mrb[0].mxu0 %v4359
    %v4698 = vpop.f32.mrb[0].mxu0
    %v4699 = vadd.f32 0.0, %v4698
    %v4700 = vpop.f32.mrb[0].mxu0
    %4701 = vmatprep.mubr.f32.mxu0 0.0
    %4702 = vmatmul.mubr.f32.gmra.mrb[0].mxu0 %v4362
    %v4703 = vpop.f32.mrb[0].mxu0
    %v4704 = vadd.f32 0.0, %v4703
    %v4705 = vpop.f32.mrb[0].mxu0
    %4706 = vmatprep.mubr.f32.mxu0 0.0
    %4707 = vmatmul.mubr.f32.gmra.mrb[0].mxu0 %v4365
    %v4708 = vpop.f32.mrb[0].mxu0
    %v4709 = vadd.f32 0.0, %v4708
    %v4710 = vpop.f32.mrb[0].mxu0
    %4711 = vmatprep.mubr.f32.mxu0 0.0
    %4712 = vmatmul.mubr.f32.gmra.mrb[0].mxu0 %v4368
    %v4713 = vpop.f32.mrb[0].mxu0
    %v4714 = vadd.f32 0.0, %v4713
    %v4715 = vpop.f32.mrb[0].mxu0
    %4716 = vmatprep.mubr.f32.mxu0 0.0
    %4717 = vmatmul.mubr.f32.gmra.mrb[0].mxu0 %v4371
    %v4718 = vpop.f32.mrb[0].mxu0
    %v4719 = vadd.f32 0.0, %v4718
    %v4720 = vpop.f32.mrb[0].mxu0
    %4721 = vmatprep.mubr.f32.mxu0 0.0
    %4722 = vmatmul.mubr.f32.gmra.mrb[0].mxu0 %v4374
    %v4723 = vpop.f32.mrb[0].mxu0
    %v4724 = vadd.f32 0.0, %v4723
    %v4725 = vpop.f32.mrb[0].mxu0
    %4726 = vmatprep.mubr.f32.mxu0 0.0
    %4727 = vmatmul.mubr.f32.gmra.mrb[0].mxu0 %v4377
    %v4728 = vpop.f32.mrb[0].mxu0
    %v4729 = vadd.f32 0.0, %v4728
    %v4730 = vpop.f32.mrb[0].mxu0
    %4731 = vmatprep.mubr.f32.mxu0 0.0
    %4732 = vmatmul.mubr.f32.gmra.mrb[0].mxu0 %v4380
    %v4733 = vpop.f32.mrb[0].mxu0
    %v4734 = vadd.f32 0.0, %v4733
    %v4735 = vpop.f32.mrb[0].mxu0
    %4736 = vmatprep.mubr.f32.mxu0 0.0
    %4737 = vmatmul.mubr.f32.gmra.mrb[0].mxu0 %v4383
    %v4738 = vpop.f32.mrb[0].mxu0
    %v4739 = vadd.f32 0.0, %v4738
    %v4740 = vpop.f32.mrb[0].mxu0
    %4741 = vmatprep.mubr.f32.mxu0 0.0
    %4742 = vmatmul.mubr.f32.gmra.mrb[0].mxu0 %v4386
    %v4743 = vpop.f32.mrb[0].mxu0
    %v4744 = vadd.f32 0.0, %v4743
    %v4745 = vpop.f32.mrb[0].mxu0
    %4746 = vmatprep.mubr.f32.mxu0 0.0
    %4747 = vmatmul.mubr.f32.gmra.mrb[0].mxu0 %v4389
    %v4748 = vpop.f32.mrb[0].mxu0
    %v4749 = vadd.f32 0.0, %v4748
    %v4750 = vpop.f32.mrb[0].mxu0
    %4751 = vmatprep.mubr.f32.mxu0 0.0
    %4752 = vmatmul.mubr.f32.gmra.mrb[0].mxu0 %v4392
    %v4753 = vpop.f32.mrb[0].mxu0
    %v4754 = vadd.f32 0.0, %v4753
    %v4755 = vpop.f32.mrb[0].mxu0
    %4756 = vmatprep.mubr.f32.mxu0 0.0
    %4757 = vmatmul.mubr.f32.gmra.mrb[0].mxu0 %v4395
    %v4758 = vpop.f32.mrb[0].mxu0
    %v4759 = vadd.f32 0.0, %v4758
    %v4760 = vpop.f32.mrb[0].mxu0
    %4761 = vmatprep.mubr.f32.mxu0 0.0
    %4762 = vmatmul.mubr.f32.gmra.mrb[0].mxu0 %v4398
    %v4763 = vpop.f32.mrb[0].mxu0
    %v4764 = vadd.f32 0.0, %v4763
    %v4765 = vpop.f32.mrb[0].mxu0
    %4766 = vmatprep.mubr.f32.mxu0 0.0
    %4767 = vmatmul.mubr.f32.gmra.mrb[0].mxu0 %v4401
    %v4768 = vpop.f32.mrb[0].mxu0
    %v4769 = vadd.f32 0.0, %v4768
    %v4770 = vpop.f32.mrb[0].mxu0
    %4771 = vmatprep.mubr.f32.mxu0 0.0
    %4772 = vmatmul.mubr.f32.gmra.mrb[0].mxu0 %v4404
    %v4773 = vpop.f32.mrb[0].mxu0
    %v4774 = vadd.f32 0.0, %v4773
    %v4775 = vpop.f32.mrb[0].mxu0
    %4776 = vmatprep.mubr.f32.mxu0 0.0
    %4777 = vmatmul.mubr.f32.gmra.mrb[0].mxu0 %v4407
    %v4778 = vpop.f32.mrb[0].mxu0
    %v4779 = vadd.f32 0.0, %v4778
    %v4780 = vpop.f32.mrb[0].mxu0
    %4781 = vmatprep.mubr.f32.mxu0 0.0
    %4782 = vmatmul.mubr.f32.gmra.mrb[0].mxu0 %v4410
    %v4783 = vpop.f32.mrb[0].mxu0
    %v4784 = vadd.f32 0.0, %v4783
    %v4785 = vpop.f32.mrb[0].mxu0
    %4786 = vmatprep.mubr.f32.mxu0 0.0
    %4787 = vmatmul.mubr.f32.gmra.mrb[0].mxu0 %v4413
    %v4788 = vpop.f32.mrb[0].mxu0
    %v4789 = vadd.f32 0.0, %v4788
    %v4790 = vpop.f32.mrb[0].mxu0
    %4791 = vmatprep.mubr.f32.mxu0 0.0
    %4792 = vmatmul.mubr.f32.gmra.mrb[0].mxu0 %v4416
    %v4793 = vpop.f32.mrb[0].mxu0
    %v4794 = vadd.f32 0.0, %v4793
    %v4795 = vpop.f32.mrb[0].mxu0
    %4796 = vmatprep.mubr.f32.mxu0 0.0
    %4797 = vmatmul.mubr.f32.gmra.mrb[0].mxu0 %v4419
    %v4798 = vpop.f32.mrb[0].mxu0
    %v4799 = vadd.f32 0.0, %v4798
    %v4800 = vpop.f32.mrb[0].mxu0
    %4801 = vmatprep.mubr.f32.mxu0 0.0
    %4802 = vmatmul.mubr.f32.gmra.mrb[0].mxu0 %v4422
    %v4803 = vpop.f32.mrb[0].mxu0
    %v4804 = vadd.f32 0.0, %v4803
    %v4805 = vpop.f32.mrb[0].mxu0
    %4806 = vmatprep.mubr.f32.mxu0 0.0
    %4807 = vmatmul.mubr.f32.gmra.mrb[0].mxu0 %v4425
    %v4808 = vpop.f32.mrb[0].mxu0
    %v4809 = vadd.f32 0.0, %v4808
    %v4810 = vpop.f32.mrb[0].mxu0
    %4811 = vdwg.mxu0
    %v4812 = vadd.f32 %v4105, %v4494
    %v4813 = vadd.f32 %v4106, %v4499
    %v4814 = vadd.f32 %v4107, %v4504
    %v4815 = vadd.f32 %v4108, %v4509
    %v4816 = vadd.f32 %v4109, %v4514
    %v4817 = vadd.f32 %v4110, %v4519
    %v4818 = vadd.f32 %v4111, %v4524
    %v4819 = vadd.f32 %v4112, %v4529
    %v4820 = vadd.f32 %v4113, %v4534
    %v4821 = vadd.f32 %v4114, %v4539
    %v4822 = vadd.f32 %v4115, %v4544
    %v4823 = vadd.f32 %v4116, %v4549
    %v4824 = vadd.f32 %v4117, %v4554
    %v4825 = vadd.f32 %v4118, %v4559
    %v4826 = vadd.f32 %v4119, %v4564
    %v4827 = vadd.f32 %v4120, %v4569
    %v4828 = vadd.f32 %v4121, %v4574
    %v4829 = vadd.f32 %v4122, %v4579
    %v4830 = vadd.f32 %v4123, %v4584
    %v4831 = vadd.f32 %v4124, %v4589
    %v4832 = vadd.f32 %v4125, %v4594
    %v4833 = vadd.f32 %v4126, %v4599
    %v4834 = vadd.f32 %v4127, %v4604
    %v4835 = vadd.f32 %v4128, %v4609
    %v4836 = vadd.f32 %v4129, %v4614
    %v4837 = vadd.f32 %v4130, %v4619
    %v4838 = vadd.f32 %v4131, %v4624
    %v4839 = vadd.f32 %v4132, %v4629
    %v4840 = vadd.f32 %v4133, %v4634
    %v4841 = vadd.f32 %v4134, %v4639
    %v4842 = vadd.f32 %v4135, %v4644
    %v4843 = vadd.f32 %v4136, %v4649
    %v4844 = vadd.f32 %v4137, %v4654
    %v4845 = vadd.f32 %v4138, %v4659
    %v4846 = vadd.f32 %v4139, %v4664
    %v4847 = vadd.f32 %v4140, %v4669
    %v4848 = vadd.f32 %v4141, %v4674
    %v4849 = vadd.f32 %v4142, %v4679
    %v4850 = vadd.f32 %v4143, %v4684
    %v4851 = vadd.f32 %v4144, %v4689
    %v4852 = vadd.f32 %v4145, %v4694
    %v4853 = vadd.f32 %v4146, %v4699
    %v4854 = vadd.f32 %v4147, %v4704
    %v4855 = vadd.f32 %v4148, %v4709
    %v4856 = vadd.f32 %v4149, %v4714
    %v4857 = vadd.f32 %v4150, %v4719
    %v4858 = vadd.f32 %v4151, %v4724
    %v4859 = vadd.f32 %v4152, %v4729
    %v4860 = vadd.f32 %v4153, %v4734
    %v4861 = vadd.f32 %v4154, %v4739
    %v4862 = vadd.f32 %v4155, %v4744
    %v4863 = vadd.f32 %v4156, %v4749
    %v4864 = vadd.f32 %v4157, %v4754
    %v4865 = vadd.f32 %v4158, %v4759
    %v4866 = vadd.f32 %v4159, %v4764
    %v4867 = vadd.f32 %v4160, %v4769
    %v4868 = vadd.f32 %v4161, %v4774
    %v4869 = vadd.f32 %v4162, %v4779
    %v4870 = vadd.f32 %v4163, %v4784
    %v4871 = vadd.f32 %v4164, %v4789
    %v4872 = vadd.f32 %v4165, %v4794
    %v4873 = vadd.f32 %v4166, %v4799
    %v4874 = vadd.f32 %v4167, %v4804
    %v4875 = vadd.f32 %v4168, %v4809
    %v4876 = vld [vmem:[%s0 + $0x21] sm:$0xff]
    %v4877 = vld [vmem:[%s0 + $0x29] sm:$0xff]
    %v4878 = vld [vmem:[%s0 + $0x31] sm:$0xff]
    %v4879 = vld [vmem:[%s0 + $0x39] sm:$0xff]
    %v4880 = vld [vmem:[%s0 + $0x41] sm:$0xff]
    %v4881 = vld [vmem:[%s0 + $0x49] sm:$0xff]
    %v4882 = vld [vmem:[%s0 + $0x51] sm:$0xff]
    %v4883 = vld [vmem:[%s0 + $0x59] sm:$0xff]
    %v4884 = vld [vmem:[%s0 + $0x61] sm:$0xff]
    %v4885 = vld [vmem:[%s0 + $0x69] sm:$0xff]
    %v4886 = vld [vmem:[%s0 + $0x71] sm:$0xff]
    %v4887 = vld [vmem:[%s0 + $0x79] sm:$0xff]
    %v4888 = vld [vmem:[%s0 + $0x81] sm:$0xff]
    %v4889 = vld [vmem:[%s0 + $0x89] sm:$0xff]
    %v4890 = vld [vmem:[%s0 + $0x91] sm:$0xff]
    %v4891 = vld [vmem:[%s0 + $0x99] sm:$0xff]
    %v4892 = vld [vmem:[%s0 + $0xa1] sm:$0xff]
    %v4893 = vld [vmem:[%s0 + $0xa9] sm:$0xff]
    %v4894 = vld [vmem:[%s0 + $0xb1] sm:$0xff]
    %v4895 = vld [vmem:[%s0 + $0xb9] sm:$0xff]
    %v4896 = vld [vmem:[%s0 + $0xc1] sm:$0xff]
    %v4897 = vld [vmem:[%s0 + $0xc9] sm:$0xff]
    %v4898 = vld [vmem:[%s0 + $0xd1] sm:$0xff]
    %v4899 = vld [vmem:[%s0 + $0xd9] sm:$0xff]
    %v4900 = vld [vmem:[%s0 + $0xe1] sm:$0xff]
    %v4901 = vld [vmem:[%s0 + $0xe9] sm:$0xff]
    %v4902 = vld [vmem:[%s0 + $0xf1] sm:$0xff]
    %v4903 = vld [vmem:[%s0 + $0xf9] sm:$0xff]
    %v4904 = vld [vmem:[%s0 + $0x101] sm:$0xff]
    %v4905 = vld [vmem:[%s0 + $0x109] sm:$0xff]
    %v4906 = vld [vmem:[%s0 + $0x111] sm:$0xff]
    %v4907 = vld [vmem:[%s0 + $0x119] sm:$0xff]
    %v4908 = vld [vmem:[%s0 + $0x121] sm:$0xff]
    %v4909 = vld [vmem:[%s0 + $0x129] sm:$0xff]
    %v4910 = vld [vmem:[%s0 + $0x131] sm:$0xff]
    %v4911 = vld [vmem:[%s0 + $0x139] sm:$0xff]
    %v4912 = vld [vmem:[%s0 + $0x141] sm:$0xff]
    %v4913 = vld [vmem:[%s0 + $0x149] sm:$0xff]
    %v4914 = vld [vmem:[%s0 + $0x151] sm:$0xff]
    %v4915 = vld [vmem:[%s0 + $0x159] sm:$0xff]
    %v4916 = vld [vmem:[%s0 + $0x161] sm:$0xff]
    %v4917 = vld [vmem:[%s0 + $0x169] sm:$0xff]
    %v4918 = vld [vmem:[%s0 + $0x171] sm:$0xff]
    %v4919 = vld [vmem:[%s0 + $0x179] sm:$0xff]
    %v4920 = vld [vmem:[%s0 + $0x181] sm:$0xff]
    %v4921 = vld [vmem:[%s0 + $0x189] sm:$0xff]
    %v4922 = vld [vmem:[%s0 + $0x191] sm:$0xff]
    %v4923 = vld [vmem:[%s0 + $0x199] sm:$0xff]
    %v4924 = vld [vmem:[%s0 + $0x1a1] sm:$0xff]
    %v4925 = vld [vmem:[%s0 + $0x1a9] sm:$0xff]
    %v4926 = vld [vmem:[%s0 + $0x1b1] sm:$0xff]
    %v4927 = vld [vmem:[%s0 + $0x1b9] sm:$0xff]
    %v4928 = vld [vmem:[%s0 + $0x1c1] sm:$0xff]
    %v4929 = vld [vmem:[%s0 + $0x1c9] sm:$0xff]
    %v4930 = vld [vmem:[%s0 + $0x1d1] sm:$0xff]
    %v4931 = vld [vmem:[%s0 + $0x1d9] sm:$0xff]
    %v4932 = vld [vmem:[%s0 + $0x1e1] sm:$0xff]
    %v4933 = vld [vmem:[%s0 + $0x1e9] sm:$0xff]
    %v4934 = vld [vmem:[%s0 + $0x1f1] sm:$0xff]
    %v4935 = vld [vmem:[%s0 + $0x1f9] sm:$0xff]
    %v4936 = vld [vmem:[%s0 + $0x201] sm:$0xff]
    %v4937 = vld [vmem:[%s0 + $0x209] sm:$0xff]
    %v4938 = vld [vmem:[%s0 + $0x211] sm:$0xff]
    %v4939 = vld [vmem:[%s0 + $0x219] sm:$0xff]
    %s4940 = scalar_lea.vmem %s1, 56
    %v4941 = vld [vmem:[%s4940] sm:$0xff]
    %v4943 = vsel %vm186, %v4876, 0
    %v4946 = vsel %vm186, %v4877, 0
    %v4949 = vsel %vm186, %v4878, 0
    %v4952 = vsel %vm186, %v4879, 0
    %v4955 = vsel %vm186, %v4880, 0
    %v4958 = vsel %vm186, %v4881, 0
    %v4961 = vsel %vm186, %v4882, 0
    %v4964 = vsel %vm186, %v4883, 0
    %v4967 = vsel %vm186, %v4884, 0
    %v4970 = vsel %vm186, %v4885, 0
    %v4973 = vsel %vm186, %v4886, 0
    %v4976 = vsel %vm186, %v4887, 0
    %v4979 = vsel %vm186, %v4888, 0
    %v4982 = vsel %vm186, %v4889, 0
    %v4985 = vsel %vm186, %v4890, 0
    %v4988 = vsel %vm186, %v4891, 0
    %v4991 = vsel %vm186, %v4892, 0
    %v4994 = vsel %vm186, %v4893, 0
    %v4997 = vsel %vm186, %v4894, 0
    %v5000 = vsel %vm186, %v4895, 0
    %v5003 = vsel %vm186, %v4896, 0
    %v5006 = vsel %vm186, %v4897, 0
    %v5009 = vsel %vm186, %v4898, 0
    %v5012 = vsel %vm186, %v4899, 0
    %v5015 = vsel %vm186, %v4900, 0
    %v5018 = vsel %vm186, %v4901, 0
    %v5021 = vsel %vm186, %v4902, 0
    %v5024 = vsel %vm186, %v4903, 0
    %v5027 = vsel %vm186, %v4904, 0
    %v5030 = vsel %vm186, %v4905, 0
    %v5033 = vsel %vm186, %v4906, 0
    %v5036 = vsel %vm186, %v4907, 0
    %v5039 = vsel %vm186, %v4908, 0
    %v5042 = vsel %vm186, %v4909, 0
    %v5045 = vsel %vm186, %v4910, 0
    %v5048 = vsel %vm186, %v4911, 0
    %v5051 = vsel %vm186, %v4912, 0
    %v5054 = vsel %vm186, %v4913, 0
    %v5057 = vsel %vm186, %v4914, 0
    %v5060 = vsel %vm186, %v4915, 0
    %v5063 = vsel %vm186, %v4916, 0
    %v5066 = vsel %vm186, %v4917, 0
    %v5069 = vsel %vm186, %v4918, 0
    %v5072 = vsel %vm186, %v4919, 0
    %v5075 = vsel %vm186, %v4920, 0
    %v5078 = vsel %vm186, %v4921, 0
    %v5081 = vsel %vm186, %v4922, 0
    %v5084 = vsel %vm186, %v4923, 0
    %v5087 = vsel %vm186, %v4924, 0
    %v5090 = vsel %vm186, %v4925, 0
    %v5093 = vsel %vm186, %v4926, 0
    %v5096 = vsel %vm186, %v4927, 0
    %v5099 = vsel %vm186, %v4928, 0
    %v5102 = vsel %vm186, %v4929, 0
    %v5105 = vsel %vm186, %v4930, 0
    %v5108 = vsel %vm186, %v4931, 0
    %v5111 = vsel %vm186, %v4932, 0
    %v5114 = vsel %vm186, %v4933, 0
    %v5117 = vsel %vm186, %v4934, 0
    %v5120 = vsel %vm186, %v4935, 0
    %v5123 = vsel %vm186, %v4936, 0
    %v5126 = vsel %vm186, %v4937, 0
    %v5129 = vsel %vm186, %v4938, 0
    %v5132 = vsel %vm186, %v4939, 0
    %5134 = vmatprep.subr.mxu0 0.0
    %5135 = vmatpush1.msra.mxu0 %v4941
    %5136 = vmatprep.subr.mxu0 0.0
    %5137 = vmatpush1.msra.mxu0 0.0
    %5138 = vmatprep.subr.mxu0 0.0
    %5139 = vmatpush1.msra.mxu0 0.0
    %5140 = vmatprep.subr.mxu0 0.0
    %5141 = vmatpush1.msra.mxu0 0.0
    %5142 = vmatprep.subr.mxu0 0.0
    %5143 = vmatpush1.msra.mxu0 0.0
    %5144 = vmatprep.subr.mxu0 0.0
    %5145 = vmatpush1.msra.mxu0 0.0
    %5146 = vmatprep.subr.mxu0 0.0
    %5147 = vmatpush1.msra.mxu0 0.0
    %5148 = vmatprep.subr.mxu0 0.0
    %5149 = vmatpush1.msra.mxu0 0.0
    %5150 = vmatprep.subr.mxu0 0.0
    %5151 = vmatpush1.msra.mxu0 0.0
    %5152 = vmatprep.subr.mxu0 0.0
    %5153 = vmatpush1.msra.mxu0 0.0
    %5154 = vmatprep.subr.mxu0 0.0
    %5155 = vmatpush1.msra.mxu0 0.0
    %5156 = vmatprep.subr.mxu0 0.0
    %5157 = vmatpush1.msra.mxu0 0.0
    %5158 = vmatprep.subr.mxu0 0.0
    %5159 = vmatpush1.msra.mxu0 0.0
    %5160 = vmatprep.subr.mxu0 0.0
    %5161 = vmatpush1.msra.mxu0 0.0
    %5162 = vmatprep.subr.mxu0 0.0
    %5163 = vmatpush1.msra.mxu0 0.0
    %5164 = vmatprep.subr.mxu0 0.0
    %5165 = vmatpush1.msra.mxu0 0.0
    %5166 = vmatprep.subr.mxu0 0.0
    %5167 = vmatpush1.msra.mxu0 0.0
    %5168 = vmatprep.subr.mxu0 0.0
    %5169 = vmatpush1.msra.mxu0 0.0
    %5170 = vmatprep.subr.mxu0 0.0
    %5171 = vmatpush1.msra.mxu0 0.0
    %5172 = vmatprep.subr.mxu0 0.0
    %5173 = vmatpush1.msra.mxu0 0.0
    %5174 = vmatprep.subr.mxu0 0.0
    %5175 = vmatpush1.msra.mxu0 0.0
    %5176 = vmatprep.subr.mxu0 0.0
    %5177 = vmatpush1.msra.mxu0 0.0
    %5178 = vmatprep.subr.mxu0 0.0
    %5179 = vmatpush1.msra.mxu0 0.0
    %5180 = vmatprep.subr.mxu0 0.0
    %5181 = vmatpush1.msra.mxu0 0.0
    %5182 = vmatprep.subr.mxu0 0.0
    %5183 = vmatpush1.msra.mxu0 0.0
    %5184 = vmatprep.subr.mxu0 0.0
    %5185 = vmatpush1.msra.mxu0 0.0
    %5186 = vmatprep.subr.mxu0 0.0
    %5187 = vmatpush1.msra.mxu0 0.0
    %5188 = vmatprep.subr.mxu0 0.0
    %5189 = vmatpush1.msra.mxu0 0.0
    %5190 = vmatprep.subr.mxu0 0.0
    %5191 = vmatpush1.msra.mxu0 0.0
    %5192 = vmatprep.subr.mxu0 0.0
    %5193 = vmatpush1.msra.mxu0 0.0
    %5194 = vmatprep.subr.mxu0 0.0
    %5195 = vmatpush1.msra.mxu0 0.0
    %5196 = vmatprep.subr.mxu0 0.0
    %5197 = vmatpush1.msra.mxu0 0.0
    %5198 = vmatprep.mubr.f32.mxu0 0.0
    %5199 = vmatmul.mubr.f32.gmra.mrb[0].mxu0 %v4943
    %v5200 = vpop.f32.mrb[0].mxu0
    %v5201 = vadd.f32 0.0, %v5200
    %v5202 = vpop.f32.mrb[0].mxu0
    %5203 = vmatprep.mubr.f32.mxu0 0.0
    %5204 = vmatmul.mubr.f32.gmra.mrb[0].mxu0 %v4946
    %v5205 = vpop.f32.mrb[0].mxu0
    %v5206 = vadd.f32 0.0, %v5205
    %v5207 = vpop.f32.mrb[0].mxu0
    %5208 = vmatprep.mubr.f32.mxu0 0.0
    %5209 = vmatmul.mubr.f32.gmra.mrb[0].mxu0 %v4949
    %v5210 = vpop.f32.mrb[0].mxu0
    %v5211 = vadd.f32 0.0, %v5210
    %v5212 = vpop.f32.mrb[0].mxu0
    %5213 = vmatprep.mubr.f32.mxu0 0.0
    %5214 = vmatmul.mubr.f32.gmra.mrb[0].mxu0 %v4952
    %v5215 = vpop.f32.mrb[0].mxu0
    %v5216 = vadd.f32 0.0, %v5215
    %v5217 = vpop.f32.mrb[0].mxu0
    %5218 = vmatprep.mubr.f32.mxu0 0.0
    %5219 = vmatmul.mubr.f32.gmra.mrb[0].mxu0 %v4955
    %v5220 = vpop.f32.mrb[0].mxu0
    %v5221 = vadd.f32 0.0, %v5220
    %v5222 = vpop.f32.mrb[0].mxu0
    %5223 = vmatprep.mubr.f32.mxu0 0.0
    %5224 = vmatmul.mubr.f32.gmra.mrb[0].mxu0 %v4958
    %v5225 = vpop.f32.mrb[0].mxu0
    %v5226 = vadd.f32 0.0, %v5225
    %v5227 = vpop.f32.mrb[0].mxu0
    %5228 = vmatprep.mubr.f32.mxu0 0.0
    %5229 = vmatmul.mubr.f32.gmra.mrb[0].mxu0 %v4961
    %v5230 = vpop.f32.mrb[0].mxu0
    %v5231 = vadd.f32 0.0, %v5230
    %v5232 = vpop.f32.mrb[0].mxu0
    %5233 = vmatprep.mubr.f32.mxu0 0.0
    %5234 = vmatmul.mubr.f32.gmra.mrb[0].mxu0 %v4964
    %v5235 = vpop.f32.mrb[0].mxu0
    %v5236 = vadd.f32 0.0, %v5235
    %v5237 = vpop.f32.mrb[0].mxu0
    %5238 = vmatprep.mubr.f32.mxu0 0.0
    %5239 = vmatmul.mubr.f32.gmra.mrb[0].mxu0 %v4967
    %v5240 = vpop.f32.mrb[0].mxu0
    %v5241 = vadd.f32 0.0, %v5240
    %v5242 = vpop.f32.mrb[0].mxu0
    %5243 = vmatprep.mubr.f32.mxu0 0.0
    %5244 = vmatmul.mubr.f32.gmra.mrb[0].mxu0 %v4970
    %v5245 = vpop.f32.mrb[0].mxu0
    %v5246 = vadd.f32 0.0, %v5245
    %v5247 = vpop.f32.mrb[0].mxu0
    %5248 = vmatprep.mubr.f32.mxu0 0.0
    %5249 = vmatmul.mubr.f32.gmra.mrb[0].mxu0 %v4973
    %v5250 = vpop.f32.mrb[0].mxu0
    %v5251 = vadd.f32 0.0, %v5250
    %v5252 = vpop.f32.mrb[0].mxu0
    %5253 = vmatprep.mubr.f32.mxu0 0.0
    %5254 = vmatmul.mubr.f32.gmra.mrb[0].mxu0 %v4976
    %v5255 = vpop.f32.mrb[0].mxu0
    %v5256 = vadd.f32 0.0, %v5255
    %v5257 = vpop.f32.mrb[0].mxu0
    %5258 = vmatprep.mubr.f32.mxu0 0.0
    %5259 = vmatmul.mubr.f32.gmra.mrb[0].mxu0 %v4979
    %v5260 = vpop.f32.mrb[0].mxu0
    %v5261 = vadd.f32 0.0, %v5260
    %v5262 = vpop.f32.mrb[0].mxu0
    %5263 = vmatprep.mubr.f32.mxu0 0.0
    %5264 = vmatmul.mubr.f32.gmra.mrb[0].mxu0 %v4982
    %v5265 = vpop.f32.mrb[0].mxu0
    %v5266 = vadd.f32 0.0, %v5265
    %v5267 = vpop.f32.mrb[0].mxu0
    %5268 = vmatprep.mubr.f32.mxu0 0.0
    %5269 = vmatmul.mubr.f32.gmra.mrb[0].mxu0 %v4985
    %v5270 = vpop.f32.mrb[0].mxu0
    %v5271 = vadd.f32 0.0, %v5270
    %v5272 = vpop.f32.mrb[0].mxu0
    %5273 = vmatprep.mubr.f32.mxu0 0.0
    %5274 = vmatmul.mubr.f32.gmra.mrb[0].mxu0 %v4988
    %v5275 = vpop.f32.mrb[0].mxu0
    %v5276 = vadd.f32 0.0, %v5275
    %v5277 = vpop.f32.mrb[0].mxu0
    %5278 = vmatprep.mubr.f32.mxu0 0.0
    %5279 = vmatmul.mubr.f32.gmra.mrb[0].mxu0 %v4991
    %v5280 = vpop.f32.mrb[0].mxu0
    %v5281 = vadd.f32 0.0, %v5280
    %v5282 = vpop.f32.mrb[0].mxu0
    %5283 = vmatprep.mubr.f32.mxu0 0.0
    %5284 = vmatmul.mubr.f32.gmra.mrb[0].mxu0 %v4994
    %v5285 = vpop.f32.mrb[0].mxu0
    %v5286 = vadd.f32 0.0, %v5285
    %v5287 = vpop.f32.mrb[0].mxu0
    %5288 = vmatprep.mubr.f32.mxu0 0.0
    %5289 = vmatmul.mubr.f32.gmra.mrb[0].mxu0 %v4997
    %v5290 = vpop.f32.mrb[0].mxu0
    %v5291 = vadd.f32 0.0, %v5290
    %v5292 = vpop.f32.mrb[0].mxu0
    %5293 = vmatprep.mubr.f32.mxu0 0.0
    %5294 = vmatmul.mubr.f32.gmra.mrb[0].mxu0 %v5000
    %v5295 = vpop.f32.mrb[0].mxu0
    %v5296 = vadd.f32 0.0, %v5295
    %v5297 = vpop.f32.mrb[0].mxu0
    %5298 = vmatprep.mubr.f32.mxu0 0.0
    %5299 = vmatmul.mubr.f32.gmra.mrb[0].mxu0 %v5003
    %v5300 = vpop.f32.mrb[0].mxu0
    %v5301 = vadd.f32 0.0, %v5300
    %v5302 = vpop.f32.mrb[0].mxu0
    %5303 = vmatprep.mubr.f32.mxu0 0.0
    %5304 = vmatmul.mubr.f32.gmra.mrb[0].mxu0 %v5006
    %v5305 = vpop.f32.mrb[0].mxu0
    %v5306 = vadd.f32 0.0, %v5305
    %v5307 = vpop.f32.mrb[0].mxu0
    %5308 = vmatprep.mubr.f32.mxu0 0.0
    %5309 = vmatmul.mubr.f32.gmra.mrb[0].mxu0 %v5009
    %v5310 = vpop.f32.mrb[0].mxu0
    %v5311 = vadd.f32 0.0, %v5310
    %v5312 = vpop.f32.mrb[0].mxu0
    %5313 = vmatprep.mubr.f32.mxu0 0.0
    %5314 = vmatmul.mubr.f32.gmra.mrb[0].mxu0 %v5012
    %v5315 = vpop.f32.mrb[0].mxu0
    %v5316 = vadd.f32 0.0, %v5315
    %v5317 = vpop.f32.mrb[0].mxu0
    %5318 = vmatprep.mubr.f32.mxu0 0.0
    %5319 = vmatmul.mubr.f32.gmra.mrb[0].mxu0 %v5015
    %v5320 = vpop.f32.mrb[0].mxu0
    %v5321 = vadd.f32 0.0, %v5320
    %v5322 = vpop.f32.mrb[0].mxu0
    %5323 = vmatprep.mubr.f32.mxu0 0.0
    %5324 = vmatmul.mubr.f32.gmra.mrb[0].mxu0 %v5018
    %v5325 = vpop.f32.mrb[0].mxu0
    %v5326 = vadd.f32 0.0, %v5325
    %v5327 = vpop.f32.mrb[0].mxu0
    %5328 = vmatprep.mubr.f32.mxu0 0.0
    %5329 = vmatmul.mubr.f32.gmra.mrb[0].mxu0 %v5021
    %v5330 = vpop.f32.mrb[0].mxu0
    %v5331 = vadd.f32 0.0, %v5330
    %v5332 = vpop.f32.mrb[0].mxu0
    %5333 = vmatprep.mubr.f32.mxu0 0.0
    %5334 = vmatmul.mubr.f32.gmra.mrb[0].mxu0 %v5024
    %v5335 = vpop.f32.mrb[0].mxu0
    %v5336 = vadd.f32 0.0, %v5335
    %v5337 = vpop.f32.mrb[0].mxu0
    %5338 = vmatprep.mubr.f32.mxu0 0.0
    %5339 = vmatmul.mubr.f32.gmra.mrb[0].mxu0 %v5027
    %v5340 = vpop.f32.mrb[0].mxu0
    %v5341 = vadd.f32 0.0, %v5340
    %v5342 = vpop.f32.mrb[0].mxu0
    %5343 = vmatprep.mubr.f32.mxu0 0.0
    %5344 = vmatmul.mubr.f32.gmra.mrb[0].mxu0 %v5030
    %v5345 = vpop.f32.mrb[0].mxu0
    %v5346 = vadd.f32 0.0, %v5345
    %v5347 = vpop.f32.mrb[0].mxu0
    %5348 = vmatprep.mubr.f32.mxu0 0.0
    %5349 = vmatmul.mubr.f32.gmra.mrb[0].mxu0 %v5033
    %v5350 = vpop.f32.mrb[0].mxu0
    %v5351 = vadd.f32 0.0, %v5350
    %v5352 = vpop.f32.mrb[0].mxu0
    %5353 = vmatprep.mubr.f32.mxu0 0.0
    %5354 = vmatmul.mubr.f32.gmra.mrb[0].mxu0 %v5036
    %v5355 = vpop.f32.mrb[0].mxu0
    %v5356 = vadd.f32 0.0, %v5355
    %v5357 = vpop.f32.mrb[0].mxu0
    %5358 = vmatprep.mubr.f32.mxu0 0.0
    %5359 = vmatmul.mubr.f32.gmra.mrb[0].mxu0 %v5039
    %v5360 = vpop.f32.mrb[0].mxu0
    %v5361 = vadd.f32 0.0, %v5360
    %v5362 = vpop.f32.mrb[0].mxu0
    %5363 = vmatprep.mubr.f32.mxu0 0.0
    %5364 = vmatmul.mubr.f32.gmra.mrb[0].mxu0 %v5042
    %v5365 = vpop.f32.mrb[0].mxu0
    %v5366 = vadd.f32 0.0, %v5365
    %v5367 = vpop.f32.mrb[0].mxu0
    %5368 = vmatprep.mubr.f32.mxu0 0.0
    %5369 = vmatmul.mubr.f32.gmra.mrb[0].mxu0 %v5045
    %v5370 = vpop.f32.mrb[0].mxu0
    %v5371 = vadd.f32 0.0, %v5370
    %v5372 = vpop.f32.mrb[0].mxu0
    %5373 = vmatprep.mubr.f32.mxu0 0.0
    %5374 = vmatmul.mubr.f32.gmra.mrb[0].mxu0 %v5048
    %v5375 = vpop.f32.mrb[0].mxu0
    %v5376 = vadd.f32 0.0, %v5375
    %v5377 = vpop.f32.mrb[0].mxu0
    %5378 = vmatprep.mubr.f32.mxu0 0.0
    %5379 = vmatmul.mubr.f32.gmra.mrb[0].mxu0 %v5051
    %v5380 = vpop.f32.mrb[0].mxu0
    %v5381 = vadd.f32 0.0, %v5380
    %v5382 = vpop.f32.mrb[0].mxu0
    %5383 = vmatprep.mubr.f32.mxu0 0.0
    %5384 = vmatmul.mubr.f32.gmra.mrb[0].mxu0 %v5054
    %v5385 = vpop.f32.mrb[0].mxu0
    %v5386 = vadd.f32 0.0, %v5385
    %v5387 = vpop.f32.mrb[0].mxu0
    %5388 = vmatprep.mubr.f32.mxu0 0.0
    %5389 = vmatmul.mubr.f32.gmra.mrb[0].mxu0 %v5057
    %v5390 = vpop.f32.mrb[0].mxu0
    %v5391 = vadd.f32 0.0, %v5390
    %v5392 = vpop.f32.mrb[0].mxu0
    %5393 = vmatprep.mubr.f32.mxu0 0.0
    %5394 = vmatmul.mubr.f32.gmra.mrb[0].mxu0 %v5060
    %v5395 = vpop.f32.mrb[0].mxu0
    %v5396 = vadd.f32 0.0, %v5395
    %v5397 = vpop.f32.mrb[0].mxu0
    %5398 = vmatprep.mubr.f32.mxu0 0.0
    %5399 = vmatmul.mubr.f32.gmra.mrb[0].mxu0 %v5063
    %v5400 = vpop.f32.mrb[0].mxu0
    %v5401 = vadd.f32 0.0, %v5400
    %v5402 = vpop.f32.mrb[0].mxu0
    %5403 = vmatprep.mubr.f32.mxu0 0.0
    %5404 = vmatmul.mubr.f32.gmra.mrb[0].mxu0 %v5066
    %v5405 = vpop.f32.mrb[0].mxu0
    %v5406 = vadd.f32 0.0, %v5405
    %v5407 = vpop.f32.mrb[0].mxu0
    %5408 = vmatprep.mubr.f32.mxu0 0.0
    %5409 = vmatmul.mubr.f32.gmra.mrb[0].mxu0 %v5069
    %v5410 = vpop.f32.mrb[0].mxu0
    %v5411 = vadd.f32 0.0, %v5410
    %v5412 = vpop.f32.mrb[0].mxu0
    %5413 = vmatprep.mubr.f32.mxu0 0.0
    %5414 = vmatmul.mubr.f32.gmra.mrb[0].mxu0 %v5072
    %v5415 = vpop.f32.mrb[0].mxu0
    %v5416 = vadd.f32 0.0, %v5415
    %v5417 = vpop.f32.mrb[0].mxu0
    %5418 = vmatprep.mubr.f32.mxu0 0.0
    %5419 = vmatmul.mubr.f32.gmra.mrb[0].mxu0 %v5075
    %v5420 = vpop.f32.mrb[0].mxu0
    %v5421 = vadd.f32 0.0, %v5420
    %v5422 = vpop.f32.mrb[0].mxu0
    %5423 = vmatprep.mubr.f32.mxu0 0.0
    %5424 = vmatmul.mubr.f32.gmra.mrb[0].mxu0 %v5078
    %v5425 = vpop.f32.mrb[0].mxu0
    %v5426 = vadd.f32 0.0, %v5425
    %v5427 = vpop.f32.mrb[0].mxu0
    %5428 = vmatprep.mubr.f32.mxu0 0.0
    %5429 = vmatmul.mubr.f32.gmra.mrb[0].mxu0 %v5081
    %v5430 = vpop.f32.mrb[0].mxu0
    %v5431 = vadd.f32 0.0, %v5430
    %v5432 = vpop.f32.mrb[0].mxu0
    %5433 = vmatprep.mubr.f32.mxu0 0.0
    %5434 = vmatmul.mubr.f32.gmra.mrb[0].mxu0 %v5084
    %v5435 = vpop.f32.mrb[0].mxu0
    %v5436 = vadd.f32 0.0, %v5435
    %v5437 = vpop.f32.mrb[0].mxu0
    %5438 = vmatprep.mubr.f32.mxu0 0.0
    %5439 = vmatmul.mubr.f32.gmra.mrb[0].mxu0 %v5087
    %v5440 = vpop.f32.mrb[0].mxu0
    %v5441 = vadd.f32 0.0, %v5440
    %v5442 = vpop.f32.mrb[0].mxu0
    %5443 = vmatprep.mubr.f32.mxu0 0.0
    %5444 = vmatmul.mubr.f32.gmra.mrb[0].mxu0 %v5090
    %v5445 = vpop.f32.mrb[0].mxu0
    %v5446 = vadd.f32 0.0, %v5445
    %v5447 = vpop.f32.mrb[0].mxu0
    %5448 = vmatprep.mubr.f32.mxu0 0.0
    %5449 = vmatmul.mubr.f32.gmra.mrb[0].mxu0 %v5093
    %v5450 = vpop.f32.mrb[0].mxu0
    %v5451 = vadd.f32 0.0, %v5450
    %v5452 = vpop.f32.mrb[0].mxu0
    %5453 = vmatprep.mubr.f32.mxu0 0.0
    %5454 = vmatmul.mubr.f32.gmra.mrb[0].mxu0 %v5096
    %v5455 = vpop.f32.mrb[0].mxu0
    %v5456 = vadd.f32 0.0, %v5455
    %v5457 = vpop.f32.mrb[0].mxu0
    %5458 = vmatprep.mubr.f32.mxu0 0.0
    %5459 = vmatmul.mubr.f32.gmra.mrb[0].mxu0 %v5099
    %v5460 = vpop.f32.mrb[0].mxu0
    %v5461 = vadd.f32 0.0, %v5460
    %v5462 = vpop.f32.mrb[0].mxu0
    %5463 = vmatprep.mubr.f32.mxu0 0.0
    %5464 = vmatmul.mubr.f32.gmra.mrb[0].mxu0 %v5102
    %v5465 = vpop.f32.mrb[0].mxu0
    %v5466 = vadd.f32 0.0, %v5465
    %v5467 = vpop.f32.mrb[0].mxu0
    %5468 = vmatprep.mubr.f32.mxu0 0.0
    %5469 = vmatmul.mubr.f32.gmra.mrb[0].mxu0 %v5105
    %v5470 = vpop.f32.mrb[0].mxu0
    %v5471 = vadd.f32 0.0, %v5470
    %v5472 = vpop.f32.mrb[0].mxu0
    %5473 = vmatprep.mubr.f32.mxu0 0.0
    %5474 = vmatmul.mubr.f32.gmra.mrb[0].mxu0 %v5108
    %v5475 = vpop.f32.mrb[0].mxu0
    %v5476 = vadd.f32 0.0, %v5475
    %v5477 = vpop.f32.mrb[0].mxu0
    %5478 = vmatprep.mubr.f32.mxu0 0.0
    %5479 = vmatmul.mubr.f32.gmra.mrb[0].mxu0 %v5111
    %v5480 = vpop.f32.mrb[0].mxu0
    %v5481 = vadd.f32 0.0, %v5480
    %v5482 = vpop.f32.mrb[0].mxu0
    %5483 = vmatprep.mubr.f32.mxu0 0.0
    %5484 = vmatmul.mubr.f32.gmra.mrb[0].mxu0 %v5114
    %v5485 = vpop.f32.mrb[0].mxu0
    %v5486 = vadd.f32 0.0, %v5485
    %v5487 = vpop.f32.mrb[0].mxu0
    %5488 = vmatprep.mubr.f32.mxu0 0.0
    %5489 = vmatmul.mubr.f32.gmra.mrb[0].mxu0 %v5117
    %v5490 = vpop.f32.mrb[0].mxu0
    %v5491 = vadd.f32 0.0, %v5490
    %v5492 = vpop.f32.mrb[0].mxu0
    %5493 = vmatprep.mubr.f32.mxu0 0.0
    %5494 = vmatmul.mubr.f32.gmra.mrb[0].mxu0 %v5120
    %v5495 = vpop.f32.mrb[0].mxu0
    %v5496 = vadd.f32 0.0, %v5495
    %v5497 = vpop.f32.mrb[0].mxu0
    %5498 = vmatprep.mubr.f32.mxu0 0.0
    %5499 = vmatmul.mubr.f32.gmra.mrb[0].mxu0 %v5123
    %v5500 = vpop.f32.mrb[0].mxu0
    %v5501 = vadd.f32 0.0, %v5500
    %v5502 = vpop.f32.mrb[0].mxu0
    %5503 = vmatprep.mubr.f32.mxu0 0.0
    %5504 = vmatmul.mubr.f32.gmra.mrb[0].mxu0 %v5126
    %v5505 = vpop.f32.mrb[0].mxu0
    %v5506 = vadd.f32 0.0, %v5505
    %v5507 = vpop.f32.mrb[0].mxu0
    %5508 = vmatprep.mubr.f32.mxu0 0.0
    %5509 = vmatmul.mubr.f32.gmra.mrb[0].mxu0 %v5129
    %v5510 = vpop.f32.mrb[0].mxu0
    %v5511 = vadd.f32 0.0, %v5510
    %v5512 = vpop.f32.mrb[0].mxu0
    %5513 = vmatprep.mubr.f32.mxu0 0.0
    %5514 = vmatmul.mubr.f32.gmra.mrb[0].mxu0 %v5132
    %v5515 = vpop.f32.mrb[0].mxu0
    %v5516 = vadd.f32 0.0, %v5515
    %v5517 = vpop.f32.mrb[0].mxu0
    %5518 = vdwg.mxu0
    %v5519 = vadd.f32 %v4812, %v5201
    %v5520 = vadd.f32 %v4813, %v5206
    %v5521 = vadd.f32 %v4814, %v5211
    %v5522 = vadd.f32 %v4815, %v5216
    %v5523 = vadd.f32 %v4816, %v5221
    %v5524 = vadd.f32 %v4817, %v5226
    %v5525 = vadd.f32 %v4818, %v5231
    %v5526 = vadd.f32 %v4819, %v5236
    %v5527 = vadd.f32 %v4820, %v5241
    %v5528 = vadd.f32 %v4821, %v5246
    %v5529 = vadd.f32 %v4822, %v5251
    %v5530 = vadd.f32 %v4823, %v5256
    %v5531 = vadd.f32 %v4824, %v5261
    %v5532 = vadd.f32 %v4825, %v5266
    %v5533 = vadd.f32 %v4826, %v5271
    %v5534 = vadd.f32 %v4827, %v5276
    %v5535 = vadd.f32 %v4828, %v5281
    %v5536 = vadd.f32 %v4829, %v5286
    %v5537 = vadd.f32 %v4830, %v5291
    %v5538 = vadd.f32 %v4831, %v5296
    %v5539 = vadd.f32 %v4832, %v5301
    %v5540 = vadd.f32 %v4833, %v5306
    %v5541 = vadd.f32 %v4834, %v5311
    %v5542 = vadd.f32 %v4835, %v5316
    %v5543 = vadd.f32 %v4836, %v5321
    %v5544 = vadd.f32 %v4837, %v5326
    %v5545 = vadd.f32 %v4838, %v5331
    %v5546 = vadd.f32 %v4839, %v5336
    %v5547 = vadd.f32 %v4840, %v5341
    %v5548 = vadd.f32 %v4841, %v5346
    %v5549 = vadd.f32 %v4842, %v5351
    %v5550 = vadd.f32 %v4843, %v5356
    %v5551 = vadd.f32 %v4844, %v5361
    %v5552 = vadd.f32 %v4845, %v5366
    %v5553 = vadd.f32 %v4846, %v5371
    %v5554 = vadd.f32 %v4847, %v5376
    %v5555 = vadd.f32 %v4848, %v5381
    %v5556 = vadd.f32 %v4849, %v5386
    %v5557 = vadd.f32 %v4850, %v5391
    %v5558 = vadd.f32 %v4851, %v5396
    %v5559 = vadd.f32 %v4852, %v5401
    %v5560 = vadd.f32 %v4853, %v5406
    %v5561 = vadd.f32 %v4854, %v5411
    %v5562 = vadd.f32 %v4855, %v5416
    %v5563 = vadd.f32 %v4856, %v5421
    %v5564 = vadd.f32 %v4857, %v5426
    %v5565 = vadd.f32 %v4858, %v5431
    %v5566 = vadd.f32 %v4859, %v5436
    %v5567 = vadd.f32 %v4860, %v5441
    %v5568 = vadd.f32 %v4861, %v5446
    %v5569 = vadd.f32 %v4862, %v5451
    %v5570 = vadd.f32 %v4863, %v5456
    %v5571 = vadd.f32 %v4864, %v5461
    %v5572 = vadd.f32 %v4865, %v5466
    %v5573 = vadd.f32 %v4866, %v5471
    %v5574 = vadd.f32 %v4867, %v5476
    %v5575 = vadd.f32 %v4868, %v5481
    %v5576 = vadd.f32 %v4869, %v5486
    %v5577 = vadd.f32 %v4870, %v5491
    %v5578 = vadd.f32 %v4871, %v5496
    %v5579 = vadd.f32 %v4872, %v5501
    %v5580 = vadd.f32 %v4873, %v5506
    %v5581 = vadd.f32 %v4874, %v5511
    %v5582 = vadd.f32 %v4875, %v5516
    %v5583 = vld [vmem:[%s0 + $0x22] sm:$0xff]
    %v5584 = vld [vmem:[%s0 + $0x2a] sm:$0xff]
    %v5585 = vld [vmem:[%s0 + $0x32] sm:$0xff]
    %v5586 = vld [vmem:[%s0 + $0x3a] sm:$0xff]
    %v5587 = vld [vmem:[%s0 + $0x42] sm:$0xff]
    %v5588 = vld [vmem:[%s0 + $0x4a] sm:$0xff]
    %v5589 = vld [vmem:[%s0 + $0x52] sm:$0xff]
    %v5590 = vld [vmem:[%s0 + $0x5a] sm:$0xff]
    %v5591 = vld [vmem:[%s0 + $0x62] sm:$0xff]
    %v5592 = vld [vmem:[%s0 + $0x6a] sm:$0xff]
    %v5593 = vld [vmem:[%s0 + $0x72] sm:$0xff]
    %v5594 = vld [vmem:[%s0 + $0x7a] sm:$0xff]
    %v5595 = vld [vmem:[%s0 + $0x82] sm:$0xff]
    %v5596 = vld [vmem:[%s0 + $0x8a] sm:$0xff]
    %v5597 = vld [vmem:[%s0 + $0x92] sm:$0xff]
    %v5598 = vld [vmem:[%s0 + $0x9a] sm:$0xff]
    %v5599 = vld [vmem:[%s0 + $0xa2] sm:$0xff]
    %v5600 = vld [vmem:[%s0 + $0xaa] sm:$0xff]
    %v5601 = vld [vmem:[%s0 + $0xb2] sm:$0xff]
    %v5602 = vld [vmem:[%s0 + $0xba] sm:$0xff]
    %v5603 = vld [vmem:[%s0 + $0xc2] sm:$0xff]
    %v5604 = vld [vmem:[%s0 + $0xca] sm:$0xff]
    %v5605 = vld [vmem:[%s0 + $0xd2] sm:$0xff]
    %v5606 = vld [vmem:[%s0 + $0xda] sm:$0xff]
    %v5607 = vld [vmem:[%s0 + $0xe2] sm:$0xff]
    %v5608 = vld [vmem:[%s0 + $0xea] sm:$0xff]
    %v5609 = vld [vmem:[%s0 + $0xf2] sm:$0xff]
    %v5610 = vld [vmem:[%s0 + $0xfa] sm:$0xff]
    %v5611 = vld [vmem:[%s0 + $0x102] sm:$0xff]
    %v5612 = vld [vmem:[%s0 + $0x10a] sm:$0xff]
    %v5613 = vld [vmem:[%s0 + $0x112] sm:$0xff]
    %v5614 = vld [vmem:[%s0 + $0x11a] sm:$0xff]
    %v5615 = vld [vmem:[%s0 + $0x122] sm:$0xff]
    %v5616 = vld [vmem:[%s0 + $0x12a] sm:$0xff]
    %v5617 = vld [vmem:[%s0 + $0x132] sm:$0xff]
    %v5618 = vld [vmem:[%s0 + $0x13a] sm:$0xff]
    %v5619 = vld [vmem:[%s0 + $0x142] sm:$0xff]
    %v5620 = vld [vmem:[%s0 + $0x14a] sm:$0xff]
    %v5621 = vld [vmem:[%s0 + $0x152] sm:$0xff]
    %v5622 = vld [vmem:[%s0 + $0x15a] sm:$0xff]
    %v5623 = vld [vmem:[%s0 + $0x162] sm:$0xff]
    %v5624 = vld [vmem:[%s0 + $0x16a] sm:$0xff]
    %v5625 = vld [vmem:[%s0 + $0x172] sm:$0xff]
    %v5626 = vld [vmem:[%s0 + $0x17a] sm:$0xff]
    %v5627 = vld [vmem:[%s0 + $0x182] sm:$0xff]
    %v5628 = vld [vmem:[%s0 + $0x18a] sm:$0xff]
    %v5629 = vld [vmem:[%s0 + $0x192] sm:$0xff]
    %v5630 = vld [vmem:[%s0 + $0x19a] sm:$0xff]
    %v5631 = vld [vmem:[%s0 + $0x1a2] sm:$0xff]
    %v5632 = vld [vmem:[%s0 + $0x1aa] sm:$0xff]
    %v5633 = vld [vmem:[%s0 + $0x1b2] sm:$0xff]
    %v5634 = vld [vmem:[%s0 + $0x1ba] sm:$0xff]
    %v5635 = vld [vmem:[%s0 + $0x1c2] sm:$0xff]
    %v5636 = vld [vmem:[%s0 + $0x1ca] sm:$0xff]
    %v5637 = vld [vmem:[%s0 + $0x1d2] sm:$0xff]
    %v5638 = vld [vmem:[%s0 + $0x1da] sm:$0xff]
    %v5639 = vld [vmem:[%s0 + $0x1e2] sm:$0xff]
    %v5640 = vld [vmem:[%s0 + $0x1ea] sm:$0xff]
    %v5641 = vld [vmem:[%s0 + $0x1f2] sm:$0xff]
    %v5642 = vld [vmem:[%s0 + $0x1fa] sm:$0xff]
    %v5643 = vld [vmem:[%s0 + $0x202] sm:$0xff]
    %v5644 = vld [vmem:[%s0 + $0x20a] sm:$0xff]
    %v5645 = vld [vmem:[%s0 + $0x212] sm:$0xff]
    %v5646 = vld [vmem:[%s0 + $0x21a] sm:$0xff]
    %s5647 = scalar_lea.vmem %s1, 64
    %v5648 = vld [vmem:[%s5647] sm:$0xff]
    %v5650 = vsel %vm186, %v5583, 0
    %v5653 = vsel %vm186, %v5584, 0
    %v5656 = vsel %vm186, %v5585, 0
    %v5659 = vsel %vm186, %v5586, 0
    %v5662 = vsel %vm186, %v5587, 0
    %v5665 = vsel %vm186, %v5588, 0
    %v5668 = vsel %vm186, %v5589, 0
    %v5671 = vsel %vm186, %v5590, 0
    %v5674 = vsel %vm186, %v5591, 0
    %v5677 = vsel %vm186, %v5592, 0
    %v5680 = vsel %vm186, %v5593, 0
    %v5683 = vsel %vm186, %v5594, 0
    %v5686 = vsel %vm186, %v5595, 0
    %v5689 = vsel %vm186, %v5596, 0
    %v5692 = vsel %vm186, %v5597, 0
    %v5695 = vsel %vm186, %v5598, 0
    %v5698 = vsel %vm186, %v5599, 0
    %v5701 = vsel %vm186, %v5600, 0
    %v5704 = vsel %vm186, %v5601, 0
    %v5707 = vsel %vm186, %v5602, 0
    %v5710 = vsel %vm186, %v5603, 0
    %v5713 = vsel %vm186, %v5604, 0
    %v5716 = vsel %vm186, %v5605, 0
    %v5719 = vsel %vm186, %v5606, 0
    %v5722 = vsel %vm186, %v5607, 0
    %v5725 = vsel %vm186, %v5608, 0
    %v5728 = vsel %vm186, %v5609, 0
    %v5731 = vsel %vm186, %v5610, 0
    %v5734 = vsel %vm186, %v5611, 0
    %v5737 = vsel %vm186, %v5612, 0
    %v5740 = vsel %vm186, %v5613, 0
    %v5743 = vsel %vm186, %v5614, 0
    %v5746 = vsel %vm186, %v5615, 0
    %v5749 = vsel %vm186, %v5616, 0
    %v5752 = vsel %vm186, %v5617, 0
    %v5755 = vsel %vm186, %v5618, 0
    %v5758 = vsel %vm186, %v5619, 0
    %v5761 = vsel %vm186, %v5620, 0
    %v5764 = vsel %vm186, %v5621, 0
    %v5767 = vsel %vm186, %v5622, 0
    %v5770 = vsel %vm186, %v5623, 0
    %v5773 = vsel %vm186, %v5624, 0
    %v5776 = vsel %vm186, %v5625, 0
    %v5779 = vsel %vm186, %v5626, 0
    %v5782 = vsel %vm186, %v5627, 0
    %v5785 = vsel %vm186, %v5628, 0
    %v5788 = vsel %vm186, %v5629, 0
    %v5791 = vsel %vm186, %v5630, 0
    %v5794 = vsel %vm186, %v5631, 0
    %v5797 = vsel %vm186, %v5632, 0
    %v5800 = vsel %vm186, %v5633, 0
    %v5803 = vsel %vm186, %v5634, 0
    %v5806 = vsel %vm186, %v5635, 0
    %v5809 = vsel %vm186, %v5636, 0
    %v5812 = vsel %vm186, %v5637, 0
    %v5815 = vsel %vm186, %v5638, 0
    %v5818 = vsel %vm186, %v5639, 0
    %v5821 = vsel %vm186, %v5640, 0
    %v5824 = vsel %vm186, %v5641, 0
    %v5827 = vsel %vm186, %v5642, 0
    %v5830 = vsel %vm186, %v5643, 0
    %v5833 = vsel %vm186, %v5644, 0
    %v5836 = vsel %vm186, %v5645, 0
    %v5839 = vsel %vm186, %v5646, 0
    %5841 = vmatprep.subr.mxu0 0.0
    %5842 = vmatpush1.msra.mxu0 %v5648
    %5843 = vmatprep.subr.mxu0 0.0
    %5844 = vmatpush1.msra.mxu0 0.0
    %5845 = vmatprep.subr.mxu0 0.0
    %5846 = vmatpush1.msra.mxu0 0.0
    %5847 = vmatprep.subr.mxu0 0.0
    %5848 = vmatpush1.msra.mxu0 0.0
    %5849 = vmatprep.subr.mxu0 0.0
    %5850 = vmatpush1.msra.mxu0 0.0
    %5851 = vmatprep.subr.mxu0 0.0
    %5852 = vmatpush1.msra.mxu0 0.0
    %5853 = vmatprep.subr.mxu0 0.0
    %5854 = vmatpush1.msra.mxu0 0.0
    %5855 = vmatprep.subr.mxu0 0.0
    %5856 = vmatpush1.msra.mxu0 0.0
    %5857 = vmatprep.subr.mxu0 0.0
    %5858 = vmatpush1.msra.mxu0 0.0
    %5859 = vmatprep.subr.mxu0 0.0
    %5860 = vmatpush1.msra.mxu0 0.0
    %5861 = vmatprep.subr.mxu0 0.0
    %5862 = vmatpush1.msra.mxu0 0.0
    %5863 = vmatprep.subr.mxu0 0.0
    %5864 = vmatpush1.msra.mxu0 0.0
    %5865 = vmatprep.subr.mxu0 0.0
    %5866 = vmatpush1.msra.mxu0 0.0
    %5867 = vmatprep.subr.mxu0 0.0
    %5868 = vmatpush1.msra.mxu0 0.0
    %5869 = vmatprep.subr.mxu0 0.0
    %5870 = vmatpush1.msra.mxu0 0.0
    %5871 = vmatprep.subr.mxu0 0.0
    %5872 = vmatpush1.msra.mxu0 0.0
    %5873 = vmatprep.subr.mxu0 0.0
    %5874 = vmatpush1.msra.mxu0 0.0
    %5875 = vmatprep.subr.mxu0 0.0
    %5876 = vmatpush1.msra.mxu0 0.0
    %5877 = vmatprep.subr.mxu0 0.0
    %5878 = vmatpush1.msra.mxu0 0.0
    %5879 = vmatprep.subr.mxu0 0.0
    %5880 = vmatpush1.msra.mxu0 0.0
    %5881 = vmatprep.subr.mxu0 0.0
    %5882 = vmatpush1.msra.mxu0 0.0
    %5883 = vmatprep.subr.mxu0 0.0
    %5884 = vmatpush1.msra.mxu0 0.0
    %5885 = vmatprep.subr.mxu0 0.0
    %5886 = vmatpush1.msra.mxu0 0.0
    %5887 = vmatprep.subr.mxu0 0.0
    %5888 = vmatpush1.msra.mxu0 0.0
    %5889 = vmatprep.subr.mxu0 0.0
    %5890 = vmatpush1.msra.mxu0 0.0
    %5891 = vmatprep.subr.mxu0 0.0
    %5892 = vmatpush1.msra.mxu0 0.0
    %5893 = vmatprep.subr.mxu0 0.0
    %5894 = vmatpush1.msra.mxu0 0.0
    %5895 = vmatprep.subr.mxu0 0.0
    %5896 = vmatpush1.msra.mxu0 0.0
    %5897 = vmatprep.subr.mxu0 0.0
    %5898 = vmatpush1.msra.mxu0 0.0
    %5899 = vmatprep.subr.mxu0 0.0
    %5900 = vmatpush1.msra.mxu0 0.0
    %5901 = vmatprep.subr.mxu0 0.0
    %5902 = vmatpush1.msra.mxu0 0.0
    %5903 = vmatprep.subr.mxu0 0.0
    %5904 = vmatpush1.msra.mxu0 0.0
    %5905 = vmatprep.mubr.f32.mxu0 0.0
    %5906 = vmatmul.mubr.f32.gmra.mrb[0].mxu0 %v5650
    %v5907 = vpop.f32.mrb[0].mxu0
    %v5908 = vadd.f32 0.0, %v5907
    %v5909 = vpop.f32.mrb[0].mxu0
    %5910 = vmatprep.mubr.f32.mxu0 0.0
    %5911 = vmatmul.mubr.f32.gmra.mrb[0].mxu0 %v5653
    %v5912 = vpop.f32.mrb[0].mxu0
    %v5913 = vadd.f32 0.0, %v5912
    %v5914 = vpop.f32.mrb[0].mxu0
    %5915 = vmatprep.mubr.f32.mxu0 0.0
    %5916 = vmatmul.mubr.f32.gmra.mrb[0].mxu0 %v5656
    %v5917 = vpop.f32.mrb[0].mxu0
    %v5918 = vadd.f32 0.0, %v5917
    %v5919 = vpop.f32.mrb[0].mxu0
    %5920 = vmatprep.mubr.f32.mxu0 0.0
    %5921 = vmatmul.mubr.f32.gmra.mrb[0].mxu0 %v5659
    %v5922 = vpop.f32.mrb[0].mxu0
    %v5923 = vadd.f32 0.0, %v5922
    %v5924 = vpop.f32.mrb[0].mxu0
    %5925 = vmatprep.mubr.f32.mxu0 0.0
    %5926 = vmatmul.mubr.f32.gmra.mrb[0].mxu0 %v5662
    %v5927 = vpop.f32.mrb[0].mxu0
    %v5928 = vadd.f32 0.0, %v5927
    %v5929 = vpop.f32.mrb[0].mxu0
    %5930 = vmatprep.mubr.f32.mxu0 0.0
    %5931 = vmatmul.mubr.f32.gmra.mrb[0].mxu0 %v5665
    %v5932 = vpop.f32.mrb[0].mxu0
    %v5933 = vadd.f32 0.0, %v5932
    %v5934 = vpop.f32.mrb[0].mxu0
    %5935 = vmatprep.mubr.f32.mxu0 0.0
    %5936 = vmatmul.mubr.f32.gmra.mrb[0].mxu0 %v5668
    %v5937 = vpop.f32.mrb[0].mxu0
    %v5938 = vadd.f32 0.0, %v5937
    %v5939 = vpop.f32.mrb[0].mxu0
    %5940 = vmatprep.mubr.f32.mxu0 0.0
    %5941 = vmatmul.mubr.f32.gmra.mrb[0].mxu0 %v5671
    %v5942 = vpop.f32.mrb[0].mxu0
    %v5943 = vadd.f32 0.0, %v5942
    %v5944 = vpop.f32.mrb[0].mxu0
    %5945 = vmatprep.mubr.f32.mxu0 0.0
    %5946 = vmatmul.mubr.f32.gmra.mrb[0].mxu0 %v5674
    %v5947 = vpop.f32.mrb[0].mxu0
    %v5948 = vadd.f32 0.0, %v5947
    %v5949 = vpop.f32.mrb[0].mxu0
    %5950 = vmatprep.mubr.f32.mxu0 0.0
    %5951 = vmatmul.mubr.f32.gmra.mrb[0].mxu0 %v5677
    %v5952 = vpop.f32.mrb[0].mxu0
    %v5953 = vadd.f32 0.0, %v5952
    %v5954 = vpop.f32.mrb[0].mxu0
    %5955 = vmatprep.mubr.f32.mxu0 0.0
    %5956 = vmatmul.mubr.f32.gmra.mrb[0].mxu0 %v5680
    %v5957 = vpop.f32.mrb[0].mxu0
    %v5958 = vadd.f32 0.0, %v5957
    %v5959 = vpop.f32.mrb[0].mxu0
    %5960 = vmatprep.mubr.f32.mxu0 0.0
    %5961 = vmatmul.mubr.f32.gmra.mrb[0].mxu0 %v5683
    %v5962 = vpop.f32.mrb[0].mxu0
    %v5963 = vadd.f32 0.0, %v5962
    %v5964 = vpop.f32.mrb[0].mxu0
    %5965 = vmatprep.mubr.f32.mxu0 0.0
    %5966 = vmatmul.mubr.f32.gmra.mrb[0].mxu0 %v5686
    %v5967 = vpop.f32.mrb[0].mxu0
    %v5968 = vadd.f32 0.0, %v5967
    %v5969 = vpop.f32.mrb[0].mxu0
    %5970 = vmatprep.mubr.f32.mxu0 0.0
    %5971 = vmatmul.mubr.f32.gmra.mrb[0].mxu0 %v5689
    %v5972 = vpop.f32.mrb[0].mxu0
    %v5973 = vadd.f32 0.0, %v5972
    %v5974 = vpop.f32.mrb[0].mxu0
    %5975 = vmatprep.mubr.f32.mxu0 0.0
    %5976 = vmatmul.mubr.f32.gmra.mrb[0].mxu0 %v5692
    %v5977 = vpop.f32.mrb[0].mxu0
    %v5978 = vadd.f32 0.0, %v5977
    %v5979 = vpop.f32.mrb[0].mxu0
    %5980 = vmatprep.mubr.f32.mxu0 0.0
    %5981 = vmatmul.mubr.f32.gmra.mrb[0].mxu0 %v5695
    %v5982 = vpop.f32.mrb[0].mxu0
    %v5983 = vadd.f32 0.0, %v5982
    %v5984 = vpop.f32.mrb[0].mxu0
    %5985 = vmatprep.mubr.f32.mxu0 0.0
    %5986 = vmatmul.mubr.f32.gmra.mrb[0].mxu0 %v5698
    %v5987 = vpop.f32.mrb[0].mxu0
    %v5988 = vadd.f32 0.0, %v5987
    %v5989 = vpop.f32.mrb[0].mxu0
    %5990 = vmatprep.mubr.f32.mxu0 0.0
    %5991 = vmatmul.mubr.f32.gmra.mrb[0].mxu0 %v5701
    %v5992 = vpop.f32.mrb[0].mxu0
    %v5993 = vadd.f32 0.0, %v5992
    %v5994 = vpop.f32.mrb[0].mxu0
    %5995 = vmatprep.mubr.f32.mxu0 0.0
    %5996 = vmatmul.mubr.f32.gmra.mrb[0].mxu0 %v5704
    %v5997 = vpop.f32.mrb[0].mxu0
    %v5998 = vadd.f32 0.0, %v5997
    %v5999 = vpop.f32.mrb[0].mxu0
    %6000 = vmatprep.mubr.f32.mxu0 0.0
    %6001 = vmatmul.mubr.f32.gmra.mrb[0].mxu0 %v5707
    %v6002 = vpop.f32.mrb[0].mxu0
    %v6003 = vadd.f32 0.0, %v6002
    %v6004 = vpop.f32.mrb[0].mxu0
    %6005 = vmatprep.mubr.f32.mxu0 0.0
    %6006 = vmatmul.mubr.f32.gmra.mrb[0].mxu0 %v5710
    %v6007 = vpop.f32.mrb[0].mxu0
    %v6008 = vadd.f32 0.0, %v6007
    %v6009 = vpop.f32.mrb[0].mxu0
    %6010 = vmatprep.mubr.f32.mxu0 0.0
    %6011 = vmatmul.mubr.f32.gmra.mrb[0].mxu0 %v5713
    %v6012 = vpop.f32.mrb[0].mxu0
    %v6013 = vadd.f32 0.0, %v6012
    %v6014 = vpop.f32.mrb[0].mxu0
    %6015 = vmatprep.mubr.f32.mxu0 0.0
    %6016 = vmatmul.mubr.f32.gmra.mrb[0].mxu0 %v5716
    %v6017 = vpop.f32.mrb[0].mxu0
    %v6018 = vadd.f32 0.0, %v6017
    %v6019 = vpop.f32.mrb[0].mxu0
    %6020 = vmatprep.mubr.f32.mxu0 0.0
    %6021 = vmatmul.mubr.f32.gmra.mrb[0].mxu0 %v5719
    %v6022 = vpop.f32.mrb[0].mxu0
    %v6023 = vadd.f32 0.0, %v6022
    %v6024 = vpop.f32.mrb[0].mxu0
    %6025 = vmatprep.mubr.f32.mxu0 0.0
    %6026 = vmatmul.mubr.f32.gmra.mrb[0].mxu0 %v5722
    %v6027 = vpop.f32.mrb[0].mxu0
    %v6028 = vadd.f32 0.0, %v6027
    %v6029 = vpop.f32.mrb[0].mxu0
    %6030 = vmatprep.mubr.f32.mxu0 0.0
    %6031 = vmatmul.mubr.f32.gmra.mrb[0].mxu0 %v5725
    %v6032 = vpop.f32.mrb[0].mxu0
    %v6033 = vadd.f32 0.0, %v6032
    %v6034 = vpop.f32.mrb[0].mxu0
    %6035 = vmatprep.mubr.f32.mxu0 0.0
    %6036 = vmatmul.mubr.f32.gmra.mrb[0].mxu0 %v5728
    %v6037 = vpop.f32.mrb[0].mxu0
    %v6038 = vadd.f32 0.0, %v6037
    %v6039 = vpop.f32.mrb[0].mxu0
    %6040 = vmatprep.mubr.f32.mxu0 0.0
    %6041 = vmatmul.mubr.f32.gmra.mrb[0].mxu0 %v5731
    %v6042 = vpop.f32.mrb[0].mxu0
    %v6043 = vadd.f32 0.0, %v6042
    %v6044 = vpop.f32.mrb[0].mxu0
    %6045 = vmatprep.mubr.f32.mxu0 0.0
    %6046 = vmatmul.mubr.f32.gmra.mrb[0].mxu0 %v5734
    %v6047 = vpop.f32.mrb[0].mxu0
    %v6048 = vadd.f32 0.0, %v6047
    %v6049 = vpop.f32.mrb[0].mxu0
    %6050 = vmatprep.mubr.f32.mxu0 0.0
    %6051 = vmatmul.mubr.f32.gmra.mrb[0].mxu0 %v5737
    %v6052 = vpop.f32.mrb[0].mxu0
    %v6053 = vadd.f32 0.0, %v6052
    %v6054 = vpop.f32.mrb[0].mxu0
    %6055 = vmatprep.mubr.f32.mxu0 0.0
    %6056 = vmatmul.mubr.f32.gmra.mrb[0].mxu0 %v5740
    %v6057 = vpop.f32.mrb[0].mxu0
    %v6058 = vadd.f32 0.0, %v6057
    %v6059 = vpop.f32.mrb[0].mxu0
    %6060 = vmatprep.mubr.f32.mxu0 0.0
    %6061 = vmatmul.mubr.f32.gmra.mrb[0].mxu0 %v5743
    %v6062 = vpop.f32.mrb[0].mxu0
    %v6063 = vadd.f32 0.0, %v6062
    %v6064 = vpop.f32.mrb[0].mxu0
    %6065 = vmatprep.mubr.f32.mxu0 0.0
    %6066 = vmatmul.mubr.f32.gmra.mrb[0].mxu0 %v5746
    %v6067 = vpop.f32.mrb[0].mxu0
    %v6068 = vadd.f32 0.0, %v6067
    %v6069 = vpop.f32.mrb[0].mxu0
    %6070 = vmatprep.mubr.f32.mxu0 0.0
    %6071 = vmatmul.mubr.f32.gmra.mrb[0].mxu0 %v5749
    %v6072 = vpop.f32.mrb[0].mxu0
    %v6073 = vadd.f32 0.0, %v6072
    %v6074 = vpop.f32.mrb[0].mxu0
    %6075 = vmatprep.mubr.f32.mxu0 0.0
    %6076 = vmatmul.mubr.f32.gmra.mrb[0].mxu0 %v5752
    %v6077 = vpop.f32.mrb[0].mxu0
    %v6078 = vadd.f32 0.0, %v6077
    %v6079 = vpop.f32.mrb[0].mxu0
    %6080 = vmatprep.mubr.f32.mxu0 0.0
    %6081 = vmatmul.mubr.f32.gmra.mrb[0].mxu0 %v5755
    %v6082 = vpop.f32.mrb[0].mxu0
    %v6083 = vadd.f32 0.0, %v6082
    %v6084 = vpop.f32.mrb[0].mxu0
    %6085 = vmatprep.mubr.f32.mxu0 0.0
    %6086 = vmatmul.mubr.f32.gmra.mrb[0].mxu0 %v5758
    %v6087 = vpop.f32.mrb[0].mxu0
    %v6088 = vadd.f32 0.0, %v6087
    %v6089 = vpop.f32.mrb[0].mxu0
    %6090 = vmatprep.mubr.f32.mxu0 0.0
    %6091 = vmatmul.mubr.f32.gmra.mrb[0].mxu0 %v5761
    %v6092 = vpop.f32.mrb[0].mxu0
    %v6093 = vadd.f32 0.0, %v6092
    %v6094 = vpop.f32.mrb[0].mxu0
    %6095 = vmatprep.mubr.f32.mxu0 0.0
    %6096 = vmatmul.mubr.f32.gmra.mrb[0].mxu0 %v5764
    %v6097 = vpop.f32.mrb[0].mxu0
    %v6098 = vadd.f32 0.0, %v6097
    %v6099 = vpop.f32.mrb[0].mxu0
    %6100 = vmatprep.mubr.f32.mxu0 0.0
    %6101 = vmatmul.mubr.f32.gmra.mrb[0].mxu0 %v5767
    %v6102 = vpop.f32.mrb[0].mxu0
    %v6103 = vadd.f32 0.0, %v6102
    %v6104 = vpop.f32.mrb[0].mxu0
    %6105 = vmatprep.mubr.f32.mxu0 0.0
    %6106 = vmatmul.mubr.f32.gmra.mrb[0].mxu0 %v5770
    %v6107 = vpop.f32.mrb[0].mxu0
    %v6108 = vadd.f32 0.0, %v6107
    %v6109 = vpop.f32.mrb[0].mxu0
    %6110 = vmatprep.mubr.f32.mxu0 0.0
    %6111 = vmatmul.mubr.f32.gmra.mrb[0].mxu0 %v5773
    %v6112 = vpop.f32.mrb[0].mxu0
    %v6113 = vadd.f32 0.0, %v6112
    %v6114 = vpop.f32.mrb[0].mxu0
    %6115 = vmatprep.mubr.f32.mxu0 0.0
    %6116 = vmatmul.mubr.f32.gmra.mrb[0].mxu0 %v5776
    %v6117 = vpop.f32.mrb[0].mxu0
    %v6118 = vadd.f32 0.0, %v6117
    %v6119 = vpop.f32.mrb[0].mxu0
    %6120 = vmatprep.mubr.f32.mxu0 0.0
    %6121 = vmatmul.mubr.f32.gmra.mrb[0].mxu0 %v5779
    %v6122 = vpop.f32.mrb[0].mxu0
    %v6123 = vadd.f32 0.0, %v6122
    %v6124 = vpop.f32.mrb[0].mxu0
    %6125 = vmatprep.mubr.f32.mxu0 0.0
    %6126 = vmatmul.mubr.f32.gmra.mrb[0].mxu0 %v5782
    %v6127 = vpop.f32.mrb[0].mxu0
    %v6128 = vadd.f32 0.0, %v6127
    %v6129 = vpop.f32.mrb[0].mxu0
    %6130 = vmatprep.mubr.f32.mxu0 0.0
    %6131 = vmatmul.mubr.f32.gmra.mrb[0].mxu0 %v5785
    %v6132 = vpop.f32.mrb[0].mxu0
    %v6133 = vadd.f32 0.0, %v6132
    %v6134 = vpop.f32.mrb[0].mxu0
    %6135 = vmatprep.mubr.f32.mxu0 0.0
    %6136 = vmatmul.mubr.f32.gmra.mrb[0].mxu0 %v5788
    %v6137 = vpop.f32.mrb[0].mxu0
    %v6138 = vadd.f32 0.0, %v6137
    %v6139 = vpop.f32.mrb[0].mxu0
    %6140 = vmatprep.mubr.f32.mxu0 0.0
    %6141 = vmatmul.mubr.f32.gmra.mrb[0].mxu0 %v5791
    %v6142 = vpop.f32.mrb[0].mxu0
    %v6143 = vadd.f32 0.0, %v6142
    %v6144 = vpop.f32.mrb[0].mxu0
    %6145 = vmatprep.mubr.f32.mxu0 0.0
    %6146 = vmatmul.mubr.f32.gmra.mrb[0].mxu0 %v5794
    %v6147 = vpop.f32.mrb[0].mxu0
    %v6148 = vadd.f32 0.0, %v6147
    %v6149 = vpop.f32.mrb[0].mxu0
    %6150 = vmatprep.mubr.f32.mxu0 0.0
    %6151 = vmatmul.mubr.f32.gmra.mrb[0].mxu0 %v5797
    %v6152 = vpop.f32.mrb[0].mxu0
    %v6153 = vadd.f32 0.0, %v6152
    %v6154 = vpop.f32.mrb[0].mxu0
    %6155 = vmatprep.mubr.f32.mxu0 0.0
    %6156 = vmatmul.mubr.f32.gmra.mrb[0].mxu0 %v5800
    %v6157 = vpop.f32.mrb[0].mxu0
    %v6158 = vadd.f32 0.0, %v6157
    %v6159 = vpop.f32.mrb[0].mxu0
    %6160 = vmatprep.mubr.f32.mxu0 0.0
    %6161 = vmatmul.mubr.f32.gmra.mrb[0].mxu0 %v5803
    %v6162 = vpop.f32.mrb[0].mxu0
    %v6163 = vadd.f32 0.0, %v6162
    %v6164 = vpop.f32.mrb[0].mxu0
    %6165 = vmatprep.mubr.f32.mxu0 0.0
    %6166 = vmatmul.mubr.f32.gmra.mrb[0].mxu0 %v5806
    %v6167 = vpop.f32.mrb[0].mxu0
    %v6168 = vadd.f32 0.0, %v6167
    %v6169 = vpop.f32.mrb[0].mxu0
    %6170 = vmatprep.mubr.f32.mxu0 0.0
    %6171 = vmatmul.mubr.f32.gmra.mrb[0].mxu0 %v5809
    %v6172 = vpop.f32.mrb[0].mxu0
    %v6173 = vadd.f32 0.0, %v6172
    %v6174 = vpop.f32.mrb[0].mxu0
    %6175 = vmatprep.mubr.f32.mxu0 0.0
    %6176 = vmatmul.mubr.f32.gmra.mrb[0].mxu0 %v5812
    %v6177 = vpop.f32.mrb[0].mxu0
    %v6178 = vadd.f32 0.0, %v6177
    %v6179 = vpop.f32.mrb[0].mxu0
    %6180 = vmatprep.mubr.f32.mxu0 0.0
    %6181 = vmatmul.mubr.f32.gmra.mrb[0].mxu0 %v5815
    %v6182 = vpop.f32.mrb[0].mxu0
    %v6183 = vadd.f32 0.0, %v6182
    %v6184 = vpop.f32.mrb[0].mxu0
    %6185 = vmatprep.mubr.f32.mxu0 0.0
    %6186 = vmatmul.mubr.f32.gmra.mrb[0].mxu0 %v5818
    %v6187 = vpop.f32.mrb[0].mxu0
    %v6188 = vadd.f32 0.0, %v6187
    %v6189 = vpop.f32.mrb[0].mxu0
    %6190 = vmatprep.mubr.f32.mxu0 0.0
    %6191 = vmatmul.mubr.f32.gmra.mrb[0].mxu0 %v5821
    %v6192 = vpop.f32.mrb[0].mxu0
    %v6193 = vadd.f32 0.0, %v6192
    %v6194 = vpop.f32.mrb[0].mxu0
    %6195 = vmatprep.mubr.f32.mxu0 0.0
    %6196 = vmatmul.mubr.f32.gmra.mrb[0].mxu0 %v5824
    %v6197 = vpop.f32.mrb[0].mxu0
    %v6198 = vadd.f32 0.0, %v6197
    %v6199 = vpop.f32.mrb[0].mxu0
    %6200 = vmatprep.mubr.f32.mxu0 0.0
    %6201 = vmatmul.mubr.f32.gmra.mrb[0].mxu0 %v5827
    %v6202 = vpop.f32.mrb[0].mxu0
    %v6203 = vadd.f32 0.0, %v6202
    %v6204 = vpop.f32.mrb[0].mxu0
    %6205 = vmatprep.mubr.f32.mxu0 0.0
    %6206 = vmatmul.mubr.f32.gmra.mrb[0].mxu0 %v5830
    %v6207 = vpop.f32.mrb[0].mxu0
    %v6208 = vadd.f32 0.0, %v6207
    %v6209 = vpop.f32.mrb[0].mxu0
    %6210 = vmatprep.mubr.f32.mxu0 0.0
    %6211 = vmatmul.mubr.f32.gmra.mrb[0].mxu0 %v5833
    %v6212 = vpop.f32.mrb[0].mxu0
    %v6213 = vadd.f32 0.0, %v6212
    %v6214 = vpop.f32.mrb[0].mxu0
    %6215 = vmatprep.mubr.f32.mxu0 0.0
    %6216 = vmatmul.mubr.f32.gmra.mrb[0].mxu0 %v5836
    %v6217 = vpop.f32.mrb[0].mxu0
    %v6218 = vadd.f32 0.0, %v6217
    %v6219 = vpop.f32.mrb[0].mxu0
    %6220 = vmatprep.mubr.f32.mxu0 0.0
    %6221 = vmatmul.mubr.f32.gmra.mrb[0].mxu0 %v5839
    %v6222 = vpop.f32.mrb[0].mxu0
    %v6223 = vadd.f32 0.0, %v6222
    %v6224 = vpop.f32.mrb[0].mxu0
    %6225 = vdwg.mxu0
    %v6226 = vadd.f32 %v5519, %v5908
    %v6227 = vadd.f32 %v5520, %v5913
    %v6228 = vadd.f32 %v5521, %v5918
    %v6229 = vadd.f32 %v5522, %v5923
    %v6230 = vadd.f32 %v5523, %v5928
    %v6231 = vadd.f32 %v5524, %v5933
    %v6232 = vadd.f32 %v5525, %v5938
    %v6233 = vadd.f32 %v5526, %v5943
    %v6234 = vadd.f32 %v5527, %v5948
    %v6235 = vadd.f32 %v5528, %v5953
    %v6236 = vadd.f32 %v5529, %v5958
    %v6237 = vadd.f32 %v5530, %v5963
    %v6238 = vadd.f32 %v5531, %v5968
    %v6239 = vadd.f32 %v5532, %v5973
    %v6240 = vadd.f32 %v5533, %v5978
    %v6241 = vadd.f32 %v5534, %v5983
    %v6242 = vadd.f32 %v5535, %v5988
    %v6243 = vadd.f32 %v5536, %v5993
    %v6244 = vadd.f32 %v5537, %v5998
    %v6245 = vadd.f32 %v5538, %v6003
    %v6246 = vadd.f32 %v5539, %v6008
    %v6247 = vadd.f32 %v5540, %v6013
    %v6248 = vadd.f32 %v5541, %v6018
    %v6249 = vadd.f32 %v5542, %v6023
    %v6250 = vadd.f32 %v5543, %v6028
    %v6251 = vadd.f32 %v5544, %v6033
    %v6252 = vadd.f32 %v5545, %v6038
    %v6253 = vadd.f32 %v5546, %v6043
    %v6254 = vadd.f32 %v5547, %v6048
    %v6255 = vadd.f32 %v5548, %v6053
    %v6256 = vadd.f32 %v5549, %v6058
    %v6257 = vadd.f32 %v5550, %v6063
    %v6258 = vadd.f32 %v5551, %v6068
    %v6259 = vadd.f32 %v5552, %v6073
    %v6260 = vadd.f32 %v5553, %v6078
    %v6261 = vadd.f32 %v5554, %v6083
    %v6262 = vadd.f32 %v5555, %v6088
    %v6263 = vadd.f32 %v5556, %v6093
    %v6264 = vadd.f32 %v5557, %v6098
    %v6265 = vadd.f32 %v5558, %v6103
    %v6266 = vadd.f32 %v5559, %v6108
    %v6267 = vadd.f32 %v5560, %v6113
    %v6268 = vadd.f32 %v5561, %v6118
    %v6269 = vadd.f32 %v5562, %v6123
    %v6270 = vadd.f32 %v5563, %v6128
    %v6271 = vadd.f32 %v5564, %v6133
    %v6272 = vadd.f32 %v5565, %v6138
    %v6273 = vadd.f32 %v5566, %v6143
    %v6274 = vadd.f32 %v5567, %v6148
    %v6275 = vadd.f32 %v5568, %v6153
    %v6276 = vadd.f32 %v5569, %v6158
    %v6277 = vadd.f32 %v5570, %v6163
    %v6278 = vadd.f32 %v5571, %v6168
    %v6279 = vadd.f32 %v5572, %v6173
    %v6280 = vadd.f32 %v5573, %v6178
    %v6281 = vadd.f32 %v5574, %v6183
    %v6282 = vadd.f32 %v5575, %v6188
    %v6283 = vadd.f32 %v5576, %v6193
    %v6284 = vadd.f32 %v5577, %v6198
    %v6285 = vadd.f32 %v5578, %v6203
    %v6286 = vadd.f32 %v5579, %v6208
    %v6287 = vadd.f32 %v5580, %v6213
    %v6288 = vadd.f32 %v5581, %v6218
    %v6289 = vadd.f32 %v5582, %v6223
    %v6290 = vld [vmem:[%s2] sm:$0x1]
    %v6292 = vlaneseq
    %v6293 = vshrl.u32 %v6292, 7
    %v6294 = vsub.s32 0, %v6293
    %v6295 = vrot.slane %v6290, %v6294
    %v6297 = vadd.f32 %v6226, %v6295
    %v6298 = vadd.f32 %v6227, %v6295
    %v6299 = vadd.f32 %v6228, %v6295
    %v6300 = vadd.f32 %v6229, %v6295
    %v6301 = vadd.f32 %v6230, %v6295
    %v6302 = vadd.f32 %v6231, %v6295
    %v6303 = vadd.f32 %v6232, %v6295
    %v6304 = vadd.f32 %v6233, %v6295
    %v6305 = vadd.f32 %v6234, %v6295
    %v6306 = vadd.f32 %v6235, %v6295
    %v6307 = vadd.f32 %v6236, %v6295
    %v6308 = vadd.f32 %v6237, %v6295
    %v6309 = vadd.f32 %v6238, %v6295
    %v6310 = vadd.f32 %v6239, %v6295
    %v6311 = vadd.f32 %v6240, %v6295
    %v6312 = vadd.f32 %v6241, %v6295
    %v6313 = vadd.f32 %v6242, %v6295
    %v6314 = vadd.f32 %v6243, %v6295
    %v6315 = vadd.f32 %v6244, %v6295
    %v6316 = vadd.f32 %v6245, %v6295
    %v6317 = vadd.f32 %v6246, %v6295
    %v6318 = vadd.f32 %v6247, %v6295
    %v6319 = vadd.f32 %v6248, %v6295
    %v6320 = vadd.f32 %v6249, %v6295
    %v6321 = vadd.f32 %v6250, %v6295
    %v6322 = vadd.f32 %v6251, %v6295
    %v6323 = vadd.f32 %v6252, %v6295
    %v6324 = vadd.f32 %v6253, %v6295
    %v6325 = vadd.f32 %v6254, %v6295
    %v6326 = vadd.f32 %v6255, %v6295
    %v6327 = vadd.f32 %v6256, %v6295
    %v6328 = vadd.f32 %v6257, %v6295
    %v6329 = vadd.f32 %v6258, %v6295
    %v6330 = vadd.f32 %v6259, %v6295
    %v6331 = vadd.f32 %v6260, %v6295
    %v6332 = vadd.f32 %v6261, %v6295
    %v6333 = vadd.f32 %v6262, %v6295
    %v6334 = vadd.f32 %v6263, %v6295
    %v6335 = vadd.f32 %v6264, %v6295
    %v6336 = vadd.f32 %v6265, %v6295
    %v6337 = vadd.f32 %v6266, %v6295
    %v6338 = vadd.f32 %v6267, %v6295
    %v6339 = vadd.f32 %v6268, %v6295
    %v6340 = vadd.f32 %v6269, %v6295
    %v6341 = vadd.f32 %v6270, %v6295
    %v6342 = vadd.f32 %v6271, %v6295
    %v6343 = vadd.f32 %v6272, %v6295
    %v6344 = vadd.f32 %v6273, %v6295
    %v6345 = vadd.f32 %v6274, %v6295
    %v6346 = vadd.f32 %v6275, %v6295
    %v6347 = vadd.f32 %v6276, %v6295
    %v6348 = vadd.f32 %v6277, %v6295
    %v6349 = vadd.f32 %v6278, %v6295
    %v6350 = vadd.f32 %v6279, %v6295
    %v6351 = vadd.f32 %v6280, %v6295
    %v6352 = vadd.f32 %v6281, %v6295
    %v6353 = vadd.f32 %v6282, %v6295
    %v6354 = vadd.f32 %v6283, %v6295
    %v6355 = vadd.f32 %v6284, %v6295
    %v6356 = vadd.f32 %v6285, %v6295
    %v6357 = vadd.f32 %v6286, %v6295
    %v6358 = vadd.f32 %v6287, %v6295
    %v6359 = vadd.f32 %v6288, %v6295
    %v6360 = vadd.f32 %v6289, %v6295
    %v6361 = vld [vmem:[#allocation3] sm:$0xff]
    %v6362 = vld [vmem:[#allocation3 + $0x8] sm:$0xff]
    %v6363 = vld [vmem:[#allocation3 + $0x10] sm:$0xff]
    %v6364 = vld [vmem:[#allocation3 + $0x18] sm:$0xff]
    %v6365 = vld [vmem:[#allocation3 + $0x20] sm:$0xff]
    %v6366 = vld [vmem:[#allocation3 + $0x28] sm:$0xff]
    %v6367 = vld [vmem:[#allocation3 + $0x30] sm:$0xff]
    %v6368 = vld [vmem:[#allocation3 + $0x38] sm:$0xff]
    %v6369 = vld [vmem:[#allocation3 + $0x40] sm:$0xff]
    %v6370 = vld [vmem:[#allocation3 + $0x48] sm:$0xff]
    %v6371 = vld [vmem:[#allocation3 + $0x50] sm:$0xff]
    %v6372 = vld [vmem:[#allocation3 + $0x58] sm:$0xff]
    %v6373 = vld [vmem:[#allocation3 + $0x60] sm:$0xff]
    %v6374 = vld [vmem:[#allocation3 + $0x68] sm:$0xff]
    %v6375 = vld [vmem:[#allocation3 + $0x70] sm:$0xff]
    %v6376 = vld [vmem:[#allocation3 + $0x78] sm:$0xff]
    %v6377 = vld [vmem:[#allocation3 + $0x80] sm:$0xff]
    %v6378 = vld [vmem:[#allocation3 + $0x88] sm:$0xff]
    %v6379 = vld [vmem:[#allocation3 + $0x90] sm:$0xff]
    %v6380 = vld [vmem:[#allocation3 + $0x98] sm:$0xff]
    %v6381 = vld [vmem:[#allocation3 + $0xa0] sm:$0xff]
    %v6382 = vld [vmem:[#allocation3 + $0xa8] sm:$0xff]
    %v6383 = vld [vmem:[#allocation3 + $0xb0] sm:$0xff]
    %v6384 = vld [vmem:[#allocation3 + $0xb8] sm:$0xff]
    %v6385 = vld [vmem:[#allocation3 + $0xc0] sm:$0xff]
    %v6386 = vld [vmem:[#allocation3 + $0xc8] sm:$0xff]
    %v6387 = vld [vmem:[#allocation3 + $0xd0] sm:$0xff]
    %v6388 = vld [vmem:[#allocation3 + $0xd8] sm:$0xff]
    %v6389 = vld [vmem:[#allocation3 + $0xe0] sm:$0xff]
    %v6390 = vld [vmem:[#allocation3 + $0xe8] sm:$0xff]
    %v6391 = vld [vmem:[#allocation3 + $0xf0] sm:$0xff]
    %v6392 = vld [vmem:[#allocation3 + $0xf8] sm:$0xff]
    %v6393 = vld [vmem:[#allocation3 + $0x100] sm:$0xff]
    %v6394 = vld [vmem:[#allocation3 + $0x108] sm:$0xff]
    %v6395 = vld [vmem:[#allocation3 + $0x110] sm:$0xff]
    %v6396 = vld [vmem:[#allocation3 + $0x118] sm:$0xff]
    %v6397 = vld [vmem:[#allocation3 + $0x120] sm:$0xff]
    %v6398 = vld [vmem:[#allocation3 + $0x128] sm:$0xff]
    %v6399 = vld [vmem:[#allocation3 + $0x130] sm:$0xff]
    %v6400 = vld [vmem:[#allocation3 + $0x138] sm:$0xff]
    %v6401 = vld [vmem:[#allocation3 + $0x140] sm:$0xff]
    %v6402 = vld [vmem:[#allocation3 + $0x148] sm:$0xff]
    %v6403 = vld [vmem:[#allocation3 + $0x150] sm:$0xff]
    %v6404 = vld [vmem:[#allocation3 + $0x158] sm:$0xff]
    %v6405 = vld [vmem:[#allocation3 + $0x160] sm:$0xff]
    %v6406 = vld [vmem:[#allocation3 + $0x168] sm:$0xff]
    %v6407 = vld [vmem:[#allocation3 + $0x170] sm:$0xff]
    %v6408 = vld [vmem:[#allocation3 + $0x178] sm:$0xff]
    %v6409 = vld [vmem:[#allocation3 + $0x180] sm:$0xff]
    %v6410 = vld [vmem:[#allocation3 + $0x188] sm:$0xff]
    %v6411 = vld [vmem:[#allocation3 + $0x190] sm:$0xff]
    %v6412 = vld [vmem:[#allocation3 + $0x198] sm:$0xff]
    %v6413 = vld [vmem:[#allocation3 + $0x1a0] sm:$0xff]
    %v6414 = vld [vmem:[#allocation3 + $0x1a8] sm:$0xff]
    %v6415 = vld [vmem:[#allocation3 + $0x1b0] sm:$0xff]
    %v6416 = vld [vmem:[#allocation3 + $0x1b8] sm:$0xff]
    %v6417 = vld [vmem:[#allocation3 + $0x1c0] sm:$0xff]
    %v6418 = vld [vmem:[#allocation3 + $0x1c8] sm:$0xff]
    %v6419 = vld [vmem:[#allocation3 + $0x1d0] sm:$0xff]
    %v6420 = vld [vmem:[#allocation3 + $0x1d8] sm:$0xff]
    %v6421 = vld [vmem:[#allocation3 + $0x1e0] sm:$0xff]
    %v6422 = vld [vmem:[#allocation3 + $0x1e8] sm:$0xff]
    %v6423 = vld [vmem:[#allocation3 + $0x1f0] sm:$0xff]
    %v6424 = vld [vmem:[#allocation3 + $0x1f8] sm:$0xff]
    %6426 = vset.pattern.permute.xlu0 0
    %6427 = vperm.xlu0 %6426, %v6361
    %v6428 = vpop.permute.xlu0 %6427
    %6431 = vset.pattern.permute.xlu0 0
    %6432 = vperm.xlu0 %6431, %v6362
    %v6433 = vpop.permute.xlu0 %6432
    %6436 = vset.pattern.permute.xlu0 0
    %6437 = vperm.xlu0 %6436, %v6363
    %v6438 = vpop.permute.xlu0 %6437
    %6441 = vset.pattern.permute.xlu0 0
    %6442 = vperm.xlu0 %6441, %v6364
    %v6443 = vpop.permute.xlu0 %6442
    %6446 = vset.pattern.permute.xlu0 0
    %6447 = vperm.xlu0 %6446, %v6365
    %v6448 = vpop.permute.xlu0 %6447
    %6451 = vset.pattern.permute.xlu0 0
    %6452 = vperm.xlu0 %6451, %v6366
    %v6453 = vpop.permute.xlu0 %6452
    %6456 = vset.pattern.permute.xlu0 0
    %6457 = vperm.xlu0 %6456, %v6367
    %v6458 = vpop.permute.xlu0 %6457
    %6461 = vset.pattern.permute.xlu0 0
    %6462 = vperm.xlu0 %6461, %v6368
    %v6463 = vpop.permute.xlu0 %6462
    %6466 = vset.pattern.permute.xlu0 0
    %6467 = vperm.xlu0 %6466, %v6369
    %v6468 = vpop.permute.xlu0 %6467
    %6471 = vset.pattern.permute.xlu0 0
    %6472 = vperm.xlu0 %6471, %v6370
    %v6473 = vpop.permute.xlu0 %6472
    %6476 = vset.pattern.permute.xlu0 0
    %6477 = vperm.xlu0 %6476, %v6371
    %v6478 = vpop.permute.xlu0 %6477
    %6481 = vset.pattern.permute.xlu0 0
    %6482 = vperm.xlu0 %6481, %v6372
    %v6483 = vpop.permute.xlu0 %6482
    %6486 = vset.pattern.permute.xlu0 0
    %6487 = vperm.xlu0 %6486, %v6373
    %v6488 = vpop.permute.xlu0 %6487
    %6491 = vset.pattern.permute.xlu0 0
    %6492 = vperm.xlu0 %6491, %v6374
    %v6493 = vpop.permute.xlu0 %6492
    %6496 = vset.pattern.permute.xlu0 0
    %6497 = vperm.xlu0 %6496, %v6375
    %v6498 = vpop.permute.xlu0 %6497
    %6501 = vset.pattern.permute.xlu0 0
    %6502 = vperm.xlu0 %6501, %v6376
    %v6503 = vpop.permute.xlu0 %6502
    %6506 = vset.pattern.permute.xlu0 0
    %6507 = vperm.xlu0 %6506, %v6377
    %v6508 = vpop.permute.xlu0 %6507
    %6511 = vset.pattern.permute.xlu0 0
    %6512 = vperm.xlu0 %6511, %v6378
    %v6513 = vpop.permute.xlu0 %6512
    %6516 = vset.pattern.permute.xlu0 0
    %6517 = vperm.xlu0 %6516, %v6379
    %v6518 = vpop.permute.xlu0 %6517
    %6521 = vset.pattern.permute.xlu0 0
    %6522 = vperm.xlu0 %6521, %v6380
    %v6523 = vpop.permute.xlu0 %6522
    %6526 = vset.pattern.permute.xlu0 0
    %6527 = vperm.xlu0 %6526, %v6381
    %v6528 = vpop.permute.xlu0 %6527
    %6531 = vset.pattern.permute.xlu0 0
    %6532 = vperm.xlu0 %6531, %v6382
    %v6533 = vpop.permute.xlu0 %6532
    %6536 = vset.pattern.permute.xlu0 0
    %6537 = vperm.xlu0 %6536, %v6383
    %v6538 = vpop.permute.xlu0 %6537
    %6541 = vset.pattern.permute.xlu0 0
    %6542 = vperm.xlu0 %6541, %v6384
    %v6543 = vpop.permute.xlu0 %6542
    %6546 = vset.pattern.permute.xlu0 0
    %6547 = vperm.xlu0 %6546, %v6385
    %v6548 = vpop.permute.xlu0 %6547
    %6551 = vset.pattern.permute.xlu0 0
    %6552 = vperm.xlu0 %6551, %v6386
    %v6553 = vpop.permute.xlu0 %6552
    %6556 = vset.pattern.permute.xlu0 0
    %6557 = vperm.xlu0 %6556, %v6387
    %v6558 = vpop.permute.xlu0 %6557
    %6561 = vset.pattern.permute.xlu0 0
    %6562 = vperm.xlu0 %6561, %v6388
    %v6563 = vpop.permute.xlu0 %6562
    %6566 = vset.pattern.permute.xlu0 0
    %6567 = vperm.xlu0 %6566, %v6389
    %v6568 = vpop.permute.xlu0 %6567
    %6571 = vset.pattern.permute.xlu0 0
    %6572 = vperm.xlu0 %6571, %v6390
    %v6573 = vpop.permute.xlu0 %6572
    %6576 = vset.pattern.permute.xlu0 0
    %6577 = vperm.xlu0 %6576, %v6391
    %v6578 = vpop.permute.xlu0 %6577
    %6581 = vset.pattern.permute.xlu0 0
    %6582 = vperm.xlu0 %6581, %v6392
    %v6583 = vpop.permute.xlu0 %6582
    %6586 = vset.pattern.permute.xlu0 0
    %6587 = vperm.xlu0 %6586, %v6393
    %v6588 = vpop.permute.xlu0 %6587
    %6591 = vset.pattern.permute.xlu0 0
    %6592 = vperm.xlu0 %6591, %v6394
    %v6593 = vpop.permute.xlu0 %6592
    %6596 = vset.pattern.permute.xlu0 0
    %6597 = vperm.xlu0 %6596, %v6395
    %v6598 = vpop.permute.xlu0 %6597
    %6601 = vset.pattern.permute.xlu0 0
    %6602 = vperm.xlu0 %6601, %v6396
    %v6603 = vpop.permute.xlu0 %6602
    %6606 = vset.pattern.permute.xlu0 0
    %6607 = vperm.xlu0 %6606, %v6397
    %v6608 = vpop.permute.xlu0 %6607
    %6611 = vset.pattern.permute.xlu0 0
    %6612 = vperm.xlu0 %6611, %v6398
    %v6613 = vpop.permute.xlu0 %6612
    %6616 = vset.pattern.permute.xlu0 0
    %6617 = vperm.xlu0 %6616, %v6399
    %v6618 = vpop.permute.xlu0 %6617
    %6621 = vset.pattern.permute.xlu0 0
    %6622 = vperm.xlu0 %6621, %v6400
    %v6623 = vpop.permute.xlu0 %6622
    %6626 = vset.pattern.permute.xlu0 0
    %6627 = vperm.xlu0 %6626, %v6401
    %v6628 = vpop.permute.xlu0 %6627
    %6631 = vset.pattern.permute.xlu0 0
    %6632 = vperm.xlu0 %6631, %v6402
    %v6633 = vpop.permute.xlu0 %6632
    %6636 = vset.pattern.permute.xlu0 0
    %6637 = vperm.xlu0 %6636, %v6403
    %v6638 = vpop.permute.xlu0 %6637
    %6641 = vset.pattern.permute.xlu0 0
    %6642 = vperm.xlu0 %6641, %v6404
    %v6643 = vpop.permute.xlu0 %6642
    %6646 = vset.pattern.permute.xlu0 0
    %6647 = vperm.xlu0 %6646, %v6405
    %v6648 = vpop.permute.xlu0 %6647
    %6651 = vset.pattern.permute.xlu0 0
    %6652 = vperm.xlu0 %6651, %v6406
    %v6653 = vpop.permute.xlu0 %6652
    %6656 = vset.pattern.permute.xlu0 0
    %6657 = vperm.xlu0 %6656, %v6407
    %v6658 = vpop.permute.xlu0 %6657
    %6661 = vset.pattern.permute.xlu0 0
    %6662 = vperm.xlu0 %6661, %v6408
    %v6663 = vpop.permute.xlu0 %6662
    %6666 = vset.pattern.permute.xlu0 0
    %6667 = vperm.xlu0 %6666, %v6409
    %v6668 = vpop.permute.xlu0 %6667
    %6671 = vset.pattern.permute.xlu0 0
    %6672 = vperm.xlu0 %6671, %v6410
    %v6673 = vpop.permute.xlu0 %6672
    %6676 = vset.pattern.permute.xlu0 0
    %6677 = vperm.xlu0 %6676, %v6411
    %v6678 = vpop.permute.xlu0 %6677
    %6681 = vset.pattern.permute.xlu0 0
    %6682 = vperm.xlu0 %6681, %v6412
    %v6683 = vpop.permute.xlu0 %6682
    %6686 = vset.pattern.permute.xlu0 0
    %6687 = vperm.xlu0 %6686, %v6413
    %v6688 = vpop.permute.xlu0 %6687
    %6691 = vset.pattern.permute.xlu0 0
    %6692 = vperm.xlu0 %6691, %v6414
    %v6693 = vpop.permute.xlu0 %6692
    %6696 = vset.pattern.permute.xlu0 0
    %6697 = vperm.xlu0 %6696, %v6415
    %v6698 = vpop.permute.xlu0 %6697
    %6701 = vset.pattern.permute.xlu0 0
    %6702 = vperm.xlu0 %6701, %v6416
    %v6703 = vpop.permute.xlu0 %6702
    %6706 = vset.pattern.permute.xlu0 0
    %6707 = vperm.xlu0 %6706, %v6417
    %v6708 = vpop.permute.xlu0 %6707
    %6711 = vset.pattern.permute.xlu0 0
    %6712 = vperm.xlu0 %6711, %v6418
    %v6713 = vpop.permute.xlu0 %6712
    %6716 = vset.pattern.permute.xlu0 0
    %6717 = vperm.xlu0 %6716, %v6419
    %v6718 = vpop.permute.xlu0 %6717
    %6721 = vset.pattern.permute.xlu0 0
    %6722 = vperm.xlu0 %6721, %v6420
    %v6723 = vpop.permute.xlu0 %6722
    %6726 = vset.pattern.permute.xlu0 0
    %6727 = vperm.xlu0 %6726, %v6421
    %v6728 = vpop.permute.xlu0 %6727
    %6731 = vset.pattern.permute.xlu0 0
    %6732 = vperm.xlu0 %6731, %v6422
    %v6733 = vpop.permute.xlu0 %6732
    %6736 = vset.pattern.permute.xlu0 0
    %6737 = vperm.xlu0 %6736, %v6423
    %v6738 = vpop.permute.xlu0 %6737
    %6741 = vset.pattern.permute.xlu0 0
    %6742 = vperm.xlu0 %6741, %v6424
    %v6743 = vpop.permute.xlu0 %6742
    %v6745 = vmul.f32 %v6297, %v6428
    %v6746 = vmul.f32 %v6298, %v6433
    %v6747 = vmul.f32 %v6299, %v6438
    %v6748 = vmul.f32 %v6300, %v6443
    %v6749 = vmul.f32 %v6301, %v6448
    %v6750 = vmul.f32 %v6302, %v6453
    %v6751 = vmul.f32 %v6303, %v6458
    %v6752 = vmul.f32 %v6304, %v6463
    %v6753 = vmul.f32 %v6305, %v6468
    %v6754 = vmul.f32 %v6306, %v6473
    %v6755 = vmul.f32 %v6307, %v6478
    %v6756 = vmul.f32 %v6308, %v6483
    %v6757 = vmul.f32 %v6309, %v6488
    %v6758 = vmul.f32 %v6310, %v6493
    %v6759 = vmul.f32 %v6311, %v6498
    %v6760 = vmul.f32 %v6312, %v6503
    %v6761 = vmul.f32 %v6313, %v6508
    %v6762 = vmul.f32 %v6314, %v6513
    %v6763 = vmul.f32 %v6315, %v6518
    %v6764 = vmul.f32 %v6316, %v6523
    %v6765 = vmul.f32 %v6317, %v6528
    %v6766 = vmul.f32 %v6318, %v6533
    %v6767 = vmul.f32 %v6319, %v6538
    %v6768 = vmul.f32 %v6320, %v6543
    %v6769 = vmul.f32 %v6321, %v6548
    %v6770 = vmul.f32 %v6322, %v6553
    %v6771 = vmul.f32 %v6323, %v6558
    %v6772 = vmul.f32 %v6324, %v6563
    %v6773 = vmul.f32 %v6325, %v6568
    %v6774 = vmul.f32 %v6326, %v6573
    %v6775 = vmul.f32 %v6327, %v6578
    %v6776 = vmul.f32 %v6328, %v6583
    %v6777 = vmul.f32 %v6329, %v6588
    %v6778 = vmul.f32 %v6330, %v6593
    %v6779 = vmul.f32 %v6331, %v6598
    %v6780 = vmul.f32 %v6332, %v6603
    %v6781 = vmul.f32 %v6333, %v6608
    %v6782 = vmul.f32 %v6334, %v6613
    %v6783 = vmul.f32 %v6335, %v6618
    %v6784 = vmul.f32 %v6336, %v6623
    %v6785 = vmul.f32 %v6337, %v6628
    %v6786 = vmul.f32 %v6338, %v6633
    %v6787 = vmul.f32 %v6339, %v6638
    %v6788 = vmul.f32 %v6340, %v6643
    %v6789 = vmul.f32 %v6341, %v6648
    %v6790 = vmul.f32 %v6342, %v6653
    %v6791 = vmul.f32 %v6343, %v6658
    %v6792 = vmul.f32 %v6344, %v6663
    %v6793 = vmul.f32 %v6345, %v6668
    %v6794 = vmul.f32 %v6346, %v6673
    %v6795 = vmul.f32 %v6347, %v6678
    %v6796 = vmul.f32 %v6348, %v6683
    %v6797 = vmul.f32 %v6349, %v6688
    %v6798 = vmul.f32 %v6350, %v6693
    %v6799 = vmul.f32 %v6351, %v6698
    %v6800 = vmul.f32 %v6352, %v6703
    %v6801 = vmul.f32 %v6353, %v6708
    %v6802 = vmul.f32 %v6354, %v6713
    %v6803 = vmul.f32 %v6355, %v6718
    %v6804 = vmul.f32 %v6356, %v6723
    %v6805 = vmul.f32 %v6357, %v6728
    %v6806 = vmul.f32 %v6358, %v6733
    %v6807 = vmul.f32 %v6359, %v6738
    %v6808 = vmul.f32 %v6360, %v6743
    %vm6809 = vcmask 261120
    %v6810 = vsel %vm6809, %v6745, 0.0
    %v6811 = vsel %vm6809, %v6746, 0.0
    %v6812 = vadd.f32 %v6810, %v6811
    %v6813 = vsel %vm6809, %v6747, 0.0
    %v6814 = vadd.f32 %v6812, %v6813
    %v6815 = vsel %vm6809, %v6748, 0.0
    %v6816 = vadd.f32 %v6814, %v6815
    %v6817 = vsel %vm6809, %v6749, 0.0
    %v6818 = vadd.f32 %v6816, %v6817
    %v6819 = vsel %vm6809, %v6750, 0.0
    %v6820 = vadd.f32 %v6818, %v6819
    %v6821 = vsel %vm6809, %v6751, 0.0
    %v6822 = vadd.f32 %v6820, %v6821
    %v6823 = vsel %vm6809, %v6752, 0.0
    %v6824 = vadd.f32 %v6822, %v6823
    %v6825 = vsel %vm6809, %v6753, 0.0
    %v6826 = vadd.f32 %v6824, %v6825
    %v6827 = vsel %vm6809, %v6754, 0.0
    %v6828 = vadd.f32 %v6826, %v6827
    %v6829 = vsel %vm6809, %v6755, 0.0
    %v6830 = vadd.f32 %v6828, %v6829
    %v6831 = vsel %vm6809, %v6756, 0.0
    %v6832 = vadd.f32 %v6830, %v6831
    %v6833 = vsel %vm6809, %v6757, 0.0
    %v6834 = vadd.f32 %v6832, %v6833
    %v6835 = vsel %vm6809, %v6758, 0.0
    %v6836 = vadd.f32 %v6834, %v6835
    %v6837 = vsel %vm6809, %v6759, 0.0
    %v6838 = vadd.f32 %v6836, %v6837
    %v6839 = vsel %vm6809, %v6760, 0.0
    %v6840 = vadd.f32 %v6838, %v6839
    %v6841 = vsel %vm6809, %v6761, 0.0
    %v6842 = vadd.f32 %v6840, %v6841
    %v6843 = vsel %vm6809, %v6762, 0.0
    %v6844 = vadd.f32 %v6842, %v6843
    %v6845 = vsel %vm6809, %v6763, 0.0
    %v6846 = vadd.f32 %v6844, %v6845
    %v6847 = vsel %vm6809, %v6764, 0.0
    %v6848 = vadd.f32 %v6846, %v6847
    %v6849 = vsel %vm6809, %v6765, 0.0
    %v6850 = vadd.f32 %v6848, %v6849
    %v6851 = vsel %vm6809, %v6766, 0.0
    %v6852 = vadd.f32 %v6850, %v6851
    %v6853 = vsel %vm6809, %v6767, 0.0
    %v6854 = vadd.f32 %v6852, %v6853
    %v6855 = vsel %vm6809, %v6768, 0.0
    %v6856 = vadd.f32 %v6854, %v6855
    %v6857 = vsel %vm6809, %v6769, 0.0
    %v6858 = vadd.f32 %v6856, %v6857
    %v6859 = vsel %vm6809, %v6770, 0.0
    %v6860 = vadd.f32 %v6858, %v6859
    %v6861 = vsel %vm6809, %v6771, 0.0
    %v6862 = vadd.f32 %v6860, %v6861
    %v6863 = vsel %vm6809, %v6772, 0.0
    %v6864 = vadd.f32 %v6862, %v6863
    %v6865 = vsel %vm6809, %v6773, 0.0
    %v6866 = vadd.f32 %v6864, %v6865
    %v6867 = vsel %vm6809, %v6774, 0.0
    %v6868 = vadd.f32 %v6866, %v6867
    %v6869 = vsel %vm6809, %v6775, 0.0
    %v6870 = vadd.f32 %v6868, %v6869
    %v6871 = vsel %vm6809, %v6776, 0.0
    %v6872 = vadd.f32 %v6870, %v6871
    %v6873 = vsel %vm6809, %v6777, 0.0
    %v6874 = vadd.f32 %v6872, %v6873
    %v6875 = vsel %vm6809, %v6778, 0.0
    %v6876 = vadd.f32 %v6874, %v6875
    %v6877 = vsel %vm6809, %v6779, 0.0
    %v6878 = vadd.f32 %v6876, %v6877
    %v6879 = vsel %vm6809, %v6780, 0.0
    %v6880 = vadd.f32 %v6878, %v6879
    %v6881 = vsel %vm6809, %v6781, 0.0
    %v6882 = vadd.f32 %v6880, %v6881
    %v6883 = vsel %vm6809, %v6782, 0.0
    %v6884 = vadd.f32 %v6882, %v6883
    %v6885 = vsel %vm6809, %v6783, 0.0
    %v6886 = vadd.f32 %v6884, %v6885
    %v6887 = vsel %vm6809, %v6784, 0.0
    %v6888 = vadd.f32 %v6886, %v6887
    %v6889 = vsel %vm6809, %v6785, 0.0
    %v6890 = vadd.f32 %v6888, %v6889
    %v6891 = vsel %vm6809, %v6786, 0.0
    %v6892 = vadd.f32 %v6890, %v6891
    %v6893 = vsel %vm6809, %v6787, 0.0
    %v6894 = vadd.f32 %v6892, %v6893
    %v6895 = vsel %vm6809, %v6788, 0.0
    %v6896 = vadd.f32 %v6894, %v6895
    %v6897 = vsel %vm6809, %v6789, 0.0
    %v6898 = vadd.f32 %v6896, %v6897
    %v6899 = vsel %vm6809, %v6790, 0.0
    %v6900 = vadd.f32 %v6898, %v6899
    %v6901 = vsel %vm6809, %v6791, 0.0
    %v6902 = vadd.f32 %v6900, %v6901
    %v6903 = vsel %vm6809, %v6792, 0.0
    %v6904 = vadd.f32 %v6902, %v6903
    %v6905 = vsel %vm6809, %v6793, 0.0
    %v6906 = vadd.f32 %v6904, %v6905
    %v6907 = vsel %vm6809, %v6794, 0.0
    %v6908 = vadd.f32 %v6906, %v6907
    %v6909 = vsel %vm6809, %v6795, 0.0
    %v6910 = vadd.f32 %v6908, %v6909
    %v6911 = vsel %vm6809, %v6796, 0.0
    %v6912 = vadd.f32 %v6910, %v6911
    %v6913 = vsel %vm6809, %v6797, 0.0
    %v6914 = vadd.f32 %v6912, %v6913
    %v6915 = vsel %vm6809, %v6798, 0.0
    %v6916 = vadd.f32 %v6914, %v6915
    %v6917 = vsel %vm6809, %v6799, 0.0
    %v6918 = vadd.f32 %v6916, %v6917
    %v6919 = vsel %vm6809, %v6800, 0.0
    %v6920 = vadd.f32 %v6918, %v6919
    %v6921 = vsel %vm6809, %v6801, 0.0
    %v6922 = vadd.f32 %v6920, %v6921
    %v6923 = vsel %vm6809, %v6802, 0.0
    %v6924 = vadd.f32 %v6922, %v6923
    %v6925 = vsel %vm6809, %v6803, 0.0
    %v6926 = vadd.f32 %v6924, %v6925
    %v6927 = vsel %vm6809, %v6804, 0.0
    %v6928 = vadd.f32 %v6926, %v6927
    %v6929 = vsel %vm6809, %v6805, 0.0
    %v6930 = vadd.f32 %v6928, %v6929
    %v6931 = vsel %vm6809, %v6806, 0.0
    %v6932 = vadd.f32 %v6930, %v6931
    %v6933 = vsel %vm6809, %v6807, 0.0
    %v6934 = vadd.f32 %v6932, %v6933
    %v6935 = vsel %vm6809, %v6808, 0.0
    %v6936 = vadd.f32 %v6934, %v6935
    %v6937 = vrot.slane %v6936, 4
    %v6938 = vadd.f32 %v6936, %v6937
    %v6939 = vrot.slane %v6938, 2
    %v6940 = vadd.f32 %v6938, %v6939
    %v6941 = vrot.slane %v6940, 1
    %v6942 = vadd.f32 %v6940, %v6941
    %v6943 = vmul.f32 %v6745, %v6297
    %v6944 = vmul.f32 %v6746, %v6298
    %v6945 = vmul.f32 %v6747, %v6299
    %v6946 = vmul.f32 %v6748, %v6300
    %v6947 = vmul.f32 %v6749, %v6301
    %v6948 = vmul.f32 %v6750, %v6302
    %v6949 = vmul.f32 %v6751, %v6303
    %v6950 = vmul.f32 %v6752, %v6304
    %v6951 = vmul.f32 %v6753, %v6305
    %v6952 = vmul.f32 %v6754, %v6306
    %v6953 = vmul.f32 %v6755, %v6307
    %v6954 = vmul.f32 %v6756, %v6308
    %v6955 = vmul.f32 %v6757, %v6309
    %v6956 = vmul.f32 %v6758, %v6310
    %v6957 = vmul.f32 %v6759, %v6311
    %v6958 = vmul.f32 %v6760, %v6312
    %v6959 = vmul.f32 %v6761, %v6313
    %v6960 = vmul.f32 %v6762, %v6314
    %v6961 = vmul.f32 %v6763, %v6315
    %v6962 = vmul.f32 %v6764, %v6316
    %v6963 = vmul.f32 %v6765, %v6317
    %v6964 = vmul.f32 %v6766, %v6318
    %v6965 = vmul.f32 %v6767, %v6319
    %v6966 = vmul.f32 %v6768, %v6320
    %v6967 = vmul.f32 %v6769, %v6321
    %v6968 = vmul.f32 %v6770, %v6322
    %v6969 = vmul.f32 %v6771, %v6323
    %v6970 = vmul.f32 %v6772, %v6324
    %v6971 = vmul.f32 %v6773, %v6325
    %v6972 = vmul.f32 %v6774, %v6326
    %v6973 = vmul.f32 %v6775, %v6327
    %v6974 = vmul.f32 %v6776, %v6328
    %v6975 = vmul.f32 %v6777, %v6329
    %v6976 = vmul.f32 %v6778, %v6330
    %v6977 = vmul.f32 %v6779, %v6331
    %v6978 = vmul.f32 %v6780, %v6332
    %v6979 = vmul.f32 %v6781, %v6333
    %v6980 = vmul.f32 %v6782, %v6334
    %v6981 = vmul.f32 %v6783, %v6335
    %v6982 = vmul.f32 %v6784, %v6336
    %v6983 = vmul.f32 %v6785, %v6337
    %v6984 = vmul.f32 %v6786, %v6338
    %v6985 = vmul.f32 %v6787, %v6339
    %v6986 = vmul.f32 %v6788, %v6340
    %v6987 = vmul.f32 %v6789, %v6341
    %v6988 = vmul.f32 %v6790, %v6342
    %v6989 = vmul.f32 %v6791, %v6343
    %v6990 = vmul.f32 %v6792, %v6344
    %v6991 = vmul.f32 %v6793, %v6345
    %v6992 = vmul.f32 %v6794, %v6346
    %v6993 = vmul.f32 %v6795, %v6347
    %v6994 = vmul.f32 %v6796, %v6348
    %v6995 = vmul.f32 %v6797, %v6349
    %v6996 = vmul.f32 %v6798, %v6350
    %v6997 = vmul.f32 %v6799, %v6351
    %v6998 = vmul.f32 %v6800, %v6352
    %v6999 = vmul.f32 %v6801, %v6353
    %v7000 = vmul.f32 %v6802, %v6354
    %v7001 = vmul.f32 %v6803, %v6355
    %v7002 = vmul.f32 %v6804, %v6356
    %v7003 = vmul.f32 %v6805, %v6357
    %v7004 = vmul.f32 %v6806, %v6358
    %v7005 = vmul.f32 %v6807, %v6359
    %v7006 = vmul.f32 %v6808, %v6360
    %v7007 = vsel %vm6809, %v6943, 0.0
    %v7008 = vsel %vm6809, %v6944, 0.0
    %v7009 = vadd.f32 %v7007, %v7008
    %v7010 = vsel %vm6809, %v6945, 0.0
    %v7011 = vadd.f32 %v7009, %v7010
    %v7012 = vsel %vm6809, %v6946, 0.0
    %v7013 = vadd.f32 %v7011, %v7012
    %v7014 = vsel %vm6809, %v6947, 0.0
    %v7015 = vadd.f32 %v7013, %v7014
    %v7016 = vsel %vm6809, %v6948, 0.0
    %v7017 = vadd.f32 %v7015, %v7016
    %v7018 = vsel %vm6809, %v6949, 0.0
    %v7019 = vadd.f32 %v7017, %v7018
    %v7020 = vsel %vm6809, %v6950, 0.0
    %v7021 = vadd.f32 %v7019, %v7020
    %v7022 = vsel %vm6809, %v6951, 0.0
    %v7023 = vadd.f32 %v7021, %v7022
    %v7024 = vsel %vm6809, %v6952, 0.0
    %v7025 = vadd.f32 %v7023, %v7024
    %v7026 = vsel %vm6809, %v6953, 0.0
    %v7027 = vadd.f32 %v7025, %v7026
    %v7028 = vsel %vm6809, %v6954, 0.0
    %v7029 = vadd.f32 %v7027, %v7028
    %v7030 = vsel %vm6809, %v6955, 0.0
    %v7031 = vadd.f32 %v7029, %v7030
    %v7032 = vsel %vm6809, %v6956, 0.0
    %v7033 = vadd.f32 %v7031, %v7032
    %v7034 = vsel %vm6809, %v6957, 0.0
    %v7035 = vadd.f32 %v7033, %v7034
    %v7036 = vsel %vm6809, %v6958, 0.0
    %v7037 = vadd.f32 %v7035, %v7036
    %v7038 = vsel %vm6809, %v6959, 0.0
    %v7039 = vadd.f32 %v7037, %v7038
    %v7040 = vsel %vm6809, %v6960, 0.0
    %v7041 = vadd.f32 %v7039, %v7040
    %v7042 = vsel %vm6809, %v6961, 0.0
    %v7043 = vadd.f32 %v7041, %v7042
    %v7044 = vsel %vm6809, %v6962, 0.0
    %v7045 = vadd.f32 %v7043, %v7044
    %v7046 = vsel %vm6809, %v6963, 0.0
    %v7047 = vadd.f32 %v7045, %v7046
    %v7048 = vsel %vm6809, %v6964, 0.0
    %v7049 = vadd.f32 %v7047, %v7048
    %v7050 = vsel %vm6809, %v6965, 0.0
    %v7051 = vadd.f32 %v7049, %v7050
    %v7052 = vsel %vm6809, %v6966, 0.0
    %v7053 = vadd.f32 %v7051, %v7052
    %v7054 = vsel %vm6809, %v6967, 0.0
    %v7055 = vadd.f32 %v7053, %v7054
    %v7056 = vsel %vm6809, %v6968, 0.0
    %v7057 = vadd.f32 %v7055, %v7056
    %v7058 = vsel %vm6809, %v6969, 0.0
    %v7059 = vadd.f32 %v7057, %v7058
    %v7060 = vsel %vm6809, %v6970, 0.0
    %v7061 = vadd.f32 %v7059, %v7060
    %v7062 = vsel %vm6809, %v6971, 0.0
    %v7063 = vadd.f32 %v7061, %v7062
    %v7064 = vsel %vm6809, %v6972, 0.0
    %v7065 = vadd.f32 %v7063, %v7064
    %v7066 = vsel %vm6809, %v6973, 0.0
    %v7067 = vadd.f32 %v7065, %v7066
    %v7068 = vsel %vm6809, %v6974, 0.0
    %v7069 = vadd.f32 %v7067, %v7068
    %v7070 = vsel %vm6809, %v6975, 0.0
    %v7071 = vadd.f32 %v7069, %v7070
    %v7072 = vsel %vm6809, %v6976, 0.0
    %v7073 = vadd.f32 %v7071, %v7072
    %v7074 = vsel %vm6809, %v6977, 0.0
    %v7075 = vadd.f32 %v7073, %v7074
    %v7076 = vsel %vm6809, %v6978, 0.0
    %v7077 = vadd.f32 %v7075, %v7076
    %v7078 = vsel %vm6809, %v6979, 0.0
    %v7079 = vadd.f32 %v7077, %v7078
    %v7080 = vsel %vm6809, %v6980, 0.0
    %v7081 = vadd.f32 %v7079, %v7080
    %v7082 = vsel %vm6809, %v6981, 0.0
    %v7083 = vadd.f32 %v7081, %v7082
    %v7084 = vsel %vm6809, %v6982, 0.0
    %v7085 = vadd.f32 %v7083, %v7084
    %v7086 = vsel %vm6809, %v6983, 0.0
    %v7087 = vadd.f32 %v7085, %v7086
    %v7088 = vsel %vm6809, %v6984, 0.0
    %v7089 = vadd.f32 %v7087, %v7088
    %v7090 = vsel %vm6809, %v6985, 0.0
    %v7091 = vadd.f32 %v7089, %v7090
    %v7092 = vsel %vm6809, %v6986, 0.0
    %v7093 = vadd.f32 %v7091, %v7092
    %v7094 = vsel %vm6809, %v6987, 0.0
    %v7095 = vadd.f32 %v7093, %v7094
    %v7096 = vsel %vm6809, %v6988, 0.0
    %v7097 = vadd.f32 %v7095, %v7096
    %v7098 = vsel %vm6809, %v6989, 0.0
    %v7099 = vadd.f32 %v7097, %v7098
    %v7100 = vsel %vm6809, %v6990, 0.0
    %v7101 = vadd.f32 %v7099, %v7100
    %v7102 = vsel %vm6809, %v6991, 0.0
    %v7103 = vadd.f32 %v7101, %v7102
    %v7104 = vsel %vm6809, %v6992, 0.0
    %v7105 = vadd.f32 %v7103, %v7104
    %v7106 = vsel %vm6809, %v6993, 0.0
    %v7107 = vadd.f32 %v7105, %v7106
    %v7108 = vsel %vm6809, %v6994, 0.0
    %v7109 = vadd.f32 %v7107, %v7108
    %v7110 = vsel %vm6809, %v6995, 0.0
    %v7111 = vadd.f32 %v7109, %v7110
    %v7112 = vsel %vm6809, %v6996, 0.0
    %v7113 = vadd.f32 %v7111, %v7112
    %v7114 = vsel %vm6809, %v6997, 0.0
    %v7115 = vadd.f32 %v7113, %v7114
    %v7116 = vsel %vm6809, %v6998, 0.0
    %v7117 = vadd.f32 %v7115, %v7116
    %v7118 = vsel %vm6809, %v6999, 0.0
    %v7119 = vadd.f32 %v7117, %v7118
    %v7120 = vsel %vm6809, %v7000, 0.0
    %v7121 = vadd.f32 %v7119, %v7120
    %v7122 = vsel %vm6809, %v7001, 0.0
    %v7123 = vadd.f32 %v7121, %v7122
    %v7124 = vsel %vm6809, %v7002, 0.0
    %v7125 = vadd.f32 %v7123, %v7124
    %v7126 = vsel %vm6809, %v7003, 0.0
    %v7127 = vadd.f32 %v7125, %v7126
    %v7128 = vsel %vm6809, %v7004, 0.0
    %v7129 = vadd.f32 %v7127, %v7128
    %v7130 = vsel %vm6809, %v7005, 0.0
    %v7131 = vadd.f32 %v7129, %v7130
    %v7132 = vsel %vm6809, %v7006, 0.0
    %v7133 = vadd.f32 %v7131, %v7132
    %v7134 = vrot.slane %v7133, 4
    %v7135 = vadd.f32 %v7133, %v7134
    %v7136 = vrot.slane %v7135, 2
    %v7137 = vadd.f32 %v7135, %v7136
    %v7138 = vrot.slane %v7137, 1
    %v7139 = vadd.f32 %v7137, %v7138
    %v7140 = vmul.f32 %v6942, 0.0025510204
    %v7141 = vmul.f32 %v7139, 0.0025510204
    %v7142 = vmul.f32 %v7140, %v7140
    %v7143 = vsub.f32 %v7141, %v7142
    %v7144 = vsub.f32 %v6297, %v7140
    %v7145 = vsub.f32 %v6298, %v7140
    %v7146 = vsub.f32 %v6299, %v7140
    %v7147 = vsub.f32 %v6300, %v7140
    %v7148 = vsub.f32 %v6301, %v7140
    %v7149 = vsub.f32 %v6302, %v7140
    %v7150 = vsub.f32 %v6303, %v7140
    %v7151 = vsub.f32 %v6304, %v7140
    %v7152 = vsub.f32 %v6305, %v7140
    %v7153 = vsub.f32 %v6306, %v7140
    %v7154 = vsub.f32 %v6307, %v7140
    %v7155 = vsub.f32 %v6308, %v7140
    %v7156 = vsub.f32 %v6309, %v7140
    %v7157 = vsub.f32 %v6310, %v7140
    %v7158 = vsub.f32 %v6311, %v7140
    %v7159 = vsub.f32 %v6312, %v7140
    %v7160 = vsub.f32 %v6313, %v7140
    %v7161 = vsub.f32 %v6314, %v7140
    %v7162 = vsub.f32 %v6315, %v7140
    %v7163 = vsub.f32 %v6316, %v7140
    %v7164 = vsub.f32 %v6317, %v7140
    %v7165 = vsub.f32 %v6318, %v7140
    %v7166 = vsub.f32 %v6319, %v7140
    %v7167 = vsub.f32 %v6320, %v7140
    %v7168 = vsub.f32 %v6321, %v7140
    %v7169 = vsub.f32 %v6322, %v7140
    %v7170 = vsub.f32 %v6323, %v7140
    %v7171 = vsub.f32 %v6324, %v7140
    %v7172 = vsub.f32 %v6325, %v7140
    %v7173 = vsub.f32 %v6326, %v7140
    %v7174 = vsub.f32 %v6327, %v7140
    %v7175 = vsub.f32 %v6328, %v7140
    %v7176 = vsub.f32 %v6329, %v7140
    %v7177 = vsub.f32 %v6330, %v7140
    %v7178 = vsub.f32 %v6331, %v7140
    %v7179 = vsub.f32 %v6332, %v7140
    %v7180 = vsub.f32 %v6333, %v7140
    %v7181 = vsub.f32 %v6334, %v7140
    %v7182 = vsub.f32 %v6335, %v7140
    %v7183 = vsub.f32 %v6336, %v7140
    %v7184 = vsub.f32 %v6337, %v7140
    %v7185 = vsub.f32 %v6338, %v7140
    %v7186 = vsub.f32 %v6339, %v7140
    %v7187 = vsub.f32 %v6340, %v7140
    %v7188 = vsub.f32 %v6341, %v7140
    %v7189 = vsub.f32 %v6342, %v7140
    %v7190 = vsub.f32 %v6343, %v7140
    %v7191 = vsub.f32 %v6344, %v7140
    %v7192 = vsub.f32 %v6345, %v7140
    %v7193 = vsub.f32 %v6346, %v7140
    %v7194 = vsub.f32 %v6347, %v7140
    %v7195 = vsub.f32 %v6348, %v7140
    %v7196 = vsub.f32 %v6349, %v7140
    %v7197 = vsub.f32 %v6350, %v7140
    %v7198 = vsub.f32 %v6351, %v7140
    %v7199 = vsub.f32 %v6352, %v7140
    %v7200 = vsub.f32 %v6353, %v7140
    %v7201 = vsub.f32 %v6354, %v7140
    %v7202 = vsub.f32 %v6355, %v7140
    %v7203 = vsub.f32 %v6356, %v7140
    %v7204 = vsub.f32 %v6357, %v7140
    %v7205 = vsub.f32 %v6358, %v7140
    %v7206 = vsub.f32 %v6359, %v7140
    %v7207 = vsub.f32 %v6360, %v7140
    %v7208 = vadd.f32 %v7143, 1e-05
    %v7209 = vrsqrt.pop %v7208
    %v7210 = vmul.f32 %v7144, %v7209
    %v7211 = vmul.f32 %v7145, %v7209
    %v7212 = vmul.f32 %v7146, %v7209
    %v7213 = vmul.f32 %v7147, %v7209
    %v7214 = vmul.f32 %v7148, %v7209
    %v7215 = vmul.f32 %v7149, %v7209
    %v7216 = vmul.f32 %v7150, %v7209
    %v7217 = vmul.f32 %v7151, %v7209
    %v7218 = vmul.f32 %v7152, %v7209
    %v7219 = vmul.f32 %v7153, %v7209
    %v7220 = vmul.f32 %v7154, %v7209
    %v7221 = vmul.f32 %v7155, %v7209
    %v7222 = vmul.f32 %v7156, %v7209
    %v7223 = vmul.f32 %v7157, %v7209
    %v7224 = vmul.f32 %v7158, %v7209
    %v7225 = vmul.f32 %v7159, %v7209
    %v7226 = vmul.f32 %v7160, %v7209
    %v7227 = vmul.f32 %v7161, %v7209
    %v7228 = vmul.f32 %v7162, %v7209
    %v7229 = vmul.f32 %v7163, %v7209
    %v7230 = vmul.f32 %v7164, %v7209
    %v7231 = vmul.f32 %v7165, %v7209
    %v7232 = vmul.f32 %v7166, %v7209
    %v7233 = vmul.f32 %v7167, %v7209
    %v7234 = vmul.f32 %v7168, %v7209
    %v7235 = vmul.f32 %v7169, %v7209
    %v7236 = vmul.f32 %v7170, %v7209
    %v7237 = vmul.f32 %v7171, %v7209
    %v7238 = vmul.f32 %v7172, %v7209
    %v7239 = vmul.f32 %v7173, %v7209
    %v7240 = vmul.f32 %v7174, %v7209
    %v7241 = vmul.f32 %v7175, %v7209
    %v7242 = vmul.f32 %v7176, %v7209
    %v7243 = vmul.f32 %v7177, %v7209
    %v7244 = vmul.f32 %v7178, %v7209
    %v7245 = vmul.f32 %v7179, %v7209
    %v7246 = vmul.f32 %v7180, %v7209
    %v7247 = vmul.f32 %v7181, %v7209
    %v7248 = vmul.f32 %v7182, %v7209
    %v7249 = vmul.f32 %v7183, %v7209
    %v7250 = vmul.f32 %v7184, %v7209
    %v7251 = vmul.f32 %v7185, %v7209
    %v7252 = vmul.f32 %v7186, %v7209
    %v7253 = vmul.f32 %v7187, %v7209
    %v7254 = vmul.f32 %v7188, %v7209
    %v7255 = vmul.f32 %v7189, %v7209
    %v7256 = vmul.f32 %v7190, %v7209
    %v7257 = vmul.f32 %v7191, %v7209
    %v7258 = vmul.f32 %v7192, %v7209
    %v7259 = vmul.f32 %v7193, %v7209
    %v7260 = vmul.f32 %v7194, %v7209
    %v7261 = vmul.f32 %v7195, %v7209
    %v7262 = vmul.f32 %v7196, %v7209
    %v7263 = vmul.f32 %v7197, %v7209
    %v7264 = vmul.f32 %v7198, %v7209
    %v7265 = vmul.f32 %v7199, %v7209
    %v7266 = vmul.f32 %v7200, %v7209
    %v7267 = vmul.f32 %v7201, %v7209
    %v7268 = vmul.f32 %v7202, %v7209
    %v7269 = vmul.f32 %v7203, %v7209
    %v7270 = vmul.f32 %v7204, %v7209
    %v7271 = vmul.f32 %v7205, %v7209
    %v7272 = vmul.f32 %v7206, %v7209
    %v7273 = vmul.f32 %v7207, %v7209
    %v7274 = vld [vmem:[%s3] sm:$0x1]
    %v7276 = vlaneseq
    %v7277 = vshrl.u32 %v7276, 7
    %v7278 = vsub.s32 0, %v7277
    %v7279 = vrot.slane %v7274, %v7278
    %v7281 = vmul.f32 %v7210, %v7279
    %v7282 = vmul.f32 %v7211, %v7279
    %v7283 = vmul.f32 %v7212, %v7279
    %v7284 = vmul.f32 %v7213, %v7279
    %v7285 = vmul.f32 %v7214, %v7279
    %v7286 = vmul.f32 %v7215, %v7279
    %v7287 = vmul.f32 %v7216, %v7279
    %v7288 = vmul.f32 %v7217, %v7279
    %v7289 = vmul.f32 %v7218, %v7279
    %v7290 = vmul.f32 %v7219, %v7279
    %v7291 = vmul.f32 %v7220, %v7279
    %v7292 = vmul.f32 %v7221, %v7279
    %v7293 = vmul.f32 %v7222, %v7279
    %v7294 = vmul.f32 %v7223, %v7279
    %v7295 = vmul.f32 %v7224, %v7279
    %v7296 = vmul.f32 %v7225, %v7279
    %v7297 = vmul.f32 %v7226, %v7279
    %v7298 = vmul.f32 %v7227, %v7279
    %v7299 = vmul.f32 %v7228, %v7279
    %v7300 = vmul.f32 %v7229, %v7279
    %v7301 = vmul.f32 %v7230, %v7279
    %v7302 = vmul.f32 %v7231, %v7279
    %v7303 = vmul.f32 %v7232, %v7279
    %v7304 = vmul.f32 %v7233, %v7279
    %v7305 = vmul.f32 %v7234, %v7279
    %v7306 = vmul.f32 %v7235, %v7279
    %v7307 = vmul.f32 %v7236, %v7279
    %v7308 = vmul.f32 %v7237, %v7279
    %v7309 = vmul.f32 %v7238, %v7279
    %v7310 = vmul.f32 %v7239, %v7279
    %v7311 = vmul.f32 %v7240, %v7279
    %v7312 = vmul.f32 %v7241, %v7279
    %v7313 = vmul.f32 %v7242, %v7279
    %v7314 = vmul.f32 %v7243, %v7279
    %v7315 = vmul.f32 %v7244, %v7279
    %v7316 = vmul.f32 %v7245, %v7279
    %v7317 = vmul.f32 %v7246, %v7279
    %v7318 = vmul.f32 %v7247, %v7279
    %v7319 = vmul.f32 %v7248, %v7279
    %v7320 = vmul.f32 %v7249, %v7279
    %v7321 = vmul.f32 %v7250, %v7279
    %v7322 = vmul.f32 %v7251, %v7279
    %v7323 = vmul.f32 %v7252, %v7279
    %v7324 = vmul.f32 %v7253, %v7279
    %v7325 = vmul.f32 %v7254, %v7279
    %v7326 = vmul.f32 %v7255, %v7279
    %v7327 = vmul.f32 %v7256, %v7279
    %v7328 = vmul.f32 %v7257, %v7279
    %v7329 = vmul.f32 %v7258, %v7279
    %v7330 = vmul.f32 %v7259, %v7279
    %v7331 = vmul.f32 %v7260, %v7279
    %v7332 = vmul.f32 %v7261, %v7279
    %v7333 = vmul.f32 %v7262, %v7279
    %v7334 = vmul.f32 %v7263, %v7279
    %v7335 = vmul.f32 %v7264, %v7279
    %v7336 = vmul.f32 %v7265, %v7279
    %v7337 = vmul.f32 %v7266, %v7279
    %v7338 = vmul.f32 %v7267, %v7279
    %v7339 = vmul.f32 %v7268, %v7279
    %v7340 = vmul.f32 %v7269, %v7279
    %v7341 = vmul.f32 %v7270, %v7279
    %v7342 = vmul.f32 %v7271, %v7279
    %v7343 = vmul.f32 %v7272, %v7279
    %v7344 = vmul.f32 %v7273, %v7279
    %v7345 = vld [vmem:[%s4] sm:$0x1]
    %v7347 = vlaneseq
    %v7348 = vshrl.u32 %v7347, 7
    %v7349 = vsub.s32 0, %v7348
    %v7350 = vrot.slane %v7345, %v7349
    %v7352 = vadd.f32 %v7281, %v7350
    %v7353 = vadd.f32 %v7282, %v7350
    %v7354 = vadd.f32 %v7283, %v7350
    %v7355 = vadd.f32 %v7284, %v7350
    %v7356 = vadd.f32 %v7285, %v7350
    %v7357 = vadd.f32 %v7286, %v7350
    %v7358 = vadd.f32 %v7287, %v7350
    %v7359 = vadd.f32 %v7288, %v7350
    %v7360 = vadd.f32 %v7289, %v7350
    %v7361 = vadd.f32 %v7290, %v7350
    %v7362 = vadd.f32 %v7291, %v7350
    %v7363 = vadd.f32 %v7292, %v7350
    %v7364 = vadd.f32 %v7293, %v7350
    %v7365 = vadd.f32 %v7294, %v7350
    %v7366 = vadd.f32 %v7295, %v7350
    %v7367 = vadd.f32 %v7296, %v7350
    %v7368 = vadd.f32 %v7297, %v7350
    %v7369 = vadd.f32 %v7298, %v7350
    %v7370 = vadd.f32 %v7299, %v7350
    %v7371 = vadd.f32 %v7300, %v7350
    %v7372 = vadd.f32 %v7301, %v7350
    %v7373 = vadd.f32 %v7302, %v7350
    %v7374 = vadd.f32 %v7303, %v7350
    %v7375 = vadd.f32 %v7304, %v7350
    %v7376 = vadd.f32 %v7305, %v7350
    %v7377 = vadd.f32 %v7306, %v7350
    %v7378 = vadd.f32 %v7307, %v7350
    %v7379 = vadd.f32 %v7308, %v7350
    %v7380 = vadd.f32 %v7309, %v7350
    %v7381 = vadd.f32 %v7310, %v7350
    %v7382 = vadd.f32 %v7311, %v7350
    %v7383 = vadd.f32 %v7312, %v7350
    %v7384 = vadd.f32 %v7313, %v7350
    %v7385 = vadd.f32 %v7314, %v7350
    %v7386 = vadd.f32 %v7315, %v7350
    %v7387 = vadd.f32 %v7316, %v7350
    %v7388 = vadd.f32 %v7317, %v7350
    %v7389 = vadd.f32 %v7318, %v7350
    %v7390 = vadd.f32 %v7319, %v7350
    %v7391 = vadd.f32 %v7320, %v7350
    %v7392 = vadd.f32 %v7321, %v7350
    %v7393 = vadd.f32 %v7322, %v7350
    %v7394 = vadd.f32 %v7323, %v7350
    %v7395 = vadd.f32 %v7324, %v7350
    %v7396 = vadd.f32 %v7325, %v7350
    %v7397 = vadd.f32 %v7326, %v7350
    %v7398 = vadd.f32 %v7327, %v7350
    %v7399 = vadd.f32 %v7328, %v7350
    %v7400 = vadd.f32 %v7329, %v7350
    %v7401 = vadd.f32 %v7330, %v7350
    %v7402 = vadd.f32 %v7331, %v7350
    %v7403 = vadd.f32 %v7332, %v7350
    %v7404 = vadd.f32 %v7333, %v7350
    %v7405 = vadd.f32 %v7334, %v7350
    %v7406 = vadd.f32 %v7335, %v7350
    %v7407 = vadd.f32 %v7336, %v7350
    %v7408 = vadd.f32 %v7337, %v7350
    %v7409 = vadd.f32 %v7338, %v7350
    %v7410 = vadd.f32 %v7339, %v7350
    %v7411 = vadd.f32 %v7340, %v7350
    %v7412 = vadd.f32 %v7341, %v7350
    %v7413 = vadd.f32 %v7342, %v7350
    %v7414 = vadd.f32 %v7343, %v7350
    %v7415 = vadd.f32 %v7344, %v7350
    %7416 = vst.msk [vmem:[#allocation2] sm:$0xff] %vm6809, %v7352
    %7417 = vst.msk [vmem:[#allocation2 + $0x8] sm:$0xff] %vm6809, %v7353
    %7418 = vst.msk [vmem:[#allocation2 + $0x10] sm:$0xff] %vm6809, %v7354
    %7419 = vst.msk [vmem:[#allocation2 + $0x18] sm:$0xff] %vm6809, %v7355
    %7420 = vst.msk [vmem:[#allocation2 + $0x20] sm:$0xff] %vm6809, %v7356
    %7421 = vst.msk [vmem:[#allocation2 + $0x28] sm:$0xff] %vm6809, %v7357
    %7422 = vst.msk [vmem:[#allocation2 + $0x30] sm:$0xff] %vm6809, %v7358
    %7423 = vst.msk [vmem:[#allocation2 + $0x38] sm:$0xff] %vm6809, %v7359
    %7424 = vst.msk [vmem:[#allocation2 + $0x40] sm:$0xff] %vm6809, %v7360
    %7425 = vst.msk [vmem:[#allocation2 + $0x48] sm:$0xff] %vm6809, %v7361
    %7426 = vst.msk [vmem:[#allocation2 + $0x50] sm:$0xff] %vm6809, %v7362
    %7427 = vst.msk [vmem:[#allocation2 + $0x58] sm:$0xff] %vm6809, %v7363
    %7428 = vst.msk [vmem:[#allocation2 + $0x60] sm:$0xff] %vm6809, %v7364
    %7429 = vst.msk [vmem:[#allocation2 + $0x68] sm:$0xff] %vm6809, %v7365
    %7430 = vst.msk [vmem:[#allocation2 + $0x70] sm:$0xff] %vm6809, %v7366
    %7431 = vst.msk [vmem:[#allocation2 + $0x78] sm:$0xff] %vm6809, %v7367
    %7432 = vst.msk [vmem:[#allocation2 + $0x80] sm:$0xff] %vm6809, %v7368
    %7433 = vst.msk [vmem:[#allocation2 + $0x88] sm:$0xff] %vm6809, %v7369
    %7434 = vst.msk [vmem:[#allocation2 + $0x90] sm:$0xff] %vm6809, %v7370
    %7435 = vst.msk [vmem:[#allocation2 + $0x98] sm:$0xff] %vm6809, %v7371
    %7436 = vst.msk [vmem:[#allocation2 + $0xa0] sm:$0xff] %vm6809, %v7372
    %7437 = vst.msk [vmem:[#allocation2 + $0xa8] sm:$0xff] %vm6809, %v7373
    %7438 = vst.msk [vmem:[#allocation2 + $0xb0] sm:$0xff] %vm6809, %v7374
    %7439 = vst.msk [vmem:[#allocation2 + $0xb8] sm:$0xff] %vm6809, %v7375
    %7440 = vst.msk [vmem:[#allocation2 + $0xc0] sm:$0xff] %vm6809, %v7376
    %7441 = vst.msk [vmem:[#allocation2 + $0xc8] sm:$0xff] %vm6809, %v7377
    %7442 = vst.msk [vmem:[#allocation2 + $0xd0] sm:$0xff] %vm6809, %v7378
    %7443 = vst.msk [vmem:[#allocation2 + $0xd8] sm:$0xff] %vm6809, %v7379
    %7444 = vst.msk [vmem:[#allocation2 + $0xe0] sm:$0xff] %vm6809, %v7380
    %7445 = vst.msk [vmem:[#allocation2 + $0xe8] sm:$0xff] %vm6809, %v7381
    %7446 = vst.msk [vmem:[#allocation2 + $0xf0] sm:$0xff] %vm6809, %v7382
    %7447 = vst.msk [vmem:[#allocation2 + $0xf8] sm:$0xff] %vm6809, %v7383
    %7448 = vst.msk [vmem:[#allocation2 + $0x100] sm:$0xff] %vm6809, %v7384
    %7449 = vst.msk [vmem:[#allocation2 + $0x108] sm:$0xff] %vm6809, %v7385
    %7450 = vst.msk [vmem:[#allocation2 + $0x110] sm:$0xff] %vm6809, %v7386
    %7451 = vst.msk [vmem:[#allocation2 + $0x118] sm:$0xff] %vm6809, %v7387
    %7452 = vst.msk [vmem:[#allocation2 + $0x120] sm:$0xff] %vm6809, %v7388
    %7453 = vst.msk [vmem:[#allocation2 + $0x128] sm:$0xff] %vm6809, %v7389
    %7454 = vst.msk [vmem:[#allocation2 + $0x130] sm:$0xff] %vm6809, %v7390
    %7455 = vst.msk [vmem:[#allocation2 + $0x138] sm:$0xff] %vm6809, %v7391
    %7456 = vst.msk [vmem:[#allocation2 + $0x140] sm:$0xff] %vm6809, %v7392
    %7457 = vst.msk [vmem:[#allocation2 + $0x148] sm:$0xff] %vm6809, %v7393
    %7458 = vst.msk [vmem:[#allocation2 + $0x150] sm:$0xff] %vm6809, %v7394
    %7459 = vst.msk [vmem:[#allocation2 + $0x158] sm:$0xff] %vm6809, %v7395
    %7460 = vst.msk [vmem:[#allocation2 + $0x160] sm:$0xff] %vm6809, %v7396
    %7461 = vst.msk [vmem:[#allocation2 + $0x168] sm:$0xff] %vm6809, %v7397
    %7462 = vst.msk [vmem:[#allocation2 + $0x170] sm:$0xff] %vm6809, %v7398
    %7463 = vst.msk [vmem:[#allocation2 + $0x178] sm:$0xff] %vm6809, %v7399
    %7464 = vst.msk [vmem:[#allocation2 + $0x180] sm:$0xff] %vm6809, %v7400
    %7465 = vst.msk [vmem:[#allocation2 + $0x188] sm:$0xff] %vm6809, %v7401
    %7466 = vst.msk [vmem:[#allocation2 + $0x190] sm:$0xff] %vm6809, %v7402
    %7467 = vst.msk [vmem:[#allocation2 + $0x198] sm:$0xff] %vm6809, %v7403
    %7468 = vst.msk [vmem:[#allocation2 + $0x1a0] sm:$0xff] %vm6809, %v7404
    %7469 = vst.msk [vmem:[#allocation2 + $0x1a8] sm:$0xff] %vm6809, %v7405
    %7470 = vst.msk [vmem:[#allocation2 + $0x1b0] sm:$0xff] %vm6809, %v7406
    %7471 = vst.msk [vmem:[#allocation2 + $0x1b8] sm:$0xff] %vm6809, %v7407
    %7472 = vst.msk [vmem:[#allocation2 + $0x1c0] sm:$0xff] %vm6809, %v7408
    %7473 = vst.msk [vmem:[#allocation2 + $0x1c8] sm:$0xff] %vm6809, %v7409
    %7474 = vst.msk [vmem:[#allocation2 + $0x1d0] sm:$0xff] %vm6809, %v7410
    %7475 = vst.msk [vmem:[#allocation2 + $0x1d8] sm:$0xff] %vm6809, %v7411
    %7476 = vst.msk [vmem:[#allocation2 + $0x1e0] sm:$0xff] %vm6809, %v7412
    %7477 = vst.msk [vmem:[#allocation2 + $0x1e8] sm:$0xff] %vm6809, %v7413
    %7478 = vst.msk [vmem:[#allocation2 + $0x1f0] sm:$0xff] %vm6809, %v7414
    %7479 = vst.msk [vmem:[#allocation2 + $0x1f8] sm:$0xff] %vm6809, %v7415
    %7480 = vst.msk [vmem:[#allocation2 + $0x200] sm:$0xff] %vm6809, 0.0
    %7481 = vst.msk [vmem:[#allocation2 + $0x208] sm:$0xff] %vm6809, 0.0
    %7482 = vst.msk [vmem:[#allocation2 + $0x210] sm:$0xff] %vm6809, 0.0
    %7483 = vst.msk [vmem:[#allocation2 + $0x218] sm:$0xff] %vm6809, 0.0
    %7484 = vst.msk [vmem:[#allocation2 + $0x220] sm:$0xff] %vm6809, 0.0
    %v7485 = vld [vmem:[%s5] sm:$0xff]
    %v7486 = vld [vmem:[%s5 + $0x8] sm:$0xff]
    %v7487 = vld [vmem:[%s5 + $0x10] sm:$0xff]
    %v7488 = vld [vmem:[%s5 + $0x18] sm:$0xff]
    %v7489 = vld [vmem:[#allocation2] sm:$0xff]
    %v7490 = vld [vmem:[#allocation2 + $0x8] sm:$0xff]
    %v7491 = vld [vmem:[#allocation2 + $0x10] sm:$0xff]
    %v7492 = vld [vmem:[#allocation2 + $0x18] sm:$0xff]
    %v7493 = vld [vmem:[#allocation2 + $0x20] sm:$0xff]
    %v7494 = vld [vmem:[#allocation2 + $0x28] sm:$0xff]
    %v7495 = vld [vmem:[#allocation2 + $0x30] sm:$0xff]
    %v7496 = vld [vmem:[#allocation2 + $0x38] sm:$0xff]
    %v7497 = vld [vmem:[#allocation2 + $0x40] sm:$0xff]
    %v7498 = vld [vmem:[#allocation2 + $0x48] sm:$0xff]
    %v7499 = vld [vmem:[#allocation2 + $0x50] sm:$0xff]
    %v7500 = vld [vmem:[#allocation2 + $0x58] sm:$0xff]
    %v7501 = vld [vmem:[#allocation2 + $0x60] sm:$0xff]
    %v7502 = vld [vmem:[#allocation2 + $0x68] sm:$0xff]
    %v7503 = vld [vmem:[#allocation2 + $0x70] sm:$0xff]
    %v7504 = vld [vmem:[#allocation2 + $0x78] sm:$0xff]
    %v7505 = vld [vmem:[#allocation2 + $0x80] sm:$0xff]
    %v7506 = vld [vmem:[#allocation2 + $0x88] sm:$0xff]
    %v7507 = vld [vmem:[#allocation2 + $0x90] sm:$0xff]
    %v7508 = vld [vmem:[#allocation2 + $0x98] sm:$0xff]
    %v7509 = vld [vmem:[#allocation2 + $0xa0] sm:$0xff]
    %v7510 = vld [vmem:[#allocation2 + $0xa8] sm:$0xff]
    %v7511 = vld [vmem:[#allocation2 + $0xb0] sm:$0xff]
    %v7512 = vld [vmem:[#allocation2 + $0xb8] sm:$0xff]
    %v7513 = vld [vmem:[#allocation2 + $0xc0] sm:$0xff]
    %v7514 = vld [vmem:[#allocation2 + $0xc8] sm:$0xff]
    %v7515 = vld [vmem:[#allocation2 + $0xd0] sm:$0xff]
    %v7516 = vld [vmem:[#allocation2 + $0xd8] sm:$0xff]
    %v7517 = vld [vmem:[#allocation2 + $0xe0] sm:$0xff]
    %v7518 = vld [vmem:[#allocation2 + $0xe8] sm:$0xff]
    %v7519 = vld [vmem:[#allocation2 + $0xf0] sm:$0xff]
    %v7520 = vld [vmem:[#allocation2 + $0xf8] sm:$0xff]
    %v7521 = vld [vmem:[#allocation2 + $0x100] sm:$0xff]
    %v7522 = vld [vmem:[#allocation2 + $0x108] sm:$0xff]
    %v7523 = vld [vmem:[#allocation2 + $0x110] sm:$0xff]
    %v7524 = vld [vmem:[#allocation2 + $0x118] sm:$0xff]
    %v7525 = vld [vmem:[#allocation2 + $0x120] sm:$0xff]
    %v7526 = vld [vmem:[#allocation2 + $0x128] sm:$0xff]
    %v7527 = vld [vmem:[#allocation2 + $0x130] sm:$0xff]
    %v7528 = vld [vmem:[#allocation2 + $0x138] sm:$0xff]
    %v7529 = vld [vmem:[#allocation2 + $0x140] sm:$0xff]
    %v7530 = vld [vmem:[#allocation2 + $0x148] sm:$0xff]
    %v7531 = vld [vmem:[#allocation2 + $0x150] sm:$0xff]
    %v7532 = vld [vmem:[#allocation2 + $0x158] sm:$0xff]
    %v7533 = vld [vmem:[#allocation2 + $0x160] sm:$0xff]
    %v7534 = vld [vmem:[#allocation2 + $0x168] sm:$0xff]
    %v7535 = vld [vmem:[#allocation2 + $0x170] sm:$0xff]
    %v7536 = vld [vmem:[#allocation2 + $0x178] sm:$0xff]
    %v7537 = vld [vmem:[#allocation2 + $0x180] sm:$0xff]
    %v7538 = vld [vmem:[#allocation2 + $0x188] sm:$0xff]
    %v7539 = vld [vmem:[#allocation2 + $0x190] sm:$0xff]
    %v7540 = vld [vmem:[#allocation2 + $0x198] sm:$0xff]
    %v7541 = vld [vmem:[#allocation2 + $0x1a0] sm:$0xff]
    %v7542 = vld [vmem:[#allocation2 + $0x1a8] sm:$0xff]
    %v7543 = vld [vmem:[#allocation2 + $0x1b0] sm:$0xff]
    %v7544 = vld [vmem:[#allocation2 + $0x1b8] sm:$0xff]
    %v7545 = vld [vmem:[#allocation2 + $0x1c0] sm:$0xff]
    %v7546 = vld [vmem:[#allocation2 + $0x1c8] sm:$0xff]
    %v7547 = vld [vmem:[#allocation2 + $0x1d0] sm:$0xff]
    %v7548 = vld [vmem:[#allocation2 + $0x1d8] sm:$0xff]
    %v7549 = vld [vmem:[#allocation2 + $0x1e0] sm:$0xff]
    %v7550 = vld [vmem:[#allocation2 + $0x1e8] sm:$0xff]
    %v7551 = vld [vmem:[#allocation2 + $0x1f0] sm:$0xff]
    %v7552 = vld [vmem:[#allocation2 + $0x1f8] sm:$0xff]
    %s7553 = scalar_lea.vmem %s5, 32
    %v7554 = vld [vmem:[%s7553] sm:$0xff]
    %v7555 = vld [vmem:[%s7553 + $0x8] sm:$0xff]
    %v7556 = vld [vmem:[%s7553 + $0x10] sm:$0xff]
    %v7557 = vld [vmem:[%s7553 + $0x18] sm:$0xff]
    %v7558 = vld [vmem:[#allocation2 + $0x1] sm:$0xff]
    %v7559 = vld [vmem:[#allocation2 + $0x9] sm:$0xff]
    %v7560 = vld [vmem:[#allocation2 + $0x11] sm:$0xff]
    %v7561 = vld [vmem:[#allocation2 + $0x19] sm:$0xff]
    %v7562 = vld [vmem:[#allocation2 + $0x21] sm:$0xff]
    %v7563 = vld [vmem:[#allocation2 + $0x29] sm:$0xff]
    %v7564 = vld [vmem:[#allocation2 + $0x31] sm:$0xff]
    %v7565 = vld [vmem:[#allocation2 + $0x39] sm:$0xff]
    %v7566 = vld [vmem:[#allocation2 + $0x41] sm:$0xff]
    %v7567 = vld [vmem:[#allocation2 + $0x49] sm:$0xff]
    %v7568 = vld [vmem:[#allocation2 + $0x51] sm:$0xff]
    %v7569 = vld [vmem:[#allocation2 + $0x59] sm:$0xff]
    %v7570 = vld [vmem:[#allocation2 + $0x61] sm:$0xff]
    %v7571 = vld [vmem:[#allocation2 + $0x69] sm:$0xff]
    %v7572 = vld [vmem:[#allocation2 + $0x71] sm:$0xff]
    %v7573 = vld [vmem:[#allocation2 + $0x79] sm:$0xff]
    %v7574 = vld [vmem:[#allocation2 + $0x81] sm:$0xff]
    %v7575 = vld [vmem:[#allocation2 + $0x89] sm:$0xff]
    %v7576 = vld [vmem:[#allocation2 + $0x91] sm:$0xff]
    %v7577 = vld [vmem:[#allocation2 + $0x99] sm:$0xff]
    %v7578 = vld [vmem:[#allocation2 + $0xa1] sm:$0xff]
    %v7579 = vld [vmem:[#allocation2 + $0xa9] sm:$0xff]
    %v7580 = vld [vmem:[#allocation2 + $0xb1] sm:$0xff]
    %v7581 = vld [vmem:[#allocation2 + $0xb9] sm:$0xff]
    %v7582 = vld [vmem:[#allocation2 + $0xc1] sm:$0xff]
    %v7583 = vld [vmem:[#allocation2 + $0xc9] sm:$0xff]
    %v7584 = vld [vmem:[#allocation2 + $0xd1] sm:$0xff]
    %v7585 = vld [vmem:[#allocation2 + $0xd9] sm:$0xff]
    %v7586 = vld [vmem:[#allocation2 + $0xe1] sm:$0xff]
    %v7587 = vld [vmem:[#allocation2 + $0xe9] sm:$0xff]
    %v7588 = vld [vmem:[#allocation2 + $0xf1] sm:$0xff]
    %v7589 = vld [vmem:[#allocation2 + $0xf9] sm:$0xff]
    %v7590 = vld [vmem:[#allocation2 + $0x101] sm:$0xff]
    %v7591 = vld [vmem:[#allocation2 + $0x109] sm:$0xff]
    %v7592 = vld [vmem:[#allocation2 + $0x111] sm:$0xff]
    %v7593 = vld [vmem:[#allocation2 + $0x119] sm:$0xff]
    %v7594 = vld [vmem:[#allocation2 + $0x121] sm:$0xff]
    %v7595 = vld [vmem:[#allocation2 + $0x129] sm:$0xff]
    %v7596 = vld [vmem:[#allocation2 + $0x131] sm:$0xff]
    %v7597 = vld [vmem:[#allocation2 + $0x139] sm:$0xff]
    %v7598 = vld [vmem:[#allocation2 + $0x141] sm:$0xff]
    %v7599 = vld [vmem:[#allocation2 + $0x149] sm:$0xff]
    %v7600 = vld [vmem:[#allocation2 + $0x151] sm:$0xff]
    %v7601 = vld [vmem:[#allocation2 + $0x159] sm:$0xff]
    %v7602 = vld [vmem:[#allocation2 + $0x161] sm:$0xff]
    %v7603 = vld [vmem:[#allocation2 + $0x169] sm:$0xff]
    %v7604 = vld [vmem:[#allocation2 + $0x171] sm:$0xff]
    %v7605 = vld [vmem:[#allocation2 + $0x179] sm:$0xff]
    %v7606 = vld [vmem:[#allocation2 + $0x181] sm:$0xff]
    %v7607 = vld [vmem:[#allocation2 + $0x189] sm:$0xff]
    %v7608 = vld [vmem:[#allocation2 + $0x191] sm:$0xff]
    %v7609 = vld [vmem:[#allocation2 + $0x199] sm:$0xff]
    %v7610 = vld [vmem:[#allocation2 + $0x1a1] sm:$0xff]
    %v7611 = vld [vmem:[#allocation2 + $0x1a9] sm:$0xff]
    %v7612 = vld [vmem:[#allocation2 + $0x1b1] sm:$0xff]
    %v7613 = vld [vmem:[#allocation2 + $0x1b9] sm:$0xff]
    %v7614 = vld [vmem:[#allocation2 + $0x1c1] sm:$0xff]
    %v7615 = vld [vmem:[#allocation2 + $0x1c9] sm:$0xff]
    %v7616 = vld [vmem:[#allocation2 + $0x1d1] sm:$0xff]
    %v7617 = vld [vmem:[#allocation2 + $0x1d9] sm:$0xff]
    %v7618 = vld [vmem:[#allocation2 + $0x1e1] sm:$0xff]
    %v7619 = vld [vmem:[#allocation2 + $0x1e9] sm:$0xff]
    %v7620 = vld [vmem:[#allocation2 + $0x1f1] sm:$0xff]
    %v7621 = vld [vmem:[#allocation2 + $0x1f9] sm:$0xff]
    %v7623 = vsel %vm6809, %v7554, 0
    %v7626 = vsel %vm6809, %v7555, 0
    %v7629 = vsel %vm6809, %v7556, 0
    %v7632 = vsel %vm6809, %v7557, 0
    %v7635 = vsel %vm6809, %v7558, 0
    %v7638 = vsel %vm6809, %v7559, 0
    %v7641 = vsel %vm6809, %v7560, 0
    %v7644 = vsel %vm6809, %v7561, 0
    %v7647 = vsel %vm6809, %v7562, 0
    %v7650 = vsel %vm6809, %v7563, 0
    %v7653 = vsel %vm6809, %v7564, 0
    %v7656 = vsel %vm6809, %v7565, 0
    %v7659 = vsel %vm6809, %v7566, 0
    %v7662 = vsel %vm6809, %v7567, 0
    %v7665 = vsel %vm6809, %v7568, 0
    %v7668 = vsel %vm6809, %v7569, 0
    %v7671 = vsel %vm6809, %v7570, 0
    %v7674 = vsel %vm6809, %v7571, 0
    %v7677 = vsel %vm6809, %v7572, 0
    %v7680 = vsel %vm6809, %v7573, 0
    %v7683 = vsel %vm6809, %v7574, 0
    %v7686 = vsel %vm6809, %v7575, 0
    %v7689 = vsel %vm6809, %v7576, 0
    %v7692 = vsel %vm6809, %v7577, 0
    %v7695 = vsel %vm6809, %v7578, 0
    %v7698 = vsel %vm6809, %v7579, 0
    %v7701 = vsel %vm6809, %v7580, 0
    %v7704 = vsel %vm6809, %v7581, 0
    %v7707 = vsel %vm6809, %v7582, 0
    %v7710 = vsel %vm6809, %v7583, 0
    %v7713 = vsel %vm6809, %v7584, 0
    %v7716 = vsel %vm6809, %v7585, 0
    %v7719 = vsel %vm6809, %v7586, 0
    %v7722 = vsel %vm6809, %v7587, 0
    %v7725 = vsel %vm6809, %v7588, 0
    %v7728 = vsel %vm6809, %v7589, 0
    %v7731 = vsel %vm6809, %v7590, 0
    %v7734 = vsel %vm6809, %v7591, 0
    %v7737 = vsel %vm6809, %v7592, 0
    %v7740 = vsel %vm6809, %v7593, 0
    %v7743 = vsel %vm6809, %v7594, 0
    %v7746 = vsel %vm6809, %v7595, 0
    %v7749 = vsel %vm6809, %v7596, 0
    %v7752 = vsel %vm6809, %v7597, 0
    %v7755 = vsel %vm6809, %v7598, 0
    %v7758 = vsel %vm6809, %v7599, 0
    %v7761 = vsel %vm6809, %v7600, 0
    %v7764 = vsel %vm6809, %v7601, 0
    %v7767 = vsel %vm6809, %v7602, 0
    %v7770 = vsel %vm6809, %v7603, 0
    %v7773 = vsel %vm6809, %v7604, 0
    %v7776 = vsel %vm6809, %v7605, 0
    %v7779 = vsel %vm6809, %v7606, 0
    %v7782 = vsel %vm6809, %v7607, 0
    %v7785 = vsel %vm6809, %v7608, 0
    %v7788 = vsel %vm6809, %v7609, 0
    %v7791 = vsel %vm6809, %v7610, 0
    %v7794 = vsel %vm6809, %v7611, 0
    %v7797 = vsel %vm6809, %v7612, 0
    %v7800 = vsel %vm6809, %v7613, 0
    %v7803 = vsel %vm6809, %v7614, 0
    %v7806 = vsel %vm6809, %v7615, 0
    %v7809 = vsel %vm6809, %v7616, 0
    %v7812 = vsel %vm6809, %v7617, 0
    %v7815 = vsel %vm6809, %v7618, 0
    %v7818 = vsel %vm6809, %v7619, 0
    %v7821 = vsel %vm6809, %v7620, 0
    %v7824 = vsel %vm6809, %v7621, 0
    %7826 = vmatprep.subr.mxu0 0.0
    %7827 = vmatpush1.xpose.msra.mxu0 %v7635
    %7828 = vmatprep.subr.mxu0 0.0
    %7829 = vmatpush1.xpose.msra.mxu0 %v7638
    %7830 = vmatprep.subr.mxu0 0.0
    %7831 = vmatpush1.xpose.msra.mxu0 %v7641
    %7832 = vmatprep.subr.mxu0 0.0
    %7833 = vmatpush1.xpose.msra.mxu0 %v7644
    %7834 = vmatprep.subr.mxu0 0.0
    %7835 = vmatpush1.xpose.msra.mxu0 %v7647
    %7836 = vmatprep.subr.mxu0 0.0
    %7837 = vmatpush1.xpose.msra.mxu0 %v7650
    %7838 = vmatprep.subr.mxu0 0.0
    %7839 = vmatpush1.xpose.msra.mxu0 %v7653
    %7840 = vmatprep.subr.mxu0 0.0
    %7841 = vmatpush1.xpose.msra.mxu0 %v7656
    %7842 = vmatprep.subr.mxu0 0.0
    %7843 = vmatpush1.xpose.msra.mxu0 %v7659
    %7844 = vmatprep.subr.mxu0 0.0
    %7845 = vmatpush1.xpose.msra.mxu0 %v7662
    %7846 = vmatprep.subr.mxu0 0.0
    %7847 = vmatpush1.xpose.msra.mxu0 %v7665
    %7848 = vmatprep.subr.mxu0 0.0
    %7849 = vmatpush1.xpose.msra.mxu0 %v7668
    %7850 = vmatprep.subr.mxu0 0.0
    %7851 = vmatpush1.xpose.msra.mxu0 %v7671
    %7852 = vmatprep.subr.mxu0 0.0
    %7853 = vmatpush1.xpose.msra.mxu0 %v7674
    %7854 = vmatprep.subr.mxu0 0.0
    %7855 = vmatpush1.xpose.msra.mxu0 %v7677
    %7856 = vmatprep.subr.mxu0 0.0
    %7857 = vmatpush1.xpose.msra.mxu0 %v7680
    %7858 = vmatprep.subr.mxu0 0.0
    %7859 = vmatpush1.xpose.msra.mxu0 %v7683
    %7860 = vmatprep.subr.mxu0 0.0
    %7861 = vmatpush1.xpose.msra.mxu0 %v7686
    %7862 = vmatprep.subr.mxu0 0.0
    %7863 = vmatpush1.xpose.msra.mxu0 %v7689
    %7864 = vmatprep.subr.mxu0 0.0
    %7865 = vmatpush1.xpose.msra.mxu0 %v7692
    %7866 = vmatprep.subr.mxu0 0.0
    %7867 = vmatpush1.xpose.msra.mxu0 %v7695
    %7868 = vmatprep.subr.mxu0 0.0
    %7869 = vmatpush1.xpose.msra.mxu0 %v7698
    %7870 = vmatprep.subr.mxu0 0.0
    %7871 = vmatpush1.xpose.msra.mxu0 %v7701
    %7872 = vmatprep.subr.mxu0 0.0
    %7873 = vmatpush1.xpose.msra.mxu0 %v7704
    %7874 = vmatprep.subr.mxu0 0.0
    %7875 = vmatpush1.xpose.msra.mxu0 %v7707
    %7876 = vmatprep.subr.mxu0 0.0
    %7877 = vmatpush1.xpose.msra.mxu0 %v7710
    %7878 = vmatprep.subr.mxu0 0.0
    %7879 = vmatpush1.xpose.msra.mxu0 %v7713
    %7880 = vmatprep.subr.mxu0 0.0
    %7881 = vmatpush1.xpose.msra.mxu0 %v7716
    %7882 = vmatprep.subr.mxu0 0.0
    %7883 = vmatpush1.xpose.msra.mxu0 %v7719
    %7884 = vmatprep.subr.mxu0 0.0
    %7885 = vmatpush1.xpose.msra.mxu0 %v7722
    %7886 = vmatprep.subr.mxu0 0.0
    %7887 = vmatpush1.xpose.msra.mxu0 %v7725
    %7888 = vmatprep.subr.mxu0 0.0
    %7889 = vmatpush1.xpose.msra.mxu0 %v7728
    %7890 = vmatprep.mubr.f32.mxu0 0.0
    %7891 = vmatmul.mubr.f32.gmra.mrb[0].mxu0 %v7623
    %v7892 = vpop.f32.mrb[0].mxu0
    %v7893 = vadd.f32 0.0, %v7892
    %v7894 = vpop.f32.mrb[0].mxu0
    %v7895 = vadd.f32 0.0, %v7894
    %7896 = vmatprep.mubr.f32.mxu0 0.0
    %7897 = vmatmul.mubr.f32.gmra.mrb[0].mxu0 %v7626
    %v7898 = vpop.f32.mrb[0].mxu0
    %v7899 = vadd.f32 0.0, %v7898
    %v7900 = vpop.f32.mrb[0].mxu0
    %v7901 = vadd.f32 0.0, %v7900
    %7902 = vmatprep.mubr.f32.mxu0 0.0
    %7903 = vmatmul.mubr.f32.gmra.mrb[0].mxu0 %v7629
    %v7904 = vpop.f32.mrb[0].mxu0
    %v7905 = vadd.f32 0.0, %v7904
    %v7906 = vpop.f32.mrb[0].mxu0
    %v7907 = vadd.f32 0.0, %v7906
    %7908 = vmatprep.mubr.f32.mxu0 0.0
    %7909 = vmatmul.mubr.f32.gmra.mrb[0].mxu0 %v7632
    %v7910 = vpop.f32.mrb[0].mxu0
    %v7911 = vadd.f32 0.0, %v7910
    %v7912 = vpop.f32.mrb[0].mxu0
    %v7913 = vadd.f32 0.0, %v7912
    %7914 = vdwg.mxu0
    %7915 = vmatprep.subr.mxu0 0.0
    %7916 = vmatpush1.xpose.msra.mxu0 %v7731
    %7917 = vmatprep.subr.mxu0 0.0
    %7918 = vmatpush1.xpose.msra.mxu0 %v7734
    %7919 = vmatprep.subr.mxu0 0.0
    %7920 = vmatpush1.xpose.msra.mxu0 %v7737
    %7921 = vmatprep.subr.mxu0 0.0
    %7922 = vmatpush1.xpose.msra.mxu0 %v7740
    %7923 = vmatprep.subr.mxu0 0.0
    %7924 = vmatpush1.xpose.msra.mxu0 %v7743
    %7925 = vmatprep.subr.mxu0 0.0
    %7926 = vmatpush1.xpose.msra.mxu0 %v7746
    %7927 = vmatprep.subr.mxu0 0.0
    %7928 = vmatpush1.xpose.msra.mxu0 %v7749
    %7929 = vmatprep.subr.mxu0 0.0
    %7930 = vmatpush1.xpose.msra.mxu0 %v7752
    %7931 = vmatprep.subr.mxu0 0.0
    %7932 = vmatpush1.xpose.msra.mxu0 %v7755
    %7933 = vmatprep.subr.mxu0 0.0
    %7934 = vmatpush1.xpose.msra.mxu0 %v7758
    %7935 = vmatprep.subr.mxu0 0.0
    %7936 = vmatpush1.xpose.msra.mxu0 %v7761
    %7937 = vmatprep.subr.mxu0 0.0
    %7938 = vmatpush1.xpose.msra.mxu0 %v7764
    %7939 = vmatprep.subr.mxu0 0.0
    %7940 = vmatpush1.xpose.msra.mxu0 %v7767
    %7941 = vmatprep.subr.mxu0 0.0
    %7942 = vmatpush1.xpose.msra.mxu0 %v7770
    %7943 = vmatprep.subr.mxu0 0.0
    %7944 = vmatpush1.xpose.msra.mxu0 %v7773
    %7945 = vmatprep.subr.mxu0 0.0
    %7946 = vmatpush1.xpose.msra.mxu0 %v7776
    %7947 = vmatprep.subr.mxu0 0.0
    %7948 = vmatpush1.xpose.msra.mxu0 %v7779
    %7949 = vmatprep.subr.mxu0 0.0
    %7950 = vmatpush1.xpose.msra.mxu0 %v7782
    %7951 = vmatprep.subr.mxu0 0.0
    %7952 = vmatpush1.xpose.msra.mxu0 %v7785
    %7953 = vmatprep.subr.mxu0 0.0
    %7954 = vmatpush1.xpose.msra.mxu0 %v7788
    %7955 = vmatprep.subr.mxu0 0.0
    %7956 = vmatpush1.xpose.msra.mxu0 %v7791
    %7957 = vmatprep.subr.mxu0 0.0
    %7958 = vmatpush1.xpose.msra.mxu0 %v7794
    %7959 = vmatprep.subr.mxu0 0.0
    %7960 = vmatpush1.xpose.msra.mxu0 %v7797
    %7961 = vmatprep.subr.mxu0 0.0
    %7962 = vmatpush1.xpose.msra.mxu0 %v7800
    %7963 = vmatprep.subr.mxu0 0.0
    %7964 = vmatpush1.xpose.msra.mxu0 %v7803
    %7965 = vmatprep.subr.mxu0 0.0
    %7966 = vmatpush1.xpose.msra.mxu0 %v7806
    %7967 = vmatprep.subr.mxu0 0.0
    %7968 = vmatpush1.xpose.msra.mxu0 %v7809
    %7969 = vmatprep.subr.mxu0 0.0
    %7970 = vmatpush1.xpose.msra.mxu0 %v7812
    %7971 = vmatprep.subr.mxu0 0.0
    %7972 = vmatpush1.xpose.msra.mxu0 %v7815
    %7973 = vmatprep.subr.mxu0 0.0
    %7974 = vmatpush1.xpose.msra.mxu0 %v7818
    %7975 = vmatprep.subr.mxu0 0.0
    %7976 = vmatpush1.xpose.msra.mxu0 %v7821
    %7977 = vmatprep.subr.mxu0 0.0
    %7978 = vmatpush1.xpose.msra.mxu0 %v7824
    %7979 = vmatprep.mubr.f32.mxu0 0.0
    %7980 = vmatmul.mubr.f32.gmra.mrb[0].mxu0 %v7623
    %v7981 = vpop.f32.mrb[0].mxu0
    %v7982 = vadd.f32 0.0, %v7981
    %v7983 = vpop.f32.mrb[0].mxu0
    %v7984 = vadd.f32 0.0, %v7983
    %7985 = vmatprep.mubr.f32.mxu0 0.0
    %7986 = vmatmul.mubr.f32.gmra.mrb[0].mxu0 %v7626
    %v7987 = vpop.f32.mrb[0].mxu0
    %v7988 = vadd.f32 0.0, %v7987
    %v7989 = vpop.f32.mrb[0].mxu0
    %v7990 = vadd.f32 0.0, %v7989
    %7991 = vmatprep.mubr.f32.mxu0 0.0
    %7992 = vmatmul.mubr.f32.gmra.mrb[0].mxu0 %v7629
    %v7993 = vpop.f32.mrb[0].mxu0
    %v7994 = vadd.f32 0.0, %v7993
    %v7995 = vpop.f32.mrb[0].mxu0
    %v7996 = vadd.f32 0.0, %v7995
    %7997 = vmatprep.mubr.f32.mxu0 0.0
    %7998 = vmatmul.mubr.f32.gmra.mrb[0].mxu0 %v7632
    %v7999 = vpop.f32.mrb[0].mxu0
    %v8000 = vadd.f32 0.0, %v7999
    %v8001 = vpop.f32.mrb[0].mxu0
    %v8002 = vadd.f32 0.0, %v8001
    %8003 = vdwg.mxu0
    %v8005 = vsel %vm6809, %v7485, 0
    %v8008 = vsel %vm6809, %v7486, 0
    %v8011 = vsel %vm6809, %v7487, 0
    %v8014 = vsel %vm6809, %v7488, 0
    %v8017 = vsel %vm6809, %v7489, 0
    %v8020 = vsel %vm6809, %v7490, 0
    %v8023 = vsel %vm6809, %v7491, 0
    %v8026 = vsel %vm6809, %v7492, 0
    %v8029 = vsel %vm6809, %v7493, 0
    %v8032 = vsel %vm6809, %v7494, 0
    %v8035 = vsel %vm6809, %v7495, 0
    %v8038 = vsel %vm6809, %v7496, 0
    %v8041 = vsel %vm6809, %v7497, 0
    %v8044 = vsel %vm6809, %v7498, 0
    %v8047 = vsel %vm6809, %v7499, 0
    %v8050 = vsel %vm6809, %v7500, 0
    %v8053 = vsel %vm6809, %v7501, 0
    %v8056 = vsel %vm6809, %v7502, 0
    %v8059 = vsel %vm6809, %v7503, 0
    %v8062 = vsel %vm6809, %v7504, 0
    %v8065 = vsel %vm6809, %v7505, 0
    %v8068 = vsel %vm6809, %v7506, 0
    %v8071 = vsel %vm6809, %v7507, 0
    %v8074 = vsel %vm6809, %v7508, 0
    %v8077 = vsel %vm6809, %v7509, 0
    %v8080 = vsel %vm6809, %v7510, 0
    %v8083 = vsel %vm6809, %v7511, 0
    %v8086 = vsel %vm6809, %v7512, 0
    %v8089 = vsel %vm6809, %v7513, 0
    %v8092 = vsel %vm6809, %v7514, 0
    %v8095 = vsel %vm6809, %v7515, 0
    %v8098 = vsel %vm6809, %v7516, 0
    %v8101 = vsel %vm6809, %v7517, 0
    %v8104 = vsel %vm6809, %v7518, 0
    %v8107 = vsel %vm6809, %v7519, 0
    %v8110 = vsel %vm6809, %v7520, 0
    %v8113 = vsel %vm6809, %v7521, 0
    %v8116 = vsel %vm6809, %v7522, 0
    %v8119 = vsel %vm6809, %v7523, 0
    %v8122 = vsel %vm6809, %v7524, 0
    %v8125 = vsel %vm6809, %v7525, 0
    %v8128 = vsel %vm6809, %v7526, 0
    %v8131 = vsel %vm6809, %v7527, 0
    %v8134 = vsel %vm6809, %v7528, 0
    %v8137 = vsel %vm6809, %v7529, 0
    %v8140 = vsel %vm6809, %v7530, 0
    %v8143 = vsel %vm6809, %v7531, 0
    %v8146 = vsel %vm6809, %v7532, 0
    %v8149 = vsel %vm6809, %v7533, 0
    %v8152 = vsel %vm6809, %v7534, 0
    %v8155 = vsel %vm6809, %v7535, 0
    %v8158 = vsel %vm6809, %v7536, 0
    %v8161 = vsel %vm6809, %v7537, 0
    %v8164 = vsel %vm6809, %v7538, 0
    %v8167 = vsel %vm6809, %v7539, 0
    %v8170 = vsel %vm6809, %v7540, 0
    %v8173 = vsel %vm6809, %v7541, 0
    %v8176 = vsel %vm6809, %v7542, 0
    %v8179 = vsel %vm6809, %v7543, 0
    %v8182 = vsel %vm6809, %v7544, 0
    %v8185 = vsel %vm6809, %v7545, 0
    %v8188 = vsel %vm6809, %v7546, 0
    %v8191 = vsel %vm6809, %v7547, 0
    %v8194 = vsel %vm6809, %v7548, 0
    %v8197 = vsel %vm6809, %v7549, 0
    %v8200 = vsel %vm6809, %v7550, 0
    %v8203 = vsel %vm6809, %v7551, 0
    %v8206 = vsel %vm6809, %v7552, 0
    %8208 = vmatprep.subr.mxu0 0.0
    %8209 = vmatpush1.xpose.msra.mxu0 %v8017
    %8210 = vmatprep.subr.mxu0 0.0
    %8211 = vmatpush1.xpose.msra.mxu0 %v8020
    %8212 = vmatprep.subr.mxu0 0.0
    %8213 = vmatpush1.xpose.msra.mxu0 %v8023
    %8214 = vmatprep.subr.mxu0 0.0
    %8215 = vmatpush1.xpose.msra.mxu0 %v8026
    %8216 = vmatprep.subr.mxu0 0.0
    %8217 = vmatpush1.xpose.msra.mxu0 %v8029
    %8218 = vmatprep.subr.mxu0 0.0
    %8219 = vmatpush1.xpose.msra.mxu0 %v8032
    %8220 = vmatprep.subr.mxu0 0.0
    %8221 = vmatpush1.xpose.msra.mxu0 %v8035
    %8222 = vmatprep.subr.mxu0 0.0
    %8223 = vmatpush1.xpose.msra.mxu0 %v8038
    %8224 = vmatprep.subr.mxu0 0.0
    %8225 = vmatpush1.xpose.msra.mxu0 %v8041
    %8226 = vmatprep.subr.mxu0 0.0
    %8227 = vmatpush1.xpose.msra.mxu0 %v8044
    %8228 = vmatprep.subr.mxu0 0.0
    %8229 = vmatpush1.xpose.msra.mxu0 %v8047
    %8230 = vmatprep.subr.mxu0 0.0
    %8231 = vmatpush1.xpose.msra.mxu0 %v8050
    %8232 = vmatprep.subr.mxu0 0.0
    %8233 = vmatpush1.xpose.msra.mxu0 %v8053
    %8234 = vmatprep.subr.mxu0 0.0
    %8235 = vmatpush1.xpose.msra.mxu0 %v8056
    %8236 = vmatprep.subr.mxu0 0.0
    %8237 = vmatpush1.xpose.msra.mxu0 %v8059
    %8238 = vmatprep.subr.mxu0 0.0
    %8239 = vmatpush1.xpose.msra.mxu0 %v8062
    %8240 = vmatprep.subr.mxu0 0.0
    %8241 = vmatpush1.xpose.msra.mxu0 %v8065
    %8242 = vmatprep.subr.mxu0 0.0
    %8243 = vmatpush1.xpose.msra.mxu0 %v8068
    %8244 = vmatprep.subr.mxu0 0.0
    %8245 = vmatpush1.xpose.msra.mxu0 %v8071
    %8246 = vmatprep.subr.mxu0 0.0
    %8247 = vmatpush1.xpose.msra.mxu0 %v8074
    %8248 = vmatprep.subr.mxu0 0.0
    %8249 = vmatpush1.xpose.msra.mxu0 %v8077
    %8250 = vmatprep.subr.mxu0 0.0
    %8251 = vmatpush1.xpose.msra.mxu0 %v8080
    %8252 = vmatprep.subr.mxu0 0.0
    %8253 = vmatpush1.xpose.msra.mxu0 %v8083
    %8254 = vmatprep.subr.mxu0 0.0
    %8255 = vmatpush1.xpose.msra.mxu0 %v8086
    %8256 = vmatprep.subr.mxu0 0.0
    %8257 = vmatpush1.xpose.msra.mxu0 %v8089
    %8258 = vmatprep.subr.mxu0 0.0
    %8259 = vmatpush1.xpose.msra.mxu0 %v8092
    %8260 = vmatprep.subr.mxu0 0.0
    %8261 = vmatpush1.xpose.msra.mxu0 %v8095
    %8262 = vmatprep.subr.mxu0 0.0
    %8263 = vmatpush1.xpose.msra.mxu0 %v8098
    %8264 = vmatprep.subr.mxu0 0.0
    %8265 = vmatpush1.xpose.msra.mxu0 %v8101
    %8266 = vmatprep.subr.mxu0 0.0
    %8267 = vmatpush1.xpose.msra.mxu0 %v8104
    %8268 = vmatprep.subr.mxu0 0.0
    %8269 = vmatpush1.xpose.msra.mxu0 %v8107
    %8270 = vmatprep.subr.mxu0 0.0
    %8271 = vmatpush1.xpose.msra.mxu0 %v8110
    %8272 = vmatprep.mubr.f32.mxu0 0.0
    %8273 = vmatmul.mubr.f32.gmra.mrb[0].mxu0 %v8005
    %v8274 = vpop.f32.mrb[0].mxu0
    %v8275 = vadd.f32 %v7893, %v8274
    %v8276 = vpop.f32.mrb[0].mxu0
    %v8277 = vadd.f32 %v7895, %v8276
    %8278 = vmatprep.mubr.f32.mxu0 0.0
    %8279 = vmatmul.mubr.f32.gmra.mrb[0].mxu0 %v8008
    %v8280 = vpop.f32.mrb[0].mxu0
    %v8281 = vadd.f32 %v7899, %v8280
    %v8282 = vpop.f32.mrb[0].mxu0
    %v8283 = vadd.f32 %v7901, %v8282
    %8284 = vmatprep.mubr.f32.mxu0 0.0
    %8285 = vmatmul.mubr.f32.gmra.mrb[0].mxu0 %v8011
    %v8286 = vpop.f32.mrb[0].mxu0
    %v8287 = vadd.f32 %v7905, %v8286
    %v8288 = vpop.f32.mrb[0].mxu0
    %v8289 = vadd.f32 %v7907, %v8288
    %8290 = vmatprep.mubr.f32.mxu0 0.0
    %8291 = vmatmul.mubr.f32.gmra.mrb[0].mxu0 %v8014
    %v8292 = vpop.f32.mrb[0].mxu0
    %v8293 = vadd.f32 %v7911, %v8292
    %v8294 = vpop.f32.mrb[0].mxu0
    %v8295 = vadd.f32 %v7913, %v8294
    %8296 = vdwg.mxu0
    %8297 = vmatprep.subr.mxu0 0.0
    %8298 = vmatpush1.xpose.msra.mxu0 %v8113
    %8299 = vmatprep.subr.mxu0 0.0
    %8300 = vmatpush1.xpose.msra.mxu0 %v8116
    %8301 = vmatprep.subr.mxu0 0.0
    %8302 = vmatpush1.xpose.msra.mxu0 %v8119
    %8303 = vmatprep.subr.mxu0 0.0
    %8304 = vmatpush1.xpose.msra.mxu0 %v8122
    %8305 = vmatprep.subr.mxu0 0.0
    %8306 = vmatpush1.xpose.msra.mxu0 %v8125
    %8307 = vmatprep.subr.mxu0 0.0
    %8308 = vmatpush1.xpose.msra.mxu0 %v8128
    %8309 = vmatprep.subr.mxu0 0.0
    %8310 = vmatpush1.xpose.msra.mxu0 %v8131
    %8311 = vmatprep.subr.mxu0 0.0
    %8312 = vmatpush1.xpose.msra.mxu0 %v8134
    %8313 = vmatprep.subr.mxu0 0.0
    %8314 = vmatpush1.xpose.msra.mxu0 %v8137
    %8315 = vmatprep.subr.mxu0 0.0
    %8316 = vmatpush1.xpose.msra.mxu0 %v8140
    %8317 = vmatprep.subr.mxu0 0.0
    %8318 = vmatpush1.xpose.msra.mxu0 %v8143
    %8319 = vmatprep.subr.mxu0 0.0
    %8320 = vmatpush1.xpose.msra.mxu0 %v8146
    %8321 = vmatprep.subr.mxu0 0.0
    %8322 = vmatpush1.xpose.msra.mxu0 %v8149
    %8323 = vmatprep.subr.mxu0 0.0
    %8324 = vmatpush1.xpose.msra.mxu0 %v8152
    %8325 = vmatprep.subr.mxu0 0.0
    %8326 = vmatpush1.xpose.msra.mxu0 %v8155
    %8327 = vmatprep.subr.mxu0 0.0
    %8328 = vmatpush1.xpose.msra.mxu0 %v8158
    %8329 = vmatprep.subr.mxu0 0.0
    %8330 = vmatpush1.xpose.msra.mxu0 %v8161
    %8331 = vmatprep.subr.mxu0 0.0
    %8332 = vmatpush1.xpose.msra.mxu0 %v8164
    %8333 = vmatprep.subr.mxu0 0.0
    %8334 = vmatpush1.xpose.msra.mxu0 %v8167
    %8335 = vmatprep.subr.mxu0 0.0
    %8336 = vmatpush1.xpose.msra.mxu0 %v8170
    %8337 = vmatprep.subr.mxu0 0.0
    %8338 = vmatpush1.xpose.msra.mxu0 %v8173
    %8339 = vmatprep.subr.mxu0 0.0
    %8340 = vmatpush1.xpose.msra.mxu0 %v8176
    %8341 = vmatprep.subr.mxu0 0.0
    %8342 = vmatpush1.xpose.msra.mxu0 %v8179
    %8343 = vmatprep.subr.mxu0 0.0
    %8344 = vmatpush1.xpose.msra.mxu0 %v8182
    %8345 = vmatprep.subr.mxu0 0.0
    %8346 = vmatpush1.xpose.msra.mxu0 %v8185
    %8347 = vmatprep.subr.mxu0 0.0
    %8348 = vmatpush1.xpose.msra.mxu0 %v8188
    %8349 = vmatprep.subr.mxu0 0.0
    %8350 = vmatpush1.xpose.msra.mxu0 %v8191
    %8351 = vmatprep.subr.mxu0 0.0
    %8352 = vmatpush1.xpose.msra.mxu0 %v8194
    %8353 = vmatprep.subr.mxu0 0.0
    %8354 = vmatpush1.xpose.msra.mxu0 %v8197
    %8355 = vmatprep.subr.mxu0 0.0
    %8356 = vmatpush1.xpose.msra.mxu0 %v8200
    %8357 = vmatprep.subr.mxu0 0.0
    %8358 = vmatpush1.xpose.msra.mxu0 %v8203
    %8359 = vmatprep.subr.mxu0 0.0
    %8360 = vmatpush1.xpose.msra.mxu0 %v8206
    %8361 = vmatprep.mubr.f32.mxu0 0.0
    %8362 = vmatmul.mubr.f32.gmra.mrb[0].mxu0 %v8005
    %v8363 = vpop.f32.mrb[0].mxu0
    %v8364 = vadd.f32 %v7982, %v8363
    %v8365 = vpop.f32.mrb[0].mxu0
    %v8366 = vadd.f32 %v7984, %v8365
    %8367 = vmatprep.mubr.f32.mxu0 0.0
    %8368 = vmatmul.mubr.f32.gmra.mrb[0].mxu0 %v8008
    %v8369 = vpop.f32.mrb[0].mxu0
    %v8370 = vadd.f32 %v7988, %v8369
    %v8371 = vpop.f32.mrb[0].mxu0
    %v8372 = vadd.f32 %v7990, %v8371
    %8373 = vmatprep.mubr.f32.mxu0 0.0
    %8374 = vmatmul.mubr.f32.gmra.mrb[0].mxu0 %v8011
    %v8375 = vpop.f32.mrb[0].mxu0
    %v8376 = vadd.f32 %v7994, %v8375
    %v8377 = vpop.f32.mrb[0].mxu0
    %v8378 = vadd.f32 %v7996, %v8377
    %8379 = vmatprep.mubr.f32.mxu0 0.0
    %8380 = vmatmul.mubr.f32.gmra.mrb[0].mxu0 %v8014
    %v8381 = vpop.f32.mrb[0].mxu0
    %v8382 = vadd.f32 %v8000, %v8381
    %v8383 = vpop.f32.mrb[0].mxu0
    %v8384 = vadd.f32 %v8002, %v8383
    %8385 = vdwg.mxu0
    %s8386 = scalar_lea.vmem %s5, 64
    %v8387 = vld [vmem:[%s8386] sm:$0xff]
    %v8388 = vld [vmem:[%s8386 + $0x8] sm:$0xff]
    %v8389 = vld [vmem:[%s8386 + $0x10] sm:$0xff]
    %v8390 = vld [vmem:[%s8386 + $0x18] sm:$0xff]
    %v8391 = vld [vmem:[#allocation2 + $0x2] sm:$0xff]
    %v8392 = vld [vmem:[#allocation2 + $0xa] sm:$0xff]
    %v8393 = vld [vmem:[#allocation2 + $0x12] sm:$0xff]
    %v8394 = vld [vmem:[#allocation2 + $0x1a] sm:$0xff]
    %v8395 = vld [vmem:[#allocation2 + $0x22] sm:$0xff]
    %v8396 = vld [vmem:[#allocation2 + $0x2a] sm:$0xff]
    %v8397 = vld [vmem:[#allocation2 + $0x32] sm:$0xff]
    %v8398 = vld [vmem:[#allocation2 + $0x3a] sm:$0xff]
    %v8399 = vld [vmem:[#allocation2 + $0x42] sm:$0xff]
    %v8400 = vld [vmem:[#allocation2 + $0x4a] sm:$0xff]
    %v8401 = vld [vmem:[#allocation2 + $0x52] sm:$0xff]
    %v8402 = vld [vmem:[#allocation2 + $0x5a] sm:$0xff]
    %v8403 = vld [vmem:[#allocation2 + $0x62] sm:$0xff]
    %v8404 = vld [vmem:[#allocation2 + $0x6a] sm:$0xff]
    %v8405 = vld [vmem:[#allocation2 + $0x72] sm:$0xff]
    %v8406 = vld [vmem:[#allocation2 + $0x7a] sm:$0xff]
    %v8407 = vld [vmem:[#allocation2 + $0x82] sm:$0xff]
    %v8408 = vld [vmem:[#allocation2 + $0x8a] sm:$0xff]
    %v8409 = vld [vmem:[#allocation2 + $0x92] sm:$0xff]
    %v8410 = vld [vmem:[#allocation2 + $0x9a] sm:$0xff]
    %v8411 = vld [vmem:[#allocation2 + $0xa2] sm:$0xff]
    %v8412 = vld [vmem:[#allocation2 + $0xaa] sm:$0xff]
    %v8413 = vld [vmem:[#allocation2 + $0xb2] sm:$0xff]
    %v8414 = vld [vmem:[#allocation2 + $0xba] sm:$0xff]
    %v8415 = vld [vmem:[#allocation2 + $0xc2] sm:$0xff]
    %v8416 = vld [vmem:[#allocation2 + $0xca] sm:$0xff]
    %v8417 = vld [vmem:[#allocation2 + $0xd2] sm:$0xff]
    %v8418 = vld [vmem:[#allocation2 + $0xda] sm:$0xff]
    %v8419 = vld [vmem:[#allocation2 + $0xe2] sm:$0xff]
    %v8420 = vld [vmem:[#allocation2 + $0xea] sm:$0xff]
    %v8421 = vld [vmem:[#allocation2 + $0xf2] sm:$0xff]
    %v8422 = vld [vmem:[#allocation2 + $0xfa] sm:$0xff]
    %v8423 = vld [vmem:[#allocation2 + $0x102] sm:$0xff]
    %v8424 = vld [vmem:[#allocation2 + $0x10a] sm:$0xff]
    %v8425 = vld [vmem:[#allocation2 + $0x112] sm:$0xff]
    %v8426 = vld [vmem:[#allocation2 + $0x11a] sm:$0xff]
    %v8427 = vld [vmem:[#allocation2 + $0x122] sm:$0xff]
    %v8428 = vld [vmem:[#allocation2 + $0x12a] sm:$0xff]
    %v8429 = vld [vmem:[#allocation2 + $0x132] sm:$0xff]
    %v8430 = vld [vmem:[#allocation2 + $0x13a] sm:$0xff]
    %v8431 = vld [vmem:[#allocation2 + $0x142] sm:$0xff]
    %v8432 = vld [vmem:[#allocation2 + $0x14a] sm:$0xff]
    %v8433 = vld [vmem:[#allocation2 + $0x152] sm:$0xff]
    %v8434 = vld [vmem:[#allocation2 + $0x15a] sm:$0xff]
    %v8435 = vld [vmem:[#allocation2 + $0x162] sm:$0xff]
    %v8436 = vld [vmem:[#allocation2 + $0x16a] sm:$0xff]
    %v8437 = vld [vmem:[#allocation2 + $0x172] sm:$0xff]
    %v8438 = vld [vmem:[#allocation2 + $0x17a] sm:$0xff]
    %v8439 = vld [vmem:[#allocation2 + $0x182] sm:$0xff]
    %v8440 = vld [vmem:[#allocation2 + $0x18a] sm:$0xff]
    %v8441 = vld [vmem:[#allocation2 + $0x192] sm:$0xff]
    %v8442 = vld [vmem:[#allocation2 + $0x19a] sm:$0xff]
    %v8443 = vld [vmem:[#allocation2 + $0x1a2] sm:$0xff]
    %v8444 = vld [vmem:[#allocation2 + $0x1aa] sm:$0xff]
    %v8445 = vld [vmem:[#allocation2 + $0x1b2] sm:$0xff]
    %v8446 = vld [vmem:[#allocation2 + $0x1ba] sm:$0xff]
    %v8447 = vld [vmem:[#allocation2 + $0x1c2] sm:$0xff]
    %v8448 = vld [vmem:[#allocation2 + $0x1ca] sm:$0xff]
    %v8449 = vld [vmem:[#allocation2 + $0x1d2] sm:$0xff]
    %v8450 = vld [vmem:[#allocation2 + $0x1da] sm:$0xff]
    %v8451 = vld [vmem:[#allocation2 + $0x1e2] sm:$0xff]
    %v8452 = vld [vmem:[#allocation2 + $0x1ea] sm:$0xff]
    %v8453 = vld [vmem:[#allocation2 + $0x1f2] sm:$0xff]
    %v8454 = vld [vmem:[#allocation2 + $0x1fa] sm:$0xff]
    %v8456 = vsel %vm6809, %v8387, 0
    %v8459 = vsel %vm6809, %v8388, 0
    %v8462 = vsel %vm6809, %v8389, 0
    %v8465 = vsel %vm6809, %v8390, 0
    %v8468 = vsel %vm6809, %v8391, 0
    %v8471 = vsel %vm6809, %v8392, 0
    %v8474 = vsel %vm6809, %v8393, 0
    %v8477 = vsel %vm6809, %v8394, 0
    %v8480 = vsel %vm6809, %v8395, 0
    %v8483 = vsel %vm6809, %v8396, 0
    %v8486 = vsel %vm6809, %v8397, 0
    %v8489 = vsel %vm6809, %v8398, 0
    %v8492 = vsel %vm6809, %v8399, 0
    %v8495 = vsel %vm6809, %v8400, 0
    %v8498 = vsel %vm6809, %v8401, 0
    %v8501 = vsel %vm6809, %v8402, 0
    %v8504 = vsel %vm6809, %v8403, 0
    %v8507 = vsel %vm6809, %v8404, 0
    %v8510 = vsel %vm6809, %v8405, 0
    %v8513 = vsel %vm6809, %v8406, 0
    %v8516 = vsel %vm6809, %v8407, 0
    %v8519 = vsel %vm6809, %v8408, 0
    %v8522 = vsel %vm6809, %v8409, 0
    %v8525 = vsel %vm6809, %v8410, 0
    %v8528 = vsel %vm6809, %v8411, 0
    %v8531 = vsel %vm6809, %v8412, 0
    %v8534 = vsel %vm6809, %v8413, 0
    %v8537 = vsel %vm6809, %v8414, 0
    %v8540 = vsel %vm6809, %v8415, 0
    %v8543 = vsel %vm6809, %v8416, 0
    %v8546 = vsel %vm6809, %v8417, 0
    %v8549 = vsel %vm6809, %v8418, 0
    %v8552 = vsel %vm6809, %v8419, 0
    %v8555 = vsel %vm6809, %v8420, 0
    %v8558 = vsel %vm6809, %v8421, 0
    %v8561 = vsel %vm6809, %v8422, 0
    %v8564 = vsel %vm6809, %v8423, 0
    %v8567 = vsel %vm6809, %v8424, 0
    %v8570 = vsel %vm6809, %v8425, 0
    %v8573 = vsel %vm6809, %v8426, 0
    %v8576 = vsel %vm6809, %v8427, 0
    %v8579 = vsel %vm6809, %v8428, 0
    %v8582 = vsel %vm6809, %v8429, 0
    %v8585 = vsel %vm6809, %v8430, 0
    %v8588 = vsel %vm6809, %v8431, 0
    %v8591 = vsel %vm6809, %v8432, 0
    %v8594 = vsel %vm6809, %v8433, 0
    %v8597 = vsel %vm6809, %v8434, 0
    %v8600 = vsel %vm6809, %v8435, 0
    %v8603 = vsel %vm6809, %v8436, 0
    %v8606 = vsel %vm6809, %v8437, 0
    %v8609 = vsel %vm6809, %v8438, 0
    %v8612 = vsel %vm6809, %v8439, 0
    %v8615 = vsel %vm6809, %v8440, 0
    %v8618 = vsel %vm6809, %v8441, 0
    %v8621 = vsel %vm6809, %v8442, 0
    %v8624 = vsel %vm6809, %v8443, 0
    %v8627 = vsel %vm6809, %v8444, 0
    %v8630 = vsel %vm6809, %v8445, 0
    %v8633 = vsel %vm6809, %v8446, 0
    %v8636 = vsel %vm6809, %v8447, 0
    %v8639 = vsel %vm6809, %v8448, 0
    %v8642 = vsel %vm6809, %v8449, 0
    %v8645 = vsel %vm6809, %v8450, 0
    %v8648 = vsel %vm6809, %v8451, 0
    %v8651 = vsel %vm6809, %v8452, 0
    %v8654 = vsel %vm6809, %v8453, 0
    %v8657 = vsel %vm6809, %v8454, 0
    %8659 = vmatprep.subr.mxu0 0.0
    %8660 = vmatpush1.xpose.msra.mxu0 %v8468
    %8661 = vmatprep.subr.mxu0 0.0
    %8662 = vmatpush1.xpose.msra.mxu0 %v8471
    %8663 = vmatprep.subr.mxu0 0.0
    %8664 = vmatpush1.xpose.msra.mxu0 %v8474
    %8665 = vmatprep.subr.mxu0 0.0
    %8666 = vmatpush1.xpose.msra.mxu0 %v8477
    %8667 = vmatprep.subr.mxu0 0.0
    %8668 = vmatpush1.xpose.msra.mxu0 %v8480
    %8669 = vmatprep.subr.mxu0 0.0
    %8670 = vmatpush1.xpose.msra.mxu0 %v8483
    %8671 = vmatprep.subr.mxu0 0.0
    %8672 = vmatpush1.xpose.msra.mxu0 %v8486
    %8673 = vmatprep.subr.mxu0 0.0
    %8674 = vmatpush1.xpose.msra.mxu0 %v8489
    %8675 = vmatprep.subr.mxu0 0.0
    %8676 = vmatpush1.xpose.msra.mxu0 %v8492
    %8677 = vmatprep.subr.mxu0 0.0
    %8678 = vmatpush1.xpose.msra.mxu0 %v8495
    %8679 = vmatprep.subr.mxu0 0.0
    %8680 = vmatpush1.xpose.msra.mxu0 %v8498
    %8681 = vmatprep.subr.mxu0 0.0
    %8682 = vmatpush1.xpose.msra.mxu0 %v8501
    %8683 = vmatprep.subr.mxu0 0.0
    %8684 = vmatpush1.xpose.msra.mxu0 %v8504
    %8685 = vmatprep.subr.mxu0 0.0
    %8686 = vmatpush1.xpose.msra.mxu0 %v8507
    %8687 = vmatprep.subr.mxu0 0.0
    %8688 = vmatpush1.xpose.msra.mxu0 %v8510
    %8689 = vmatprep.subr.mxu0 0.0
    %8690 = vmatpush1.xpose.msra.mxu0 %v8513
    %8691 = vmatprep.subr.mxu0 0.0
    %8692 = vmatpush1.xpose.msra.mxu0 %v8516
    %8693 = vmatprep.subr.mxu0 0.0
    %8694 = vmatpush1.xpose.msra.mxu0 %v8519
    %8695 = vmatprep.subr.mxu0 0.0
    %8696 = vmatpush1.xpose.msra.mxu0 %v8522
    %8697 = vmatprep.subr.mxu0 0.0
    %8698 = vmatpush1.xpose.msra.mxu0 %v8525
    %8699 = vmatprep.subr.mxu0 0.0
    %8700 = vmatpush1.xpose.msra.mxu0 %v8528
    %8701 = vmatprep.subr.mxu0 0.0
    %8702 = vmatpush1.xpose.msra.mxu0 %v8531
    %8703 = vmatprep.subr.mxu0 0.0
    %8704 = vmatpush1.xpose.msra.mxu0 %v8534
    %8705 = vmatprep.subr.mxu0 0.0
    %8706 = vmatpush1.xpose.msra.mxu0 %v8537
    %8707 = vmatprep.subr.mxu0 0.0
    %8708 = vmatpush1.xpose.msra.mxu0 %v8540
    %8709 = vmatprep.subr.mxu0 0.0
    %8710 = vmatpush1.xpose.msra.mxu0 %v8543
    %8711 = vmatprep.subr.mxu0 0.0
    %8712 = vmatpush1.xpose.msra.mxu0 %v8546
    %8713 = vmatprep.subr.mxu0 0.0
    %8714 = vmatpush1.xpose.msra.mxu0 %v8549
    %8715 = vmatprep.subr.mxu0 0.0
    %8716 = vmatpush1.xpose.msra.mxu0 %v8552
    %8717 = vmatprep.subr.mxu0 0.0
    %8718 = vmatpush1.xpose.msra.mxu0 %v8555
    %8719 = vmatprep.subr.mxu0 0.0
    %8720 = vmatpush1.xpose.msra.mxu0 %v8558
    %8721 = vmatprep.subr.mxu0 0.0
    %8722 = vmatpush1.xpose.msra.mxu0 %v8561
    %8723 = vmatprep.mubr.f32.mxu0 0.0
    %8724 = vmatmul.mubr.f32.gmra.mrb[0].mxu0 %v8456
    %v8725 = vpop.f32.mrb[0].mxu0
    %v8726 = vadd.f32 0.0, %v8725
    %v8727 = vpop.f32.mrb[0].mxu0
    %v8728 = vadd.f32 0.0, %v8727
    %8729 = vmatprep.mubr.f32.mxu0 0.0
    %8730 = vmatmul.mubr.f32.gmra.mrb[0].mxu0 %v8459
    %v8731 = vpop.f32.mrb[0].mxu0
    %v8732 = vadd.f32 0.0, %v8731
    %v8733 = vpop.f32.mrb[0].mxu0
    %v8734 = vadd.f32 0.0, %v8733
    %8735 = vmatprep.mubr.f32.mxu0 0.0
    %8736 = vmatmul.mubr.f32.gmra.mrb[0].mxu0 %v8462
    %v8737 = vpop.f32.mrb[0].mxu0
    %v8738 = vadd.f32 0.0, %v8737
    %v8739 = vpop.f32.mrb[0].mxu0
    %v8740 = vadd.f32 0.0, %v8739
    %8741 = vmatprep.mubr.f32.mxu0 0.0
    %8742 = vmatmul.mubr.f32.gmra.mrb[0].mxu0 %v8465
    %v8743 = vpop.f32.mrb[0].mxu0
    %v8744 = vadd.f32 0.0, %v8743
    %v8745 = vpop.f32.mrb[0].mxu0
    %v8746 = vadd.f32 0.0, %v8745
    %8747 = vdwg.mxu0
    %8748 = vmatprep.subr.mxu0 0.0
    %8749 = vmatpush1.xpose.msra.mxu0 %v8564
    %8750 = vmatprep.subr.mxu0 0.0
    %8751 = vmatpush1.xpose.msra.mxu0 %v8567
    %8752 = vmatprep.subr.mxu0 0.0
    %8753 = vmatpush1.xpose.msra.mxu0 %v8570
    %8754 = vmatprep.subr.mxu0 0.0
    %8755 = vmatpush1.xpose.msra.mxu0 %v8573
    %8756 = vmatprep.subr.mxu0 0.0
    %8757 = vmatpush1.xpose.msra.mxu0 %v8576
    %8758 = vmatprep.subr.mxu0 0.0
    %8759 = vmatpush1.xpose.msra.mxu0 %v8579
    %8760 = vmatprep.subr.mxu0 0.0
    %8761 = vmatpush1.xpose.msra.mxu0 %v8582
    %8762 = vmatprep.subr.mxu0 0.0
    %8763 = vmatpush1.xpose.msra.mxu0 %v8585
    %8764 = vmatprep.subr.mxu0 0.0
    %8765 = vmatpush1.xpose.msra.mxu0 %v8588
    %8766 = vmatprep.subr.mxu0 0.0
    %8767 = vmatpush1.xpose.msra.mxu0 %v8591
    %8768 = vmatprep.subr.mxu0 0.0
    %8769 = vmatpush1.xpose.msra.mxu0 %v8594
    %8770 = vmatprep.subr.mxu0 0.0
    %8771 = vmatpush1.xpose.msra.mxu0 %v8597
    %8772 = vmatprep.subr.mxu0 0.0
    %8773 = vmatpush1.xpose.msra.mxu0 %v8600
    %8774 = vmatprep.subr.mxu0 0.0
    %8775 = vmatpush1.xpose.msra.mxu0 %v8603
    %8776 = vmatprep.subr.mxu0 0.0
    %8777 = vmatpush1.xpose.msra.mxu0 %v8606
    %8778 = vmatprep.subr.mxu0 0.0
    %8779 = vmatpush1.xpose.msra.mxu0 %v8609
    %8780 = vmatprep.subr.mxu0 0.0
    %8781 = vmatpush1.xpose.msra.mxu0 %v8612
    %8782 = vmatprep.subr.mxu0 0.0
    %8783 = vmatpush1.xpose.msra.mxu0 %v8615
    %8784 = vmatprep.subr.mxu0 0.0
    %8785 = vmatpush1.xpose.msra.mxu0 %v8618
    %8786 = vmatprep.subr.mxu0 0.0
    %8787 = vmatpush1.xpose.msra.mxu0 %v8621
    %8788 = vmatprep.subr.mxu0 0.0
    %8789 = vmatpush1.xpose.msra.mxu0 %v8624
    %8790 = vmatprep.subr.mxu0 0.0
    %8791 = vmatpush1.xpose.msra.mxu0 %v8627
    %8792 = vmatprep.subr.mxu0 0.0
    %8793 = vmatpush1.xpose.msra.mxu0 %v8630
    %8794 = vmatprep.subr.mxu0 0.0
    %8795 = vmatpush1.xpose.msra.mxu0 %v8633
    %8796 = vmatprep.subr.mxu0 0.0
    %8797 = vmatpush1.xpose.msra.mxu0 %v8636
    %8798 = vmatprep.subr.mxu0 0.0
    %8799 = vmatpush1.xpose.msra.mxu0 %v8639
    %8800 = vmatprep.subr.mxu0 0.0
    %8801 = vmatpush1.xpose.msra.mxu0 %v8642
    %8802 = vmatprep.subr.mxu0 0.0
    %8803 = vmatpush1.xpose.msra.mxu0 %v8645
    %8804 = vmatprep.subr.mxu0 0.0
    %8805 = vmatpush1.xpose.msra.mxu0 %v8648
    %8806 = vmatprep.subr.mxu0 0.0
    %8807 = vmatpush1.xpose.msra.mxu0 %v8651
    %8808 = vmatprep.subr.mxu0 0.0
    %8809 = vmatpush1.xpose.msra.mxu0 %v8654
    %8810 = vmatprep.subr.mxu0 0.0
    %8811 = vmatpush1.xpose.msra.mxu0 %v8657
    %8812 = vmatprep.mubr.f32.mxu0 0.0
    %8813 = vmatmul.mubr.f32.gmra.mrb[0].mxu0 %v8456
    %v8814 = vpop.f32.mrb[0].mxu0
    %v8815 = vadd.f32 0.0, %v8814
    %v8816 = vpop.f32.mrb[0].mxu0
    %v8817 = vadd.f32 0.0, %v8816
    %8818 = vmatprep.mubr.f32.mxu0 0.0
    %8819 = vmatmul.mubr.f32.gmra.mrb[0].mxu0 %v8459
    %v8820 = vpop.f32.mrb[0].mxu0
    %v8821 = vadd.f32 0.0, %v8820
    %v8822 = vpop.f32.mrb[0].mxu0
    %v8823 = vadd.f32 0.0, %v8822
    %8824 = vmatprep.mubr.f32.mxu0 0.0
    %8825 = vmatmul.mubr.f32.gmra.mrb[0].mxu0 %v8462
    %v8826 = vpop.f32.mrb[0].mxu0
    %v8827 = vadd.f32 0.0, %v8826
    %v8828 = vpop.f32.mrb[0].mxu0
    %v8829 = vadd.f32 0.0, %v8828
    %8830 = vmatprep.mubr.f32.mxu0 0.0
    %8831 = vmatmul.mubr.f32.gmra.mrb[0].mxu0 %v8465
    %v8832 = vpop.f32.mrb[0].mxu0
    %v8833 = vadd.f32 0.0, %v8832
    %v8834 = vpop.f32.mrb[0].mxu0
    %v8835 = vadd.f32 0.0, %v8834
    %8836 = vdwg.mxu0
    %v8837 = vadd.f32 %v8275, %v8726
    %v8838 = vadd.f32 %v8277, %v8728
    %v8839 = vadd.f32 %v8364, %v8815
    %v8840 = vadd.f32 %v8366, %v8817
    %v8841 = vadd.f32 %v8281, %v8732
    %v8842 = vadd.f32 %v8283, %v8734
    %v8843 = vadd.f32 %v8370, %v8821
    %v8844 = vadd.f32 %v8372, %v8823
    %v8845 = vadd.f32 %v8287, %v8738
    %v8846 = vadd.f32 %v8289, %v8740
    %v8847 = vadd.f32 %v8376, %v8827
    %v8848 = vadd.f32 %v8378, %v8829
    %v8849 = vadd.f32 %v8293, %v8744
    %v8850 = vadd.f32 %v8295, %v8746
    %v8851 = vadd.f32 %v8382, %v8833
    %v8852 = vadd.f32 %v8384, %v8835
    %s8853 = scalar_lea.vmem %s5, 96
    %v8854 = vld [vmem:[%s8853] sm:$0xff]
    %v8855 = vld [vmem:[%s8853 + $0x8] sm:$0xff]
    %v8856 = vld [vmem:[%s8853 + $0x10] sm:$0xff]
    %v8857 = vld [vmem:[%s8853 + $0x18] sm:$0xff]
    %v8858 = vld [vmem:[#allocation2 + $0x10] sm:$0xff]
    %v8859 = vld [vmem:[#allocation2 + $0x18] sm:$0xff]
    %v8860 = vld [vmem:[#allocation2 + $0x20] sm:$0xff]
    %v8861 = vld [vmem:[#allocation2 + $0x28] sm:$0xff]
    %v8862 = vld [vmem:[#allocation2 + $0x30] sm:$0xff]
    %v8863 = vld [vmem:[#allocation2 + $0x38] sm:$0xff]
    %v8864 = vld [vmem:[#allocation2 + $0x40] sm:$0xff]
    %v8865 = vld [vmem:[#allocation2 + $0x48] sm:$0xff]
    %v8866 = vld [vmem:[#allocation2 + $0x50] sm:$0xff]
    %v8867 = vld [vmem:[#allocation2 + $0x58] sm:$0xff]
    %v8868 = vld [vmem:[#allocation2 + $0x60] sm:$0xff]
    %v8869 = vld [vmem:[#allocation2 + $0x68] sm:$0xff]
    %v8870 = vld [vmem:[#allocation2 + $0x70] sm:$0xff]
    %v8871 = vld [vmem:[#allocation2 + $0x78] sm:$0xff]
    %v8872 = vld [vmem:[#allocation2 + $0x80] sm:$0xff]
    %v8873 = vld [vmem:[#allocation2 + $0x88] sm:$0xff]
    %v8874 = vld [vmem:[#allocation2 + $0x90] sm:$0xff]
    %v8875 = vld [vmem:[#allocation2 + $0x98] sm:$0xff]
    %v8876 = vld [vmem:[#allocation2 + $0xa0] sm:$0xff]
    %v8877 = vld [vmem:[#allocation2 + $0xa8] sm:$0xff]
    %v8878 = vld [vmem:[#allocation2 + $0xb0] sm:$0xff]
    %v8879 = vld [vmem:[#allocation2 + $0xb8] sm:$0xff]
    %v8880 = vld [vmem:[#allocation2 + $0xc0] sm:$0xff]
    %v8881 = vld [vmem:[#allocation2 + $0xc8] sm:$0xff]
    %v8882 = vld [vmem:[#allocation2 + $0xd0] sm:$0xff]
    %v8883 = vld [vmem:[#allocation2 + $0xd8] sm:$0xff]
    %v8884 = vld [vmem:[#allocation2 + $0xe0] sm:$0xff]
    %v8885 = vld [vmem:[#allocation2 + $0xe8] sm:$0xff]
    %v8886 = vld [vmem:[#allocation2 + $0xf0] sm:$0xff]
    %v8887 = vld [vmem:[#allocation2 + $0xf8] sm:$0xff]
    %v8888 = vld [vmem:[#allocation2 + $0x100] sm:$0xff]
    %v8889 = vld [vmem:[#allocation2 + $0x108] sm:$0xff]
    %v8890 = vld [vmem:[#allocation2 + $0x110] sm:$0xff]
    %v8891 = vld [vmem:[#allocation2 + $0x118] sm:$0xff]
    %v8892 = vld [vmem:[#allocation2 + $0x120] sm:$0xff]
    %v8893 = vld [vmem:[#allocation2 + $0x128] sm:$0xff]
    %v8894 = vld [vmem:[#allocation2 + $0x130] sm:$0xff]
    %v8895 = vld [vmem:[#allocation2 + $0x138] sm:$0xff]
    %v8896 = vld [vmem:[#allocation2 + $0x140] sm:$0xff]
    %v8897 = vld [vmem:[#allocation2 + $0x148] sm:$0xff]
    %v8898 = vld [vmem:[#allocation2 + $0x150] sm:$0xff]
    %v8899 = vld [vmem:[#allocation2 + $0x158] sm:$0xff]
    %v8900 = vld [vmem:[#allocation2 + $0x160] sm:$0xff]
    %v8901 = vld [vmem:[#allocation2 + $0x168] sm:$0xff]
    %v8902 = vld [vmem:[#allocation2 + $0x170] sm:$0xff]
    %v8903 = vld [vmem:[#allocation2 + $0x178] sm:$0xff]
    %v8904 = vld [vmem:[#allocation2 + $0x180] sm:$0xff]
    %v8905 = vld [vmem:[#allocation2 + $0x188] sm:$0xff]
    %v8906 = vld [vmem:[#allocation2 + $0x190] sm:$0xff]
    %v8907 = vld [vmem:[#allocation2 + $0x198] sm:$0xff]
    %v8908 = vld [vmem:[#allocation2 + $0x1a0] sm:$0xff]
    %v8909 = vld [vmem:[#allocation2 + $0x1a8] sm:$0xff]
    %v8910 = vld [vmem:[#allocation2 + $0x1b0] sm:$0xff]
    %v8911 = vld [vmem:[#allocation2 + $0x1b8] sm:$0xff]
    %v8912 = vld [vmem:[#allocation2 + $0x1c0] sm:$0xff]
    %v8913 = vld [vmem:[#allocation2 + $0x1c8] sm:$0xff]
    %v8914 = vld [vmem:[#allocation2 + $0x1d0] sm:$0xff]
    %v8915 = vld [vmem:[#allocation2 + $0x1d8] sm:$0xff]
    %v8916 = vld [vmem:[#allocation2 + $0x1e0] sm:$0xff]
    %v8917 = vld [vmem:[#allocation2 + $0x1e8] sm:$0xff]
    %v8918 = vld [vmem:[#allocation2 + $0x1f0] sm:$0xff]
    %v8919 = vld [vmem:[#allocation2 + $0x1f8] sm:$0xff]
    %v8920 = vld [vmem:[#allocation2 + $0x200] sm:$0xff]
    %v8921 = vld [vmem:[#allocation2 + $0x208] sm:$0xff]
    %v8923 = vsel %vm6809, %v8854, 0
    %v8926 = vsel %vm6809, %v8855, 0
    %v8929 = vsel %vm6809, %v8856, 0
    %v8932 = vsel %vm6809, %v8857, 0
    %v8935 = vsel %vm6809, %v8858, 0
    %v8938 = vsel %vm6809, %v8859, 0
    %v8941 = vsel %vm6809, %v8860, 0
    %v8944 = vsel %vm6809, %v8861, 0
    %v8947 = vsel %vm6809, %v8862, 0
    %v8950 = vsel %vm6809, %v8863, 0
    %v8953 = vsel %vm6809, %v8864, 0
    %v8956 = vsel %vm6809, %v8865, 0
    %v8959 = vsel %vm6809, %v8866, 0
    %v8962 = vsel %vm6809, %v8867, 0
    %v8965 = vsel %vm6809, %v8868, 0
    %v8968 = vsel %vm6809, %v8869, 0
    %v8971 = vsel %vm6809, %v8870, 0
    %v8974 = vsel %vm6809, %v8871, 0
    %v8977 = vsel %vm6809, %v8872, 0
    %v8980 = vsel %vm6809, %v8873, 0
    %v8983 = vsel %vm6809, %v8874, 0
    %v8986 = vsel %vm6809, %v8875, 0
    %v8989 = vsel %vm6809, %v8876, 0
    %v8992 = vsel %vm6809, %v8877, 0
    %v8995 = vsel %vm6809, %v8878, 0
    %v8998 = vsel %vm6809, %v8879, 0
    %v9001 = vsel %vm6809, %v8880, 0
    %v9004 = vsel %vm6809, %v8881, 0
    %v9007 = vsel %vm6809, %v8882, 0
    %v9010 = vsel %vm6809, %v8883, 0
    %v9013 = vsel %vm6809, %v8884, 0
    %v9016 = vsel %vm6809, %v8885, 0
    %v9019 = vsel %vm6809, %v8886, 0
    %v9022 = vsel %vm6809, %v8887, 0
    %v9025 = vsel %vm6809, %v8888, 0
    %v9028 = vsel %vm6809, %v8889, 0
    %v9031 = vsel %vm6809, %v8890, 0
    %v9034 = vsel %vm6809, %v8891, 0
    %v9037 = vsel %vm6809, %v8892, 0
    %v9040 = vsel %vm6809, %v8893, 0
    %v9043 = vsel %vm6809, %v8894, 0
    %v9046 = vsel %vm6809, %v8895, 0
    %v9049 = vsel %vm6809, %v8896, 0
    %v9052 = vsel %vm6809, %v8897, 0
    %v9055 = vsel %vm6809, %v8898, 0
    %v9058 = vsel %vm6809, %v8899, 0
    %v9061 = vsel %vm6809, %v8900, 0
    %v9064 = vsel %vm6809, %v8901, 0
    %v9067 = vsel %vm6809, %v8902, 0
    %v9070 = vsel %vm6809, %v8903, 0
    %v9073 = vsel %vm6809, %v8904, 0
    %v9076 = vsel %vm6809, %v8905, 0
    %v9079 = vsel %vm6809, %v8906, 0
    %v9082 = vsel %vm6809, %v8907, 0
    %v9085 = vsel %vm6809, %v8908, 0
    %v9088 = vsel %vm6809, %v8909, 0
    %v9091 = vsel %vm6809, %v8910, 0
    %v9094 = vsel %vm6809, %v8911, 0
    %v9097 = vsel %vm6809, %v8912, 0
    %v9100 = vsel %vm6809, %v8913, 0
    %v9103 = vsel %vm6809, %v8914, 0
    %v9106 = vsel %vm6809, %v8915, 0
    %v9109 = vsel %vm6809, %v8916, 0
    %v9112 = vsel %vm6809, %v8917, 0
    %v9115 = vsel %vm6809, %v8918, 0
    %v9118 = vsel %vm6809, %v8919, 0
    %v9121 = vsel %vm6809, %v8920, 0
    %v9124 = vsel %vm6809, %v8921, 0
    %9126 = vmatprep.subr.mxu0 0.0
    %9127 = vmatpush1.xpose.msra.mxu0 %v8935
    %9128 = vmatprep.subr.mxu0 0.0
    %9129 = vmatpush1.xpose.msra.mxu0 %v8938
    %9130 = vmatprep.subr.mxu0 0.0
    %9131 = vmatpush1.xpose.msra.mxu0 %v8941
    %9132 = vmatprep.subr.mxu0 0.0
    %9133 = vmatpush1.xpose.msra.mxu0 %v8944
    %9134 = vmatprep.subr.mxu0 0.0
    %9135 = vmatpush1.xpose.msra.mxu0 %v8947
    %9136 = vmatprep.subr.mxu0 0.0
    %9137 = vmatpush1.xpose.msra.mxu0 %v8950
    %9138 = vmatprep.subr.mxu0 0.0
    %9139 = vmatpush1.xpose.msra.mxu0 %v8953
    %9140 = vmatprep.subr.mxu0 0.0
    %9141 = vmatpush1.xpose.msra.mxu0 %v8956
    %9142 = vmatprep.subr.mxu0 0.0
    %9143 = vmatpush1.xpose.msra.mxu0 %v8959
    %9144 = vmatprep.subr.mxu0 0.0
    %9145 = vmatpush1.xpose.msra.mxu0 %v8962
    %9146 = vmatprep.subr.mxu0 0.0
    %9147 = vmatpush1.xpose.msra.mxu0 %v8965
    %9148 = vmatprep.subr.mxu0 0.0
    %9149 = vmatpush1.xpose.msra.mxu0 %v8968
    %9150 = vmatprep.subr.mxu0 0.0
    %9151 = vmatpush1.xpose.msra.mxu0 %v8971
    %9152 = vmatprep.subr.mxu0 0.0
    %9153 = vmatpush1.xpose.msra.mxu0 %v8974
    %9154 = vmatprep.subr.mxu0 0.0
    %9155 = vmatpush1.xpose.msra.mxu0 %v8977
    %9156 = vmatprep.subr.mxu0 0.0
    %9157 = vmatpush1.xpose.msra.mxu0 %v8980
    %9158 = vmatprep.subr.mxu0 0.0
    %9159 = vmatpush1.xpose.msra.mxu0 %v8983
    %9160 = vmatprep.subr.mxu0 0.0
    %9161 = vmatpush1.xpose.msra.mxu0 %v8986
    %9162 = vmatprep.subr.mxu0 0.0
    %9163 = vmatpush1.xpose.msra.mxu0 %v8989
    %9164 = vmatprep.subr.mxu0 0.0
    %9165 = vmatpush1.xpose.msra.mxu0 %v8992
    %9166 = vmatprep.subr.mxu0 0.0
    %9167 = vmatpush1.xpose.msra.mxu0 %v8995
    %9168 = vmatprep.subr.mxu0 0.0
    %9169 = vmatpush1.xpose.msra.mxu0 %v8998
    %9170 = vmatprep.subr.mxu0 0.0
    %9171 = vmatpush1.xpose.msra.mxu0 %v9001
    %9172 = vmatprep.subr.mxu0 0.0
    %9173 = vmatpush1.xpose.msra.mxu0 %v9004
    %9174 = vmatprep.subr.mxu0 0.0
    %9175 = vmatpush1.xpose.msra.mxu0 %v9007
    %9176 = vmatprep.subr.mxu0 0.0
    %9177 = vmatpush1.xpose.msra.mxu0 %v9010
    %9178 = vmatprep.subr.mxu0 0.0
    %9179 = vmatpush1.xpose.msra.mxu0 %v9013
    %9180 = vmatprep.subr.mxu0 0.0
    %9181 = vmatpush1.xpose.msra.mxu0 %v9016
    %9182 = vmatprep.subr.mxu0 0.0
    %9183 = vmatpush1.xpose.msra.mxu0 %v9019
    %9184 = vmatprep.subr.mxu0 0.0
    %9185 = vmatpush1.xpose.msra.mxu0 %v9022
    %9186 = vmatprep.subr.mxu0 0.0
    %9187 = vmatpush1.xpose.msra.mxu0 %v9025
    %9188 = vmatprep.subr.mxu0 0.0
    %9189 = vmatpush1.xpose.msra.mxu0 %v9028
    %9190 = vmatprep.mubr.f32.mxu0 0.0
    %9191 = vmatmul.mubr.f32.gmra.mrb[0].mxu0 %v8923
    %v9192 = vpop.f32.mrb[0].mxu0
    %v9193 = vadd.f32 0.0, %v9192
    %v9194 = vpop.f32.mrb[0].mxu0
    %v9195 = vadd.f32 0.0, %v9194
    %9196 = vmatprep.mubr.f32.mxu0 0.0
    %9197 = vmatmul.mubr.f32.gmra.mrb[0].mxu0 %v8926
    %v9198 = vpop.f32.mrb[0].mxu0
    %v9199 = vadd.f32 0.0, %v9198
    %v9200 = vpop.f32.mrb[0].mxu0
    %v9201 = vadd.f32 0.0, %v9200
    %9202 = vmatprep.mubr.f32.mxu0 0.0
    %9203 = vmatmul.mubr.f32.gmra.mrb[0].mxu0 %v8929
    %v9204 = vpop.f32.mrb[0].mxu0
    %v9205 = vadd.f32 0.0, %v9204
    %v9206 = vpop.f32.mrb[0].mxu0
    %v9207 = vadd.f32 0.0, %v9206
    %9208 = vmatprep.mubr.f32.mxu0 0.0
    %9209 = vmatmul.mubr.f32.gmra.mrb[0].mxu0 %v8932
    %v9210 = vpop.f32.mrb[0].mxu0
    %v9211 = vadd.f32 0.0, %v9210
    %v9212 = vpop.f32.mrb[0].mxu0
    %v9213 = vadd.f32 0.0, %v9212
    %9214 = vdwg.mxu0
    %9215 = vmatprep.subr.mxu0 0.0
    %9216 = vmatpush1.xpose.msra.mxu0 %v9031
    %9217 = vmatprep.subr.mxu0 0.0
    %9218 = vmatpush1.xpose.msra.mxu0 %v9034
    %9219 = vmatprep.subr.mxu0 0.0
    %9220 = vmatpush1.xpose.msra.mxu0 %v9037
    %9221 = vmatprep.subr.mxu0 0.0
    %9222 = vmatpush1.xpose.msra.mxu0 %v9040
    %9223 = vmatprep.subr.mxu0 0.0
    %9224 = vmatpush1.xpose.msra.mxu0 %v9043
    %9225 = vmatprep.subr.mxu0 0.0
    %9226 = vmatpush1.xpose.msra.mxu0 %v9046
    %9227 = vmatprep.subr.mxu0 0.0
    %9228 = vmatpush1.xpose.msra.mxu0 %v9049
    %9229 = vmatprep.subr.mxu0 0.0
    %9230 = vmatpush1.xpose.msra.mxu0 %v9052
    %9231 = vmatprep.subr.mxu0 0.0
    %9232 = vmatpush1.xpose.msra.mxu0 %v9055
    %9233 = vmatprep.subr.mxu0 0.0
    %9234 = vmatpush1.xpose.msra.mxu0 %v9058
    %9235 = vmatprep.subr.mxu0 0.0
    %9236 = vmatpush1.xpose.msra.mxu0 %v9061
    %9237 = vmatprep.subr.mxu0 0.0
    %9238 = vmatpush1.xpose.msra.mxu0 %v9064
    %9239 = vmatprep.subr.mxu0 0.0
    %9240 = vmatpush1.xpose.msra.mxu0 %v9067
    %9241 = vmatprep.subr.mxu0 0.0
    %9242 = vmatpush1.xpose.msra.mxu0 %v9070
    %9243 = vmatprep.subr.mxu0 0.0
    %9244 = vmatpush1.xpose.msra.mxu0 %v9073
    %9245 = vmatprep.subr.mxu0 0.0
    %9246 = vmatpush1.xpose.msra.mxu0 %v9076
    %9247 = vmatprep.subr.mxu0 0.0
    %9248 = vmatpush1.xpose.msra.mxu0 %v9079
    %9249 = vmatprep.subr.mxu0 0.0
    %9250 = vmatpush1.xpose.msra.mxu0 %v9082
    %9251 = vmatprep.subr.mxu0 0.0
    %9252 = vmatpush1.xpose.msra.mxu0 %v9085
    %9253 = vmatprep.subr.mxu0 0.0
    %9254 = vmatpush1.xpose.msra.mxu0 %v9088
    %9255 = vmatprep.subr.mxu0 0.0
    %9256 = vmatpush1.xpose.msra.mxu0 %v9091
    %9257 = vmatprep.subr.mxu0 0.0
    %9258 = vmatpush1.xpose.msra.mxu0 %v9094
    %9259 = vmatprep.subr.mxu0 0.0
    %9260 = vmatpush1.xpose.msra.mxu0 %v9097
    %9261 = vmatprep.subr.mxu0 0.0
    %9262 = vmatpush1.xpose.msra.mxu0 %v9100
    %9263 = vmatprep.subr.mxu0 0.0
    %9264 = vmatpush1.xpose.msra.mxu0 %v9103
    %9265 = vmatprep.subr.mxu0 0.0
    %9266 = vmatpush1.xpose.msra.mxu0 %v9106
    %9267 = vmatprep.subr.mxu0 0.0
    %9268 = vmatpush1.xpose.msra.mxu0 %v9109
    %9269 = vmatprep.subr.mxu0 0.0
    %9270 = vmatpush1.xpose.msra.mxu0 %v9112
    %9271 = vmatprep.subr.mxu0 0.0
    %9272 = vmatpush1.xpose.msra.mxu0 %v9115
    %9273 = vmatprep.subr.mxu0 0.0
    %9274 = vmatpush1.xpose.msra.mxu0 %v9118
    %9275 = vmatprep.subr.mxu0 0.0
    %9276 = vmatpush1.xpose.msra.mxu0 %v9121
    %9277 = vmatprep.subr.mxu0 0.0
    %9278 = vmatpush1.xpose.msra.mxu0 %v9124
    %9279 = vmatprep.mubr.f32.mxu0 0.0
    %9280 = vmatmul.mubr.f32.gmra.mrb[0].mxu0 %v8923
    %v9281 = vpop.f32.mrb[0].mxu0
    %v9282 = vadd.f32 0.0, %v9281
    %v9283 = vpop.f32.mrb[0].mxu0
    %v9284 = vadd.f32 0.0, %v9283
    %9285 = vmatprep.mubr.f32.mxu0 0.0
    %9286 = vmatmul.mubr.f32.gmra.mrb[0].mxu0 %v8926
    %v9287 = vpop.f32.mrb[0].mxu0
    %v9288 = vadd.f32 0.0, %v9287
    %v9289 = vpop.f32.mrb[0].mxu0
    %v9290 = vadd.f32 0.0, %v9289
    %9291 = vmatprep.mubr.f32.mxu0 0.0
    %9292 = vmatmul.mubr.f32.gmra.mrb[0].mxu0 %v8929
    %v9293 = vpop.f32.mrb[0].mxu0
    %v9294 = vadd.f32 0.0, %v9293
    %v9295 = vpop.f32.mrb[0].mxu0
    %v9296 = vadd.f32 0.0, %v9295
    %9297 = vmatprep.mubr.f32.mxu0 0.0
    %9298 = vmatmul.mubr.f32.gmra.mrb[0].mxu0 %v8932
    %v9299 = vpop.f32.mrb[0].mxu0
    %v9300 = vadd.f32 0.0, %v9299
    %v9301 = vpop.f32.mrb[0].mxu0
    %v9302 = vadd.f32 0.0, %v9301
    %9303 = vdwg.mxu0
    %v9304 = vadd.f32 %v8837, %v9193
    %v9305 = vadd.f32 %v8838, %v9195
    %v9306 = vadd.f32 %v8839, %v9282
    %v9307 = vadd.f32 %v8840, %v9284
    %v9308 = vadd.f32 %v8841, %v9199
    %v9309 = vadd.f32 %v8842, %v9201
    %v9310 = vadd.f32 %v8843, %v9288
    %v9311 = vadd.f32 %v8844, %v9290
    %v9312 = vadd.f32 %v8845, %v9205
    %v9313 = vadd.f32 %v8846, %v9207
    %v9314 = vadd.f32 %v8847, %v9294
    %v9315 = vadd.f32 %v8848, %v9296
    %v9316 = vadd.f32 %v8849, %v9211
    %v9317 = vadd.f32 %v8850, %v9213
    %v9318 = vadd.f32 %v8851, %v9300
    %v9319 = vadd.f32 %v8852, %v9302
    %s9320 = scalar_lea.vmem %s5, 128
    %v9321 = vld [vmem:[%s9320] sm:$0xff]
    %v9322 = vld [vmem:[%s9320 + $0x8] sm:$0xff]
    %v9323 = vld [vmem:[%s9320 + $0x10] sm:$0xff]
    %v9324 = vld [vmem:[%s9320 + $0x18] sm:$0xff]
    %v9325 = vld [vmem:[#allocation2 + $0x11] sm:$0xff]
    %v9326 = vld [vmem:[#allocation2 + $0x19] sm:$0xff]
    %v9327 = vld [vmem:[#allocation2 + $0x21] sm:$0xff]
    %v9328 = vld [vmem:[#allocation2 + $0x29] sm:$0xff]
    %v9329 = vld [vmem:[#allocation2 + $0x31] sm:$0xff]
    %v9330 = vld [vmem:[#allocation2 + $0x39] sm:$0xff]
    %v9331 = vld [vmem:[#allocation2 + $0x41] sm:$0xff]
    %v9332 = vld [vmem:[#allocation2 + $0x49] sm:$0xff]
    %v9333 = vld [vmem:[#allocation2 + $0x51] sm:$0xff]
    %v9334 = vld [vmem:[#allocation2 + $0x59] sm:$0xff]
    %v9335 = vld [vmem:[#allocation2 + $0x61] sm:$0xff]
    %v9336 = vld [vmem:[#allocation2 + $0x69] sm:$0xff]
    %v9337 = vld [vmem:[#allocation2 + $0x71] sm:$0xff]
    %v9338 = vld [vmem:[#allocation2 + $0x79] sm:$0xff]
    %v9339 = vld [vmem:[#allocation2 + $0x81] sm:$0xff]
    %v9340 = vld [vmem:[#allocation2 + $0x89] sm:$0xff]
    %v9341 = vld [vmem:[#allocation2 + $0x91] sm:$0xff]
    %v9342 = vld [vmem:[#allocation2 + $0x99] sm:$0xff]
    %v9343 = vld [vmem:[#allocation2 + $0xa1] sm:$0xff]
    %v9344 = vld [vmem:[#allocation2 + $0xa9] sm:$0xff]
    %v9345 = vld [vmem:[#allocation2 + $0xb1] sm:$0xff]
    %v9346 = vld [vmem:[#allocation2 + $0xb9] sm:$0xff]
    %v9347 = vld [vmem:[#allocation2 + $0xc1] sm:$0xff]
    %v9348 = vld [vmem:[#allocation2 + $0xc9] sm:$0xff]
    %v9349 = vld [vmem:[#allocation2 + $0xd1] sm:$0xff]
    %v9350 = vld [vmem:[#allocation2 + $0xd9] sm:$0xff]
    %v9351 = vld [vmem:[#allocation2 + $0xe1] sm:$0xff]
    %v9352 = vld [vmem:[#allocation2 + $0xe9] sm:$0xff]
    %v9353 = vld [vmem:[#allocation2 + $0xf1] sm:$0xff]
    %v9354 = vld [vmem:[#allocation2 + $0xf9] sm:$0xff]
    %v9355 = vld [vmem:[#allocation2 + $0x101] sm:$0xff]
    %v9356 = vld [vmem:[#allocation2 + $0x109] sm:$0xff]
    %v9357 = vld [vmem:[#allocation2 + $0x111] sm:$0xff]
    %v9358 = vld [vmem:[#allocation2 + $0x119] sm:$0xff]
    %v9359 = vld [vmem:[#allocation2 + $0x121] sm:$0xff]
    %v9360 = vld [vmem:[#allocation2 + $0x129] sm:$0xff]
    %v9361 = vld [vmem:[#allocation2 + $0x131] sm:$0xff]
    %v9362 = vld [vmem:[#allocation2 + $0x139] sm:$0xff]
    %v9363 = vld [vmem:[#allocation2 + $0x141] sm:$0xff]
    %v9364 = vld [vmem:[#allocation2 + $0x149] sm:$0xff]
    %v9365 = vld [vmem:[#allocation2 + $0x151] sm:$0xff]
    %v9366 = vld [vmem:[#allocation2 + $0x159] sm:$0xff]
    %v9367 = vld [vmem:[#allocation2 + $0x161] sm:$0xff]
    %v9368 = vld [vmem:[#allocation2 + $0x169] sm:$0xff]
    %v9369 = vld [vmem:[#allocation2 + $0x171] sm:$0xff]
    %v9370 = vld [vmem:[#allocation2 + $0x179] sm:$0xff]
    %v9371 = vld [vmem:[#allocation2 + $0x181] sm:$0xff]
    %v9372 = vld [vmem:[#allocation2 + $0x189] sm:$0xff]
    %v9373 = vld [vmem:[#allocation2 + $0x191] sm:$0xff]
    %v9374 = vld [vmem:[#allocation2 + $0x199] sm:$0xff]
    %v9375 = vld [vmem:[#allocation2 + $0x1a1] sm:$0xff]
    %v9376 = vld [vmem:[#allocation2 + $0x1a9] sm:$0xff]
    %v9377 = vld [vmem:[#allocation2 + $0x1b1] sm:$0xff]
    %v9378 = vld [vmem:[#allocation2 + $0x1b9] sm:$0xff]
    %v9379 = vld [vmem:[#allocation2 + $0x1c1] sm:$0xff]
    %v9380 = vld [vmem:[#allocation2 + $0x1c9] sm:$0xff]
    %v9381 = vld [vmem:[#allocation2 + $0x1d1] sm:$0xff]
    %v9382 = vld [vmem:[#allocation2 + $0x1d9] sm:$0xff]
    %v9383 = vld [vmem:[#allocation2 + $0x1e1] sm:$0xff]
    %v9384 = vld [vmem:[#allocation2 + $0x1e9] sm:$0xff]
    %v9385 = vld [vmem:[#allocation2 + $0x1f1] sm:$0xff]
    %v9386 = vld [vmem:[#allocation2 + $0x1f9] sm:$0xff]
    %v9387 = vld [vmem:[#allocation2 + $0x201] sm:$0xff]
    %v9388 = vld [vmem:[#allocation2 + $0x209] sm:$0xff]
    %v9390 = vsel %vm6809, %v9321, 0
    %v9393 = vsel %vm6809, %v9322, 0
    %v9396 = vsel %vm6809, %v9323, 0
    %v9399 = vsel %vm6809, %v9324, 0
    %v9402 = vsel %vm6809, %v9325, 0
    %v9405 = vsel %vm6809, %v9326, 0
    %v9408 = vsel %vm6809, %v9327, 0
    %v9411 = vsel %vm6809, %v9328, 0
    %v9414 = vsel %vm6809, %v9329, 0
    %v9417 = vsel %vm6809, %v9330, 0
    %v9420 = vsel %vm6809, %v9331, 0
    %v9423 = vsel %vm6809, %v9332, 0
    %v9426 = vsel %vm6809, %v9333, 0
    %v9429 = vsel %vm6809, %v9334, 0
    %v9432 = vsel %vm6809, %v9335, 0
    %v9435 = vsel %vm6809, %v9336, 0
    %v9438 = vsel %vm6809, %v9337, 0
    %v9441 = vsel %vm6809, %v9338, 0
    %v9444 = vsel %vm6809, %v9339, 0
    %v9447 = vsel %vm6809, %v9340, 0
    %v9450 = vsel %vm6809, %v9341, 0
    %v9453 = vsel %vm6809, %v9342, 0
    %v9456 = vsel %vm6809, %v9343, 0
    %v9459 = vsel %vm6809, %v9344, 0
    %v9462 = vsel %vm6809, %v9345, 0
    %v9465 = vsel %vm6809, %v9346, 0
    %v9468 = vsel %vm6809, %v9347, 0
    %v9471 = vsel %vm6809, %v9348, 0
    %v9474 = vsel %vm6809, %v9349, 0
    %v9477 = vsel %vm6809, %v9350, 0
    %v9480 = vsel %vm6809, %v9351, 0
    %v9483 = vsel %vm6809, %v9352, 0
    %v9486 = vsel %vm6809, %v9353, 0
    %v9489 = vsel %vm6809, %v9354, 0
    %v9492 = vsel %vm6809, %v9355, 0
    %v9495 = vsel %vm6809, %v9356, 0
    %v9498 = vsel %vm6809, %v9357, 0
    %v9501 = vsel %vm6809, %v9358, 0
    %v9504 = vsel %vm6809, %v9359, 0
    %v9507 = vsel %vm6809, %v9360, 0
    %v9510 = vsel %vm6809, %v9361, 0
    %v9513 = vsel %vm6809, %v9362, 0
    %v9516 = vsel %vm6809, %v9363, 0
    %v9519 = vsel %vm6809, %v9364, 0
    %v9522 = vsel %vm6809, %v9365, 0
    %v9525 = vsel %vm6809, %v9366, 0
    %v9528 = vsel %vm6809, %v9367, 0
    %v9531 = vsel %vm6809, %v9368, 0
    %v9534 = vsel %vm6809, %v9369, 0
    %v9537 = vsel %vm6809, %v9370, 0
    %v9540 = vsel %vm6809, %v9371, 0
    %v9543 = vsel %vm6809, %v9372, 0
    %v9546 = vsel %vm6809, %v9373, 0
    %v9549 = vsel %vm6809, %v9374, 0
    %v9552 = vsel %vm6809, %v9375, 0
    %v9555 = vsel %vm6809, %v9376, 0
    %v9558 = vsel %vm6809, %v9377, 0
    %v9561 = vsel %vm6809, %v9378, 0
    %v9564 = vsel %vm6809, %v9379, 0
    %v9567 = vsel %vm6809, %v9380, 0
    %v9570 = vsel %vm6809, %v9381, 0
    %v9573 = vsel %vm6809, %v9382, 0
    %v9576 = vsel %vm6809, %v9383, 0
    %v9579 = vsel %vm6809, %v9384, 0
    %v9582 = vsel %vm6809, %v9385, 0
    %v9585 = vsel %vm6809, %v9386, 0
    %v9588 = vsel %vm6809, %v9387, 0
    %v9591 = vsel %vm6809, %v9388, 0
    %9593 = vmatprep.subr.mxu0 0.0
    %9594 = vmatpush1.xpose.msra.mxu0 %v9402
    %9595 = vmatprep.subr.mxu0 0.0
    %9596 = vmatpush1.xpose.msra.mxu0 %v9405
    %9597 = vmatprep.subr.mxu0 0.0
    %9598 = vmatpush1.xpose.msra.mxu0 %v9408
    %9599 = vmatprep.subr.mxu0 0.0
    %9600 = vmatpush1.xpose.msra.mxu0 %v9411
    %9601 = vmatprep.subr.mxu0 0.0
    %9602 = vmatpush1.xpose.msra.mxu0 %v9414
    %9603 = vmatprep.subr.mxu0 0.0
    %9604 = vmatpush1.xpose.msra.mxu0 %v9417
    %9605 = vmatprep.subr.mxu0 0.0
    %9606 = vmatpush1.xpose.msra.mxu0 %v9420
    %9607 = vmatprep.subr.mxu0 0.0
    %9608 = vmatpush1.xpose.msra.mxu0 %v9423
    %9609 = vmatprep.subr.mxu0 0.0
    %9610 = vmatpush1.xpose.msra.mxu0 %v9426
    %9611 = vmatprep.subr.mxu0 0.0
    %9612 = vmatpush1.xpose.msra.mxu0 %v9429
    %9613 = vmatprep.subr.mxu0 0.0
    %9614 = vmatpush1.xpose.msra.mxu0 %v9432
    %9615 = vmatprep.subr.mxu0 0.0
    %9616 = vmatpush1.xpose.msra.mxu0 %v9435
    %9617 = vmatprep.subr.mxu0 0.0
    %9618 = vmatpush1.xpose.msra.mxu0 %v9438
    %9619 = vmatprep.subr.mxu0 0.0
    %9620 = vmatpush1.xpose.msra.mxu0 %v9441
    %9621 = vmatprep.subr.mxu0 0.0
    %9622 = vmatpush1.xpose.msra.mxu0 %v9444
    %9623 = vmatprep.subr.mxu0 0.0
    %9624 = vmatpush1.xpose.msra.mxu0 %v9447
    %9625 = vmatprep.subr.mxu0 0.0
    %9626 = vmatpush1.xpose.msra.mxu0 %v9450
    %9627 = vmatprep.subr.mxu0 0.0
    %9628 = vmatpush1.xpose.msra.mxu0 %v9453
    %9629 = vmatprep.subr.mxu0 0.0
    %9630 = vmatpush1.xpose.msra.mxu0 %v9456
    %9631 = vmatprep.subr.mxu0 0.0
    %9632 = vmatpush1.xpose.msra.mxu0 %v9459
    %9633 = vmatprep.subr.mxu0 0.0
    %9634 = vmatpush1.xpose.msra.mxu0 %v9462
    %9635 = vmatprep.subr.mxu0 0.0
    %9636 = vmatpush1.xpose.msra.mxu0 %v9465
    %9637 = vmatprep.subr.mxu0 0.0
    %9638 = vmatpush1.xpose.msra.mxu0 %v9468
    %9639 = vmatprep.subr.mxu0 0.0
    %9640 = vmatpush1.xpose.msra.mxu0 %v9471
    %9641 = vmatprep.subr.mxu0 0.0
    %9642 = vmatpush1.xpose.msra.mxu0 %v9474
    %9643 = vmatprep.subr.mxu0 0.0
    %9644 = vmatpush1.xpose.msra.mxu0 %v9477
    %9645 = vmatprep.subr.mxu0 0.0
    %9646 = vmatpush1.xpose.msra.mxu0 %v9480
    %9647 = vmatprep.subr.mxu0 0.0
    %9648 = vmatpush1.xpose.msra.mxu0 %v9483
    %9649 = vmatprep.subr.mxu0 0.0
    %9650 = vmatpush1.xpose.msra.mxu0 %v9486
    %9651 = vmatprep.subr.mxu0 0.0
    %9652 = vmatpush1.xpose.msra.mxu0 %v9489
    %9653 = vmatprep.subr.mxu0 0.0
    %9654 = vmatpush1.xpose.msra.mxu0 %v9492
    %9655 = vmatprep.subr.mxu0 0.0
    %9656 = vmatpush1.xpose.msra.mxu0 %v9495
    %9657 = vmatprep.mubr.f32.mxu0 0.0
    %9658 = vmatmul.mubr.f32.gmra.mrb[0].mxu0 %v9390
    %v9659 = vpop.f32.mrb[0].mxu0
    %v9660 = vadd.f32 0.0, %v9659
    %v9661 = vpop.f32.mrb[0].mxu0
    %v9662 = vadd.f32 0.0, %v9661
    %9663 = vmatprep.mubr.f32.mxu0 0.0
    %9664 = vmatmul.mubr.f32.gmra.mrb[0].mxu0 %v9393
    %v9665 = vpop.f32.mrb[0].mxu0
    %v9666 = vadd.f32 0.0, %v9665
    %v9667 = vpop.f32.mrb[0].mxu0
    %v9668 = vadd.f32 0.0, %v9667
    %9669 = vmatprep.mubr.f32.mxu0 0.0
    %9670 = vmatmul.mubr.f32.gmra.mrb[0].mxu0 %v9396
    %v9671 = vpop.f32.mrb[0].mxu0
    %v9672 = vadd.f32 0.0, %v9671
    %v9673 = vpop.f32.mrb[0].mxu0
    %v9674 = vadd.f32 0.0, %v9673
    %9675 = vmatprep.mubr.f32.mxu0 0.0
    %9676 = vmatmul.mubr.f32.gmra.mrb[0].mxu0 %v9399
    %v9677 = vpop.f32.mrb[0].mxu0
    %v9678 = vadd.f32 0.0, %v9677
    %v9679 = vpop.f32.mrb[0].mxu0
    %v9680 = vadd.f32 0.0, %v9679
    %9681 = vdwg.mxu0
    %9682 = vmatprep.subr.mxu0 0.0
    %9683 = vmatpush1.xpose.msra.mxu0 %v9498
    %9684 = vmatprep.subr.mxu0 0.0
    %9685 = vmatpush1.xpose.msra.mxu0 %v9501
    %9686 = vmatprep.subr.mxu0 0.0
    %9687 = vmatpush1.xpose.msra.mxu0 %v9504
    %9688 = vmatprep.subr.mxu0 0.0
    %9689 = vmatpush1.xpose.msra.mxu0 %v9507
    %9690 = vmatprep.subr.mxu0 0.0
    %9691 = vmatpush1.xpose.msra.mxu0 %v9510
    %9692 = vmatprep.subr.mxu0 0.0
    %9693 = vmatpush1.xpose.msra.mxu0 %v9513
    %9694 = vmatprep.subr.mxu0 0.0
    %9695 = vmatpush1.xpose.msra.mxu0 %v9516
    %9696 = vmatprep.subr.mxu0 0.0
    %9697 = vmatpush1.xpose.msra.mxu0 %v9519
    %9698 = vmatprep.subr.mxu0 0.0
    %9699 = vmatpush1.xpose.msra.mxu0 %v9522
    %9700 = vmatprep.subr.mxu0 0.0
    %9701 = vmatpush1.xpose.msra.mxu0 %v9525
    %9702 = vmatprep.subr.mxu0 0.0
    %9703 = vmatpush1.xpose.msra.mxu0 %v9528
    %9704 = vmatprep.subr.mxu0 0.0
    %9705 = vmatpush1.xpose.msra.mxu0 %v9531
    %9706 = vmatprep.subr.mxu0 0.0
    %9707 = vmatpush1.xpose.msra.mxu0 %v9534
    %9708 = vmatprep.subr.mxu0 0.0
    %9709 = vmatpush1.xpose.msra.mxu0 %v9537
    %9710 = vmatprep.subr.mxu0 0.0
    %9711 = vmatpush1.xpose.msra.mxu0 %v9540
    %9712 = vmatprep.subr.mxu0 0.0
    %9713 = vmatpush1.xpose.msra.mxu0 %v9543
    %9714 = vmatprep.subr.mxu0 0.0
    %9715 = vmatpush1.xpose.msra.mxu0 %v9546
    %9716 = vmatprep.subr.mxu0 0.0
    %9717 = vmatpush1.xpose.msra.mxu0 %v9549
    %9718 = vmatprep.subr.mxu0 0.0
    %9719 = vmatpush1.xpose.msra.mxu0 %v9552
    %9720 = vmatprep.subr.mxu0 0.0
    %9721 = vmatpush1.xpose.msra.mxu0 %v9555
    %9722 = vmatprep.subr.mxu0 0.0
    %9723 = vmatpush1.xpose.msra.mxu0 %v9558
    %9724 = vmatprep.subr.mxu0 0.0
    %9725 = vmatpush1.xpose.msra.mxu0 %v9561
    %9726 = vmatprep.subr.mxu0 0.0
    %9727 = vmatpush1.xpose.msra.mxu0 %v9564
    %9728 = vmatprep.subr.mxu0 0.0
    %9729 = vmatpush1.xpose.msra.mxu0 %v9567
    %9730 = vmatprep.subr.mxu0 0.0
    %9731 = vmatpush1.xpose.msra.mxu0 %v9570
    %9732 = vmatprep.subr.mxu0 0.0
    %9733 = vmatpush1.xpose.msra.mxu0 %v9573
    %9734 = vmatprep.subr.mxu0 0.0
    %9735 = vmatpush1.xpose.msra.mxu0 %v9576
    %9736 = vmatprep.subr.mxu0 0.0
    %9737 = vmatpush1.xpose.msra.mxu0 %v9579
    %9738 = vmatprep.subr.mxu0 0.0
    %9739 = vmatpush1.xpose.msra.mxu0 %v9582
    %9740 = vmatprep.subr.mxu0 0.0
    %9741 = vmatpush1.xpose.msra.mxu0 %v9585
    %9742 = vmatprep.subr.mxu0 0.0
    %9743 = vmatpush1.xpose.msra.mxu0 %v9588
    %9744 = vmatprep.subr.mxu0 0.0
    %9745 = vmatpush1.xpose.msra.mxu0 %v9591
    %9746 = vmatprep.mubr.f32.mxu0 0.0
    %9747 = vmatmul.mubr.f32.gmra.mrb[0].mxu0 %v9390
    %v9748 = vpop.f32.mrb[0].mxu0
    %v9749 = vadd.f32 0.0, %v9748
    %v9750 = vpop.f32.mrb[0].mxu0
    %v9751 = vadd.f32 0.0, %v9750
    %9752 = vmatprep.mubr.f32.mxu0 0.0
    %9753 = vmatmul.mubr.f32.gmra.mrb[0].mxu0 %v9393
    %v9754 = vpop.f32.mrb[0].mxu0
    %v9755 = vadd.f32 0.0, %v9754
    %v9756 = vpop.f32.mrb[0].mxu0
    %v9757 = vadd.f32 0.0, %v9756
    %9758 = vmatprep.mubr.f32.mxu0 0.0
    %9759 = vmatmul.mubr.f32.gmra.mrb[0].mxu0 %v9396
    %v9760 = vpop.f32.mrb[0].mxu0
    %v9761 = vadd.f32 0.0, %v9760
    %v9762 = vpop.f32.mrb[0].mxu0
    %v9763 = vadd.f32 0.0, %v9762
    %9764 = vmatprep.mubr.f32.mxu0 0.0
    %9765 = vmatmul.mubr.f32.gmra.mrb[0].mxu0 %v9399
    %v9766 = vpop.f32.mrb[0].mxu0
    %v9767 = vadd.f32 0.0, %v9766
    %v9768 = vpop.f32.mrb[0].mxu0
    %v9769 = vadd.f32 0.0, %v9768
    %9770 = vdwg.mxu0
    %v9771 = vadd.f32 %v9304, %v9660
    %v9772 = vadd.f32 %v9305, %v9662
    %v9773 = vadd.f32 %v9306, %v9749
    %v9774 = vadd.f32 %v9307, %v9751
    %v9775 = vadd.f32 %v9308, %v9666
    %v9776 = vadd.f32 %v9309, %v9668
    %v9777 = vadd.f32 %v9310, %v9755
    %v9778 = vadd.f32 %v9311, %v9757
    %v9779 = vadd.f32 %v9312, %v9672
    %v9780 = vadd.f32 %v9313, %v9674
    %v9781 = vadd.f32 %v9314, %v9761
    %v9782 = vadd.f32 %v9315, %v9763
    %v9783 = vadd.f32 %v9316, %v9678
    %v9784 = vadd.f32 %v9317, %v9680
    %v9785 = vadd.f32 %v9318, %v9767
    %v9786 = vadd.f32 %v9319, %v9769
    %s9787 = scalar_lea.vmem %s5, 160
    %v9788 = vld [vmem:[%s9787] sm:$0xff]
    %v9789 = vld [vmem:[%s9787 + $0x8] sm:$0xff]
    %v9790 = vld [vmem:[%s9787 + $0x10] sm:$0xff]
    %v9791 = vld [vmem:[%s9787 + $0x18] sm:$0xff]
    %v9792 = vld [vmem:[#allocation2 + $0x12] sm:$0xff]
    %v9793 = vld [vmem:[#allocation2 + $0x1a] sm:$0xff]
    %v9794 = vld [vmem:[#allocation2 + $0x22] sm:$0xff]
    %v9795 = vld [vmem:[#allocation2 + $0x2a] sm:$0xff]
    %v9796 = vld [vmem:[#allocation2 + $0x32] sm:$0xff]
    %v9797 = vld [vmem:[#allocation2 + $0x3a] sm:$0xff]
    %v9798 = vld [vmem:[#allocation2 + $0x42] sm:$0xff]
    %v9799 = vld [vmem:[#allocation2 + $0x4a] sm:$0xff]
    %v9800 = vld [vmem:[#allocation2 + $0x52] sm:$0xff]
    %v9801 = vld [vmem:[#allocation2 + $0x5a] sm:$0xff]
    %v9802 = vld [vmem:[#allocation2 + $0x62] sm:$0xff]
    %v9803 = vld [vmem:[#allocation2 + $0x6a] sm:$0xff]
    %v9804 = vld [vmem:[#allocation2 + $0x72] sm:$0xff]
    %v9805 = vld [vmem:[#allocation2 + $0x7a] sm:$0xff]
    %v9806 = vld [vmem:[#allocation2 + $0x82] sm:$0xff]
    %v9807 = vld [vmem:[#allocation2 + $0x8a] sm:$0xff]
    %v9808 = vld [vmem:[#allocation2 + $0x92] sm:$0xff]
    %v9809 = vld [vmem:[#allocation2 + $0x9a] sm:$0xff]
    %v9810 = vld [vmem:[#allocation2 + $0xa2] sm:$0xff]
    %v9811 = vld [vmem:[#allocation2 + $0xaa] sm:$0xff]
    %v9812 = vld [vmem:[#allocation2 + $0xb2] sm:$0xff]
    %v9813 = vld [vmem:[#allocation2 + $0xba] sm:$0xff]
    %v9814 = vld [vmem:[#allocation2 + $0xc2] sm:$0xff]
    %v9815 = vld [vmem:[#allocation2 + $0xca] sm:$0xff]
    %v9816 = vld [vmem:[#allocation2 + $0xd2] sm:$0xff]
    %v9817 = vld [vmem:[#allocation2 + $0xda] sm:$0xff]
    %v9818 = vld [vmem:[#allocation2 + $0xe2] sm:$0xff]
    %v9819 = vld [vmem:[#allocation2 + $0xea] sm:$0xff]
    %v9820 = vld [vmem:[#allocation2 + $0xf2] sm:$0xff]
    %v9821 = vld [vmem:[#allocation2 + $0xfa] sm:$0xff]
    %v9822 = vld [vmem:[#allocation2 + $0x102] sm:$0xff]
    %v9823 = vld [vmem:[#allocation2 + $0x10a] sm:$0xff]
    %v9824 = vld [vmem:[#allocation2 + $0x112] sm:$0xff]
    %v9825 = vld [vmem:[#allocation2 + $0x11a] sm:$0xff]
    %v9826 = vld [vmem:[#allocation2 + $0x122] sm:$0xff]
    %v9827 = vld [vmem:[#allocation2 + $0x12a] sm:$0xff]
    %v9828 = vld [vmem:[#allocation2 + $0x132] sm:$0xff]
    %v9829 = vld [vmem:[#allocation2 + $0x13a] sm:$0xff]
    %v9830 = vld [vmem:[#allocation2 + $0x142] sm:$0xff]
    %v9831 = vld [vmem:[#allocation2 + $0x14a] sm:$0xff]
    %v9832 = vld [vmem:[#allocation2 + $0x152] sm:$0xff]
    %v9833 = vld [vmem:[#allocation2 + $0x15a] sm:$0xff]
    %v9834 = vld [vmem:[#allocation2 + $0x162] sm:$0xff]
    %v9835 = vld [vmem:[#allocation2 + $0x16a] sm:$0xff]
    %v9836 = vld [vmem:[#allocation2 + $0x172] sm:$0xff]
    %v9837 = vld [vmem:[#allocation2 + $0x17a] sm:$0xff]
    %v9838 = vld [vmem:[#allocation2 + $0x182] sm:$0xff]
    %v9839 = vld [vmem:[#allocation2 + $0x18a] sm:$0xff]
    %v9840 = vld [vmem:[#allocation2 + $0x192] sm:$0xff]
    %v9841 = vld [vmem:[#allocation2 + $0x19a] sm:$0xff]
    %v9842 = vld [vmem:[#allocation2 + $0x1a2] sm:$0xff]
    %v9843 = vld [vmem:[#allocation2 + $0x1aa] sm:$0xff]
    %v9844 = vld [vmem:[#allocation2 + $0x1b2] sm:$0xff]
    %v9845 = vld [vmem:[#allocation2 + $0x1ba] sm:$0xff]
    %v9846 = vld [vmem:[#allocation2 + $0x1c2] sm:$0xff]
    %v9847 = vld [vmem:[#allocation2 + $0x1ca] sm:$0xff]
    %v9848 = vld [vmem:[#allocation2 + $0x1d2] sm:$0xff]
    %v9849 = vld [vmem:[#allocation2 + $0x1da] sm:$0xff]
    %v9850 = vld [vmem:[#allocation2 + $0x1e2] sm:$0xff]
    %v9851 = vld [vmem:[#allocation2 + $0x1ea] sm:$0xff]
    %v9852 = vld [vmem:[#allocation2 + $0x1f2] sm:$0xff]
    %v9853 = vld [vmem:[#allocation2 + $0x1fa] sm:$0xff]
    %v9854 = vld [vmem:[#allocation2 + $0x202] sm:$0xff]
    %v9855 = vld [vmem:[#allocation2 + $0x20a] sm:$0xff]
    %v9857 = vsel %vm6809, %v9788, 0
    %v9860 = vsel %vm6809, %v9789, 0
    %v9863 = vsel %vm6809, %v9790, 0
    %v9866 = vsel %vm6809, %v9791, 0
    %v9869 = vsel %vm6809, %v9792, 0
    %v9872 = vsel %vm6809, %v9793, 0
    %v9875 = vsel %vm6809, %v9794, 0
    %v9878 = vsel %vm6809, %v9795, 0
    %v9881 = vsel %vm6809, %v9796, 0
    %v9884 = vsel %vm6809, %v9797, 0
    %v9887 = vsel %vm6809, %v9798, 0
    %v9890 = vsel %vm6809, %v9799, 0
    %v9893 = vsel %vm6809, %v9800, 0
    %v9896 = vsel %vm6809, %v9801, 0
    %v9899 = vsel %vm6809, %v9802, 0
    %v9902 = vsel %vm6809, %v9803, 0
    %v9905 = vsel %vm6809, %v9804, 0
    %v9908 = vsel %vm6809, %v9805, 0
    %v9911 = vsel %vm6809, %v9806, 0
    %v9914 = vsel %vm6809, %v9807, 0
    %v9917 = vsel %vm6809, %v9808, 0
    %v9920 = vsel %vm6809, %v9809, 0
    %v9923 = vsel %vm6809, %v9810, 0
    %v9926 = vsel %vm6809, %v9811, 0
    %v9929 = vsel %vm6809, %v9812, 0
    %v9932 = vsel %vm6809, %v9813, 0
    %v9935 = vsel %vm6809, %v9814, 0
    %v9938 = vsel %vm6809, %v9815, 0
    %v9941 = vsel %vm6809, %v9816, 0
    %v9944 = vsel %vm6809, %v9817, 0
    %v9947 = vsel %vm6809, %v9818, 0
    %v9950 = vsel %vm6809, %v9819, 0
    %v9953 = vsel %vm6809, %v9820, 0
    %v9956 = vsel %vm6809, %v9821, 0
    %v9959 = vsel %vm6809, %v9822, 0
    %v9962 = vsel %vm6809, %v9823, 0
    %v9965 = vsel %vm6809, %v9824, 0
    %v9968 = vsel %vm6809, %v9825, 0
    %v9971 = vsel %vm6809, %v9826, 0
    %v9974 = vsel %vm6809, %v9827, 0
    %v9977 = vsel %vm6809, %v9828, 0
    %v9980 = vsel %vm6809, %v9829, 0
    %v9983 = vsel %vm6809, %v9830, 0
    %v9986 = vsel %vm6809, %v9831, 0
    %v9989 = vsel %vm6809, %v9832, 0
    %v9992 = vsel %vm6809, %v9833, 0
    %v9995 = vsel %vm6809, %v9834, 0
    %v9998 = vsel %vm6809, %v9835, 0
    %v10001 = vsel %vm6809, %v9836, 0
    %v10004 = vsel %vm6809, %v9837, 0
    %v10007 = vsel %vm6809, %v9838, 0
    %v10010 = vsel %vm6809, %v9839, 0
    %v10013 = vsel %vm6809, %v9840, 0
    %v10016 = vsel %vm6809, %v9841, 0
    %v10019 = vsel %vm6809, %v9842, 0
    %v10022 = vsel %vm6809, %v9843, 0
    %v10025 = vsel %vm6809, %v9844, 0
    %v10028 = vsel %vm6809, %v9845, 0
    %v10031 = vsel %vm6809, %v9846, 0
    %v10034 = vsel %vm6809, %v9847, 0
    %v10037 = vsel %vm6809, %v9848, 0
    %v10040 = vsel %vm6809, %v9849, 0
    %v10043 = vsel %vm6809, %v9850, 0
    %v10046 = vsel %vm6809, %v9851, 0
    %v10049 = vsel %vm6809, %v9852, 0
    %v10052 = vsel %vm6809, %v9853, 0
    %v10055 = vsel %vm6809, %v9854, 0
    %v10058 = vsel %vm6809, %v9855, 0
    %10060 = vmatprep.subr.mxu0 0.0
    %10061 = vmatpush1.xpose.msra.mxu0 %v9869
    %10062 = vmatprep.subr.mxu0 0.0
    %10063 = vmatpush1.xpose.msra.mxu0 %v9872
    %10064 = vmatprep.subr.mxu0 0.0
    %10065 = vmatpush1.xpose.msra.mxu0 %v9875
    %10066 = vmatprep.subr.mxu0 0.0
    %10067 = vmatpush1.xpose.msra.mxu0 %v9878
    %10068 = vmatprep.subr.mxu0 0.0
    %10069 = vmatpush1.xpose.msra.mxu0 %v9881
    %10070 = vmatprep.subr.mxu0 0.0
    %10071 = vmatpush1.xpose.msra.mxu0 %v9884
    %10072 = vmatprep.subr.mxu0 0.0
    %10073 = vmatpush1.xpose.msra.mxu0 %v9887
    %10074 = vmatprep.subr.mxu0 0.0
    %10075 = vmatpush1.xpose.msra.mxu0 %v9890
    %10076 = vmatprep.subr.mxu0 0.0
    %10077 = vmatpush1.xpose.msra.mxu0 %v9893
    %10078 = vmatprep.subr.mxu0 0.0
    %10079 = vmatpush1.xpose.msra.mxu0 %v9896
    %10080 = vmatprep.subr.mxu0 0.0
    %10081 = vmatpush1.xpose.msra.mxu0 %v9899
    %10082 = vmatprep.subr.mxu0 0.0
    %10083 = vmatpush1.xpose.msra.mxu0 %v9902
    %10084 = vmatprep.subr.mxu0 0.0
    %10085 = vmatpush1.xpose.msra.mxu0 %v9905
    %10086 = vmatprep.subr.mxu0 0.0
    %10087 = vmatpush1.xpose.msra.mxu0 %v9908
    %10088 = vmatprep.subr.mxu0 0.0
    %10089 = vmatpush1.xpose.msra.mxu0 %v9911
    %10090 = vmatprep.subr.mxu0 0.0
    %10091 = vmatpush1.xpose.msra.mxu0 %v9914
    %10092 = vmatprep.subr.mxu0 0.0
    %10093 = vmatpush1.xpose.msra.mxu0 %v9917
    %10094 = vmatprep.subr.mxu0 0.0
    %10095 = vmatpush1.xpose.msra.mxu0 %v9920
    %10096 = vmatprep.subr.mxu0 0.0
    %10097 = vmatpush1.xpose.msra.mxu0 %v9923
    %10098 = vmatprep.subr.mxu0 0.0
    %10099 = vmatpush1.xpose.msra.mxu0 %v9926
    %10100 = vmatprep.subr.mxu0 0.0
    %10101 = vmatpush1.xpose.msra.mxu0 %v9929
    %10102 = vmatprep.subr.mxu0 0.0
    %10103 = vmatpush1.xpose.msra.mxu0 %v9932
    %10104 = vmatprep.subr.mxu0 0.0
    %10105 = vmatpush1.xpose.msra.mxu0 %v9935
    %10106 = vmatprep.subr.mxu0 0.0
    %10107 = vmatpush1.xpose.msra.mxu0 %v9938
    %10108 = vmatprep.subr.mxu0 0.0
    %10109 = vmatpush1.xpose.msra.mxu0 %v9941
    %10110 = vmatprep.subr.mxu0 0.0
    %10111 = vmatpush1.xpose.msra.mxu0 %v9944
    %10112 = vmatprep.subr.mxu0 0.0
    %10113 = vmatpush1.xpose.msra.mxu0 %v9947
    %10114 = vmatprep.subr.mxu0 0.0
    %10115 = vmatpush1.xpose.msra.mxu0 %v9950
    %10116 = vmatprep.subr.mxu0 0.0
    %10117 = vmatpush1.xpose.msra.mxu0 %v9953
    %10118 = vmatprep.subr.mxu0 0.0
    %10119 = vmatpush1.xpose.msra.mxu0 %v9956
    %10120 = vmatprep.subr.mxu0 0.0
    %10121 = vmatpush1.xpose.msra.mxu0 %v9959
    %10122 = vmatprep.subr.mxu0 0.0
    %10123 = vmatpush1.xpose.msra.mxu0 %v9962
    %10124 = vmatprep.mubr.f32.mxu0 0.0
    %10125 = vmatmul.mubr.f32.gmra.mrb[0].mxu0 %v9857
    %v10126 = vpop.f32.mrb[0].mxu0
    %v10127 = vadd.f32 0.0, %v10126
    %v10128 = vpop.f32.mrb[0].mxu0
    %v10129 = vadd.f32 0.0, %v10128
    %10130 = vmatprep.mubr.f32.mxu0 0.0
    %10131 = vmatmul.mubr.f32.gmra.mrb[0].mxu0 %v9860
    %v10132 = vpop.f32.mrb[0].mxu0
    %v10133 = vadd.f32 0.0, %v10132
    %v10134 = vpop.f32.mrb[0].mxu0
    %v10135 = vadd.f32 0.0, %v10134
    %10136 = vmatprep.mubr.f32.mxu0 0.0
    %10137 = vmatmul.mubr.f32.gmra.mrb[0].mxu0 %v9863
    %v10138 = vpop.f32.mrb[0].mxu0
    %v10139 = vadd.f32 0.0, %v10138
    %v10140 = vpop.f32.mrb[0].mxu0
    %v10141 = vadd.f32 0.0, %v10140
    %10142 = vmatprep.mubr.f32.mxu0 0.0
    %10143 = vmatmul.mubr.f32.gmra.mrb[0].mxu0 %v9866
    %v10144 = vpop.f32.mrb[0].mxu0
    %v10145 = vadd.f32 0.0, %v10144
    %v10146 = vpop.f32.mrb[0].mxu0
    %v10147 = vadd.f32 0.0, %v10146
    %10148 = vdwg.mxu0
    %10149 = vmatprep.subr.mxu0 0.0
    %10150 = vmatpush1.xpose.msra.mxu0 %v9965
    %10151 = vmatprep.subr.mxu0 0.0
    %10152 = vmatpush1.xpose.msra.mxu0 %v9968
    %10153 = vmatprep.subr.mxu0 0.0
    %10154 = vmatpush1.xpose.msra.mxu0 %v9971
    %10155 = vmatprep.subr.mxu0 0.0
    %10156 = vmatpush1.xpose.msra.mxu0 %v9974
    %10157 = vmatprep.subr.mxu0 0.0
    %10158 = vmatpush1.xpose.msra.mxu0 %v9977
    %10159 = vmatprep.subr.mxu0 0.0
    %10160 = vmatpush1.xpose.msra.mxu0 %v9980
    %10161 = vmatprep.subr.mxu0 0.0
    %10162 = vmatpush1.xpose.msra.mxu0 %v9983
    %10163 = vmatprep.subr.mxu0 0.0
    %10164 = vmatpush1.xpose.msra.mxu0 %v9986
    %10165 = vmatprep.subr.mxu0 0.0
    %10166 = vmatpush1.xpose.msra.mxu0 %v9989
    %10167 = vmatprep.subr.mxu0 0.0
    %10168 = vmatpush1.xpose.msra.mxu0 %v9992
    %10169 = vmatprep.subr.mxu0 0.0
    %10170 = vmatpush1.xpose.msra.mxu0 %v9995
    %10171 = vmatprep.subr.mxu0 0.0
    %10172 = vmatpush1.xpose.msra.mxu0 %v9998
    %10173 = vmatprep.subr.mxu0 0.0
    %10174 = vmatpush1.xpose.msra.mxu0 %v10001
    %10175 = vmatprep.subr.mxu0 0.0
    %10176 = vmatpush1.xpose.msra.mxu0 %v10004
    %10177 = vmatprep.subr.mxu0 0.0
    %10178 = vmatpush1.xpose.msra.mxu0 %v10007
    %10179 = vmatprep.subr.mxu0 0.0
    %10180 = vmatpush1.xpose.msra.mxu0 %v10010
    %10181 = vmatprep.subr.mxu0 0.0
    %10182 = vmatpush1.xpose.msra.mxu0 %v10013
    %10183 = vmatprep.subr.mxu0 0.0
    %10184 = vmatpush1.xpose.msra.mxu0 %v10016
    %10185 = vmatprep.subr.mxu0 0.0
    %10186 = vmatpush1.xpose.msra.mxu0 %v10019
    %10187 = vmatprep.subr.mxu0 0.0
    %10188 = vmatpush1.xpose.msra.mxu0 %v10022
    %10189 = vmatprep.subr.mxu0 0.0
    %10190 = vmatpush1.xpose.msra.mxu0 %v10025
    %10191 = vmatprep.subr.mxu0 0.0
    %10192 = vmatpush1.xpose.msra.mxu0 %v10028
    %10193 = vmatprep.subr.mxu0 0.0
    %10194 = vmatpush1.xpose.msra.mxu0 %v10031
    %10195 = vmatprep.subr.mxu0 0.0
    %10196 = vmatpush1.xpose.msra.mxu0 %v10034
    %10197 = vmatprep.subr.mxu0 0.0
    %10198 = vmatpush1.xpose.msra.mxu0 %v10037
    %10199 = vmatprep.subr.mxu0 0.0
    %10200 = vmatpush1.xpose.msra.mxu0 %v10040
    %10201 = vmatprep.subr.mxu0 0.0
    %10202 = vmatpush1.xpose.msra.mxu0 %v10043
    %10203 = vmatprep.subr.mxu0 0.0
    %10204 = vmatpush1.xpose.msra.mxu0 %v10046
    %10205 = vmatprep.subr.mxu0 0.0
    %10206 = vmatpush1.xpose.msra.mxu0 %v10049
    %10207 = vmatprep.subr.mxu0 0.0
    %10208 = vmatpush1.xpose.msra.mxu0 %v10052
    %10209 = vmatprep.subr.mxu0 0.0
    %10210 = vmatpush1.xpose.msra.mxu0 %v10055
    %10211 = vmatprep.subr.mxu0 0.0
    %10212 = vmatpush1.xpose.msra.mxu0 %v10058
    %10213 = vmatprep.mubr.f32.mxu0 0.0
    %10214 = vmatmul.mubr.f32.gmra.mrb[0].mxu0 %v9857
    %v10215 = vpop.f32.mrb[0].mxu0
    %v10216 = vadd.f32 0.0, %v10215
    %v10217 = vpop.f32.mrb[0].mxu0
    %v10218 = vadd.f32 0.0, %v10217
    %10219 = vmatprep.mubr.f32.mxu0 0.0
    %10220 = vmatmul.mubr.f32.gmra.mrb[0].mxu0 %v9860
    %v10221 = vpop.f32.mrb[0].mxu0
    %v10222 = vadd.f32 0.0, %v10221
    %v10223 = vpop.f32.mrb[0].mxu0
    %v10224 = vadd.f32 0.0, %v10223
    %10225 = vmatprep.mubr.f32.mxu0 0.0
    %10226 = vmatmul.mubr.f32.gmra.mrb[0].mxu0 %v9863
    %v10227 = vpop.f32.mrb[0].mxu0
    %v10228 = vadd.f32 0.0, %v10227
    %v10229 = vpop.f32.mrb[0].mxu0
    %v10230 = vadd.f32 0.0, %v10229
    %10231 = vmatprep.mubr.f32.mxu0 0.0
    %10232 = vmatmul.mubr.f32.gmra.mrb[0].mxu0 %v9866
    %v10233 = vpop.f32.mrb[0].mxu0
    %v10234 = vadd.f32 0.0, %v10233
    %v10235 = vpop.f32.mrb[0].mxu0
    %v10236 = vadd.f32 0.0, %v10235
    %10237 = vdwg.mxu0
    %v10238 = vadd.f32 %v9771, %v10127
    %v10239 = vadd.f32 %v9772, %v10129
    %v10240 = vadd.f32 %v9773, %v10216
    %v10241 = vadd.f32 %v9774, %v10218
    %v10242 = vadd.f32 %v9775, %v10133
    %v10243 = vadd.f32 %v9776, %v10135
    %v10244 = vadd.f32 %v9777, %v10222
    %v10245 = vadd.f32 %v9778, %v10224
    %v10246 = vadd.f32 %v9779, %v10139
    %v10247 = vadd.f32 %v9780, %v10141
    %v10248 = vadd.f32 %v9781, %v10228
    %v10249 = vadd.f32 %v9782, %v10230
    %v10250 = vadd.f32 %v9783, %v10145
    %v10251 = vadd.f32 %v9784, %v10147
    %v10252 = vadd.f32 %v9785, %v10234
    %v10253 = vadd.f32 %v9786, %v10236
    %s10254 = scalar_lea.vmem %s5, 192
    %v10255 = vld [vmem:[%s10254] sm:$0xff]
    %v10256 = vld [vmem:[%s10254 + $0x8] sm:$0xff]
    %v10257 = vld [vmem:[%s10254 + $0x10] sm:$0xff]
    %v10258 = vld [vmem:[%s10254 + $0x18] sm:$0xff]
    %v10259 = vld [vmem:[#allocation2 + $0x20] sm:$0xff]
    %v10260 = vld [vmem:[#allocation2 + $0x28] sm:$0xff]
    %v10261 = vld [vmem:[#allocation2 + $0x30] sm:$0xff]
    %v10262 = vld [vmem:[#allocation2 + $0x38] sm:$0xff]
    %v10263 = vld [vmem:[#allocation2 + $0x40] sm:$0xff]
    %v10264 = vld [vmem:[#allocation2 + $0x48] sm:$0xff]
    %v10265 = vld [vmem:[#allocation2 + $0x50] sm:$0xff]
    %v10266 = vld [vmem:[#allocation2 + $0x58] sm:$0xff]
    %v10267 = vld [vmem:[#allocation2 + $0x60] sm:$0xff]
    %v10268 = vld [vmem:[#allocation2 + $0x68] sm:$0xff]
    %v10269 = vld [vmem:[#allocation2 + $0x70] sm:$0xff]
    %v10270 = vld [vmem:[#allocation2 + $0x78] sm:$0xff]
    %v10271 = vld [vmem:[#allocation2 + $0x80] sm:$0xff]
    %v10272 = vld [vmem:[#allocation2 + $0x88] sm:$0xff]
    %v10273 = vld [vmem:[#allocation2 + $0x90] sm:$0xff]
    %v10274 = vld [vmem:[#allocation2 + $0x98] sm:$0xff]
    %v10275 = vld [vmem:[#allocation2 + $0xa0] sm:$0xff]
    %v10276 = vld [vmem:[#allocation2 + $0xa8] sm:$0xff]
    %v10277 = vld [vmem:[#allocation2 + $0xb0] sm:$0xff]
    %v10278 = vld [vmem:[#allocation2 + $0xb8] sm:$0xff]
    %v10279 = vld [vmem:[#allocation2 + $0xc0] sm:$0xff]
    %v10280 = vld [vmem:[#allocation2 + $0xc8] sm:$0xff]
    %v10281 = vld [vmem:[#allocation2 + $0xd0] sm:$0xff]
    %v10282 = vld [vmem:[#allocation2 + $0xd8] sm:$0xff]
    %v10283 = vld [vmem:[#allocation2 + $0xe0] sm:$0xff]
    %v10284 = vld [vmem:[#allocation2 + $0xe8] sm:$0xff]
    %v10285 = vld [vmem:[#allocation2 + $0xf0] sm:$0xff]
    %v10286 = vld [vmem:[#allocation2 + $0xf8] sm:$0xff]
    %v10287 = vld [vmem:[#allocation2 + $0x100] sm:$0xff]
    %v10288 = vld [vmem:[#allocation2 + $0x108] sm:$0xff]
    %v10289 = vld [vmem:[#allocation2 + $0x110] sm:$0xff]
    %v10290 = vld [vmem:[#allocation2 + $0x118] sm:$0xff]
    %v10291 = vld [vmem:[#allocation2 + $0x120] sm:$0xff]
    %v10292 = vld [vmem:[#allocation2 + $0x128] sm:$0xff]
    %v10293 = vld [vmem:[#allocation2 + $0x130] sm:$0xff]
    %v10294 = vld [vmem:[#allocation2 + $0x138] sm:$0xff]
    %v10295 = vld [vmem:[#allocation2 + $0x140] sm:$0xff]
    %v10296 = vld [vmem:[#allocation2 + $0x148] sm:$0xff]
    %v10297 = vld [vmem:[#allocation2 + $0x150] sm:$0xff]
    %v10298 = vld [vmem:[#allocation2 + $0x158] sm:$0xff]
    %v10299 = vld [vmem:[#allocation2 + $0x160] sm:$0xff]
    %v10300 = vld [vmem:[#allocation2 + $0x168] sm:$0xff]
    %v10301 = vld [vmem:[#allocation2 + $0x170] sm:$0xff]
    %v10302 = vld [vmem:[#allocation2 + $0x178] sm:$0xff]
    %v10303 = vld [vmem:[#allocation2 + $0x180] sm:$0xff]
    %v10304 = vld [vmem:[#allocation2 + $0x188] sm:$0xff]
    %v10305 = vld [vmem:[#allocation2 + $0x190] sm:$0xff]
    %v10306 = vld [vmem:[#allocation2 + $0x198] sm:$0xff]
    %v10307 = vld [vmem:[#allocation2 + $0x1a0] sm:$0xff]
    %v10308 = vld [vmem:[#allocation2 + $0x1a8] sm:$0xff]
    %v10309 = vld [vmem:[#allocation2 + $0x1b0] sm:$0xff]
    %v10310 = vld [vmem:[#allocation2 + $0x1b8] sm:$0xff]
    %v10311 = vld [vmem:[#allocation2 + $0x1c0] sm:$0xff]
    %v10312 = vld [vmem:[#allocation2 + $0x1c8] sm:$0xff]
    %v10313 = vld [vmem:[#allocation2 + $0x1d0] sm:$0xff]
    %v10314 = vld [vmem:[#allocation2 + $0x1d8] sm:$0xff]
    %v10315 = vld [vmem:[#allocation2 + $0x1e0] sm:$0xff]
    %v10316 = vld [vmem:[#allocation2 + $0x1e8] sm:$0xff]
    %v10317 = vld [vmem:[#allocation2 + $0x1f0] sm:$0xff]
    %v10318 = vld [vmem:[#allocation2 + $0x1f8] sm:$0xff]
    %v10319 = vld [vmem:[#allocation2 + $0x200] sm:$0xff]
    %v10320 = vld [vmem:[#allocation2 + $0x208] sm:$0xff]
    %v10321 = vld [vmem:[#allocation2 + $0x210] sm:$0xff]
    %v10322 = vld [vmem:[#allocation2 + $0x218] sm:$0xff]
    %v10324 = vsel %vm6809, %v10255, 0
    %v10327 = vsel %vm6809, %v10256, 0
    %v10330 = vsel %vm6809, %v10257, 0
    %v10333 = vsel %vm6809, %v10258, 0
    %v10336 = vsel %vm6809, %v10259, 0
    %v10339 = vsel %vm6809, %v10260, 0
    %v10342 = vsel %vm6809, %v10261, 0
    %v10345 = vsel %vm6809, %v10262, 0
    %v10348 = vsel %vm6809, %v10263, 0
    %v10351 = vsel %vm6809, %v10264, 0
    %v10354 = vsel %vm6809, %v10265, 0
    %v10357 = vsel %vm6809, %v10266, 0
    %v10360 = vsel %vm6809, %v10267, 0
    %v10363 = vsel %vm6809, %v10268, 0
    %v10366 = vsel %vm6809, %v10269, 0
    %v10369 = vsel %vm6809, %v10270, 0
    %v10372 = vsel %vm6809, %v10271, 0
    %v10375 = vsel %vm6809, %v10272, 0
    %v10378 = vsel %vm6809, %v10273, 0
    %v10381 = vsel %vm6809, %v10274, 0
    %v10384 = vsel %vm6809, %v10275, 0
    %v10387 = vsel %vm6809, %v10276, 0
    %v10390 = vsel %vm6809, %v10277, 0
    %v10393 = vsel %vm6809, %v10278, 0
    %v10396 = vsel %vm6809, %v10279, 0
    %v10399 = vsel %vm6809, %v10280, 0
    %v10402 = vsel %vm6809, %v10281, 0
    %v10405 = vsel %vm6809, %v10282, 0
    %v10408 = vsel %vm6809, %v10283, 0
    %v10411 = vsel %vm6809, %v10284, 0
    %v10414 = vsel %vm6809, %v10285, 0
    %v10417 = vsel %vm6809, %v10286, 0
    %v10420 = vsel %vm6809, %v10287, 0
    %v10423 = vsel %vm6809, %v10288, 0
    %v10426 = vsel %vm6809, %v10289, 0
    %v10429 = vsel %vm6809, %v10290, 0
    %v10432 = vsel %vm6809, %v10291, 0
    %v10435 = vsel %vm6809, %v10292, 0
    %v10438 = vsel %vm6809, %v10293, 0
    %v10441 = vsel %vm6809, %v10294, 0
    %v10444 = vsel %vm6809, %v10295, 0
    %v10447 = vsel %vm6809, %v10296, 0
    %v10450 = vsel %vm6809, %v10297, 0
    %v10453 = vsel %vm6809, %v10298, 0
    %v10456 = vsel %vm6809, %v10299, 0
    %v10459 = vsel %vm6809, %v10300, 0
    %v10462 = vsel %vm6809, %v10301, 0
    %v10465 = vsel %vm6809, %v10302, 0
    %v10468 = vsel %vm6809, %v10303, 0
    %v10471 = vsel %vm6809, %v10304, 0
    %v10474 = vsel %vm6809, %v10305, 0
    %v10477 = vsel %vm6809, %v10306, 0
    %v10480 = vsel %vm6809, %v10307, 0
    %v10483 = vsel %vm6809, %v10308, 0
    %v10486 = vsel %vm6809, %v10309, 0
    %v10489 = vsel %vm6809, %v10310, 0
    %v10492 = vsel %vm6809, %v10311, 0
    %v10495 = vsel %vm6809, %v10312, 0
    %v10498 = vsel %vm6809, %v10313, 0
    %v10501 = vsel %vm6809, %v10314, 0
    %v10504 = vsel %vm6809, %v10315, 0
    %v10507 = vsel %vm6809, %v10316, 0
    %v10510 = vsel %vm6809, %v10317, 0
    %v10513 = vsel %vm6809, %v10318, 0
    %v10516 = vsel %vm6809, %v10319, 0
    %v10519 = vsel %vm6809, %v10320, 0
    %v10522 = vsel %vm6809, %v10321, 0
    %v10525 = vsel %vm6809, %v10322, 0
    %10527 = vmatprep.subr.mxu0 0.0
    %10528 = vmatpush1.xpose.msra.mxu0 %v10336
    %10529 = vmatprep.subr.mxu0 0.0
    %10530 = vmatpush1.xpose.msra.mxu0 %v10339
    %10531 = vmatprep.subr.mxu0 0.0
    %10532 = vmatpush1.xpose.msra.mxu0 %v10342
    %10533 = vmatprep.subr.mxu0 0.0
    %10534 = vmatpush1.xpose.msra.mxu0 %v10345
    %10535 = vmatprep.subr.mxu0 0.0
    %10536 = vmatpush1.xpose.msra.mxu0 %v10348
    %10537 = vmatprep.subr.mxu0 0.0
    %10538 = vmatpush1.xpose.msra.mxu0 %v10351
    %10539 = vmatprep.subr.mxu0 0.0
    %10540 = vmatpush1.xpose.msra.mxu0 %v10354
    %10541 = vmatprep.subr.mxu0 0.0
    %10542 = vmatpush1.xpose.msra.mxu0 %v10357
    %10543 = vmatprep.subr.mxu0 0.0
    %10544 = vmatpush1.xpose.msra.mxu0 %v10360
    %10545 = vmatprep.subr.mxu0 0.0
    %10546 = vmatpush1.xpose.msra.mxu0 %v10363
    %10547 = vmatprep.subr.mxu0 0.0
    %10548 = vmatpush1.xpose.msra.mxu0 %v10366
    %10549 = vmatprep.subr.mxu0 0.0
    %10550 = vmatpush1.xpose.msra.mxu0 %v10369
    %10551 = vmatprep.subr.mxu0 0.0
    %10552 = vmatpush1.xpose.msra.mxu0 %v10372
    %10553 = vmatprep.subr.mxu0 0.0
    %10554 = vmatpush1.xpose.msra.mxu0 %v10375
    %10555 = vmatprep.subr.mxu0 0.0
    %10556 = vmatpush1.xpose.msra.mxu0 %v10378
    %10557 = vmatprep.subr.mxu0 0.0
    %10558 = vmatpush1.xpose.msra.mxu0 %v10381
    %10559 = vmatprep.subr.mxu0 0.0
    %10560 = vmatpush1.xpose.msra.mxu0 %v10384
    %10561 = vmatprep.subr.mxu0 0.0
    %10562 = vmatpush1.xpose.msra.mxu0 %v10387
    %10563 = vmatprep.subr.mxu0 0.0
    %10564 = vmatpush1.xpose.msra.mxu0 %v10390
    %10565 = vmatprep.subr.mxu0 0.0
    %10566 = vmatpush1.xpose.msra.mxu0 %v10393
    %10567 = vmatprep.subr.mxu0 0.0
    %10568 = vmatpush1.xpose.msra.mxu0 %v10396
    %10569 = vmatprep.subr.mxu0 0.0
    %10570 = vmatpush1.xpose.msra.mxu0 %v10399
    %10571 = vmatprep.subr.mxu0 0.0
    %10572 = vmatpush1.xpose.msra.mxu0 %v10402
    %10573 = vmatprep.subr.mxu0 0.0
    %10574 = vmatpush1.xpose.msra.mxu0 %v10405
    %10575 = vmatprep.subr.mxu0 0.0
    %10576 = vmatpush1.xpose.msra.mxu0 %v10408
    %10577 = vmatprep.subr.mxu0 0.0
    %10578 = vmatpush1.xpose.msra.mxu0 %v10411
    %10579 = vmatprep.subr.mxu0 0.0
    %10580 = vmatpush1.xpose.msra.mxu0 %v10414
    %10581 = vmatprep.subr.mxu0 0.0
    %10582 = vmatpush1.xpose.msra.mxu0 %v10417
    %10583 = vmatprep.subr.mxu0 0.0
    %10584 = vmatpush1.xpose.msra.mxu0 %v10420
    %10585 = vmatprep.subr.mxu0 0.0
    %10586 = vmatpush1.xpose.msra.mxu0 %v10423
    %10587 = vmatprep.subr.mxu0 0.0
    %10588 = vmatpush1.xpose.msra.mxu0 %v10426
    %10589 = vmatprep.subr.mxu0 0.0
    %10590 = vmatpush1.xpose.msra.mxu0 %v10429
    %10591 = vmatprep.mubr.f32.mxu0 0.0
    %10592 = vmatmul.mubr.f32.gmra.mrb[0].mxu0 %v10324
    %v10593 = vpop.f32.mrb[0].mxu0
    %v10594 = vadd.f32 0.0, %v10593
    %v10595 = vpop.f32.mrb[0].mxu0
    %v10596 = vadd.f32 0.0, %v10595
    %10597 = vmatprep.mubr.f32.mxu0 0.0
    %10598 = vmatmul.mubr.f32.gmra.mrb[0].mxu0 %v10327
    %v10599 = vpop.f32.mrb[0].mxu0
    %v10600 = vadd.f32 0.0, %v10599
    %v10601 = vpop.f32.mrb[0].mxu0
    %v10602 = vadd.f32 0.0, %v10601
    %10603 = vmatprep.mubr.f32.mxu0 0.0
    %10604 = vmatmul.mubr.f32.gmra.mrb[0].mxu0 %v10330
    %v10605 = vpop.f32.mrb[0].mxu0
    %v10606 = vadd.f32 0.0, %v10605
    %v10607 = vpop.f32.mrb[0].mxu0
    %v10608 = vadd.f32 0.0, %v10607
    %10609 = vmatprep.mubr.f32.mxu0 0.0
    %10610 = vmatmul.mubr.f32.gmra.mrb[0].mxu0 %v10333
    %v10611 = vpop.f32.mrb[0].mxu0
    %v10612 = vadd.f32 0.0, %v10611
    %v10613 = vpop.f32.mrb[0].mxu0
    %v10614 = vadd.f32 0.0, %v10613
    %10615 = vdwg.mxu0
    %10616 = vmatprep.subr.mxu0 0.0
    %10617 = vmatpush1.xpose.msra.mxu0 %v10432
    %10618 = vmatprep.subr.mxu0 0.0
    %10619 = vmatpush1.xpose.msra.mxu0 %v10435
    %10620 = vmatprep.subr.mxu0 0.0
    %10621 = vmatpush1.xpose.msra.mxu0 %v10438
    %10622 = vmatprep.subr.mxu0 0.0
    %10623 = vmatpush1.xpose.msra.mxu0 %v10441
    %10624 = vmatprep.subr.mxu0 0.0
    %10625 = vmatpush1.xpose.msra.mxu0 %v10444
    %10626 = vmatprep.subr.mxu0 0.0
    %10627 = vmatpush1.xpose.msra.mxu0 %v10447
    %10628 = vmatprep.subr.mxu0 0.0
    %10629 = vmatpush1.xpose.msra.mxu0 %v10450
    %10630 = vmatprep.subr.mxu0 0.0
    %10631 = vmatpush1.xpose.msra.mxu0 %v10453
    %10632 = vmatprep.subr.mxu0 0.0
    %10633 = vmatpush1.xpose.msra.mxu0 %v10456
    %10634 = vmatprep.subr.mxu0 0.0
    %10635 = vmatpush1.xpose.msra.mxu0 %v10459
    %10636 = vmatprep.subr.mxu0 0.0
    %10637 = vmatpush1.xpose.msra.mxu0 %v10462
    %10638 = vmatprep.subr.mxu0 0.0
    %10639 = vmatpush1.xpose.msra.mxu0 %v10465
    %10640 = vmatprep.subr.mxu0 0.0
    %10641 = vmatpush1.xpose.msra.mxu0 %v10468
    %10642 = vmatprep.subr.mxu0 0.0
    %10643 = vmatpush1.xpose.msra.mxu0 %v10471
    %10644 = vmatprep.subr.mxu0 0.0
    %10645 = vmatpush1.xpose.msra.mxu0 %v10474
    %10646 = vmatprep.subr.mxu0 0.0
    %10647 = vmatpush1.xpose.msra.mxu0 %v10477
    %10648 = vmatprep.subr.mxu0 0.0
    %10649 = vmatpush1.xpose.msra.mxu0 %v10480
    %10650 = vmatprep.subr.mxu0 0.0
    %10651 = vmatpush1.xpose.msra.mxu0 %v10483
    %10652 = vmatprep.subr.mxu0 0.0
    %10653 = vmatpush1.xpose.msra.mxu0 %v10486
    %10654 = vmatprep.subr.mxu0 0.0
    %10655 = vmatpush1.xpose.msra.mxu0 %v10489
    %10656 = vmatprep.subr.mxu0 0.0
    %10657 = vmatpush1.xpose.msra.mxu0 %v10492
    %10658 = vmatprep.subr.mxu0 0.0
    %10659 = vmatpush1.xpose.msra.mxu0 %v10495
    %10660 = vmatprep.subr.mxu0 0.0
    %10661 = vmatpush1.xpose.msra.mxu0 %v10498
    %10662 = vmatprep.subr.mxu0 0.0
    %10663 = vmatpush1.xpose.msra.mxu0 %v10501
    %10664 = vmatprep.subr.mxu0 0.0
    %10665 = vmatpush1.xpose.msra.mxu0 %v10504
    %10666 = vmatprep.subr.mxu0 0.0
    %10667 = vmatpush1.xpose.msra.mxu0 %v10507
    %10668 = vmatprep.subr.mxu0 0.0
    %10669 = vmatpush1.xpose.msra.mxu0 %v10510
    %10670 = vmatprep.subr.mxu0 0.0
    %10671 = vmatpush1.xpose.msra.mxu0 %v10513
    %10672 = vmatprep.subr.mxu0 0.0
    %10673 = vmatpush1.xpose.msra.mxu0 %v10516
    %10674 = vmatprep.subr.mxu0 0.0
    %10675 = vmatpush1.xpose.msra.mxu0 %v10519
    %10676 = vmatprep.subr.mxu0 0.0
    %10677 = vmatpush1.xpose.msra.mxu0 %v10522
    %10678 = vmatprep.subr.mxu0 0.0
    %10679 = vmatpush1.xpose.msra.mxu0 %v10525
    %10680 = vmatprep.mubr.f32.mxu0 0.0
    %10681 = vmatmul.mubr.f32.gmra.mrb[0].mxu0 %v10324
    %v10682 = vpop.f32.mrb[0].mxu0
    %v10683 = vadd.f32 0.0, %v10682
    %v10684 = vpop.f32.mrb[0].mxu0
    %v10685 = vadd.f32 0.0, %v10684
    %10686 = vmatprep.mubr.f32.mxu0 0.0
    %10687 = vmatmul.mubr.f32.gmra.mrb[0].mxu0 %v10327
    %v10688 = vpop.f32.mrb[0].mxu0
    %v10689 = vadd.f32 0.0, %v10688
    %v10690 = vpop.f32.mrb[0].mxu0
    %v10691 = vadd.f32 0.0, %v10690
    %10692 = vmatprep.mubr.f32.mxu0 0.0
    %10693 = vmatmul.mubr.f32.gmra.mrb[0].mxu0 %v10330
    %v10694 = vpop.f32.mrb[0].mxu0
    %v10695 = vadd.f32 0.0, %v10694
    %v10696 = vpop.f32.mrb[0].mxu0
    %v10697 = vadd.f32 0.0, %v10696
    %10698 = vmatprep.mubr.f32.mxu0 0.0
    %10699 = vmatmul.mubr.f32.gmra.mrb[0].mxu0 %v10333
    %v10700 = vpop.f32.mrb[0].mxu0
    %v10701 = vadd.f32 0.0, %v10700
    %v10702 = vpop.f32.mrb[0].mxu0
    %v10703 = vadd.f32 0.0, %v10702
    %10704 = vdwg.mxu0
    %v10705 = vadd.f32 %v10238, %v10594
    %v10706 = vadd.f32 %v10239, %v10596
    %v10707 = vadd.f32 %v10240, %v10683
    %v10708 = vadd.f32 %v10241, %v10685
    %v10709 = vadd.f32 %v10242, %v10600
    %v10710 = vadd.f32 %v10243, %v10602
    %v10711 = vadd.f32 %v10244, %v10689
    %v10712 = vadd.f32 %v10245, %v10691
    %v10713 = vadd.f32 %v10246, %v10606
    %v10714 = vadd.f32 %v10247, %v10608
    %v10715 = vadd.f32 %v10248, %v10695
    %v10716 = vadd.f32 %v10249, %v10697
    %v10717 = vadd.f32 %v10250, %v10612
    %v10718 = vadd.f32 %v10251, %v10614
    %v10719 = vadd.f32 %v10252, %v10701
    %v10720 = vadd.f32 %v10253, %v10703
    %s10721 = scalar_lea.vmem %s5, 224
    %v10722 = vld [vmem:[%s10721] sm:$0xff]
    %v10723 = vld [vmem:[%s10721 + $0x8] sm:$0xff]
    %v10724 = vld [vmem:[%s10721 + $0x10] sm:$0xff]
    %v10725 = vld [vmem:[%s10721 + $0x18] sm:$0xff]
    %v10726 = vld [vmem:[#allocation2 + $0x21] sm:$0xff]
    %v10727 = vld [vmem:[#allocation2 + $0x29] sm:$0xff]
    %v10728 = vld [vmem:[#allocation2 + $0x31] sm:$0xff]
    %v10729 = vld [vmem:[#allocation2 + $0x39] sm:$0xff]
    %v10730 = vld [vmem:[#allocation2 + $0x41] sm:$0xff]
    %v10731 = vld [vmem:[#allocation2 + $0x49] sm:$0xff]
    %v10732 = vld [vmem:[#allocation2 + $0x51] sm:$0xff]
    %v10733 = vld [vmem:[#allocation2 + $0x59] sm:$0xff]
    %v10734 = vld [vmem:[#allocation2 + $0x61] sm:$0xff]
    %v10735 = vld [vmem:[#allocation2 + $0x69] sm:$0xff]
    %v10736 = vld [vmem:[#allocation2 + $0x71] sm:$0xff]
    %v10737 = vld [vmem:[#allocation2 + $0x79] sm:$0xff]
    %v10738 = vld [vmem:[#allocation2 + $0x81] sm:$0xff]
    %v10739 = vld [vmem:[#allocation2 + $0x89] sm:$0xff]
    %v10740 = vld [vmem:[#allocation2 + $0x91] sm:$0xff]
    %v10741 = vld [vmem:[#allocation2 + $0x99] sm:$0xff]
    %v10742 = vld [vmem:[#allocation2 + $0xa1] sm:$0xff]
    %v10743 = vld [vmem:[#allocation2 + $0xa9] sm:$0xff]
    %v10744 = vld [vmem:[#allocation2 + $0xb1] sm:$0xff]
    %v10745 = vld [vmem:[#allocation2 + $0xb9] sm:$0xff]
    %v10746 = vld [vmem:[#allocation2 + $0xc1] sm:$0xff]
    %v10747 = vld [vmem:[#allocation2 + $0xc9] sm:$0xff]
    %v10748 = vld [vmem:[#allocation2 + $0xd1] sm:$0xff]
    %v10749 = vld [vmem:[#allocation2 + $0xd9] sm:$0xff]
    %v10750 = vld [vmem:[#allocation2 + $0xe1] sm:$0xff]
    %v10751 = vld [vmem:[#allocation2 + $0xe9] sm:$0xff]
    %v10752 = vld [vmem:[#allocation2 + $0xf1] sm:$0xff]
    %v10753 = vld [vmem:[#allocation2 + $0xf9] sm:$0xff]
    %v10754 = vld [vmem:[#allocation2 + $0x101] sm:$0xff]
    %v10755 = vld [vmem:[#allocation2 + $0x109] sm:$0xff]
    %v10756 = vld [vmem:[#allocation2 + $0x111] sm:$0xff]
    %v10757 = vld [vmem:[#allocation2 + $0x119] sm:$0xff]
    %v10758 = vld [vmem:[#allocation2 + $0x121] sm:$0xff]
    %v10759 = vld [vmem:[#allocation2 + $0x129] sm:$0xff]
    %v10760 = vld [vmem:[#allocation2 + $0x131] sm:$0xff]
    %v10761 = vld [vmem:[#allocation2 + $0x139] sm:$0xff]
    %v10762 = vld [vmem:[#allocation2 + $0x141] sm:$0xff]
    %v10763 = vld [vmem:[#allocation2 + $0x149] sm:$0xff]
    %v10764 = vld [vmem:[#allocation2 + $0x151] sm:$0xff]
    %v10765 = vld [vmem:[#allocation2 + $0x159] sm:$0xff]
    %v10766 = vld [vmem:[#allocation2 + $0x161] sm:$0xff]
    %v10767 = vld [vmem:[#allocation2 + $0x169] sm:$0xff]
    %v10768 = vld [vmem:[#allocation2 + $0x171] sm:$0xff]
    %v10769 = vld [vmem:[#allocation2 + $0x179] sm:$0xff]
    %v10770 = vld [vmem:[#allocation2 + $0x181] sm:$0xff]
    %v10771 = vld [vmem:[#allocation2 + $0x189] sm:$0xff]
    %v10772 = vld [vmem:[#allocation2 + $0x191] sm:$0xff]
    %v10773 = vld [vmem:[#allocation2 + $0x199] sm:$0xff]
    %v10774 = vld [vmem:[#allocation2 + $0x1a1] sm:$0xff]
    %v10775 = vld [vmem:[#allocation2 + $0x1a9] sm:$0xff]
    %v10776 = vld [vmem:[#allocation2 + $0x1b1] sm:$0xff]
    %v10777 = vld [vmem:[#allocation2 + $0x1b9] sm:$0xff]
    %v10778 = vld [vmem:[#allocation2 + $0x1c1] sm:$0xff]
    %v10779 = vld [vmem:[#allocation2 + $0x1c9] sm:$0xff]
    %v10780 = vld [vmem:[#allocation2 + $0x1d1] sm:$0xff]
    %v10781 = vld [vmem:[#allocation2 + $0x1d9] sm:$0xff]
    %v10782 = vld [vmem:[#allocation2 + $0x1e1] sm:$0xff]
    %v10783 = vld [vmem:[#allocation2 + $0x1e9] sm:$0xff]
    %v10784 = vld [vmem:[#allocation2 + $0x1f1] sm:$0xff]
    %v10785 = vld [vmem:[#allocation2 + $0x1f9] sm:$0xff]
    %v10786 = vld [vmem:[#allocation2 + $0x201] sm:$0xff]
    %v10787 = vld [vmem:[#allocation2 + $0x209] sm:$0xff]
    %v10788 = vld [vmem:[#allocation2 + $0x211] sm:$0xff]
    %v10789 = vld [vmem:[#allocation2 + $0x219] sm:$0xff]
    %v10791 = vsel %vm6809, %v10722, 0
    %v10794 = vsel %vm6809, %v10723, 0
    %v10797 = vsel %vm6809, %v10724, 0
    %v10800 = vsel %vm6809, %v10725, 0
    %v10803 = vsel %vm6809, %v10726, 0
    %v10806 = vsel %vm6809, %v10727, 0
    %v10809 = vsel %vm6809, %v10728, 0
    %v10812 = vsel %vm6809, %v10729, 0
    %v10815 = vsel %vm6809, %v10730, 0
    %v10818 = vsel %vm6809, %v10731, 0
    %v10821 = vsel %vm6809, %v10732, 0
    %v10824 = vsel %vm6809, %v10733, 0
    %v10827 = vsel %vm6809, %v10734, 0
    %v10830 = vsel %vm6809, %v10735, 0
    %v10833 = vsel %vm6809, %v10736, 0
    %v10836 = vsel %vm6809, %v10737, 0
    %v10839 = vsel %vm6809, %v10738, 0
    %v10842 = vsel %vm6809, %v10739, 0
    %v10845 = vsel %vm6809, %v10740, 0
    %v10848 = vsel %vm6809, %v10741, 0
    %v10851 = vsel %vm6809, %v10742, 0
    %v10854 = vsel %vm6809, %v10743, 0
    %v10857 = vsel %vm6809, %v10744, 0
    %v10860 = vsel %vm6809, %v10745, 0
    %v10863 = vsel %vm6809, %v10746, 0
    %v10866 = vsel %vm6809, %v10747, 0
    %v10869 = vsel %vm6809, %v10748, 0
    %v10872 = vsel %vm6809, %v10749, 0
    %v10875 = vsel %vm6809, %v10750, 0
    %v10878 = vsel %vm6809, %v10751, 0
    %v10881 = vsel %vm6809, %v10752, 0
    %v10884 = vsel %vm6809, %v10753, 0
    %v10887 = vsel %vm6809, %v10754, 0
    %v10890 = vsel %vm6809, %v10755, 0
    %v10893 = vsel %vm6809, %v10756, 0
    %v10896 = vsel %vm6809, %v10757, 0
    %v10899 = vsel %vm6809, %v10758, 0
    %v10902 = vsel %vm6809, %v10759, 0
    %v10905 = vsel %vm6809, %v10760, 0
    %v10908 = vsel %vm6809, %v10761, 0
    %v10911 = vsel %vm6809, %v10762, 0
    %v10914 = vsel %vm6809, %v10763, 0
    %v10917 = vsel %vm6809, %v10764, 0
    %v10920 = vsel %vm6809, %v10765, 0
    %v10923 = vsel %vm6809, %v10766, 0
    %v10926 = vsel %vm6809, %v10767, 0
    %v10929 = vsel %vm6809, %v10768, 0
    %v10932 = vsel %vm6809, %v10769, 0
    %v10935 = vsel %vm6809, %v10770, 0
    %v10938 = vsel %vm6809, %v10771, 0
    %v10941 = vsel %vm6809, %v10772, 0
    %v10944 = vsel %vm6809, %v10773, 0
    %v10947 = vsel %vm6809, %v10774, 0
    %v10950 = vsel %vm6809, %v10775, 0
    %v10953 = vsel %vm6809, %v10776, 0
    %v10956 = vsel %vm6809, %v10777, 0
    %v10959 = vsel %vm6809, %v10778, 0
    %v10962 = vsel %vm6809, %v10779, 0
    %v10965 = vsel %vm6809, %v10780, 0
    %v10968 = vsel %vm6809, %v10781, 0
    %v10971 = vsel %vm6809, %v10782, 0
    %v10974 = vsel %vm6809, %v10783, 0
    %v10977 = vsel %vm6809, %v10784, 0
    %v10980 = vsel %vm6809, %v10785, 0
    %v10983 = vsel %vm6809, %v10786, 0
    %v10986 = vsel %vm6809, %v10787, 0
    %v10989 = vsel %vm6809, %v10788, 0
    %v10992 = vsel %vm6809, %v10789, 0
    %10994 = vmatprep.subr.mxu0 0.0
    %10995 = vmatpush1.xpose.msra.mxu0 %v10803
    %10996 = vmatprep.subr.mxu0 0.0
    %10997 = vmatpush1.xpose.msra.mxu0 %v10806
    %10998 = vmatprep.subr.mxu0 0.0
    %10999 = vmatpush1.xpose.msra.mxu0 %v10809
    %11000 = vmatprep.subr.mxu0 0.0
    %11001 = vmatpush1.xpose.msra.mxu0 %v10812
    %11002 = vmatprep.subr.mxu0 0.0
    %11003 = vmatpush1.xpose.msra.mxu0 %v10815
    %11004 = vmatprep.subr.mxu0 0.0
    %11005 = vmatpush1.xpose.msra.mxu0 %v10818
    %11006 = vmatprep.subr.mxu0 0.0
    %11007 = vmatpush1.xpose.msra.mxu0 %v10821
    %11008 = vmatprep.subr.mxu0 0.0
    %11009 = vmatpush1.xpose.msra.mxu0 %v10824
    %11010 = vmatprep.subr.mxu0 0.0
    %11011 = vmatpush1.xpose.msra.mxu0 %v10827
    %11012 = vmatprep.subr.mxu0 0.0
    %11013 = vmatpush1.xpose.msra.mxu0 %v10830
    %11014 = vmatprep.subr.mxu0 0.0
    %11015 = vmatpush1.xpose.msra.mxu0 %v10833
    %11016 = vmatprep.subr.mxu0 0.0
    %11017 = vmatpush1.xpose.msra.mxu0 %v10836
    %11018 = vmatprep.subr.mxu0 0.0
    %11019 = vmatpush1.xpose.msra.mxu0 %v10839
    %11020 = vmatprep.subr.mxu0 0.0
    %11021 = vmatpush1.xpose.msra.mxu0 %v10842
    %11022 = vmatprep.subr.mxu0 0.0
    %11023 = vmatpush1.xpose.msra.mxu0 %v10845
    %11024 = vmatprep.subr.mxu0 0.0
    %11025 = vmatpush1.xpose.msra.mxu0 %v10848
    %11026 = vmatprep.subr.mxu0 0.0
    %11027 = vmatpush1.xpose.msra.mxu0 %v10851
    %11028 = vmatprep.subr.mxu0 0.0
    %11029 = vmatpush1.xpose.msra.mxu0 %v10854
    %11030 = vmatprep.subr.mxu0 0.0
    %11031 = vmatpush1.xpose.msra.mxu0 %v10857
    %11032 = vmatprep.subr.mxu0 0.0
    %11033 = vmatpush1.xpose.msra.mxu0 %v10860
    %11034 = vmatprep.subr.mxu0 0.0
    %11035 = vmatpush1.xpose.msra.mxu0 %v10863
    %11036 = vmatprep.subr.mxu0 0.0
    %11037 = vmatpush1.xpose.msra.mxu0 %v10866
    %11038 = vmatprep.subr.mxu0 0.0
    %11039 = vmatpush1.xpose.msra.mxu0 %v10869
    %11040 = vmatprep.subr.mxu0 0.0
    %11041 = vmatpush1.xpose.msra.mxu0 %v10872
    %11042 = vmatprep.subr.mxu0 0.0
    %11043 = vmatpush1.xpose.msra.mxu0 %v10875
    %11044 = vmatprep.subr.mxu0 0.0
    %11045 = vmatpush1.xpose.msra.mxu0 %v10878
    %11046 = vmatprep.subr.mxu0 0.0
    %11047 = vmatpush1.xpose.msra.mxu0 %v10881
    %11048 = vmatprep.subr.mxu0 0.0
    %11049 = vmatpush1.xpose.msra.mxu0 %v10884
    %11050 = vmatprep.subr.mxu0 0.0
    %11051 = vmatpush1.xpose.msra.mxu0 %v10887
    %11052 = vmatprep.subr.mxu0 0.0
    %11053 = vmatpush1.xpose.msra.mxu0 %v10890
    %11054 = vmatprep.subr.mxu0 0.0
    %11055 = vmatpush1.xpose.msra.mxu0 %v10893
    %11056 = vmatprep.subr.mxu0 0.0
    %11057 = vmatpush1.xpose.msra.mxu0 %v10896
    %11058 = vmatprep.mubr.f32.mxu0 0.0
    %11059 = vmatmul.mubr.f32.gmra.mrb[0].mxu0 %v10791
    %v11060 = vpop.f32.mrb[0].mxu0
    %v11061 = vadd.f32 0.0, %v11060
    %v11062 = vpop.f32.mrb[0].mxu0
    %v11063 = vadd.f32 0.0, %v11062
    %11064 = vmatprep.mubr.f32.mxu0 0.0
    %11065 = vmatmul.mubr.f32.gmra.mrb[0].mxu0 %v10794
    %v11066 = vpop.f32.mrb[0].mxu0
    %v11067 = vadd.f32 0.0, %v11066
    %v11068 = vpop.f32.mrb[0].mxu0
    %v11069 = vadd.f32 0.0, %v11068
    %11070 = vmatprep.mubr.f32.mxu0 0.0
    %11071 = vmatmul.mubr.f32.gmra.mrb[0].mxu0 %v10797
    %v11072 = vpop.f32.mrb[0].mxu0
    %v11073 = vadd.f32 0.0, %v11072
    %v11074 = vpop.f32.mrb[0].mxu0
    %v11075 = vadd.f32 0.0, %v11074
    %11076 = vmatprep.mubr.f32.mxu0 0.0
    %11077 = vmatmul.mubr.f32.gmra.mrb[0].mxu0 %v10800
    %v11078 = vpop.f32.mrb[0].mxu0
    %v11079 = vadd.f32 0.0, %v11078
    %v11080 = vpop.f32.mrb[0].mxu0
    %v11081 = vadd.f32 0.0, %v11080
    %11082 = vdwg.mxu0
    %11083 = vmatprep.subr.mxu0 0.0
    %11084 = vmatpush1.xpose.msra.mxu0 %v10899
    %11085 = vmatprep.subr.mxu0 0.0
    %11086 = vmatpush1.xpose.msra.mxu0 %v10902
    %11087 = vmatprep.subr.mxu0 0.0
    %11088 = vmatpush1.xpose.msra.mxu0 %v10905
    %11089 = vmatprep.subr.mxu0 0.0
    %11090 = vmatpush1.xpose.msra.mxu0 %v10908
    %11091 = vmatprep.subr.mxu0 0.0
    %11092 = vmatpush1.xpose.msra.mxu0 %v10911
    %11093 = vmatprep.subr.mxu0 0.0
    %11094 = vmatpush1.xpose.msra.mxu0 %v10914
    %11095 = vmatprep.subr.mxu0 0.0
    %11096 = vmatpush1.xpose.msra.mxu0 %v10917
    %11097 = vmatprep.subr.mxu0 0.0
    %11098 = vmatpush1.xpose.msra.mxu0 %v10920
    %11099 = vmatprep.subr.mxu0 0.0
    %11100 = vmatpush1.xpose.msra.mxu0 %v10923
    %11101 = vmatprep.subr.mxu0 0.0
    %11102 = vmatpush1.xpose.msra.mxu0 %v10926
    %11103 = vmatprep.subr.mxu0 0.0
    %11104 = vmatpush1.xpose.msra.mxu0 %v10929
    %11105 = vmatprep.subr.mxu0 0.0
    %11106 = vmatpush1.xpose.msra.mxu0 %v10932
    %11107 = vmatprep.subr.mxu0 0.0
    %11108 = vmatpush1.xpose.msra.mxu0 %v10935
    %11109 = vmatprep.subr.mxu0 0.0
    %11110 = vmatpush1.xpose.msra.mxu0 %v10938
    %11111 = vmatprep.subr.mxu0 0.0
    %11112 = vmatpush1.xpose.msra.mxu0 %v10941
    %11113 = vmatprep.subr.mxu0 0.0
    %11114 = vmatpush1.xpose.msra.mxu0 %v10944
    %11115 = vmatprep.subr.mxu0 0.0
    %11116 = vmatpush1.xpose.msra.mxu0 %v10947
    %11117 = vmatprep.subr.mxu0 0.0
    %11118 = vmatpush1.xpose.msra.mxu0 %v10950
    %11119 = vmatprep.subr.mxu0 0.0
    %11120 = vmatpush1.xpose.msra.mxu0 %v10953
    %11121 = vmatprep.subr.mxu0 0.0
    %11122 = vmatpush1.xpose.msra.mxu0 %v10956
    %11123 = vmatprep.subr.mxu0 0.0
    %11124 = vmatpush1.xpose.msra.mxu0 %v10959
    %11125 = vmatprep.subr.mxu0 0.0
    %11126 = vmatpush1.xpose.msra.mxu0 %v10962
    %11127 = vmatprep.subr.mxu0 0.0
    %11128 = vmatpush1.xpose.msra.mxu0 %v10965
    %11129 = vmatprep.subr.mxu0 0.0
    %11130 = vmatpush1.xpose.msra.mxu0 %v10968
    %11131 = vmatprep.subr.mxu0 0.0
    %11132 = vmatpush1.xpose.msra.mxu0 %v10971
    %11133 = vmatprep.subr.mxu0 0.0
    %11134 = vmatpush1.xpose.msra.mxu0 %v10974
    %11135 = vmatprep.subr.mxu0 0.0
    %11136 = vmatpush1.xpose.msra.mxu0 %v10977
    %11137 = vmatprep.subr.mxu0 0.0
    %11138 = vmatpush1.xpose.msra.mxu0 %v10980
    %11139 = vmatprep.subr.mxu0 0.0
    %11140 = vmatpush1.xpose.msra.mxu0 %v10983
    %11141 = vmatprep.subr.mxu0 0.0
    %11142 = vmatpush1.xpose.msra.mxu0 %v10986
    %11143 = vmatprep.subr.mxu0 0.0
    %11144 = vmatpush1.xpose.msra.mxu0 %v10989
    %11145 = vmatprep.subr.mxu0 0.0
    %11146 = vmatpush1.xpose.msra.mxu0 %v10992
    %11147 = vmatprep.mubr.f32.mxu0 0.0
    %11148 = vmatmul.mubr.f32.gmra.mrb[0].mxu0 %v10791
    %v11149 = vpop.f32.mrb[0].mxu0
    %v11150 = vadd.f32 0.0, %v11149
    %v11151 = vpop.f32.mrb[0].mxu0
    %v11152 = vadd.f32 0.0, %v11151
    %11153 = vmatprep.mubr.f32.mxu0 0.0
    %11154 = vmatmul.mubr.f32.gmra.mrb[0].mxu0 %v10794
    %v11155 = vpop.f32.mrb[0].mxu0
    %v11156 = vadd.f32 0.0, %v11155
    %v11157 = vpop.f32.mrb[0].mxu0
    %v11158 = vadd.f32 0.0, %v11157
    %11159 = vmatprep.mubr.f32.mxu0 0.0
    %11160 = vmatmul.mubr.f32.gmra.mrb[0].mxu0 %v10797
    %v11161 = vpop.f32.mrb[0].mxu0
    %v11162 = vadd.f32 0.0, %v11161
    %v11163 = vpop.f32.mrb[0].mxu0
    %v11164 = vadd.f32 0.0, %v11163
    %11165 = vmatprep.mubr.f32.mxu0 0.0
    %11166 = vmatmul.mubr.f32.gmra.mrb[0].mxu0 %v10800
    %v11167 = vpop.f32.mrb[0].mxu0
    %v11168 = vadd.f32 0.0, %v11167
    %v11169 = vpop.f32.mrb[0].mxu0
    %v11170 = vadd.f32 0.0, %v11169
    %11171 = vdwg.mxu0
    %v11172 = vadd.f32 %v10705, %v11061
    %v11173 = vadd.f32 %v10706, %v11063
    %v11174 = vadd.f32 %v10707, %v11150
    %v11175 = vadd.f32 %v10708, %v11152
    %v11176 = vadd.f32 %v10709, %v11067
    %v11177 = vadd.f32 %v10710, %v11069
    %v11178 = vadd.f32 %v10711, %v11156
    %v11179 = vadd.f32 %v10712, %v11158
    %v11180 = vadd.f32 %v10713, %v11073
    %v11181 = vadd.f32 %v10714, %v11075
    %v11182 = vadd.f32 %v10715, %v11162
    %v11183 = vadd.f32 %v10716, %v11164
    %v11184 = vadd.f32 %v10717, %v11079
    %v11185 = vadd.f32 %v10718, %v11081
    %v11186 = vadd.f32 %v10719, %v11168
    %v11187 = vadd.f32 %v10720, %v11170
    %s11188 = scalar_lea.vmem %s5, 256
    %v11189 = vld [vmem:[%s11188] sm:$0xff]
    %v11190 = vld [vmem:[%s11188 + $0x8] sm:$0xff]
    %v11191 = vld [vmem:[%s11188 + $0x10] sm:$0xff]
    %v11192 = vld [vmem:[%s11188 + $0x18] sm:$0xff]
    %v11193 = vld [vmem:[#allocation2 + $0x22] sm:$0xff]
    %v11194 = vld [vmem:[#allocation2 + $0x2a] sm:$0xff]
    %v11195 = vld [vmem:[#allocation2 + $0x32] sm:$0xff]
    %v11196 = vld [vmem:[#allocation2 + $0x3a] sm:$0xff]
    %v11197 = vld [vmem:[#allocation2 + $0x42] sm:$0xff]
    %v11198 = vld [vmem:[#allocation2 + $0x4a] sm:$0xff]
    %v11199 = vld [vmem:[#allocation2 + $0x52] sm:$0xff]
    %v11200 = vld [vmem:[#allocation2 + $0x5a] sm:$0xff]
    %v11201 = vld [vmem:[#allocation2 + $0x62] sm:$0xff]
    %v11202 = vld [vmem:[#allocation2 + $0x6a] sm:$0xff]
    %v11203 = vld [vmem:[#allocation2 + $0x72] sm:$0xff]
    %v11204 = vld [vmem:[#allocation2 + $0x7a] sm:$0xff]
    %v11205 = vld [vmem:[#allocation2 + $0x82] sm:$0xff]
    %v11206 = vld [vmem:[#allocation2 + $0x8a] sm:$0xff]
    %v11207 = vld [vmem:[#allocation2 + $0x92] sm:$0xff]
    %v11208 = vld [vmem:[#allocation2 + $0x9a] sm:$0xff]
    %v11209 = vld [vmem:[#allocation2 + $0xa2] sm:$0xff]
    %v11210 = vld [vmem:[#allocation2 + $0xaa] sm:$0xff]
    %v11211 = vld [vmem:[#allocation2 + $0xb2] sm:$0xff]
    %v11212 = vld [vmem:[#allocation2 + $0xba] sm:$0xff]
    %v11213 = vld [vmem:[#allocation2 + $0xc2] sm:$0xff]
    %v11214 = vld [vmem:[#allocation2 + $0xca] sm:$0xff]
    %v11215 = vld [vmem:[#allocation2 + $0xd2] sm:$0xff]
    %v11216 = vld [vmem:[#allocation2 + $0xda] sm:$0xff]
    %v11217 = vld [vmem:[#allocation2 + $0xe2] sm:$0xff]
    %v11218 = vld [vmem:[#allocation2 + $0xea] sm:$0xff]
    %v11219 = vld [vmem:[#allocation2 + $0xf2] sm:$0xff]
    %v11220 = vld [vmem:[#allocation2 + $0xfa] sm:$0xff]
    %v11221 = vld [vmem:[#allocation2 + $0x102] sm:$0xff]
    %v11222 = vld [vmem:[#allocation2 + $0x10a] sm:$0xff]
    %v11223 = vld [vmem:[#allocation2 + $0x112] sm:$0xff]
    %v11224 = vld [vmem:[#allocation2 + $0x11a] sm:$0xff]
    %v11225 = vld [vmem:[#allocation2 + $0x122] sm:$0xff]
    %v11226 = vld [vmem:[#allocation2 + $0x12a] sm:$0xff]
    %v11227 = vld [vmem:[#allocation2 + $0x132] sm:$0xff]
    %v11228 = vld [vmem:[#allocation2 + $0x13a] sm:$0xff]
    %v11229 = vld [vmem:[#allocation2 + $0x142] sm:$0xff]
    %v11230 = vld [vmem:[#allocation2 + $0x14a] sm:$0xff]
    %v11231 = vld [vmem:[#allocation2 + $0x152] sm:$0xff]
    %v11232 = vld [vmem:[#allocation2 + $0x15a] sm:$0xff]
    %v11233 = vld [vmem:[#allocation2 + $0x162] sm:$0xff]
    %v11234 = vld [vmem:[#allocation2 + $0x16a] sm:$0xff]
    %v11235 = vld [vmem:[#allocation2 + $0x172] sm:$0xff]
    %v11236 = vld [vmem:[#allocation2 + $0x17a] sm:$0xff]
    %v11237 = vld [vmem:[#allocation2 + $0x182] sm:$0xff]
    %v11238 = vld [vmem:[#allocation2 + $0x18a] sm:$0xff]
    %v11239 = vld [vmem:[#allocation2 + $0x192] sm:$0xff]
    %v11240 = vld [vmem:[#allocation2 + $0x19a] sm:$0xff]
    %v11241 = vld [vmem:[#allocation2 + $0x1a2] sm:$0xff]
    %v11242 = vld [vmem:[#allocation2 + $0x1aa] sm:$0xff]
    %v11243 = vld [vmem:[#allocation2 + $0x1b2] sm:$0xff]
    %v11244 = vld [vmem:[#allocation2 + $0x1ba] sm:$0xff]
    %v11245 = vld [vmem:[#allocation2 + $0x1c2] sm:$0xff]
    %v11246 = vld [vmem:[#allocation2 + $0x1ca] sm:$0xff]
    %v11247 = vld [vmem:[#allocation2 + $0x1d2] sm:$0xff]
    %v11248 = vld [vmem:[#allocation2 + $0x1da] sm:$0xff]
    %v11249 = vld [vmem:[#allocation2 + $0x1e2] sm:$0xff]
    %v11250 = vld [vmem:[#allocation2 + $0x1ea] sm:$0xff]
    %v11251 = vld [vmem:[#allocation2 + $0x1f2] sm:$0xff]
    %v11252 = vld [vmem:[#allocation2 + $0x1fa] sm:$0xff]
    %v11253 = vld [vmem:[#allocation2 + $0x202] sm:$0xff]
    %v11254 = vld [vmem:[#allocation2 + $0x20a] sm:$0xff]
    %v11255 = vld [vmem:[#allocation2 + $0x212] sm:$0xff]
    %v11256 = vld [vmem:[#allocation2 + $0x21a] sm:$0xff]
    %v11258 = vsel %vm6809, %v11189, 0
    %v11261 = vsel %vm6809, %v11190, 0
    %v11264 = vsel %vm6809, %v11191, 0
    %v11267 = vsel %vm6809, %v11192, 0
    %v11270 = vsel %vm6809, %v11193, 0
    %v11273 = vsel %vm6809, %v11194, 0
    %v11276 = vsel %vm6809, %v11195, 0
    %v11279 = vsel %vm6809, %v11196, 0
    %v11282 = vsel %vm6809, %v11197, 0
    %v11285 = vsel %vm6809, %v11198, 0
    %v11288 = vsel %vm6809, %v11199, 0
    %v11291 = vsel %vm6809, %v11200, 0
    %v11294 = vsel %vm6809, %v11201, 0
    %v11297 = vsel %vm6809, %v11202, 0
    %v11300 = vsel %vm6809, %v11203, 0
    %v11303 = vsel %vm6809, %v11204, 0
    %v11306 = vsel %vm6809, %v11205, 0
    %v11309 = vsel %vm6809, %v11206, 0
    %v11312 = vsel %vm6809, %v11207, 0
    %v11315 = vsel %vm6809, %v11208, 0
    %v11318 = vsel %vm6809, %v11209, 0
    %v11321 = vsel %vm6809, %v11210, 0
    %v11324 = vsel %vm6809, %v11211, 0
    %v11327 = vsel %vm6809, %v11212, 0
    %v11330 = vsel %vm6809, %v11213, 0
    %v11333 = vsel %vm6809, %v11214, 0
    %v11336 = vsel %vm6809, %v11215, 0
    %v11339 = vsel %vm6809, %v11216, 0
    %v11342 = vsel %vm6809, %v11217, 0
    %v11345 = vsel %vm6809, %v11218, 0
    %v11348 = vsel %vm6809, %v11219, 0
    %v11351 = vsel %vm6809, %v11220, 0
    %v11354 = vsel %vm6809, %v11221, 0
    %v11357 = vsel %vm6809, %v11222, 0
    %v11360 = vsel %vm6809, %v11223, 0
    %v11363 = vsel %vm6809, %v11224, 0
    %v11366 = vsel %vm6809, %v11225, 0
    %v11369 = vsel %vm6809, %v11226, 0
    %v11372 = vsel %vm6809, %v11227, 0
    %v11375 = vsel %vm6809, %v11228, 0
    %v11378 = vsel %vm6809, %v11229, 0
    %v11381 = vsel %vm6809, %v11230, 0
    %v11384 = vsel %vm6809, %v11231, 0
    %v11387 = vsel %vm6809, %v11232, 0
    %v11390 = vsel %vm6809, %v11233, 0
    %v11393 = vsel %vm6809, %v11234, 0
    %v11396 = vsel %vm6809, %v11235, 0
    %v11399 = vsel %vm6809, %v11236, 0
    %v11402 = vsel %vm6809, %v11237, 0
    %v11405 = vsel %vm6809, %v11238, 0
    %v11408 = vsel %vm6809, %v11239, 0
    %v11411 = vsel %vm6809, %v11240, 0
    %v11414 = vsel %vm6809, %v11241, 0
    %v11417 = vsel %vm6809, %v11242, 0
    %v11420 = vsel %vm6809, %v11243, 0
    %v11423 = vsel %vm6809, %v11244, 0
    %v11426 = vsel %vm6809, %v11245, 0
    %v11429 = vsel %vm6809, %v11246, 0
    %v11432 = vsel %vm6809, %v11247, 0
    %v11435 = vsel %vm6809, %v11248, 0
    %v11438 = vsel %vm6809, %v11249, 0
    %v11441 = vsel %vm6809, %v11250, 0
    %v11444 = vsel %vm6809, %v11251, 0
    %v11447 = vsel %vm6809, %v11252, 0
    %v11450 = vsel %vm6809, %v11253, 0
    %v11453 = vsel %vm6809, %v11254, 0
    %v11456 = vsel %vm6809, %v11255, 0
    %v11459 = vsel %vm6809, %v11256, 0
    %11461 = vmatprep.subr.mxu0 0.0
    %11462 = vmatpush1.xpose.msra.mxu0 %v11270
    %11463 = vmatprep.subr.mxu0 0.0
    %11464 = vmatpush1.xpose.msra.mxu0 %v11273
    %11465 = vmatprep.subr.mxu0 0.0
    %11466 = vmatpush1.xpose.msra.mxu0 %v11276
    %11467 = vmatprep.subr.mxu0 0.0
    %11468 = vmatpush1.xpose.msra.mxu0 %v11279
    %11469 = vmatprep.subr.mxu0 0.0
    %11470 = vmatpush1.xpose.msra.mxu0 %v11282
    %11471 = vmatprep.subr.mxu0 0.0
    %11472 = vmatpush1.xpose.msra.mxu0 %v11285
    %11473 = vmatprep.subr.mxu0 0.0
    %11474 = vmatpush1.xpose.msra.mxu0 %v11288
    %11475 = vmatprep.subr.mxu0 0.0
    %11476 = vmatpush1.xpose.msra.mxu0 %v11291
    %11477 = vmatprep.subr.mxu0 0.0
    %11478 = vmatpush1.xpose.msra.mxu0 %v11294
    %11479 = vmatprep.subr.mxu0 0.0
    %11480 = vmatpush1.xpose.msra.mxu0 %v11297
    %11481 = vmatprep.subr.mxu0 0.0
    %11482 = vmatpush1.xpose.msra.mxu0 %v11300
    %11483 = vmatprep.subr.mxu0 0.0
    %11484 = vmatpush1.xpose.msra.mxu0 %v11303
    %11485 = vmatprep.subr.mxu0 0.0
    %11486 = vmatpush1.xpose.msra.mxu0 %v11306
    %11487 = vmatprep.subr.mxu0 0.0
    %11488 = vmatpush1.xpose.msra.mxu0 %v11309
    %11489 = vmatprep.subr.mxu0 0.0
    %11490 = vmatpush1.xpose.msra.mxu0 %v11312
    %11491 = vmatprep.subr.mxu0 0.0
    %11492 = vmatpush1.xpose.msra.mxu0 %v11315
    %11493 = vmatprep.subr.mxu0 0.0
    %11494 = vmatpush1.xpose.msra.mxu0 %v11318
    %11495 = vmatprep.subr.mxu0 0.0
    %11496 = vmatpush1.xpose.msra.mxu0 %v11321
    %11497 = vmatprep.subr.mxu0 0.0
    %11498 = vmatpush1.xpose.msra.mxu0 %v11324
    %11499 = vmatprep.subr.mxu0 0.0
    %11500 = vmatpush1.xpose.msra.mxu0 %v11327
    %11501 = vmatprep.subr.mxu0 0.0
    %11502 = vmatpush1.xpose.msra.mxu0 %v11330
    %11503 = vmatprep.subr.mxu0 0.0
    %11504 = vmatpush1.xpose.msra.mxu0 %v11333
    %11505 = vmatprep.subr.mxu0 0.0
    %11506 = vmatpush1.xpose.msra.mxu0 %v11336
    %11507 = vmatprep.subr.mxu0 0.0
    %11508 = vmatpush1.xpose.msra.mxu0 %v11339
    %11509 = vmatprep.subr.mxu0 0.0
    %11510 = vmatpush1.xpose.msra.mxu0 %v11342
    %11511 = vmatprep.subr.mxu0 0.0
    %11512 = vmatpush1.xpose.msra.mxu0 %v11345
    %11513 = vmatprep.subr.mxu0 0.0
    %11514 = vmatpush1.xpose.msra.mxu0 %v11348
    %11515 = vmatprep.subr.mxu0 0.0
    %11516 = vmatpush1.xpose.msra.mxu0 %v11351
    %11517 = vmatprep.subr.mxu0 0.0
    %11518 = vmatpush1.xpose.msra.mxu0 %v11354
    %11519 = vmatprep.subr.mxu0 0.0
    %11520 = vmatpush1.xpose.msra.mxu0 %v11357
    %11521 = vmatprep.subr.mxu0 0.0
    %11522 = vmatpush1.xpose.msra.mxu0 %v11360
    %11523 = vmatprep.subr.mxu0 0.0
    %11524 = vmatpush1.xpose.msra.mxu0 %v11363
    %11525 = vmatprep.mubr.f32.mxu0 0.0
    %11526 = vmatmul.mubr.f32.gmra.mrb[0].mxu0 %v11258
    %v11527 = vpop.f32.mrb[0].mxu0
    %v11528 = vadd.f32 0.0, %v11527
    %v11529 = vpop.f32.mrb[0].mxu0
    %v11530 = vadd.f32 0.0, %v11529
    %11531 = vmatprep.mubr.f32.mxu0 0.0
    %11532 = vmatmul.mubr.f32.gmra.mrb[0].mxu0 %v11261
    %v11533 = vpop.f32.mrb[0].mxu0
    %v11534 = vadd.f32 0.0, %v11533
    %v11535 = vpop.f32.mrb[0].mxu0
    %v11536 = vadd.f32 0.0, %v11535
    %11537 = vmatprep.mubr.f32.mxu0 0.0
    %11538 = vmatmul.mubr.f32.gmra.mrb[0].mxu0 %v11264
    %v11539 = vpop.f32.mrb[0].mxu0
    %v11540 = vadd.f32 0.0, %v11539
    %v11541 = vpop.f32.mrb[0].mxu0
    %v11542 = vadd.f32 0.0, %v11541
    %11543 = vmatprep.mubr.f32.mxu0 0.0
    %11544 = vmatmul.mubr.f32.gmra.mrb[0].mxu0 %v11267
    %v11545 = vpop.f32.mrb[0].mxu0
    %v11546 = vadd.f32 0.0, %v11545
    %v11547 = vpop.f32.mrb[0].mxu0
    %v11548 = vadd.f32 0.0, %v11547
    %11549 = vdwg.mxu0
    %11550 = vmatprep.subr.mxu0 0.0
    %11551 = vmatpush1.xpose.msra.mxu0 %v11366
    %11552 = vmatprep.subr.mxu0 0.0
    %11553 = vmatpush1.xpose.msra.mxu0 %v11369
    %11554 = vmatprep.subr.mxu0 0.0
    %11555 = vmatpush1.xpose.msra.mxu0 %v11372
    %11556 = vmatprep.subr.mxu0 0.0
    %11557 = vmatpush1.xpose.msra.mxu0 %v11375
    %11558 = vmatprep.subr.mxu0 0.0
    %11559 = vmatpush1.xpose.msra.mxu0 %v11378
    %11560 = vmatprep.subr.mxu0 0.0
    %11561 = vmatpush1.xpose.msra.mxu0 %v11381
    %11562 = vmatprep.subr.mxu0 0.0
    %11563 = vmatpush1.xpose.msra.mxu0 %v11384
    %11564 = vmatprep.subr.mxu0 0.0
    %11565 = vmatpush1.xpose.msra.mxu0 %v11387
    %11566 = vmatprep.subr.mxu0 0.0
    %11567 = vmatpush1.xpose.msra.mxu0 %v11390
    %11568 = vmatprep.subr.mxu0 0.0
    %11569 = vmatpush1.xpose.msra.mxu0 %v11393
    %11570 = vmatprep.subr.mxu0 0.0
    %11571 = vmatpush1.xpose.msra.mxu0 %v11396
    %11572 = vmatprep.subr.mxu0 0.0
    %11573 = vmatpush1.xpose.msra.mxu0 %v11399
    %11574 = vmatprep.subr.mxu0 0.0
    %11575 = vmatpush1.xpose.msra.mxu0 %v11402
    %11576 = vmatprep.subr.mxu0 0.0
    %11577 = vmatpush1.xpose.msra.mxu0 %v11405
    %11578 = vmatprep.subr.mxu0 0.0
    %11579 = vmatpush1.xpose.msra.mxu0 %v11408
    %11580 = vmatprep.subr.mxu0 0.0
    %11581 = vmatpush1.xpose.msra.mxu0 %v11411
    %11582 = vmatprep.subr.mxu0 0.0
    %11583 = vmatpush1.xpose.msra.mxu0 %v11414
    %11584 = vmatprep.subr.mxu0 0.0
    %11585 = vmatpush1.xpose.msra.mxu0 %v11417
    %11586 = vmatprep.subr.mxu0 0.0
    %11587 = vmatpush1.xpose.msra.mxu0 %v11420
    %11588 = vmatprep.subr.mxu0 0.0
    %11589 = vmatpush1.xpose.msra.mxu0 %v11423
    %11590 = vmatprep.subr.mxu0 0.0
    %11591 = vmatpush1.xpose.msra.mxu0 %v11426
    %11592 = vmatprep.subr.mxu0 0.0
    %11593 = vmatpush1.xpose.msra.mxu0 %v11429
    %11594 = vmatprep.subr.mxu0 0.0
    %11595 = vmatpush1.xpose.msra.mxu0 %v11432
    %11596 = vmatprep.subr.mxu0 0.0
    %11597 = vmatpush1.xpose.msra.mxu0 %v11435
    %11598 = vmatprep.subr.mxu0 0.0
    %11599 = vmatpush1.xpose.msra.mxu0 %v11438
    %11600 = vmatprep.subr.mxu0 0.0
    %11601 = vmatpush1.xpose.msra.mxu0 %v11441
    %11602 = vmatprep.subr.mxu0 0.0
    %11603 = vmatpush1.xpose.msra.mxu0 %v11444
    %11604 = vmatprep.subr.mxu0 0.0
    %11605 = vmatpush1.xpose.msra.mxu0 %v11447
    %11606 = vmatprep.subr.mxu0 0.0
    %11607 = vmatpush1.xpose.msra.mxu0 %v11450
    %11608 = vmatprep.subr.mxu0 0.0
    %11609 = vmatpush1.xpose.msra.mxu0 %v11453
    %11610 = vmatprep.subr.mxu0 0.0
    %11611 = vmatpush1.xpose.msra.mxu0 %v11456
    %11612 = vmatprep.subr.mxu0 0.0
    %11613 = vmatpush1.xpose.msra.mxu0 %v11459
    %11614 = vmatprep.mubr.f32.mxu0 0.0
    %11615 = vmatmul.mubr.f32.gmra.mrb[0].mxu0 %v11258
    %v11616 = vpop.f32.mrb[0].mxu0
    %v11617 = vadd.f32 0.0, %v11616
    %v11618 = vpop.f32.mrb[0].mxu0
    %v11619 = vadd.f32 0.0, %v11618
    %11620 = vmatprep.mubr.f32.mxu0 0.0
    %11621 = vmatmul.mubr.f32.gmra.mrb[0].mxu0 %v11261
    %v11622 = vpop.f32.mrb[0].mxu0
    %v11623 = vadd.f32 0.0, %v11622
    %v11624 = vpop.f32.mrb[0].mxu0
    %v11625 = vadd.f32 0.0, %v11624
    %11626 = vmatprep.mubr.f32.mxu0 0.0
    %11627 = vmatmul.mubr.f32.gmra.mrb[0].mxu0 %v11264
    %v11628 = vpop.f32.mrb[0].mxu0
    %v11629 = vadd.f32 0.0, %v11628
    %v11630 = vpop.f32.mrb[0].mxu0
    %v11631 = vadd.f32 0.0, %v11630
    %11632 = vmatprep.mubr.f32.mxu0 0.0
    %11633 = vmatmul.mubr.f32.gmra.mrb[0].mxu0 %v11267
    %v11634 = vpop.f32.mrb[0].mxu0
    %v11635 = vadd.f32 0.0, %v11634
    %v11636 = vpop.f32.mrb[0].mxu0
    %v11637 = vadd.f32 0.0, %v11636
    %11638 = vdwg.mxu0
    %v11639 = vadd.f32 %v11172, %v11528
    %v11640 = vadd.f32 %v11173, %v11530
    %v11641 = vadd.f32 %v11174, %v11617
    %v11642 = vadd.f32 %v11175, %v11619
    %v11643 = vadd.f32 %v11176, %v11534
    %v11644 = vadd.f32 %v11177, %v11536
    %v11645 = vadd.f32 %v11178, %v11623
    %v11646 = vadd.f32 %v11179, %v11625
    %v11647 = vadd.f32 %v11180, %v11540
    %v11648 = vadd.f32 %v11181, %v11542
    %v11649 = vadd.f32 %v11182, %v11629
    %v11650 = vadd.f32 %v11183, %v11631
    %v11651 = vadd.f32 %v11184, %v11546
    %v11652 = vadd.f32 %v11185, %v11548
    %v11653 = vadd.f32 %v11186, %v11635
    %v11654 = vadd.f32 %v11187, %v11637
    %v11655 = vld [vmem:[%s6] sm:$0xff]
    %v11656 = vld [vmem:[%s6 + $0x8] sm:$0xff]
    %v11657 = vld [vmem:[%s6 + $0x10] sm:$0xff]
    %v11658 = vld [vmem:[%s6 + $0x18] sm:$0xff]
    %11660 = vset.pattern.permute.xlu0 0
    %11661 = vperm.xlu0 %11660, %v11655
    %v11662 = vpop.permute.xlu0 %11661
    %11665 = vset.pattern.permute.xlu0 0
    %11666 = vperm.xlu0 %11665, %v11656
    %v11667 = vpop.permute.xlu0 %11666
    %11670 = vset.pattern.permute.xlu0 0
    %11671 = vperm.xlu0 %11670, %v11657
    %v11672 = vpop.permute.xlu0 %11671
    %11675 = vset.pattern.permute.xlu0 0
    %11676 = vperm.xlu0 %11675, %v11658
    %v11677 = vpop.permute.xlu0 %11676
    %v11679 = vadd.f32 %v11639, %v11662
    %v11680 = vadd.f32 %v11640, %v11662
    %v11681 = vadd.f32 %v11641, %v11662
    %v11682 = vadd.f32 %v11642, %v11662
    %v11683 = vadd.f32 %v11643, %v11667
    %v11684 = vadd.f32 %v11644, %v11667
    %v11685 = vadd.f32 %v11645, %v11667
    %v11686 = vadd.f32 %v11646, %v11667
    %v11687 = vadd.f32 %v11647, %v11672
    %v11688 = vadd.f32 %v11648, %v11672
    %v11689 = vadd.f32 %v11649, %v11672
    %v11690 = vadd.f32 %v11650, %v11672
    %v11691 = vadd.f32 %v11651, %v11677
    %v11692 = vadd.f32 %v11652, %v11677
    %v11693 = vadd.f32 %v11653, %v11677
    %v11694 = vadd.f32 %v11654, %v11677
    %v11695 = vld [vmem:[%s10] sm:$0xf]
    %v11697 = vlaneseq
    %v11698 = vshrl.u32 %v11697, 7
    %v11699 = vsub.s32 0, %v11698
    %v11700 = vrot.slane %v11695, %v11699
    %v11701 = vlaneseq
    %v11702 = vshrl.u32 %v11701, 7
    %v11703 = vsub.s32 1, %v11702
    %v11704 = vrot.slane %v11695, %v11703
    %v11705 = vlaneseq
    %v11706 = vshrl.u32 %v11705, 7
    %v11707 = vsub.s32 2, %v11706
    %v11708 = vrot.slane %v11695, %v11707
    %v11709 = vlaneseq
    %v11710 = vshrl.u32 %v11709, 7
    %v11711 = vsub.s32 3, %v11710
    %v11712 = vrot.slane %v11695, %v11711
    %v11717 = vmul.f32 %v11679, %v11700
    %v11718 = vmul.f32 %v11680, %v11704
    %v11719 = vmul.f32 %v11681, %v11708
    %v11720 = vmul.f32 %v11682, %v11712
    %v11721 = vmul.f32 %v11683, %v11700
    %v11722 = vmul.f32 %v11684, %v11704
    %v11723 = vmul.f32 %v11685, %v11708
    %v11724 = vmul.f32 %v11686, %v11712
    %v11725 = vmul.f32 %v11687, %v11700
    %v11726 = vmul.f32 %v11688, %v11704
    %v11727 = vmul.f32 %v11689, %v11708
    %v11728 = vmul.f32 %v11690, %v11712
    %v11729 = vmul.f32 %v11691, %v11700
    %v11730 = vmul.f32 %v11692, %v11704
    %v11731 = vmul.f32 %v11693, %v11708
    %v11732 = vmul.f32 %v11694, %v11712
    %v11733 = vadd.f32 %v11717, %v11718
    %v11734 = vadd.f32 %v11733, %v11719
    %v11735 = vadd.f32 %v11734, %v11720
    %11736 = vadd.xlane.f32.xlu0 %v11735
    %v11737 = vpop.xlane.xlu0 %11736
    %v11738 = vadd.f32 %v11721, %v11722
    %v11739 = vadd.f32 %v11738, %v11723
    %v11740 = vadd.f32 %v11739, %v11724
    %11741 = vadd.xlane.f32.xlu0 %v11740
    %v11742 = vpop.xlane.xlu0 %11741
    %v11743 = vadd.f32 %v11725, %v11726
    %v11744 = vadd.f32 %v11743, %v11727
    %v11745 = vadd.f32 %v11744, %v11728
    %11746 = vadd.xlane.f32.xlu0 %v11745
    %v11747 = vpop.xlane.xlu0 %11746
    %v11748 = vadd.f32 %v11729, %v11730
    %v11749 = vadd.f32 %v11748, %v11731
    %v11750 = vadd.f32 %v11749, %v11732
    %11751 = vadd.xlane.f32.xlu0 %v11750
    %v11752 = vpop.xlane.xlu0 %11751
    %v11753 = vmul.f32 %v11717, %v11679
    %v11754 = vmul.f32 %v11718, %v11680
    %v11755 = vmul.f32 %v11719, %v11681
    %v11756 = vmul.f32 %v11720, %v11682
    %v11757 = vmul.f32 %v11721, %v11683
    %v11758 = vmul.f32 %v11722, %v11684
    %v11759 = vmul.f32 %v11723, %v11685
    %v11760 = vmul.f32 %v11724, %v11686
    %v11761 = vmul.f32 %v11725, %v11687
    %v11762 = vmul.f32 %v11726, %v11688
    %v11763 = vmul.f32 %v11727, %v11689
    %v11764 = vmul.f32 %v11728, %v11690
    %v11765 = vmul.f32 %v11729, %v11691
    %v11766 = vmul.f32 %v11730, %v11692
    %v11767 = vmul.f32 %v11731, %v11693
    %v11768 = vmul.f32 %v11732, %v11694
    %v11769 = vadd.f32 %v11753, %v11754
    %v11770 = vadd.f32 %v11769, %v11755
    %v11771 = vadd.f32 %v11770, %v11756
    %11772 = vadd.xlane.f32.xlu0 %v11771
    %v11773 = vpop.xlane.xlu0 %11772
    %v11774 = vadd.f32 %v11757, %v11758
    %v11775 = vadd.f32 %v11774, %v11759
    %v11776 = vadd.f32 %v11775, %v11760
    %11777 = vadd.xlane.f32.xlu0 %v11776
    %v11778 = vpop.xlane.xlu0 %11777
    %v11779 = vadd.f32 %v11761, %v11762
    %v11780 = vadd.f32 %v11779, %v11763
    %v11781 = vadd.f32 %v11780, %v11764
    %11782 = vadd.xlane.f32.xlu0 %v11781
    %v11783 = vpop.xlane.xlu0 %11782
    %v11784 = vadd.f32 %v11765, %v11766
    %v11785 = vadd.f32 %v11784, %v11767
    %v11786 = vadd.f32 %v11785, %v11768
    %11787 = vadd.xlane.f32.xlu0 %v11786
    %v11788 = vpop.xlane.xlu0 %11787
    %v11789 = vmul.f32 %v11737, 0.0034722222
    %v11790 = vmul.f32 %v11742, 0.0034722222
    %v11791 = vmul.f32 %v11747, 0.0034722222
    %v11792 = vmul.f32 %v11752, 0.0034722222
    %v11793 = vmul.f32 %v11773, 0.0034722222
    %v11794 = vmul.f32 %v11778, 0.0034722222
    %v11795 = vmul.f32 %v11783, 0.0034722222
    %v11796 = vmul.f32 %v11788, 0.0034722222
    %v11797 = vmul.f32 %v11789, %v11789
    %v11798 = vmul.f32 %v11790, %v11790
    %v11799 = vmul.f32 %v11791, %v11791
    %v11800 = vmul.f32 %v11792, %v11792
    %v11801 = vsub.f32 %v11793, %v11797
    %v11802 = vsub.f32 %v11794, %v11798
    %v11803 = vsub.f32 %v11795, %v11799
    %v11804 = vsub.f32 %v11796, %v11800
    %v11805 = vsub.f32 %v11679, %v11789
    %v11806 = vsub.f32 %v11680, %v11789
    %v11807 = vsub.f32 %v11681, %v11789
    %v11808 = vsub.f32 %v11682, %v11789
    %v11809 = vsub.f32 %v11683, %v11790
    %v11810 = vsub.f32 %v11684, %v11790
    %v11811 = vsub.f32 %v11685, %v11790
    %v11812 = vsub.f32 %v11686, %v11790
    %v11813 = vsub.f32 %v11687, %v11791
    %v11814 = vsub.f32 %v11688, %v11791
    %v11815 = vsub.f32 %v11689, %v11791
    %v11816 = vsub.f32 %v11690, %v11791
    %v11817 = vsub.f32 %v11691, %v11792
    %v11818 = vsub.f32 %v11692, %v11792
    %v11819 = vsub.f32 %v11693, %v11792
    %v11820 = vsub.f32 %v11694, %v11792
    %v11821 = vadd.f32 %v11801, 1e-05
    %v11822 = vadd.f32 %v11802, 1e-05
    %v11823 = vadd.f32 %v11803, 1e-05
    %v11824 = vadd.f32 %v11804, 1e-05
    %v11825 = vrsqrt.pop %v11821
    %v11826 = vrsqrt.pop %v11822
    %v11827 = vrsqrt.pop %v11823
    %v11828 = vrsqrt.pop %v11824
    %v11829 = vmul.f32 %v11805, %v11825
    %v11830 = vmul.f32 %v11806, %v11825
    %v11831 = vmul.f32 %v11807, %v11825
    %v11832 = vmul.f32 %v11808, %v11825
    %v11833 = vmul.f32 %v11809, %v11826
    %v11834 = vmul.f32 %v11810, %v11826
    %v11835 = vmul.f32 %v11811, %v11826
    %v11836 = vmul.f32 %v11812, %v11826
    %v11837 = vmul.f32 %v11813, %v11827
    %v11838 = vmul.f32 %v11814, %v11827
    %v11839 = vmul.f32 %v11815, %v11827
    %v11840 = vmul.f32 %v11816, %v11827
    %v11841 = vmul.f32 %v11817, %v11828
    %v11842 = vmul.f32 %v11818, %v11828
    %v11843 = vmul.f32 %v11819, %v11828
    %v11844 = vmul.f32 %v11820, %v11828
    %v11845 = vld [vmem:[%s7] sm:$0xff]
    %v11846 = vld [vmem:[%s7 + $0x8] sm:$0xff]
    %v11847 = vld [vmem:[%s7 + $0x10] sm:$0xff]
    %v11848 = vld [vmem:[%s7 + $0x18] sm:$0xff]
    %11850 = vset.pattern.permute.xlu0 0
    %11851 = vperm.xlu0 %11850, %v11845
    %v11852 = vpop.permute.xlu0 %11851
    %11855 = vset.pattern.permute.xlu0 0
    %11856 = vperm.xlu0 %11855, %v11846
    %v11857 = vpop.permute.xlu0 %11856
    %11860 = vset.pattern.permute.xlu0 0
    %11861 = vperm.xlu0 %11860, %v11847
    %v11862 = vpop.permute.xlu0 %11861
    %11865 = vset.pattern.permute.xlu0 0
    %11866 = vperm.xlu0 %11865, %v11848
    %v11867 = vpop.permute.xlu0 %11866
    %v11869 = vmul.f32 %v11829, %v11852
    %v11870 = vmul.f32 %v11830, %v11852
    %v11871 = vmul.f32 %v11831, %v11852
    %v11872 = vmul.f32 %v11832, %v11852
    %v11873 = vmul.f32 %v11833, %v11857
    %v11874 = vmul.f32 %v11834, %v11857
    %v11875 = vmul.f32 %v11835, %v11857
    %v11876 = vmul.f32 %v11836, %v11857
    %v11877 = vmul.f32 %v11837, %v11862
    %v11878 = vmul.f32 %v11838, %v11862
    %v11879 = vmul.f32 %v11839, %v11862
    %v11880 = vmul.f32 %v11840, %v11862
    %v11881 = vmul.f32 %v11841, %v11867
    %v11882 = vmul.f32 %v11842, %v11867
    %v11883 = vmul.f32 %v11843, %v11867
    %v11884 = vmul.f32 %v11844, %v11867
    %v11885 = vld [vmem:[%s8] sm:$0xff]
    %v11886 = vld [vmem:[%s8 + $0x8] sm:$0xff]
    %v11887 = vld [vmem:[%s8 + $0x10] sm:$0xff]
    %v11888 = vld [vmem:[%s8 + $0x18] sm:$0xff]
    %11890 = vset.pattern.permute.xlu0 0
    %11891 = vperm.xlu0 %11890, %v11885
    %v11892 = vpop.permute.xlu0 %11891
    %11895 = vset.pattern.permute.xlu0 0
    %11896 = vperm.xlu0 %11895, %v11886
    %v11897 = vpop.permute.xlu0 %11896
    %11900 = vset.pattern.permute.xlu0 0
    %11901 = vperm.xlu0 %11900, %v11887
    %v11902 = vpop.permute.xlu0 %11901
    %11905 = vset.pattern.permute.xlu0 0
    %11906 = vperm.xlu0 %11905, %v11888
    %v11907 = vpop.permute.xlu0 %11906
    %v11909 = vadd.f32 %v11869, %v11892
    %v11910 = vadd.f32 %v11870, %v11892
    %v11911 = vadd.f32 %v11871, %v11892
    %v11912 = vadd.f32 %v11872, %v11892
    %v11913 = vadd.f32 %v11873, %v11897
    %v11914 = vadd.f32 %v11874, %v11897
    %v11915 = vadd.f32 %v11875, %v11897
    %v11916 = vadd.f32 %v11876, %v11897
    %v11917 = vadd.f32 %v11877, %v11902
    %v11918 = vadd.f32 %v11878, %v11902
    %v11919 = vadd.f32 %v11879, %v11902
    %v11920 = vadd.f32 %v11880, %v11902
    %v11921 = vadd.f32 %v11881, %v11907
    %v11922 = vadd.f32 %v11882, %v11907
    %v11923 = vadd.f32 %v11883, %v11907
    %v11924 = vadd.f32 %v11884, %v11907
    %v11925 = vld [vmem:[%s11] sm:$0xff]
    %v11926 = vld [vmem:[%s11 + $0x8] sm:$0xff]
    %v11927 = vld [vmem:[%s11 + $0x10] sm:$0xff]
    %v11928 = vld [vmem:[%s11 + $0x18] sm:$0xff]
    %v11929 = vld [vmem:[%s11 + $0x20] sm:$0xff]
    %v11930 = vld [vmem:[%s11 + $0x28] sm:$0xff]
    %v11931 = vld [vmem:[%s11 + $0x30] sm:$0xff]
    %v11932 = vld [vmem:[%s11 + $0x38] sm:$0xff]
    %v11933 = vld [vmem:[%s11 + $0x40] sm:$0xff]
    %v11934 = vld [vmem:[%s11 + $0x48] sm:$0xff]
    %v11935 = vld [vmem:[%s11 + $0x50] sm:$0xff]
    %v11936 = vld [vmem:[%s11 + $0x58] sm:$0xff]
    %v11937 = vld [vmem:[%s11 + $0x60] sm:$0xff]
    %v11938 = vld [vmem:[%s11 + $0x68] sm:$0xff]
    %v11939 = vld [vmem:[%s11 + $0x70] sm:$0xff]
    %v11940 = vld [vmem:[%s11 + $0x78] sm:$0xff]
    %v11941 = vld [vmem:[%s11 + $0x80] sm:$0xff]
    %v11942 = vld [vmem:[%s11 + $0x88] sm:$0xff]
    %v11943 = vld [vmem:[%s11 + $0x90] sm:$0xff]
    %v11944 = vld [vmem:[%s11 + $0x98] sm:$0xff]
    %v11945 = vld [vmem:[%s11 + $0xa0] sm:$0xff]
    %v11946 = vld [vmem:[%s11 + $0xa8] sm:$0xff]
    %v11947 = vld [vmem:[%s11 + $0xb0] sm:$0xff]
    %v11948 = vld [vmem:[%s11 + $0xb8] sm:$0xff]
    %v11949 = vld [vmem:[%s11 + $0xc0] sm:$0xff]
    %v11950 = vld [vmem:[%s11 + $0xc8] sm:$0xff]
    %v11951 = vld [vmem:[%s11 + $0xd0] sm:$0xff]
    %v11952 = vld [vmem:[%s11 + $0xd8] sm:$0xff]
    %v11953 = vld [vmem:[%s11 + $0xe0] sm:$0xff]
    %v11954 = vld [vmem:[%s11 + $0xe8] sm:$0xff]
    %v11955 = vld [vmem:[%s11 + $0xf0] sm:$0xff]
    %v11956 = vld [vmem:[%s11 + $0xf8] sm:$0xff]
    %v11957 = vld [vmem:[%s11 + $0x100] sm:$0xff]
    %v11958 = vld [vmem:[%s11 + $0x108] sm:$0xff]
    %v11959 = vld [vmem:[%s11 + $0x110] sm:$0xff]
    %v11960 = vld [vmem:[%s11 + $0x118] sm:$0xff]
    %v11961 = vld [vmem:[%s11 + $0x120] sm:$0xff]
    %v11962 = vld [vmem:[%s11 + $0x128] sm:$0xff]
    %v11963 = vld [vmem:[%s11 + $0x130] sm:$0xff]
    %v11964 = vld [vmem:[%s11 + $0x138] sm:$0xff]
    %v11965 = vld [vmem:[%s11 + $0x140] sm:$0xff]
    %v11966 = vld [vmem:[%s11 + $0x148] sm:$0xff]
    %v11967 = vld [vmem:[%s11 + $0x150] sm:$0xff]
    %v11968 = vld [vmem:[%s11 + $0x158] sm:$0xff]
    %v11969 = vld [vmem:[%s11 + $0x160] sm:$0xff]
    %v11970 = vld [vmem:[%s11 + $0x168] sm:$0xff]
    %v11971 = vld [vmem:[%s11 + $0x170] sm:$0xff]
    %v11972 = vld [vmem:[%s11 + $0x178] sm:$0xff]
    %v11973 = vld [vmem:[%s11 + $0x180] sm:$0xff]
    %v11974 = vld [vmem:[%s11 + $0x188] sm:$0xff]
    %v11975 = vld [vmem:[%s11 + $0x190] sm:$0xff]
    %v11976 = vld [vmem:[%s11 + $0x198] sm:$0xff]
    %v11977 = vld [vmem:[%s11 + $0x1a0] sm:$0xff]
    %v11978 = vld [vmem:[%s11 + $0x1a8] sm:$0xff]
    %v11979 = vld [vmem:[%s11 + $0x1b0] sm:$0xff]
    %v11980 = vld [vmem:[%s11 + $0x1b8] sm:$0xff]
    %v11981 = vld [vmem:[%s11 + $0x1c0] sm:$0xff]
    %v11982 = vld [vmem:[%s11 + $0x1c8] sm:$0xff]
    %v11983 = vld [vmem:[%s11 + $0x1d0] sm:$0xff]
    %v11984 = vld [vmem:[%s11 + $0x1d8] sm:$0xff]
    %v11985 = vld [vmem:[%s11 + $0x1e0] sm:$0xff]
    %v11986 = vld [vmem:[%s11 + $0x1e8] sm:$0xff]
    %v11987 = vld [vmem:[%s11 + $0x1f0] sm:$0xff]
    %v11988 = vld [vmem:[%s11 + $0x1f8] sm:$0xff]
    %v11989 = vld [vmem:[%s11 + $0x200] sm:$0xff]
    %v11990 = vld [vmem:[%s11 + $0x208] sm:$0xff]
    %v11991 = vld [vmem:[%s11 + $0x210] sm:$0xff]
    %v11992 = vld [vmem:[%s11 + $0x218] sm:$0xff]
    %v11993 = vld [vmem:[%s11 + $0x220] sm:$0xff]
    %v11994 = vld [vmem:[%s11 + $0x228] sm:$0xff]
    %v11995 = vld [vmem:[%s11 + $0x230] sm:$0xff]
    %v11996 = vld [vmem:[%s11 + $0x238] sm:$0xff]
    %v11997 = vld [vmem:[%s11 + $0x240] sm:$0xff]
    %v11998 = vld [vmem:[%s11 + $0x248] sm:$0xff]
    %v11999 = vld [vmem:[%s11 + $0x250] sm:$0xff]
    %v12000 = vld [vmem:[%s11 + $0x258] sm:$0xff]
    %v12001 = vld [vmem:[%s11 + $0x260] sm:$0xff]
    %v12002 = vld [vmem:[%s11 + $0x268] sm:$0xff]
    %v12003 = vld [vmem:[%s11 + $0x270] sm:$0xff]
    %v12004 = vld [vmem:[%s11 + $0x278] sm:$0xff]
    %v12005 = vld [vmem:[%s11 + $0x280] sm:$0xff]
    %v12006 = vld [vmem:[%s11 + $0x288] sm:$0xff]
    %v12007 = vld [vmem:[%s11 + $0x290] sm:$0xff]
    %v12008 = vld [vmem:[%s11 + $0x298] sm:$0xff]
    %v12009 = vld [vmem:[%s11 + $0x2a0] sm:$0xff]
    %v12010 = vld [vmem:[%s11 + $0x2a8] sm:$0xff]
    %v12011 = vld [vmem:[%s11 + $0x2b0] sm:$0xff]
    %v12012 = vld [vmem:[%s11 + $0x2b8] sm:$0xff]
    %v12013 = vld [vmem:[%s11 + $0x2c0] sm:$0xff]
    %v12014 = vld [vmem:[%s11 + $0x2c8] sm:$0xff]
    %v12015 = vld [vmem:[%s11 + $0x2d0] sm:$0xff]
    %v12016 = vld [vmem:[%s11 + $0x2d8] sm:$0xff]
    %v12017 = vld [vmem:[%s11 + $0x2e0] sm:$0xff]
    %v12018 = vld [vmem:[%s11 + $0x2e8] sm:$0xff]
    %v12019 = vld [vmem:[%s11 + $0x2f0] sm:$0xff]
    %v12020 = vld [vmem:[%s11 + $0x2f8] sm:$0xff]
    %v12021 = vld [vmem:[%s11 + $0x300] sm:$0xff]
    %v12022 = vld [vmem:[%s11 + $0x308] sm:$0xff]
    %v12023 = vld [vmem:[%s11 + $0x310] sm:$0xff]
    %v12024 = vld [vmem:[%s11 + $0x318] sm:$0xff]
    %v12025 = vld [vmem:[%s11 + $0x320] sm:$0xff]
    %v12026 = vld [vmem:[%s11 + $0x328] sm:$0xff]
    %v12027 = vld [vmem:[%s11 + $0x330] sm:$0xff]
    %v12028 = vld [vmem:[%s11 + $0x338] sm:$0xff]
    %v12029 = vld [vmem:[%s11 + $0x340] sm:$0xff]
    %v12030 = vld [vmem:[%s11 + $0x348] sm:$0xff]
    %v12031 = vld [vmem:[%s11 + $0x350] sm:$0xff]
    %v12032 = vld [vmem:[%s11 + $0x358] sm:$0xff]
    %v12033 = vld [vmem:[%s11 + $0x360] sm:$0xff]
    %v12034 = vld [vmem:[%s11 + $0x368] sm:$0xff]
    %v12035 = vld [vmem:[%s11 + $0x370] sm:$0xff]
    %v12036 = vld [vmem:[%s11 + $0x378] sm:$0xff]
    %v12037 = vld [vmem:[%s11 + $0x380] sm:$0xff]
    %v12038 = vld [vmem:[%s11 + $0x388] sm:$0xff]
    %v12039 = vld [vmem:[%s11 + $0x390] sm:$0xff]
    %v12040 = vld [vmem:[%s11 + $0x398] sm:$0xff]
    %v12041 = vld [vmem:[%s11 + $0x3a0] sm:$0xff]
    %v12042 = vld [vmem:[%s11 + $0x3a8] sm:$0xff]
    %v12043 = vld [vmem:[%s11 + $0x3b0] sm:$0xff]
    %v12044 = vld [vmem:[%s11 + $0x3b8] sm:$0xff]
    %v12045 = vld [vmem:[%s11 + $0x3c0] sm:$0xff]
    %v12046 = vld [vmem:[%s11 + $0x3c8] sm:$0xff]
    %v12047 = vld [vmem:[%s11 + $0x3d0] sm:$0xff]
    %v12048 = vld [vmem:[%s11 + $0x3d8] sm:$0xff]
    %v12049 = vld [vmem:[%s11 + $0x3e0] sm:$0xff]
    %v12050 = vld [vmem:[%s11 + $0x3e8] sm:$0xff]
    %v12051 = vld [vmem:[%s11 + $0x3f0] sm:$0xff]
    %v12052 = vld [vmem:[%s11 + $0x3f8] sm:$0xff]
    %v12053 = vld [vmem:[%s11 + $0x400] sm:$0xff]
    %v12054 = vld [vmem:[%s11 + $0x408] sm:$0xff]
    %v12055 = vld [vmem:[%s11 + $0x410] sm:$0xff]
    %v12056 = vld [vmem:[%s11 + $0x418] sm:$0xff]
    %v12057 = vld [vmem:[%s11 + $0x420] sm:$0xff]
    %v12058 = vld [vmem:[%s11 + $0x428] sm:$0xff]
    %v12059 = vld [vmem:[%s11 + $0x430] sm:$0xff]
    %v12060 = vld [vmem:[%s11 + $0x438] sm:$0xff]
    %v12061 = vld [vmem:[%s11 + $0x440] sm:$0xff]
    %v12062 = vld [vmem:[%s11 + $0x448] sm:$0xff]
    %v12063 = vld [vmem:[%s11 + $0x450] sm:$0xff]
    %v12064 = vld [vmem:[%s11 + $0x458] sm:$0xff]
    %v12065 = vld [vmem:[%s11 + $0x460] sm:$0xff]
    %v12066 = vld [vmem:[%s11 + $0x468] sm:$0xff]
    %v12067 = vld [vmem:[%s11 + $0x470] sm:$0xff]
    %v12068 = vld [vmem:[%s11 + $0x478] sm:$0xff]
    %v12069 = vld [vmem:[%s11 + $0x480] sm:$0xff]
    %v12070 = vld [vmem:[%s11 + $0x488] sm:$0xff]
    %v12071 = vld [vmem:[%s11 + $0x490] sm:$0xff]
    %v12072 = vld [vmem:[%s11 + $0x498] sm:$0xff]
    %v12073 = vld [vmem:[%s11 + $0x4a0] sm:$0xff]
    %v12074 = vld [vmem:[%s11 + $0x4a8] sm:$0xff]
    %v12075 = vld [vmem:[%s11 + $0x4b0] sm:$0xff]
    %v12076 = vld [vmem:[%s11 + $0x4b8] sm:$0xff]
    %v12077 = vld [vmem:[%s11 + $0x4c0] sm:$0xff]
    %v12078 = vld [vmem:[%s11 + $0x4c8] sm:$0xff]
    %v12079 = vld [vmem:[%s11 + $0x4d0] sm:$0xff]
    %v12080 = vld [vmem:[%s11 + $0x4d8] sm:$0xff]
    %v12081 = vld [vmem:[%s11 + $0x4e0] sm:$0xff]
    %v12082 = vld [vmem:[%s11 + $0x4e8] sm:$0xff]
    %v12083 = vld [vmem:[%s11 + $0x4f0] sm:$0xff]
    %v12084 = vld [vmem:[%s11 + $0x4f8] sm:$0xff]
    %v12085 = vld [vmem:[%s11 + $0x500] sm:$0xff]
    %v12086 = vld [vmem:[%s11 + $0x508] sm:$0xff]
    %v12087 = vld [vmem:[%s11 + $0x510] sm:$0xff]
    %v12088 = vld [vmem:[%s11 + $0x518] sm:$0xff]
    %v12089 = vld [vmem:[%s11 + $0x520] sm:$0xff]
    %v12090 = vld [vmem:[%s11 + $0x528] sm:$0xff]
    %v12091 = vld [vmem:[%s11 + $0x530] sm:$0xff]
    %v12092 = vld [vmem:[%s11 + $0x538] sm:$0xff]
    %v12093 = vld [vmem:[%s11 + $0x540] sm:$0xff]
    %v12094 = vld [vmem:[%s11 + $0x548] sm:$0xff]
    %v12095 = vld [vmem:[%s11 + $0x550] sm:$0xff]
    %v12096 = vld [vmem:[%s11 + $0x558] sm:$0xff]
    %v12097 = vld [vmem:[%s11 + $0x560] sm:$0xff]
    %v12098 = vld [vmem:[%s11 + $0x568] sm:$0xff]
    %v12099 = vld [vmem:[%s11 + $0x570] sm:$0xff]
    %v12100 = vld [vmem:[%s11 + $0x578] sm:$0xff]
    %v12101 = vld [vmem:[%s11 + $0x580] sm:$0xff]
    %v12102 = vld [vmem:[%s11 + $0x588] sm:$0xff]
    %v12103 = vld [vmem:[%s11 + $0x590] sm:$0xff]
    %v12104 = vld [vmem:[%s11 + $0x598] sm:$0xff]
    %v12105 = vld [vmem:[%s11 + $0x5a0] sm:$0xff]
    %v12106 = vld [vmem:[%s11 + $0x5a8] sm:$0xff]
    %v12107 = vld [vmem:[%s11 + $0x5b0] sm:$0xff]
    %v12108 = vld [vmem:[%s11 + $0x5b8] sm:$0xff]
    %v12109 = vld [vmem:[%s11 + $0x5c0] sm:$0xff]
    %v12110 = vld [vmem:[%s11 + $0x5c8] sm:$0xff]
    %v12111 = vld [vmem:[%s11 + $0x5d0] sm:$0xff]
    %v12112 = vld [vmem:[%s11 + $0x5d8] sm:$0xff]
    %v12113 = vld [vmem:[%s11 + $0x5e0] sm:$0xff]
    %v12114 = vld [vmem:[%s11 + $0x5e8] sm:$0xff]
    %v12115 = vld [vmem:[%s11 + $0x5f0] sm:$0xff]
    %v12116 = vld [vmem:[%s11 + $0x5f8] sm:$0xff]
    %v12117 = vld [vmem:[%s11 + $0x600] sm:$0xff]
    %v12118 = vld [vmem:[%s11 + $0x608] sm:$0xff]
    %v12119 = vld [vmem:[%s11 + $0x610] sm:$0xff]
    %v12120 = vld [vmem:[%s11 + $0x618] sm:$0xff]
    %v12121 = vld [vmem:[%s11 + $0x620] sm:$0xff]
    %v12122 = vld [vmem:[%s11 + $0x628] sm:$0xff]
    %v12123 = vld [vmem:[%s11 + $0x630] sm:$0xff]
    %v12124 = vld [vmem:[%s11 + $0x638] sm:$0xff]
    %v12125 = vld [vmem:[%s11 + $0x640] sm:$0xff]
    %v12126 = vld [vmem:[%s11 + $0x648] sm:$0xff]
    %v12127 = vld [vmem:[%s11 + $0x650] sm:$0xff]
    %v12128 = vld [vmem:[%s11 + $0x658] sm:$0xff]
    %v12129 = vld [vmem:[%s11 + $0x660] sm:$0xff]
    %v12130 = vld [vmem:[%s11 + $0x668] sm:$0xff]
    %v12131 = vld [vmem:[%s11 + $0x670] sm:$0xff]
    %v12132 = vld [vmem:[%s11 + $0x678] sm:$0xff]
    %v12133 = vld [vmem:[%s11 + $0x680] sm:$0xff]
    %v12134 = vld [vmem:[%s11 + $0x688] sm:$0xff]
    %v12135 = vld [vmem:[%s11 + $0x690] sm:$0xff]
    %v12136 = vld [vmem:[%s11 + $0x698] sm:$0xff]
    %v12137 = vld [vmem:[%s11 + $0x6a0] sm:$0xff]
    %v12138 = vld [vmem:[%s11 + $0x6a8] sm:$0xff]
    %v12139 = vld [vmem:[%s11 + $0x6b0] sm:$0xff]
    %v12140 = vld [vmem:[%s11 + $0x6b8] sm:$0xff]
    %v12141 = vld [vmem:[%s11 + $0x6c0] sm:$0xff]
    %v12142 = vld [vmem:[%s11 + $0x6c8] sm:$0xff]
    %v12143 = vld [vmem:[%s11 + $0x6d0] sm:$0xff]
    %v12144 = vld [vmem:[%s11 + $0x6d8] sm:$0xff]
    %v12145 = vld [vmem:[%s11 + $0x6e0] sm:$0xff]
    %v12146 = vld [vmem:[%s11 + $0x6e8] sm:$0xff]
    %v12147 = vld [vmem:[%s11 + $0x6f0] sm:$0xff]
    %v12148 = vld [vmem:[%s11 + $0x6f8] sm:$0xff]
    %v12149 = vld [vmem:[%s11 + $0x700] sm:$0xff]
    %v12150 = vld [vmem:[%s11 + $0x708] sm:$0xff]
    %v12151 = vld [vmem:[%s11 + $0x710] sm:$0xff]
    %v12152 = vld [vmem:[%s11 + $0x718] sm:$0xff]
    %v12153 = vld [vmem:[%s11 + $0x720] sm:$0xff]
    %v12154 = vld [vmem:[%s11 + $0x728] sm:$0xff]
    %v12155 = vld [vmem:[%s11 + $0x730] sm:$0xff]
    %v12156 = vld [vmem:[%s11 + $0x738] sm:$0xff]
    %v12157 = vld [vmem:[%s11 + $0x740] sm:$0xff]
    %v12158 = vld [vmem:[%s11 + $0x748] sm:$0xff]
    %v12159 = vld [vmem:[%s11 + $0x750] sm:$0xff]
    %v12160 = vld [vmem:[%s11 + $0x758] sm:$0xff]
    %v12161 = vld [vmem:[%s11 + $0x760] sm:$0xff]
    %v12162 = vld [vmem:[%s11 + $0x768] sm:$0xff]
    %v12163 = vld [vmem:[%s11 + $0x770] sm:$0xff]
    %v12164 = vld [vmem:[%s11 + $0x778] sm:$0xff]
    %v12165 = vld [vmem:[%s11 + $0x780] sm:$0xff]
    %v12166 = vld [vmem:[%s11 + $0x788] sm:$0xff]
    %v12167 = vld [vmem:[%s11 + $0x790] sm:$0xff]
    %v12168 = vld [vmem:[%s11 + $0x798] sm:$0xff]
    %v12169 = vld [vmem:[%s11 + $0x7a0] sm:$0xff]
    %v12170 = vld [vmem:[%s11 + $0x7a8] sm:$0xff]
    %v12171 = vld [vmem:[%s11 + $0x7b0] sm:$0xff]
    %v12172 = vld [vmem:[%s11 + $0x7b8] sm:$0xff]
    %v12173 = vld [vmem:[%s11 + $0x7c0] sm:$0xff]
    %v12174 = vld [vmem:[%s11 + $0x7c8] sm:$0xff]
    %v12175 = vld [vmem:[%s11 + $0x7d0] sm:$0xff]
    %v12176 = vld [vmem:[%s11 + $0x7d8] sm:$0xff]
    %v12177 = vld [vmem:[%s11 + $0x7e0] sm:$0xff]
    %v12178 = vld [vmem:[%s11 + $0x7e8] sm:$0xff]
    %v12179 = vld [vmem:[%s11 + $0x7f0] sm:$0xff]
    %v12180 = vld [vmem:[%s11 + $0x7f8] sm:$0xff]
    %12181 = vmatprep.subr.mxu0 %v11926
    %12182 = vmatpush1.msra.mxu0 %v11925
    %12183 = vmatprep.subr.mxu0 %v11934
    %12184 = vmatpush1.msra.mxu0 %v11933
    %12185 = vmatprep.subr.mxu0 %v11942
    %12186 = vmatpush1.msra.mxu0 %v11941
    %12187 = vmatprep.subr.mxu0 %v11950
    %12188 = vmatpush1.msra.mxu0 %v11949
    %12189 = vmatprep.subr.mxu0 %v11958
    %12190 = vmatpush1.msra.mxu0 %v11957
    %12191 = vmatprep.subr.mxu0 %v11966
    %12192 = vmatpush1.msra.mxu0 %v11965
    %12193 = vmatprep.subr.mxu0 %v11974
    %12194 = vmatpush1.msra.mxu0 %v11973
    %12195 = vmatprep.subr.mxu0 %v11982
    %12196 = vmatpush1.msra.mxu0 %v11981
    %12197 = vmatprep.subr.mxu0 %v11990
    %12198 = vmatpush1.msra.mxu0 %v11989
    %12199 = vmatprep.subr.mxu0 %v11998
    %12200 = vmatpush1.msra.mxu0 %v11997
    %12201 = vmatprep.subr.mxu0 %v12006
    %12202 = vmatpush1.msra.mxu0 %v12005
    %12203 = vmatprep.subr.mxu0 %v12014
    %12204 = vmatpush1.msra.mxu0 %v12013
    %12205 = vmatprep.subr.mxu0 %v12022
    %12206 = vmatpush1.msra.mxu0 %v12021
    %12207 = vmatprep.subr.mxu0 %v12030
    %12208 = vmatpush1.msra.mxu0 %v12029
    %12209 = vmatprep.subr.mxu0 %v12038
    %12210 = vmatpush1.msra.mxu0 %v12037
    %12211 = vmatprep.subr.mxu0 %v12046
    %12212 = vmatpush1.msra.mxu0 %v12045
    %12213 = vmatprep.subr.mxu0 %v12054
    %12214 = vmatpush1.msra.mxu0 %v12053
    %12215 = vmatprep.subr.mxu0 %v12062
    %12216 = vmatpush1.msra.mxu0 %v12061
    %12217 = vmatprep.subr.mxu0 %v12070
    %12218 = vmatpush1.msra.mxu0 %v12069
    %12219 = vmatprep.subr.mxu0 %v12078
    %12220 = vmatpush1.msra.mxu0 %v12077
    %12221 = vmatprep.subr.mxu0 %v12086
    %12222 = vmatpush1.msra.mxu0 %v12085
    %12223 = vmatprep.subr.mxu0 %v12094
    %12224 = vmatpush1.msra.mxu0 %v12093
    %12225 = vmatprep.subr.mxu0 %v12102
    %12226 = vmatpush1.msra.mxu0 %v12101
    %12227 = vmatprep.subr.mxu0 %v12110
    %12228 = vmatpush1.msra.mxu0 %v12109
    %12229 = vmatprep.subr.mxu0 %v12118
    %12230 = vmatpush1.msra.mxu0 %v12117
    %12231 = vmatprep.subr.mxu0 %v12126
    %12232 = vmatpush1.msra.mxu0 %v12125
    %12233 = vmatprep.subr.mxu0 %v12134
    %12234 = vmatpush1.msra.mxu0 %v12133
    %12235 = vmatprep.subr.mxu0 %v12142
    %12236 = vmatpush1.msra.mxu0 %v12141
    %12237 = vmatprep.subr.mxu0 %v12150
    %12238 = vmatpush1.msra.mxu0 %v12149
    %12239 = vmatprep.subr.mxu0 %v12158
    %12240 = vmatpush1.msra.mxu0 %v12157
    %12241 = vmatprep.subr.mxu0 %v12166
    %12242 = vmatpush1.msra.mxu0 %v12165
    %12243 = vmatprep.subr.mxu0 %v12174
    %12244 = vmatpush1.msra.mxu0 %v12173
    %12245 = vmatprep.mubr.f32.mxu0 %v11910
    %12246 = vmatmul.mubr.f32.gmra.mrb[0].mxu0 %v11909
    %v12247 = vpop.f32.mrb[0].mxu0
    %v12248 = vadd.f32 0.0, %v12247
    %v12249 = vpop.f32.mrb[0].mxu0
    %v12250 = vadd.f32 0.0, %v12249
    %12251 = vmatprep.mubr.f32.mxu0 %v11914
    %12252 = vmatmul.mubr.f32.gmra.mrb[0].mxu0 %v11913
    %v12253 = vpop.f32.mrb[0].mxu0
    %v12254 = vadd.f32 0.0, %v12253
    %v12255 = vpop.f32.mrb[0].mxu0
    %v12256 = vadd.f32 0.0, %v12255
    %12257 = vmatprep.mubr.f32.mxu0 %v11918
    %12258 = vmatmul.mubr.f32.gmra.mrb[0].mxu0 %v11917
    %v12259 = vpop.f32.mrb[0].mxu0
    %v12260 = vadd.f32 0.0, %v12259
    %v12261 = vpop.f32.mrb[0].mxu0
    %v12262 = vadd.f32 0.0, %v12261
    %12263 = vmatprep.mubr.f32.mxu0 %v11922
    %12264 = vmatmul.mubr.f32.gmra.mrb[0].mxu0 %v11921
    %v12265 = vpop.f32.mrb[0].mxu0
    %v12266 = vadd.f32 0.0, %v12265
    %v12267 = vpop.f32.mrb[0].mxu0
    %v12268 = vadd.f32 0.0, %v12267
    %12269 = vdwg.mxu0
    %12270 = vmatprep.subr.mxu0 %v11928
    %12271 = vmatpush1.msra.mxu0 %v11927
    %12272 = vmatprep.subr.mxu0 %v11936
    %12273 = vmatpush1.msra.mxu0 %v11935
    %12274 = vmatprep.subr.mxu0 %v11944
    %12275 = vmatpush1.msra.mxu0 %v11943
    %12276 = vmatprep.subr.mxu0 %v11952
    %12277 = vmatpush1.msra.mxu0 %v11951
    %12278 = vmatprep.subr.mxu0 %v11960
    %12279 = vmatpush1.msra.mxu0 %v11959
    %12280 = vmatprep.subr.mxu0 %v11968
    %12281 = vmatpush1.msra.mxu0 %v11967
    %12282 = vmatprep.subr.mxu0 %v11976
    %12283 = vmatpush1.msra.mxu0 %v11975
    %12284 = vmatprep.subr.mxu0 %v11984
    %12285 = vmatpush1.msra.mxu0 %v11983
    %12286 = vmatprep.subr.mxu0 %v11992
    %12287 = vmatpush1.msra.mxu0 %v11991
    %12288 = vmatprep.subr.mxu0 %v12000
    %12289 = vmatpush1.msra.mxu0 %v11999
    %12290 = vmatprep.subr.mxu0 %v12008
    %12291 = vmatpush1.msra.mxu0 %v12007
    %12292 = vmatprep.subr.mxu0 %v12016
    %12293 = vmatpush1.msra.mxu0 %v12015
    %12294 = vmatprep.subr.mxu0 %v12024
    %12295 = vmatpush1.msra.mxu0 %v12023
    %12296 = vmatprep.subr.mxu0 %v12032
    %12297 = vmatpush1.msra.mxu0 %v12031
    %12298 = vmatprep.subr.mxu0 %v12040
    %12299 = vmatpush1.msra.mxu0 %v12039
    %12300 = vmatprep.subr.mxu0 %v12048
    %12301 = vmatpush1.msra.mxu0 %v12047
    %12302 = vmatprep.subr.mxu0 %v12056
    %12303 = vmatpush1.msra.mxu0 %v12055
    %12304 = vmatprep.subr.mxu0 %v12064
    %12305 = vmatpush1.msra.mxu0 %v12063
    %12306 = vmatprep.subr.mxu0 %v12072
    %12307 = vmatpush1.msra.mxu0 %v12071
    %12308 = vmatprep.subr.mxu0 %v12080
    %12309 = vmatpush1.msra.mxu0 %v12079
    %12310 = vmatprep.subr.mxu0 %v12088
    %12311 = vmatpush1.msra.mxu0 %v12087
    %12312 = vmatprep.subr.mxu0 %v12096
    %12313 = vmatpush1.msra.mxu0 %v12095
    %12314 = vmatprep.subr.mxu0 %v12104
    %12315 = vmatpush1.msra.mxu0 %v12103
    %12316 = vmatprep.subr.mxu0 %v12112
    %12317 = vmatpush1.msra.mxu0 %v12111
    %12318 = vmatprep.subr.mxu0 %v12120
    %12319 = vmatpush1.msra.mxu0 %v12119
    %12320 = vmatprep.subr.mxu0 %v12128
    %12321 = vmatpush1.msra.mxu0 %v12127
    %12322 = vmatprep.subr.mxu0 %v12136
    %12323 = vmatpush1.msra.mxu0 %v12135
    %12324 = vmatprep.subr.mxu0 %v12144
    %12325 = vmatpush1.msra.mxu0 %v12143
    %12326 = vmatprep.subr.mxu0 %v12152
    %12327 = vmatpush1.msra.mxu0 %v12151
    %12328 = vmatprep.subr.mxu0 %v12160
    %12329 = vmatpush1.msra.mxu0 %v12159
    %12330 = vmatprep.subr.mxu0 %v12168
    %12331 = vmatpush1.msra.mxu0 %v12167
    %12332 = vmatprep.subr.mxu0 %v12176
    %12333 = vmatpush1.msra.mxu0 %v12175
    %12334 = vmatprep.mubr.f32.mxu0 %v11910
    %12335 = vmatmul.mubr.f32.gmra.mrb[0].mxu0 %v11909
    %v12336 = vpop.f32.mrb[0].mxu0
    %v12337 = vadd.f32 0.0, %v12336
    %v12338 = vpop.f32.mrb[0].mxu0
    %v12339 = vadd.f32 0.0, %v12338
    %12340 = vmatprep.mubr.f32.mxu0 %v11914
    %12341 = vmatmul.mubr.f32.gmra.mrb[0].mxu0 %v11913
    %v12342 = vpop.f32.mrb[0].mxu0
    %v12343 = vadd.f32 0.0, %v12342
    %v12344 = vpop.f32.mrb[0].mxu0
    %v12345 = vadd.f32 0.0, %v12344
    %12346 = vmatprep.mubr.f32.mxu0 %v11918
    %12347 = vmatmul.mubr.f32.gmra.mrb[0].mxu0 %v11917
    %v12348 = vpop.f32.mrb[0].mxu0
    %v12349 = vadd.f32 0.0, %v12348
    %v12350 = vpop.f32.mrb[0].mxu0
    %v12351 = vadd.f32 0.0, %v12350
    %12352 = vmatprep.mubr.f32.mxu0 %v11922
    %12353 = vmatmul.mubr.f32.gmra.mrb[0].mxu0 %v11921
    %v12354 = vpop.f32.mrb[0].mxu0
    %v12355 = vadd.f32 0.0, %v12354
    %v12356 = vpop.f32.mrb[0].mxu0
    %v12357 = vadd.f32 0.0, %v12356
    %12358 = vdwg.mxu0
    %12359 = vmatprep.subr.mxu0 %v11930
    %12360 = vmatpush1.msra.mxu0 %v11929
    %12361 = vmatprep.subr.mxu0 %v11938
    %12362 = vmatpush1.msra.mxu0 %v11937
    %12363 = vmatprep.subr.mxu0 %v11946
    %12364 = vmatpush1.msra.mxu0 %v11945
    %12365 = vmatprep.subr.mxu0 %v11954
    %12366 = vmatpush1.msra.mxu0 %v11953
    %12367 = vmatprep.subr.mxu0 %v11962
    %12368 = vmatpush1.msra.mxu0 %v11961
    %12369 = vmatprep.subr.mxu0 %v11970
    %12370 = vmatpush1.msra.mxu0 %v11969
    %12371 = vmatprep.subr.mxu0 %v11978
    %12372 = vmatpush1.msra.mxu0 %v11977
    %12373 = vmatprep.subr.mxu0 %v11986
    %12374 = vmatpush1.msra.mxu0 %v11985
    %12375 = vmatprep.subr.mxu0 %v11994
    %12376 = vmatpush1.msra.mxu0 %v11993
    %12377 = vmatprep.subr.mxu0 %v12002
    %12378 = vmatpush1.msra.mxu0 %v12001
    %12379 = vmatprep.subr.mxu0 %v12010
    %12380 = vmatpush1.msra.mxu0 %v12009
    %12381 = vmatprep.subr.mxu0 %v12018
    %12382 = vmatpush1.msra.mxu0 %v12017
    %12383 = vmatprep.subr.mxu0 %v12026
    %12384 = vmatpush1.msra.mxu0 %v12025
    %12385 = vmatprep.subr.mxu0 %v12034
    %12386 = vmatpush1.msra.mxu0 %v12033
    %12387 = vmatprep.subr.mxu0 %v12042
    %12388 = vmatpush1.msra.mxu0 %v12041
    %12389 = vmatprep.subr.mxu0 %v12050
    %12390 = vmatpush1.msra.mxu0 %v12049
    %12391 = vmatprep.subr.mxu0 %v12058
    %12392 = vmatpush1.msra.mxu0 %v12057
    %12393 = vmatprep.subr.mxu0 %v12066
    %12394 = vmatpush1.msra.mxu0 %v12065
    %12395 = vmatprep.subr.mxu0 %v12074
    %12396 = vmatpush1.msra.mxu0 %v12073
    %12397 = vmatprep.subr.mxu0 %v12082
    %12398 = vmatpush1.msra.mxu0 %v12081
    %12399 = vmatprep.subr.mxu0 %v12090
    %12400 = vmatpush1.msra.mxu0 %v12089
    %12401 = vmatprep.subr.mxu0 %v12098
    %12402 = vmatpush1.msra.mxu0 %v12097
    %12403 = vmatprep.subr.mxu0 %v12106
    %12404 = vmatpush1.msra.mxu0 %v12105
    %12405 = vmatprep.subr.mxu0 %v12114
    %12406 = vmatpush1.msra.mxu0 %v12113
    %12407 = vmatprep.subr.mxu0 %v12122
    %12408 = vmatpush1.msra.mxu0 %v12121
    %12409 = vmatprep.subr.mxu0 %v12130
    %12410 = vmatpush1.msra.mxu0 %v12129
    %12411 = vmatprep.subr.mxu0 %v12138
    %12412 = vmatpush1.msra.mxu0 %v12137
    %12413 = vmatprep.subr.mxu0 %v12146
    %12414 = vmatpush1.msra.mxu0 %v12145
    %12415 = vmatprep.subr.mxu0 %v12154
    %12416 = vmatpush1.msra.mxu0 %v12153
    %12417 = vmatprep.subr.mxu0 %v12162
    %12418 = vmatpush1.msra.mxu0 %v12161
    %12419 = vmatprep.subr.mxu0 %v12170
    %12420 = vmatpush1.msra.mxu0 %v12169
    %12421 = vmatprep.subr.mxu0 %v12178
    %12422 = vmatpush1.msra.mxu0 %v12177
    %12423 = vmatprep.mubr.f32.mxu0 %v11910
    %12424 = vmatmul.mubr.f32.gmra.mrb[0].mxu0 %v11909
    %v12425 = vpop.f32.mrb[0].mxu0
    %v12426 = vadd.f32 0.0, %v12425
    %v12427 = vpop.f32.mrb[0].mxu0
    %v12428 = vadd.f32 0.0, %v12427
    %12429 = vmatprep.mubr.f32.mxu0 %v11914
    %12430 = vmatmul.mubr.f32.gmra.mrb[0].mxu0 %v11913
    %v12431 = vpop.f32.mrb[0].mxu0
    %v12432 = vadd.f32 0.0, %v12431
    %v12433 = vpop.f32.mrb[0].mxu0
    %v12434 = vadd.f32 0.0, %v12433
    %12435 = vmatprep.mubr.f32.mxu0 %v11918
    %12436 = vmatmul.mubr.f32.gmra.mrb[0].mxu0 %v11917
    %v12437 = vpop.f32.mrb[0].mxu0
    %v12438 = vadd.f32 0.0, %v12437
    %v12439 = vpop.f32.mrb[0].mxu0
    %v12440 = vadd.f32 0.0, %v12439
    %12441 = vmatprep.mubr.f32.mxu0 %v11922
    %12442 = vmatmul.mubr.f32.gmra.mrb[0].mxu0 %v11921
    %v12443 = vpop.f32.mrb[0].mxu0
    %v12444 = vadd.f32 0.0, %v12443
    %v12445 = vpop.f32.mrb[0].mxu0
    %v12446 = vadd.f32 0.0, %v12445
    %12447 = vdwg.mxu0
    %12448 = vmatprep.subr.mxu0 %v11932
    %12449 = vmatpush1.msra.mxu0 %v11931
    %12450 = vmatprep.subr.mxu0 %v11940
    %12451 = vmatpush1.msra.mxu0 %v11939
    %12452 = vmatprep.subr.mxu0 %v11948
    %12453 = vmatpush1.msra.mxu0 %v11947
    %12454 = vmatprep.subr.mxu0 %v11956
    %12455 = vmatpush1.msra.mxu0 %v11955
    %12456 = vmatprep.subr.mxu0 %v11964
    %12457 = vmatpush1.msra.mxu0 %v11963
    %12458 = vmatprep.subr.mxu0 %v11972
    %12459 = vmatpush1.msra.mxu0 %v11971
    %12460 = vmatprep.subr.mxu0 %v11980
    %12461 = vmatpush1.msra.mxu0 %v11979
    %12462 = vmatprep.subr.mxu0 %v11988
    %12463 = vmatpush1.msra.mxu0 %v11987
    %12464 = vmatprep.subr.mxu0 %v11996
    %12465 = vmatpush1.msra.mxu0 %v11995
    %12466 = vmatprep.subr.mxu0 %v12004
    %12467 = vmatpush1.msra.mxu0 %v12003
    %12468 = vmatprep.subr.mxu0 %v12012
    %12469 = vmatpush1.msra.mxu0 %v12011
    %12470 = vmatprep.subr.mxu0 %v12020
    %12471 = vmatpush1.msra.mxu0 %v12019
    %12472 = vmatprep.subr.mxu0 %v12028
    %12473 = vmatpush1.msra.mxu0 %v12027
    %12474 = vmatprep.subr.mxu0 %v12036
    %12475 = vmatpush1.msra.mxu0 %v12035
    %12476 = vmatprep.subr.mxu0 %v12044
    %12477 = vmatpush1.msra.mxu0 %v12043
    %12478 = vmatprep.subr.mxu0 %v12052
    %12479 = vmatpush1.msra.mxu0 %v12051
    %12480 = vmatprep.subr.mxu0 %v12060
    %12481 = vmatpush1.msra.mxu0 %v12059
    %12482 = vmatprep.subr.mxu0 %v12068
    %12483 = vmatpush1.msra.mxu0 %v12067
    %12484 = vmatprep.subr.mxu0 %v12076
    %12485 = vmatpush1.msra.mxu0 %v12075
    %12486 = vmatprep.subr.mxu0 %v12084
    %12487 = vmatpush1.msra.mxu0 %v12083
    %12488 = vmatprep.subr.mxu0 %v12092
    %12489 = vmatpush1.msra.mxu0 %v12091
    %12490 = vmatprep.subr.mxu0 %v12100
    %12491 = vmatpush1.msra.mxu0 %v12099
    %12492 = vmatprep.subr.mxu0 %v12108
    %12493 = vmatpush1.msra.mxu0 %v12107
    %12494 = vmatprep.subr.mxu0 %v12116
    %12495 = vmatpush1.msra.mxu0 %v12115
    %12496 = vmatprep.subr.mxu0 %v12124
    %12497 = vmatpush1.msra.mxu0 %v12123
    %12498 = vmatprep.subr.mxu0 %v12132
    %12499 = vmatpush1.msra.mxu0 %v12131
    %12500 = vmatprep.subr.mxu0 %v12140
    %12501 = vmatpush1.msra.mxu0 %v12139
    %12502 = vmatprep.subr.mxu0 %v12148
    %12503 = vmatpush1.msra.mxu0 %v12147
    %12504 = vmatprep.subr.mxu0 %v12156
    %12505 = vmatpush1.msra.mxu0 %v12155
    %12506 = vmatprep.subr.mxu0 %v12164
    %12507 = vmatpush1.msra.mxu0 %v12163
    %12508 = vmatprep.subr.mxu0 %v12172
    %12509 = vmatpush1.msra.mxu0 %v12171
    %12510 = vmatprep.subr.mxu0 %v12180
    %12511 = vmatpush1.msra.mxu0 %v12179
    %12512 = vmatprep.mubr.f32.mxu0 %v11910
    %12513 = vmatmul.mubr.f32.gmra.mrb[0].mxu0 %v11909
    %v12514 = vpop.f32.mrb[0].mxu0
    %v12515 = vadd.f32 0.0, %v12514
    %v12516 = vpop.f32.mrb[0].mxu0
    %v12517 = vadd.f32 0.0, %v12516
    %12518 = vmatprep.mubr.f32.mxu0 %v11914
    %12519 = vmatmul.mubr.f32.gmra.mrb[0].mxu0 %v11913
    %v12520 = vpop.f32.mrb[0].mxu0
    %v12521 = vadd.f32 0.0, %v12520
    %v12522 = vpop.f32.mrb[0].mxu0
    %v12523 = vadd.f32 0.0, %v12522
    %12524 = vmatprep.mubr.f32.mxu0 %v11918
    %12525 = vmatmul.mubr.f32.gmra.mrb[0].mxu0 %v11917
    %v12526 = vpop.f32.mrb[0].mxu0
    %v12527 = vadd.f32 0.0, %v12526
    %v12528 = vpop.f32.mrb[0].mxu0
    %v12529 = vadd.f32 0.0, %v12528
    %12530 = vmatprep.mubr.f32.mxu0 %v11922
    %12531 = vmatmul.mubr.f32.gmra.mrb[0].mxu0 %v11921
    %v12532 = vpop.f32.mrb[0].mxu0
    %v12533 = vadd.f32 0.0, %v12532
    %v12534 = vpop.f32.mrb[0].mxu0
    %v12535 = vadd.f32 0.0, %v12534
    %12536 = vdwg.mxu0
    %12537 = vst [vmem:[%s12] sm:$0xff] %v12248
    %12538 = vst [vmem:[%s12 + $0x8] sm:$0xff] %v12250
    %12539 = vst [vmem:[%s12 + $0x10] sm:$0xff] %v12337
    %12540 = vst [vmem:[%s12 + $0x18] sm:$0xff] %v12339
    %12541 = vst [vmem:[%s12 + $0x20] sm:$0xff] %v12426
    %12542 = vst [vmem:[%s12 + $0x28] sm:$0xff] %v12428
    %12543 = vst [vmem:[%s12 + $0x30] sm:$0xff] %v12515
    %12544 = vst [vmem:[%s12 + $0x38] sm:$0xff] %v12517
    %12545 = vst [vmem:[%s12 + $0x40] sm:$0xff] %v12254
    %12546 = vst [vmem:[%s12 + $0x48] sm:$0xff] %v12256
    %12547 = vst [vmem:[%s12 + $0x50] sm:$0xff] %v12343
    %12548 = vst [vmem:[%s12 + $0x58] sm:$0xff] %v12345
    %12549 = vst [vmem:[%s12 + $0x60] sm:$0xff] %v12432
    %12550 = vst [vmem:[%s12 + $0x68] sm:$0xff] %v12434
    %12551 = vst [vmem:[%s12 + $0x70] sm:$0xff] %v12521
    %12552 = vst [vmem:[%s12 + $0x78] sm:$0xff] %v12523
    %12553 = vst [vmem:[%s12 + $0x80] sm:$0xff] %v12260
    %12554 = vst [vmem:[%s12 + $0x88] sm:$0xff] %v12262
    %12555 = vst [vmem:[%s12 + $0x90] sm:$0xff] %v12349
    %12556 = vst [vmem:[%s12 + $0x98] sm:$0xff] %v12351
    %12557 = vst [vmem:[%s12 + $0xa0] sm:$0xff] %v12438
    %12558 = vst [vmem:[%s12 + $0xa8] sm:$0xff] %v12440
    %12559 = vst [vmem:[%s12 + $0xb0] sm:$0xff] %v12527
    %12560 = vst [vmem:[%s12 + $0xb8] sm:$0xff] %v12529
    %12561 = vst [vmem:[%s12 + $0xc0] sm:$0xff] %v12266
    %12562 = vst [vmem:[%s12 + $0xc8] sm:$0xff] %v12268
    %12563 = vst [vmem:[%s12 + $0xd0] sm:$0xff] %v12355
    %12564 = vst [vmem:[%s12 + $0xd8] sm:$0xff] %v12357
    %12565 = vst [vmem:[%s12 + $0xe0] sm:$0xff] %v12444
    %12566 = vst [vmem:[%s12 + $0xe8] sm:$0xff] %v12446
    %12567 = vst [vmem:[%s12 + $0xf0] sm:$0xff] %v12533
    %12568 = vst [vmem:[%s12 + $0xf8] sm:$0xff] %v12535
    %12569 = vmatprep.subr.mxu0 %v11926
    %12570 = vmatpush1.msra.mxu0 %v11925
    %12571 = vmatprep.subr.mxu0 %v11934
    %12572 = vmatpush1.msra.mxu0 %v11933
    %12573 = vmatprep.subr.mxu0 %v11942
    %12574 = vmatpush1.msra.mxu0 %v11941
    %12575 = vmatprep.subr.mxu0 %v11950
    %12576 = vmatpush1.msra.mxu0 %v11949
    %12577 = vmatprep.subr.mxu0 %v11958
    %12578 = vmatpush1.msra.mxu0 %v11957
    %12579 = vmatprep.subr.mxu0 %v11966
    %12580 = vmatpush1.msra.mxu0 %v11965
    %12581 = vmatprep.subr.mxu0 %v11974
    %12582 = vmatpush1.msra.mxu0 %v11973
    %12583 = vmatprep.subr.mxu0 %v11982
    %12584 = vmatpush1.msra.mxu0 %v11981
    %12585 = vmatprep.subr.mxu0 %v11990
    %12586 = vmatpush1.msra.mxu0 %v11989
    %12587 = vmatprep.subr.mxu0 %v11998
    %12588 = vmatpush1.msra.mxu0 %v11997
    %12589 = vmatprep.subr.mxu0 %v12006
    %12590 = vmatpush1.msra.mxu0 %v12005
    %12591 = vmatprep.subr.mxu0 %v12014
    %12592 = vmatpush1.msra.mxu0 %v12013
    %12593 = vmatprep.subr.mxu0 %v12022
    %12594 = vmatpush1.msra.mxu0 %v12021
    %12595 = vmatprep.subr.mxu0 %v12030
    %12596 = vmatpush1.msra.mxu0 %v12029
    %12597 = vmatprep.subr.mxu0 %v12038
    %12598 = vmatpush1.msra.mxu0 %v12037
    %12599 = vmatprep.subr.mxu0 %v12046
    %12600 = vmatpush1.msra.mxu0 %v12045
    %12601 = vmatprep.subr.mxu0 %v12054
    %12602 = vmatpush1.msra.mxu0 %v12053
    %12603 = vmatprep.subr.mxu0 %v12062
    %12604 = vmatpush1.msra.mxu0 %v12061
    %12605 = vmatprep.subr.mxu0 %v12070
    %12606 = vmatpush1.msra.mxu0 %v12069
    %12607 = vmatprep.subr.mxu0 %v12078
    %12608 = vmatpush1.msra.mxu0 %v12077
    %12609 = vmatprep.subr.mxu0 %v12086
    %12610 = vmatpush1.msra.mxu0 %v12085
    %12611 = vmatprep.subr.mxu0 %v12094
    %12612 = vmatpush1.msra.mxu0 %v12093
    %12613 = vmatprep.subr.mxu0 %v12102
    %12614 = vmatpush1.msra.mxu0 %v12101
    %12615 = vmatprep.subr.mxu0 %v12110
    %12616 = vmatpush1.msra.mxu0 %v12109
    %12617 = vmatprep.subr.mxu0 %v12118
    %12618 = vmatpush1.msra.mxu0 %v12117
    %12619 = vmatprep.subr.mxu0 %v12126
    %12620 = vmatpush1.msra.mxu0 %v12125
    %12621 = vmatprep.subr.mxu0 %v12134
    %12622 = vmatpush1.msra.mxu0 %v12133
    %12623 = vmatprep.subr.mxu0 %v12142
    %12624 = vmatpush1.msra.mxu0 %v12141
    %12625 = vmatprep.subr.mxu0 %v12150
    %12626 = vmatpush1.msra.mxu0 %v12149
    %12627 = vmatprep.subr.mxu0 %v12158
    %12628 = vmatpush1.msra.mxu0 %v12157
    %12629 = vmatprep.subr.mxu0 %v12166
    %12630 = vmatpush1.msra.mxu0 %v12165
    %12631 = vmatprep.subr.mxu0 %v12174
    %12632 = vmatpush1.msra.mxu0 %v12173
    %12633 = vmatprep.mubr.f32.mxu0 %v11912
    %12634 = vmatmul.mubr.f32.gmra.mrb[0].mxu0 %v11911
    %v12635 = vpop.f32.mrb[0].mxu0
    %v12636 = vadd.f32 0.0, %v12635
    %v12637 = vpop.f32.mrb[0].mxu0
    %v12638 = vadd.f32 0.0, %v12637
    %12639 = vmatprep.mubr.f32.mxu0 %v11916
    %12640 = vmatmul.mubr.f32.gmra.mrb[0].mxu0 %v11915
    %v12641 = vpop.f32.mrb[0].mxu0
    %v12642 = vadd.f32 0.0, %v12641
    %v12643 = vpop.f32.mrb[0].mxu0
    %v12644 = vadd.f32 0.0, %v12643
    %12645 = vmatprep.mubr.f32.mxu0 %v11920
    %12646 = vmatmul.mubr.f32.gmra.mrb[0].mxu0 %v11919
    %v12647 = vpop.f32.mrb[0].mxu0
    %v12648 = vadd.f32 0.0, %v12647
    %v12649 = vpop.f32.mrb[0].mxu0
    %v12650 = vadd.f32 0.0, %v12649
    %12651 = vmatprep.mubr.f32.mxu0 %v11924
    %12652 = vmatmul.mubr.f32.gmra.mrb[0].mxu0 %v11923
    %v12653 = vpop.f32.mrb[0].mxu0
    %v12654 = vadd.f32 0.0, %v12653
    %v12655 = vpop.f32.mrb[0].mxu0
    %v12656 = vadd.f32 0.0, %v12655
    %12657 = vdwg.mxu0
    %12658 = vmatprep.subr.mxu0 %v11928
    %12659 = vmatpush1.msra.mxu0 %v11927
    %12660 = vmatprep.subr.mxu0 %v11936
    %12661 = vmatpush1.msra.mxu0 %v11935
    %12662 = vmatprep.subr.mxu0 %v11944
    %12663 = vmatpush1.msra.mxu0 %v11943
    %12664 = vmatprep.subr.mxu0 %v11952
    %12665 = vmatpush1.msra.mxu0 %v11951
    %12666 = vmatprep.subr.mxu0 %v11960
    %12667 = vmatpush1.msra.mxu0 %v11959
    %12668 = vmatprep.subr.mxu0 %v11968
    %12669 = vmatpush1.msra.mxu0 %v11967
    %12670 = vmatprep.subr.mxu0 %v11976
    %12671 = vmatpush1.msra.mxu0 %v11975
    %12672 = vmatprep.subr.mxu0 %v11984
    %12673 = vmatpush1.msra.mxu0 %v11983
    %12674 = vmatprep.subr.mxu0 %v11992
    %12675 = vmatpush1.msra.mxu0 %v11991
    %12676 = vmatprep.subr.mxu0 %v12000
    %12677 = vmatpush1.msra.mxu0 %v11999
    %12678 = vmatprep.subr.mxu0 %v12008
    %12679 = vmatpush1.msra.mxu0 %v12007
    %12680 = vmatprep.subr.mxu0 %v12016
    %12681 = vmatpush1.msra.mxu0 %v12015
    %12682 = vmatprep.subr.mxu0 %v12024
    %12683 = vmatpush1.msra.mxu0 %v12023
    %12684 = vmatprep.subr.mxu0 %v12032
    %12685 = vmatpush1.msra.mxu0 %v12031
    %12686 = vmatprep.subr.mxu0 %v12040
    %12687 = vmatpush1.msra.mxu0 %v12039
    %12688 = vmatprep.subr.mxu0 %v12048
    %12689 = vmatpush1.msra.mxu0 %v12047
    %12690 = vmatprep.subr.mxu0 %v12056
    %12691 = vmatpush1.msra.mxu0 %v12055
    %12692 = vmatprep.subr.mxu0 %v12064
    %12693 = vmatpush1.msra.mxu0 %v12063
    %12694 = vmatprep.subr.mxu0 %v12072
    %12695 = vmatpush1.msra.mxu0 %v12071
    %12696 = vmatprep.subr.mxu0 %v12080
    %12697 = vmatpush1.msra.mxu0 %v12079
    %12698 = vmatprep.subr.mxu0 %v12088
    %12699 = vmatpush1.msra.mxu0 %v12087
    %12700 = vmatprep.subr.mxu0 %v12096
    %12701 = vmatpush1.msra.mxu0 %v12095
    %12702 = vmatprep.subr.mxu0 %v12104
    %12703 = vmatpush1.msra.mxu0 %v12103
    %12704 = vmatprep.subr.mxu0 %v12112
    %12705 = vmatpush1.msra.mxu0 %v12111
    %12706 = vmatprep.subr.mxu0 %v12120
    %12707 = vmatpush1.msra.mxu0 %v12119
    %12708 = vmatprep.subr.mxu0 %v12128
    %12709 = vmatpush1.msra.mxu0 %v12127
    %12710 = vmatprep.subr.mxu0 %v12136
    %12711 = vmatpush1.msra.mxu0 %v12135
    %12712 = vmatprep.subr.mxu0 %v12144
    %12713 = vmatpush1.msra.mxu0 %v12143
    %12714 = vmatprep.subr.mxu0 %v12152
    %12715 = vmatpush1.msra.mxu0 %v12151
    %12716 = vmatprep.subr.mxu0 %v12160
    %12717 = vmatpush1.msra.mxu0 %v12159
    %12718 = vmatprep.subr.mxu0 %v12168
    %12719 = vmatpush1.msra.mxu0 %v12167
    %12720 = vmatprep.subr.mxu0 %v12176
    %12721 = vmatpush1.msra.mxu0 %v12175
    %12722 = vmatprep.mubr.f32.mxu0 %v11912
    %12723 = vmatmul.mubr.f32.gmra.mrb[0].mxu0 %v11911
    %v12724 = vpop.f32.mrb[0].mxu0
    %v12725 = vadd.f32 0.0, %v12724
    %v12726 = vpop.f32.mrb[0].mxu0
    %v12727 = vadd.f32 0.0, %v12726
    %12728 = vmatprep.mubr.f32.mxu0 %v11916
    %12729 = vmatmul.mubr.f32.gmra.mrb[0].mxu0 %v11915
    %v12730 = vpop.f32.mrb[0].mxu0
    %v12731 = vadd.f32 0.0, %v12730
    %v12732 = vpop.f32.mrb[0].mxu0
    %v12733 = vadd.f32 0.0, %v12732
    %12734 = vmatprep.mubr.f32.mxu0 %v11920
    %12735 = vmatmul.mubr.f32.gmra.mrb[0].mxu0 %v11919
    %v12736 = vpop.f32.mrb[0].mxu0
    %v12737 = vadd.f32 0.0, %v12736
    %v12738 = vpop.f32.mrb[0].mxu0
    %v12739 = vadd.f32 0.0, %v12738
    %12740 = vmatprep.mubr.f32.mxu0 %v11924
    %12741 = vmatmul.mubr.f32.gmra.mrb[0].mxu0 %v11923
    %v12742 = vpop.f32.mrb[0].mxu0
    %v12743 = vadd.f32 0.0, %v12742
    %v12744 = vpop.f32.mrb[0].mxu0
    %v12745 = vadd.f32 0.0, %v12744
    %12746 = vdwg.mxu0
    %12747 = vmatprep.subr.mxu0 %v11930
    %12748 = vmatpush1.msra.mxu0 %v11929
    %12749 = vmatprep.subr.mxu0 %v11938
    %12750 = vmatpush1.msra.mxu0 %v11937
    %12751 = vmatprep.subr.mxu0 %v11946
    %12752 = vmatpush1.msra.mxu0 %v11945
    %12753 = vmatprep.subr.mxu0 %v11954
    %12754 = vmatpush1.msra.mxu0 %v11953
    %12755 = vmatprep.subr.mxu0 %v11962
    %12756 = vmatpush1.msra.mxu0 %v11961
    %12757 = vmatprep.subr.mxu0 %v11970
    %12758 = vmatpush1.msra.mxu0 %v11969
    %12759 = vmatprep.subr.mxu0 %v11978
    %12760 = vmatpush1.msra.mxu0 %v11977
    %12761 = vmatprep.subr.mxu0 %v11986
    %12762 = vmatpush1.msra.mxu0 %v11985
    %12763 = vmatprep.subr.mxu0 %v11994
    %12764 = vmatpush1.msra.mxu0 %v11993
    %12765 = vmatprep.subr.mxu0 %v12002
    %12766 = vmatpush1.msra.mxu0 %v12001
    %12767 = vmatprep.subr.mxu0 %v12010
    %12768 = vmatpush1.msra.mxu0 %v12009
    %12769 = vmatprep.subr.mxu0 %v12018
    %12770 = vmatpush1.msra.mxu0 %v12017
    %12771 = vmatprep.subr.mxu0 %v12026
    %12772 = vmatpush1.msra.mxu0 %v12025
    %12773 = vmatprep.subr.mxu0 %v12034
    %12774 = vmatpush1.msra.mxu0 %v12033
    %12775 = vmatprep.subr.mxu0 %v12042
    %12776 = vmatpush1.msra.mxu0 %v12041
    %12777 = vmatprep.subr.mxu0 %v12050
    %12778 = vmatpush1.msra.mxu0 %v12049
    %12779 = vmatprep.subr.mxu0 %v12058
    %12780 = vmatpush1.msra.mxu0 %v12057
    %12781 = vmatprep.subr.mxu0 %v12066
    %12782 = vmatpush1.msra.mxu0 %v12065
    %12783 = vmatprep.subr.mxu0 %v12074
    %12784 = vmatpush1.msra.mxu0 %v12073
    %12785 = vmatprep.subr.mxu0 %v12082
    %12786 = vmatpush1.msra.mxu0 %v12081
    %12787 = vmatprep.subr.mxu0 %v12090
    %12788 = vmatpush1.msra.mxu0 %v12089
    %12789 = vmatprep.subr.mxu0 %v12098
    %12790 = vmatpush1.msra.mxu0 %v12097
    %12791 = vmatprep.subr.mxu0 %v12106
    %12792 = vmatpush1.msra.mxu0 %v12105
    %12793 = vmatprep.subr.mxu0 %v12114
    %12794 = vmatpush1.msra.mxu0 %v12113
    %12795 = vmatprep.subr.mxu0 %v12122
    %12796 = vmatpush1.msra.mxu0 %v12121
    %12797 = vmatprep.subr.mxu0 %v12130
    %12798 = vmatpush1.msra.mxu0 %v12129
    %12799 = vmatprep.subr.mxu0 %v12138
    %12800 = vmatpush1.msra.mxu0 %v12137
    %12801 = vmatprep.subr.mxu0 %v12146
    %12802 = vmatpush1.msra.mxu0 %v12145
    %12803 = vmatprep.subr.mxu0 %v12154
    %12804 = vmatpush1.msra.mxu0 %v12153
    %12805 = vmatprep.subr.mxu0 %v12162
    %12806 = vmatpush1.msra.mxu0 %v12161
    %12807 = vmatprep.subr.mxu0 %v12170
    %12808 = vmatpush1.msra.mxu0 %v12169
    %12809 = vmatprep.subr.mxu0 %v12178
    %12810 = vmatpush1.msra.mxu0 %v12177
    %12811 = vmatprep.mubr.f32.mxu0 %v11912
    %12812 = vmatmul.mubr.f32.gmra.mrb[0].mxu0 %v11911
    %v12813 = vpop.f32.mrb[0].mxu0
    %v12814 = vadd.f32 0.0, %v12813
    %v12815 = vpop.f32.mrb[0].mxu0
    %v12816 = vadd.f32 0.0, %v12815
    %12817 = vmatprep.mubr.f32.mxu0 %v11916
    %12818 = vmatmul.mubr.f32.gmra.mrb[0].mxu0 %v11915
    %v12819 = vpop.f32.mrb[0].mxu0
    %v12820 = vadd.f32 0.0, %v12819
    %v12821 = vpop.f32.mrb[0].mxu0
    %v12822 = vadd.f32 0.0, %v12821
    %12823 = vmatprep.mubr.f32.mxu0 %v11920
    %12824 = vmatmul.mubr.f32.gmra.mrb[0].mxu0 %v11919
    %v12825 = vpop.f32.mrb[0].mxu0
    %v12826 = vadd.f32 0.0, %v12825
    %v12827 = vpop.f32.mrb[0].mxu0
    %v12828 = vadd.f32 0.0, %v12827
    %12829 = vmatprep.mubr.f32.mxu0 %v11924
    %12830 = vmatmul.mubr.f32.gmra.mrb[0].mxu0 %v11923
    %v12831 = vpop.f32.mrb[0].mxu0
    %v12832 = vadd.f32 0.0, %v12831
    %v12833 = vpop.f32.mrb[0].mxu0
    %v12834 = vadd.f32 0.0, %v12833
    %12835 = vdwg.mxu0
    %12836 = vmatprep.subr.mxu0 %v11932
    %12837 = vmatpush1.msra.mxu0 %v11931
    %12838 = vmatprep.subr.mxu0 %v11940
    %12839 = vmatpush1.msra.mxu0 %v11939
    %12840 = vmatprep.subr.mxu0 %v11948
    %12841 = vmatpush1.msra.mxu0 %v11947
    %12842 = vmatprep.subr.mxu0 %v11956
    %12843 = vmatpush1.msra.mxu0 %v11955
    %12844 = vmatprep.subr.mxu0 %v11964
    %12845 = vmatpush1.msra.mxu0 %v11963
    %12846 = vmatprep.subr.mxu0 %v11972
    %12847 = vmatpush1.msra.mxu0 %v11971
    %12848 = vmatprep.subr.mxu0 %v11980
    %12849 = vmatpush1.msra.mxu0 %v11979
    %12850 = vmatprep.subr.mxu0 %v11988
    %12851 = vmatpush1.msra.mxu0 %v11987
    %12852 = vmatprep.subr.mxu0 %v11996
    %12853 = vmatpush1.msra.mxu0 %v11995
    %12854 = vmatprep.subr.mxu0 %v12004
    %12855 = vmatpush1.msra.mxu0 %v12003
    %12856 = vmatprep.subr.mxu0 %v12012
    %12857 = vmatpush1.msra.mxu0 %v12011
    %12858 = vmatprep.subr.mxu0 %v12020
    %12859 = vmatpush1.msra.mxu0 %v12019
    %12860 = vmatprep.subr.mxu0 %v12028
    %12861 = vmatpush1.msra.mxu0 %v12027
    %12862 = vmatprep.subr.mxu0 %v12036
    %12863 = vmatpush1.msra.mxu0 %v12035
    %12864 = vmatprep.subr.mxu0 %v12044
    %12865 = vmatpush1.msra.mxu0 %v12043
    %12866 = vmatprep.subr.mxu0 %v12052
    %12867 = vmatpush1.msra.mxu0 %v12051
    %12868 = vmatprep.subr.mxu0 %v12060
    %12869 = vmatpush1.msra.mxu0 %v12059
    %12870 = vmatprep.subr.mxu0 %v12068
    %12871 = vmatpush1.msra.mxu0 %v12067
    %12872 = vmatprep.subr.mxu0 %v12076
    %12873 = vmatpush1.msra.mxu0 %v12075
    %12874 = vmatprep.subr.mxu0 %v12084
    %12875 = vmatpush1.msra.mxu0 %v12083
    %12876 = vmatprep.subr.mxu0 %v12092
    %12877 = vmatpush1.msra.mxu0 %v12091
    %12878 = vmatprep.subr.mxu0 %v12100
    %12879 = vmatpush1.msra.mxu0 %v12099
    %12880 = vmatprep.subr.mxu0 %v12108
    %12881 = vmatpush1.msra.mxu0 %v12107
    %12882 = vmatprep.subr.mxu0 %v12116
    %12883 = vmatpush1.msra.mxu0 %v12115
    %12884 = vmatprep.subr.mxu0 %v12124
    %12885 = vmatpush1.msra.mxu0 %v12123
    %12886 = vmatprep.subr.mxu0 %v12132
    %12887 = vmatpush1.msra.mxu0 %v12131
    %12888 = vmatprep.subr.mxu0 %v12140
    %12889 = vmatpush1.msra.mxu0 %v12139
    %12890 = vmatprep.subr.mxu0 %v12148
    %12891 = vmatpush1.msra.mxu0 %v12147
    %12892 = vmatprep.subr.mxu0 %v12156
    %12893 = vmatpush1.msra.mxu0 %v12155
    %12894 = vmatprep.subr.mxu0 %v12164
    %12895 = vmatpush1.msra.mxu0 %v12163
    %12896 = vmatprep.subr.mxu0 %v12172
    %12897 = vmatpush1.msra.mxu0 %v12171
    %12898 = vmatprep.subr.mxu0 %v12180
    %12899 = vmatpush1.msra.mxu0 %v12179
    %12900 = vmatprep.mubr.f32.mxu0 %v11912
    %12901 = vmatmul.mubr.f32.gmra.mrb[0].mxu0 %v11911
    %v12902 = vpop.f32.mrb[0].mxu0
    %v12903 = vadd.f32 0.0, %v12902
    %v12904 = vpop.f32.mrb[0].mxu0
    %v12905 = vadd.f32 0.0, %v12904
    %12906 = vmatprep.mubr.f32.mxu0 %v11916
    %12907 = vmatmul.mubr.f32.gmra.mrb[0].mxu0 %v11915
    %v12908 = vpop.f32.mrb[0].mxu0
    %v12909 = vadd.f32 0.0, %v12908
    %v12910 = vpop.f32.mrb[0].mxu0
    %v12911 = vadd.f32 0.0, %v12910
    %12912 = vmatprep.mubr.f32.mxu0 %v11920
    %12913 = vmatmul.mubr.f32.gmra.mrb[0].mxu0 %v11919
    %v12914 = vpop.f32.mrb[0].mxu0
    %v12915 = vadd.f32 0.0, %v12914
    %v12916 = vpop.f32.mrb[0].mxu0
    %v12917 = vadd.f32 0.0, %v12916
    %12918 = vmatprep.mubr.f32.mxu0 %v11924
    %12919 = vmatmul.mubr.f32.gmra.mrb[0].mxu0 %v11923
    %v12920 = vpop.f32.mrb[0].mxu0
    %v12921 = vadd.f32 0.0, %v12920
    %v12922 = vpop.f32.mrb[0].mxu0
    %v12923 = vadd.f32 0.0, %v12922
    %12924 = vdwg.mxu0
    %s12925 = scalar_lea.vmem %s12, 256
    %12926 = vst [vmem:[%s12925] sm:$0xff] %v12636
    %12927 = vst [vmem:[%s12925 + $0x8] sm:$0xff] %v12638
    %12928 = vst [vmem:[%s12925 + $0x10] sm:$0xff] %v12725
    %12929 = vst [vmem:[%s12925 + $0x18] sm:$0xff] %v12727
    %12930 = vst [vmem:[%s12925 + $0x20] sm:$0xff] %v12814
    %12931 = vst [vmem:[%s12925 + $0x28] sm:$0xff] %v12816
    %12932 = vst [vmem:[%s12925 + $0x30] sm:$0xff] %v12903
    %12933 = vst [vmem:[%s12925 + $0x38] sm:$0xff] %v12905
    %12934 = vst [vmem:[%s12925 + $0x40] sm:$0xff] %v12642
    %12935 = vst [vmem:[%s12925 + $0x48] sm:$0xff] %v12644
    %12936 = vst [vmem:[%s12925 + $0x50] sm:$0xff] %v12731
    %12937 = vst [vmem:[%s12925 + $0x58] sm:$0xff] %v12733
    %12938 = vst [vmem:[%s12925 + $0x60] sm:$0xff] %v12820
    %12939 = vst [vmem:[%s12925 + $0x68] sm:$0xff] %v12822
    %12940 = vst [vmem:[%s12925 + $0x70] sm:$0xff] %v12909
    %12941 = vst [vmem:[%s12925 + $0x78] sm:$0xff] %v12911
    %12942 = vst [vmem:[%s12925 + $0x80] sm:$0xff] %v12648
    %12943 = vst [vmem:[%s12925 + $0x88] sm:$0xff] %v12650
    %12944 = vst [vmem:[%s12925 + $0x90] sm:$0xff] %v12737
    %12945 = vst [vmem:[%s12925 + $0x98] sm:$0xff] %v12739
    %12946 = vst [vmem:[%s12925 + $0xa0] sm:$0xff] %v12826
    %12947 = vst [vmem:[%s12925 + $0xa8] sm:$0xff] %v12828
    %12948 = vst [vmem:[%s12925 + $0xb0] sm:$0xff] %v12915
    %12949 = vst [vmem:[%s12925 + $0xb8] sm:$0xff] %v12917
    %12950 = vst [vmem:[%s12925 + $0xc0] sm:$0xff] %v12654
    %12951 = vst [vmem:[%s12925 + $0xc8] sm:$0xff] %v12656
    %12952 = vst [vmem:[%s12925 + $0xd0] sm:$0xff] %v12743
    %12953 = vst [vmem:[%s12925 + $0xd8] sm:$0xff] %v12745
    %12954 = vst [vmem:[%s12925 + $0xe0] sm:$0xff] %v12832
    %12955 = vst [vmem:[%s12925 + $0xe8] sm:$0xff] %v12834
    %12956 = vst [vmem:[%s12925 + $0xf0] sm:$0xff] %v12921
    %12957 = vst [vmem:[%s12925 + $0xf8] sm:$0xff] %v12923
    // Predicated region
    $region54: #{model_forward.1} parent=1 // pred_check
      _
    $region55: #{model_forward.1} parent=1 // pred_check_branch
      %12959 = sbr.rel (0) target = $region57
    $region56: #{model_forward.1} parent=1 // pred_region
      _
    $region57: #{model_forward.1} parent=1 // pred_fallthru
      _
    // Predicated region
    $region58: #{model_forward.1} parent=1 // pred_check
      _
    $region59: #{model_forward.1} parent=1 // pred_check_branch
      %12961 = sbr.rel (0) target = $region61
    $region60: #{model_forward.1} parent=1 // pred_region
      _
    $region61: #{model_forward.1} parent=1 // pred_fallthru
      _
    %12962 = vsyncpa [#allocation4], 1

</llo_original>
